<compile_context>
chip_gen: v7x
topology: tpu7x:2x2x1
jax: 0.10.0
libtpu: 0.0.40
codegen_flags: <defaults>
</compile_context>

<pallas_src>
import functools
import math

import numpy as np
import jax
import jax.numpy as jnp
from jax.experimental import pallas as pl
from jax.experimental.pallas import tpu as pltpu


MATMUL_DTYPE = jnp.bfloat16          # MXU input dtype; accumulation is f32
_WEIGHT_RESIDENT_MAX = 8 * 1024 * 1024   # keep (K,N) weight panels resident up to this


@functools.lru_cache(maxsize=None)
def _vmem_limit():
    """Per-generation VMEM cap: headroom on v7x (64 MiB physical), use the
    larger VMEM on v5e/v6e (128 MiB physical; default scoped limit is small)."""
    try:
        phys = getattr(pltpu.get_tpu_info(), "vmem_capacity_bytes", None)
    except Exception:
        phys = None
    if not phys:
        return 48 * 1024 * 1024                       # safe everywhere
    if phys >= 100 * 1024 * 1024:
        return 96 * 1024 * 1024                       # v5e / v6e class
    return min(48 * 1024 * 1024, (phys * 3) // 4)     # v7x class


def _tile(dim, desired, align):
    """Largest tile <= desired that divides `dim` and is a multiple of `align`."""
    if dim <= desired:
        return dim
    t = (desired // align) * align
    while t >= align:
        if dim % t == 0:
            return t
        t -= align
    return dim


def _row_tile(M, target=512):
    """Row (sublane) tile.  Never returns a tile larger than 2*target so an
    awkward M cannot silently blow the VMEM budget; callers pad M instead."""
    if M <= target:
        return M
    t = _tile(M, target, 8)
    return t if t <= 2 * target else target


def _pad_rows(x, rows):
    if x is None or rows == 0:
        return x
    return jnp.pad(x, ((0, rows), (0, 0)))


# ----------------------------- linear (dense) -----------------------------

def _gelu_erf(y):
    # exact (erf) gelu, matching HF BERT's default hidden_act
    return 0.5 * y * (1.0 + jax.lax.erf(y * np.float32(1.0 / math.sqrt(2.0))))


def _apply_act(y, activation):
    if activation == "gelu":
        return _gelu_erf(y)
    if activation == "tanh":
        return jnp.tanh(y)
    return y


def _linear_resident_kernel(*refs, activation, has_res, has_ln, ln_eps):
    it = iter(refs)
    x_ref, w_ref, b_ref = next(it), next(it), next(it)
    res_ref = next(it) if has_res else None
    if has_ln:
        g_ref, beta_ref = next(it), next(it)
    o_ref = next(it)

    y = jnp.dot(x_ref[...], w_ref[...], preferred_element_type=jnp.float32)
    y = y + b_ref[...].astype(jnp.float32)
    y = _apply_act(y, activation)
    if has_res:
        y = y + res_ref[...].astype(jnp.float32)
    if has_ln:
        mu = jnp.mean(y, axis=-1, keepdims=True)
        var = jnp.mean(jnp.square(y - mu), axis=-1, keepdims=True)
        y = (y - mu) * jax.lax.rsqrt(var + ln_eps) * g_ref[...] + beta_ref[...]
    o_ref[...] = y.astype(o_ref.dtype)


def _linear_tiled_kernel(x_ref, w_ref, b_ref, o_ref, acc_ref, *, activation):
    k = pl.program_id(2)

    @pl.when(k == 0)
    def _():
        acc_ref[...] = jnp.zeros_like(acc_ref)

    acc_ref[...] += jnp.dot(x_ref[...], w_ref[...],
                            preferred_element_type=jnp.float32)

    @pl.when(k == pl.num_programs(2) - 1)
    def _():
        y = acc_ref[...] + b_ref[...].astype(jnp.float32)
        o_ref[...] = _apply_act(y, activation).astype(o_ref.dtype)


def linear(x, w, b, activation="none", residual=None, ln=None, ln_eps=1e-12,
           out_dtype=None):
    """y = act(x @ w + b) [+ residual] [-> LayerNorm].

    Weight panels small enough to sit in VMEM use a single (row) grid axis so
    the weight is DMA'd from HBM exactly once and each block holds the full
    K/N extent (which also enables the fused residual+LayerNorm epilogue).
    Larger weights fall back to a K/N-tiled matmul with an f32 accumulator.
    """
    M, K = x.shape
    N = w.shape[1]
    out_dtype = out_dtype or x.dtype
    budget = _vmem_limit()
    x_b = x.dtype.itemsize
    o_b = np.dtype(out_dtype).itemsize
    w_bytes = K * N * w.dtype.itemsize
    b2 = b.reshape(1, N)

    if w_bytes <= _WEIGHT_RESIDENT_MAX:
        # ---- weight-resident path: grid over rows only ----
        extra = N * residual.dtype.itemsize if residual is not None else 0

        def _est(tm):
            return (2 * tm * K * x_b + 2 * w_bytes + 2 * tm * N * o_b
                    + 2 * tm * extra + (2 << 20))

        target = 512
        tm = _row_tile(M, target)
        while _est(tm) > budget and target > 64:
            target //= 2
            tm = _row_tile(M, target)

        Mp = -(-M // tm) * tm
        xp = _pad_rows(x, Mp - M)
        rp = _pad_rows(residual, Mp - M)

        inputs = [xp, w, b2]
        in_specs = [pl.BlockSpec((tm, K), lambda i: (i, 0)),
                    pl.BlockSpec((K, N), lambda i: (0, 0)),
                    pl.BlockSpec((1, N), lambda i: (0, 0))]
        if residual is not None:
            inputs.append(rp)
            in_specs.append(pl.BlockSpec((tm, N), lambda i: (i, 0)))
        if ln is not None:
            inputs += [ln[0].reshape(1, N), ln[1].reshape(1, N)]
            in_specs += [pl.BlockSpec((1, N), lambda i: (0, 0))] * 2

        flops = 2 * M * K * N
        transc = M * N if activation in ("gelu", "tanh") else 0
        bytes_acc = M * K * x_b + w_bytes + M * N * o_b + M * extra

        out = pl.pallas_call(
            functools.partial(_linear_resident_kernel, activation=activation,
                              has_res=residual is not None,
                              has_ln=ln is not None, ln_eps=ln_eps),
            out_shape=jax.ShapeDtypeStruct((Mp, N), out_dtype),
            grid=(Mp // tm,),
            in_specs=in_specs,
            out_specs=pl.BlockSpec((tm, N), lambda i: (i, 0)),
            compiler_params=pltpu.CompilerParams(
                dimension_semantics=("parallel",),
                vmem_limit_bytes=budget),
            cost_estimate=pl.CostEstimate(flops=flops, transcendentals=transc,
                                          bytes_accessed=bytes_acc),
        )(*inputs)
        return out[:M] if Mp != M else out

    # ---- tiled fallback (oversized weights): K/N grid + f32 accumulator ----
    tn = _tile(N, 512, 128)
    tk = _tile(K, 1024, 128)

    def _est(tm):
        return (2 * tm * tk * x_b + 2 * tk * tn * w.dtype.itemsize
                + 2 * tm * tn * o_b + tm * tn * 4 + (2 << 20))

    target = 512
    tm = _row_tile(M, target)
    while _est(tm) > budget and target > 64:
        target //= 2
        tm = _row_tile(M, target)

    Mp = -(-M // tm) * tm
    xp = _pad_rows(x, Mp - M)
    out = pl.pallas_call(
        functools.partial(_linear_tiled_kernel, activation=activation),
        out_shape=jax.ShapeDtypeStruct((Mp, N), out_dtype),
        grid=(Mp // tm, N // tn, K // tk),
        in_specs=[pl.BlockSpec((tm, tk), lambda i, j, k: (i, k)),
                  pl.BlockSpec((tk, tn), lambda i, j, k: (k, j)),
                  pl.BlockSpec((1, tn), lambda i, j, k: (0, j))],
        out_specs=pl.BlockSpec((tm, tn), lambda i, j, k: (i, j)),
        scratch_shapes=[pltpu.VMEM((tm, tn), jnp.float32)],
        compiler_params=pltpu.CompilerParams(
            dimension_semantics=("parallel", "parallel", "arbitrary"),
            vmem_limit_bytes=budget),
        cost_estimate=pl.CostEstimate(
            flops=2 * M * K * N,
            transcendentals=M * N if activation in ("gelu", "tanh") else 0,
            bytes_accessed=M * K * x_b + w_bytes + M * N * o_b),
    )(xp, w, b2)
    out = out[:M] if Mp != M else out
    if ln is not None:
        return layer_norm(out, ln[0], ln[1], residual=residual, eps=ln_eps,
                          out_dtype=out_dtype)
    if residual is not None:
        out = (out.astype(jnp.float32)
               + residual.astype(jnp.float32)).astype(out_dtype)
    return out


# ----------------------------- LayerNorm -----------------------------

def _layernorm_kernel(*refs, eps, has_residual):
    if has_residual:
        x_ref, r_ref, g_ref, b_ref, o_ref = refs
        x = x_ref[...].astype(jnp.float32) + r_ref[...].astype(jnp.float32)
    else:
        x_ref, g_ref, b_ref, o_ref = refs
        x = x_ref[...].astype(jnp.float32)
    mu = jnp.mean(x, axis=-1, keepdims=True)
    var = jnp.mean(jnp.square(x - mu), axis=-1, keepdims=True)
    y = (x - mu) * jax.lax.rsqrt(var + eps) * g_ref[...] + b_ref[...]
    o_ref[...] = y.astype(o_ref.dtype)


def layer_norm(x, g, b, residual=None, eps=1e-12, out_dtype=None):
    """Row-tiled LayerNorm with optional fused residual-add (f32 math)."""
    M, H = x.shape
    out_dtype = out_dtype or x.dtype
    tm = _row_tile(M)
    Mp = -(-M // tm) * tm
    xp = _pad_rows(x, Mp - M)
    rp = _pad_rows(residual, Mp - M)
    inputs = [xp]
    in_specs = [pl.BlockSpec((tm, H), lambda i: (i, 0))]
    if residual is not None:
        inputs.append(rp)
        in_specs.append(pl.BlockSpec((tm, H), lambda i: (i, 0)))
    inputs += [g.reshape(1, H), b.reshape(1, H)]
    in_specs += [pl.BlockSpec((1, H), lambda i: (0, 0))] * 2
    out = pl.pallas_call(
        functools.partial(_layernorm_kernel, eps=eps,
                          has_residual=residual is not None),
        out_shape=jax.ShapeDtypeStruct((Mp, H), out_dtype),
        grid=(Mp // tm,),
        in_specs=in_specs,
        out_specs=pl.BlockSpec((tm, H), lambda i: (i, 0)),
        compiler_params=pltpu.CompilerParams(
            dimension_semantics=("parallel",),
            vmem_limit_bytes=_vmem_limit()),
    )(*inputs)
    return out[:M] if Mp != M else out


# ----------------------------- attention -----------------------------

def _attention_kernel(*refs, num_heads, scale, has_wo, has_ln, apply_tanh,
                      ln_eps):
    it = iter(refs)
    q_ref, k_ref, v_ref = next(it), next(it), next(it)
    wo_ref = bo_ref = res_ref = g_ref = beta_ref = None
    if has_wo:
        wo_ref, bo_ref = next(it), next(it)
    if has_ln:
        res_ref, g_ref, beta_ref = next(it), next(it), next(it)
    o_ref = next(it)
    ctx_ref = next(it) if has_wo else None       # (nb, L, H) f32 VMEM scratch

    nb, L, H = q_ref.shape
    dh = H // num_heads

    # Per-head softmax(QK^T/sqrt(dh)) @ V.  Heads are lane sub-ranges of the
    # lane-dense H dimension; per-head contexts go back into a full-H buffer
    # so the output projection and the HBM store stay lane-dense.
    for h in range(num_heads):
        sl = slice(h * dh, (h + 1) * dh)
        s = jnp.einsum("bqd,bkd->bqk", q_ref[:, :, sl], k_ref[:, :, sl],
                       preferred_element_type=jnp.float32) * scale
        s = s - jnp.max(s, axis=-1, keepdims=True)
        p = jnp.exp(s)
        # EUP approximate reciprocal: ~1e-3 relative error vs f32 reference.
        p = p * pl.reciprocal(jnp.sum(p, axis=-1, keepdims=True), approx=True)
        ctx_h = jnp.einsum("bqk,bkd->bqd", p.astype(v_ref.dtype),
                           v_ref[:, :, sl],
                           preferred_element_type=jnp.float32)
        if has_wo:
            ctx_ref[:, :, sl] = ctx_h
        else:
            y_h = jnp.tanh(ctx_h) if apply_tanh else ctx_h
            o_ref[:, :, sl] = y_h.astype(o_ref.dtype)

    if has_wo:
        ctx = ctx_ref[...]                                        # (nb, L, H)
        y = jnp.dot(ctx.reshape(nb * L, H).astype(MATMUL_DTYPE), wo_ref[...],
                    preferred_element_type=jnp.float32)
        y = y + bo_ref[...].astype(jnp.float32)
        if has_ln:
            y = y + res_ref[...].reshape(nb * L, H).astype(jnp.float32)
            mu = jnp.mean(y, axis=-1, keepdims=True)
            var = jnp.mean(jnp.square(y - mu), axis=-1, keepdims=True)
            y = (y - mu) * jax.lax.rsqrt(var + ln_eps) * g_ref[...] + beta_ref[...]
        if apply_tanh:
            y = jnp.tanh(y)
        o_ref[...] = y.reshape(nb, L, H).astype(o_ref.dtype)


def attention(qkv, num_heads, *, wo=None, bo=None, residual=None, ln=None,
              apply_tanh=False, ln_eps=1e-12, out_dtype=None):
    """Multi-head self-attention reading the fused QKV activation directly.

    qkv: (B, L, 3H).  Q/K/V are never sliced or transposed at the XLA level:
    three in_specs window the same array at lane-block offsets 0/1/2, and the
    context is written back lane-dense as (nb, L, H).  Optionally fuses the
    output projection (wo, bo) plus the residual + LayerNorm epilogue so the
    whole per-layer attention block is a single pallas_call.
    Zero additive attention mask — matches the reference (HF BertModel called
    with attention_mask=None -> all-ones mask; the SA head passes zeros).
    """
    B, L, H3 = qkv.shape
    H = H3 // 3
    dh = H // num_heads
    out_dtype = out_dtype or qkv.dtype
    has_wo = wo is not None
    has_ln = ln is not None
    assert not (has_ln and not has_wo), "LN epilogue requires the wo projection"
    budget = _vmem_limit()
    o_b = np.dtype(out_dtype).itemsize

    # How many batch elements per grid step (bigger DMAs, fewer grid steps).
    nb = 1
    for d in range(1, min(B, 8) + 1):
        if B % d:
            continue
        per = d * L * H
        est = (2 * 3 * per * qkv.dtype.itemsize + 2 * per * o_b
               + (2 * per * residual.dtype.itemsize if residual is not None else 0)
               + per * 4 + (4 << 20))
        if est <= budget // 2:
            nb = d

    if H % 128 == 0:
        inputs = [qkv, qkv, qkv]
        in_specs = [pl.BlockSpec((nb, L, H), lambda b: (b, 0, 0)),
                    pl.BlockSpec((nb, L, H), lambda b: (b, 0, 1)),
                    pl.BlockSpec((nb, L, H), lambda b: (b, 0, 2))]
    else:
        # Lane-block windowing needs H % 128 == 0; otherwise slice in XLA.
        inputs = [qkv[:, :, :H], qkv[:, :, H:2 * H], qkv[:, :, 2 * H:]]
        in_specs = [pl.BlockSpec((nb, L, H), lambda b: (b, 0, 0))] * 3

    if has_wo:
        inputs += [wo, bo.reshape(1, H)]
        in_specs += [pl.BlockSpec((H, H), lambda b: (0, 0)),
                     pl.BlockSpec((1, H), lambda b: (0, 0))]
    if has_ln:
        inputs += [residual.reshape(B, L, H),
                   ln[0].reshape(1, H), ln[1].reshape(1, H)]
        in_specs += [pl.BlockSpec((nb, L, H), lambda b: (b, 0, 0)),
                     pl.BlockSpec((1, H), lambda b: (0, 0)),
                     pl.BlockSpec((1, H), lambda b: (0, 0))]

    flops = 4 * B * num_heads * L * L * dh
    if has_wo:
        flops += 2 * B * L * H * H
    transc = B * num_heads * L * L + (B * L * H if apply_tanh else 0)
    bytes_acc = (3 * B * L * H * qkv.dtype.itemsize + B * L * H * o_b
                 + (B * L * H * residual.dtype.itemsize if has_ln else 0)
                 + (H * H * wo.dtype.itemsize if has_wo else 0))

    return pl.pallas_call(
        functools.partial(_attention_kernel, num_heads=num_heads,
                          scale=float(1.0 / math.sqrt(dh)),
                          has_wo=has_wo, has_ln=has_ln,
                          apply_tanh=apply_tanh, ln_eps=ln_eps),
        out_shape=jax.ShapeDtypeStruct((B, L, H), out_dtype),
        grid=(B // nb,),
        in_specs=in_specs,
        out_specs=pl.BlockSpec((nb, L, H), lambda b: (b, 0, 0)),
        scratch_shapes=([pltpu.VMEM((nb, L, H), jnp.float32)] if has_wo else []),
        compiler_params=pltpu.CompilerParams(
            dimension_semantics=("parallel",),
            vmem_limit_bytes=budget),
        cost_estimate=pl.CostEstimate(flops=flops, transcendentals=transc,
                                      bytes_accessed=bytes_acc),
    )(*inputs)


# ----------------------------- LCF fuse -----------------------------

def _lcf_fuse_kernel(loc_ref, mask_ref, spc_ref, wt_ref, wb_ref, b_ref, o_ref):
    # (local * cdm_mask) ++ spc, times linear_double weight, split algebraically
    # as masked @ W_top + spc @ W_bot + b.  Mask is lane-dense (exact 0/1).
    masked = loc_ref[...] * mask_ref[...]
    y = (jnp.dot(masked, wt_ref[...], preferred_element_type=jnp.float32)
         + jnp.dot(spc_ref[...], wb_ref[...], preferred_element_type=jnp.float32)
         + b_ref[...].astype(jnp.float32))
    o_ref[...] = y.astype(o_ref.dtype)


def lcf_fuse(local_flat, mask_dense, spc_flat, w_top, w_bot, b_double,
             out_dtype=None):
    M, H = local_flat.shape
    N = w_top.shape[1]
    out_dtype = out_dtype or local_flat.dtype
    tm = _row_tile(M)
    Mp = -(-M // tm) * tm
    pads = Mp - M
    loc, msk, spc = (_pad_rows(a, pads) for a in (local_flat, mask_dense, spc_flat))
    out = pl.pallas_call(
        _lcf_fuse_kernel,
        out_shape=jax.ShapeDtypeStruct((Mp, N), out_dtype),
        grid=(Mp // tm,),
        in_specs=[pl.BlockSpec((tm, H), lambda i: (i, 0)),
                  pl.BlockSpec((tm, H), lambda i: (i, 0)),
                  pl.BlockSpec((tm, H), lambda i: (i, 0)),
                  pl.BlockSpec((H, N), lambda i: (0, 0)),
                  pl.BlockSpec((H, N), lambda i: (0, 0)),
                  pl.BlockSpec((1, N), lambda i: (0, 0))],
        out_specs=pl.BlockSpec((tm, N), lambda i: (i, 0)),
        compiler_params=pltpu.CompilerParams(
            dimension_semantics=("parallel",),
            vmem_limit_bytes=_vmem_limit()),
        cost_estimate=pl.CostEstimate(
            flops=4 * M * H * N, transcendentals=0,
            bytes_accessed=(3 * M * H * local_flat.dtype.itemsize
                            + 2 * H * N * w_top.dtype.itemsize
                            + M * N * np.dtype(out_dtype).itemsize)),
    )(loc, msk, spc, w_top, w_bot, b_double.reshape(1, N))
    return out[:M] if Mp != M else out


# ----------------------------- parameter init -----------------------------

def _w(key, shape, scale=0.02, dtype=MATMUL_DTYPE):
    return (scale * jax.random.normal(key, shape, jnp.float32)).astype(dtype)


def init_params(key, cfg, opt):
    H, I = cfg["hidden"], cfg["intermediate"]
    keys = iter(jax.random.split(key, 64))
    bert = {
        "word_emb": _w(next(keys), (cfg["vocab_size"], H), dtype=jnp.float32),
        "pos_emb": _w(next(keys), (opt["max_seq_len"], H), dtype=jnp.float32),
        "type_emb": _w(next(keys), (cfg["type_vocab"], H), dtype=jnp.float32),
        "emb_ln_g": jnp.ones((H,), jnp.float32),
        "emb_ln_b": jnp.zeros((H,), jnp.float32),
        "layers": [],
    }
    for _ in range(cfg["num_layers"]):
        bert["layers"].append({
            # fused Q|K|V projection (same math as three separate Linears)
            "wqkv": _w(next(keys), (H, 3 * H)), "bqkv": jnp.zeros((3 * H,), jnp.float32),
            "wo": _w(next(keys), (H, H)), "bo": jnp.zeros((H,), jnp.float32),
            "ln1_g": jnp.ones((H,), jnp.float32), "ln1_b": jnp.zeros((H,), jnp.float32),
            "wi": _w(next(keys), (H, I)), "bi": jnp.zeros((I,), jnp.float32),
            "wo2": _w(next(keys), (I, H)), "bo2": jnp.zeros((H,), jnp.float32),
            "ln2_g": jnp.ones((H,), jnp.float32), "ln2_b": jnp.zeros((H,), jnp.float32),
        })
    params = {
        "bert": bert,
        # linear_double : bert_dim*2 -> bert_dim, stored pre-split (top/bottom)
        "w_double_top": _w(next(keys), (H, H)),
        "w_double_bot": _w(next(keys), (H, H)),
        "b_double": jnp.zeros((H,), jnp.float32),
        # SelfAttention head (fresh BertSelfAttention) fused Q|K|V
        "sa_wqkv": _w(next(keys), (H, 3 * H)),
        "sa_bqkv": jnp.zeros((3 * H,), jnp.float32),
        # BertPooler + final classifier: tiny (N=3, M=B), plain JAX, f32
        "w_pool": _w(next(keys), (H, H), dtype=jnp.float32),
        "b_pool": jnp.zeros((H,), jnp.float32),
        "w_dense": _w(next(keys), (H, opt["polarities_dim"]), dtype=jnp.float32),
        "b_dense": jnp.zeros((opt["polarities_dim"],), jnp.float32),
    }
    return params


# ----------------------------- model pieces -----------------------------

def bert_encoder(bert, input_ids, token_type_ids, cfg):
    B, L = input_ids.shape
    H, nh = cfg["hidden"], cfg["num_heads"]
    # token / position / segment embedding gathers stay in plain JAX
    emb = (bert["word_emb"][input_ids]
           + bert["pos_emb"][:L][None, :, :]
           + bert["type_emb"][token_type_ids])
    h = layer_norm(emb.reshape(B * L, H), bert["emb_ln_g"], bert["emb_ln_b"],
                   out_dtype=MATMUL_DTYPE)
    # embedding / hidden dropout: identity at inference
    for lyr in bert["layers"]:
        qkv = linear(h, lyr["wqkv"], lyr["bqkv"])               # (B*L, 3H), one matmul
        # attention + output projection + residual + LayerNorm: ONE pallas_call
        h = attention(qkv.reshape(B, L, 3 * H), nh,
                      wo=lyr["wo"], bo=lyr["bo"],
                      residual=h, ln=(lyr["ln1_g"], lyr["ln1_b"]),
                      out_dtype=MATMUL_DTYPE).reshape(B * L, H)
        inter = linear(h, lyr["wi"], lyr["bi"], activation="gelu")
        # FFN output projection + residual + LayerNorm fused in the epilogue
        h = linear(inter, lyr["wo2"], lyr["bo2"],
                   residual=h, ln=(lyr["ln2_g"], lyr["ln2_b"]))
    return h.reshape(B, L, H)


def feature_dynamic_mask(texts, asps, max_seq_len, srd):
    # Host numpy, identical semantics to the reference CDM mask, returned as a
    # per-token [B, L] 0/1 mask (the reference repeats it over bert_dim; the
    # lane-dense broadcast happens in the wrapper before the fuse kernel).
    texts = np.asarray(texts)
    asps = np.asarray(asps)
    mask = np.ones((texts.shape[0], max_seq_len), dtype=np.float32)
    for i in range(len(texts)):
        asp_len = int(np.count_nonzero(asps[i])) - 2
        hits = np.argwhere(texts[i] == asps[i][1])
        if len(hits) == 0:
            continue
        asp_begin = int(hits[0][0])
        mask_begin = asp_begin - srd if asp_begin >= srd else 0
        mask[i, :mask_begin] = 0.0
        mask[i, asp_begin + asp_len + srd:] = 0.0
    return jnp.asarray(mask)
# TODO(synk): feature_dynamic_weighted ('cdw' branch) not implemented; the
# reference config here uses local_context_focus == 'cdm'.


def lcf_bert_forward(params, cfg, opt, text_bert_indices, bert_segments_ids,
                     text_local_indices, cdm_mask):
    B, L = text_bert_indices.shape
    H = cfg["hidden"]

    # bert_spc and bert_local share the same backbone weights
    # (self.bert_local = bert) -> fuse both passes into one encoder call at 2B.
    ids = jnp.concatenate([text_bert_indices, text_local_indices], axis=0)
    types = jnp.concatenate([bert_segments_ids,
                             jnp.zeros_like(text_local_indices)], axis=0)
    enc = bert_encoder(params["bert"], ids, types, cfg)          # (2B, L, H)
    bert_spc_out, bert_local_out = enc[:B], enc[B:]
    # nn.Dropout: identity at inference.

    # local_context_focus == 'cdm': torch.mul + torch.cat + linear_double fused.
    mask_dense = jnp.broadcast_to(cdm_mask.reshape(B * L, 1),
                                  (B * L, H)).astype(MATMUL_DTYPE)
    fused = lcf_fuse(bert_local_out.reshape(B * L, H), mask_dense,
                     bert_spc_out.reshape(B * L, H),
                     params["w_double_top"], params["w_double_bot"],
                     params["b_double"])                          # (B*L, H)

    # SelfAttention head: BertSelfAttention (zero additive mask) + tanh
    qkv = linear(fused, params["sa_wqkv"], params["sa_bqkv"])
    sa_out = attention(qkv.reshape(B, L, 3 * H), cfg["num_heads"],
                       apply_tanh=True)                           # (B, L, H)

    # BertPooler (first token -> dense -> tanh) and the final classifier have
    # M=B rows / N=3 lanes: plain JAX avoids narrow-lane masked stores and
    # pallas_call overhead that would exceed the compute.
    pooled_in = sa_out[:, 0, :].astype(jnp.float32)
    pooled = jnp.tanh(pooled_in @ params["w_pool"] + params["b_pool"])
    dense_out = pooled @ params["w_dense"] + params["b_dense"]
    return dense_out


# ----------------------------- main -----------------------------

if __name__ == "__main__":
    cfg = dict(vocab_size=64, hidden=128, num_heads=4, num_layers=2,
               intermediate=256, type_vocab=2)
    opt = dict(max_seq_len=8, bert_dim=128, polarities_dim=3, SRD=2,
               dropout=0.1, local_context_focus="cdm")

    key = jax.random.PRNGKey(0)
    params = init_params(key, cfg, opt)

    # deterministic small example inputs (batch=2, seq=8); 2=[CLS], 3=[SEP]
    text_local_indices = jnp.array([[2, 5, 6, 7, 8, 3, 0, 0],
                                    [2, 9, 10, 11, 3, 0, 0, 0]], dtype=jnp.int32)
    aspect_indices = jnp.array([[2, 7, 3, 0, 0, 0, 0, 0],
                                [2, 10, 3, 0, 0, 0, 0, 0]], dtype=jnp.int32)
    text_bert_indices = jnp.array([[2, 5, 6, 7, 8, 3, 7, 3],
                                   [2, 9, 10, 11, 3, 10, 3, 0]], dtype=jnp.int32)
    bert_segments_ids = jnp.array([[0, 0, 0, 0, 0, 0, 1, 1],
                                   [0, 0, 0, 0, 0, 1, 1, 0]], dtype=jnp.int32)

    # data-dependent mask computed on host (as in the PyTorch reference)
    cdm_mask = feature_dynamic_mask(np.asarray(text_local_indices),
                                    np.asarray(aspect_indices),
                                    opt["max_seq_len"], opt["SRD"])

    fwd = jax.jit(lambda p, tb, seg, tl, m:
                  lcf_bert_forward(p, cfg, opt, tb, seg, tl, m))
    out = fwd(params, text_bert_indices, bert_segments_ids,
              text_local_indices, cdm_mask)
    out = jax.block_until_ready(out)
    assert out.shape == (2, opt["polarities_dim"]) and out.dtype == jnp.float32
    assert bool(jnp.all(jnp.isfinite(out)))
    print("KERNEL_OK")
</pallas_src>

<mosaic_0001>
module attributes {stable_mosaic.version = 11 : i64} {
  func.func @_layernorm_kernel(%arg0: i32, %arg1: memref<32x128xf32, #tpu.memory_space<vmem>>, %arg2: memref<1x128xf32, #tpu.memory_space<vmem>>, %arg3: memref<1x128xf32, #tpu.memory_space<vmem>>, %arg4: memref<32x128xbf16, #tpu.memory_space<vmem>>) attributes {dimension_semantics = [#tpu.dimension_semantics<parallel>], iteration_bounds = array<i64: 1>, scalar_prefetch = 0 : i64, scratch_operands = 0 : i64, tpu.core_type = #tpu.core_type<tc>, window_params = [{transform_indices = @transform_0, window_bounds = array<i64: 32, 128>}, {pipeline_mode = #tpu.pipeline_mode<synchronous>, transform_indices = @transform_1, window_bounds = array<i64: 1, 128>}, {pipeline_mode = #tpu.pipeline_mode<synchronous>, transform_indices = @transform_2, window_bounds = array<i64: 1, 128>}, {transform_indices = @transform_3, window_bounds = array<i64: 32, 128>}]} {
    %c0 = arith.constant 0 : index
    %c0_0 = arith.constant 0 : index
    %0 = vector.load %arg1[%c0, %c0_0] : memref<32x128xf32, #tpu.memory_space<vmem>>, vector<32x128xf32>
    %cst = arith.constant dense<0.000000e+00> : vector<32xf32>
    %1 = vector.multi_reduction <add>, %0, %cst [1] : vector<32x128xf32> to vector<32xf32>
    %2 = vector.shape_cast %1 : vector<32xf32> to vector<32x1xf32>
    %cst_1 = arith.constant 1.280000e+02 : f32
    %3 = vector.broadcast %cst_1 : f32 to vector<32x1xf32>
    %4 = arith.divf %2, %3 : vector<32x1xf32>
    %5 = vector.broadcast %4 : vector<32x1xf32> to vector<32x128xf32>
    %6 = arith.subf %0, %5 : vector<32x128xf32>
    %7 = arith.mulf %6, %6 : vector<32x128xf32>
    %cst_2 = arith.constant dense<0.000000e+00> : vector<32xf32>
    %8 = vector.multi_reduction <add>, %7, %cst_2 [1] : vector<32x128xf32> to vector<32xf32>
    %9 = vector.shape_cast %8 : vector<32xf32> to vector<32x1xf32>
    %cst_3 = arith.constant 1.280000e+02 : f32
    %10 = vector.broadcast %cst_3 : f32 to vector<32x1xf32>
    %11 = arith.divf %9, %10 : vector<32x1xf32>
    %12 = vector.broadcast %4 : vector<32x1xf32> to vector<32x128xf32>
    %13 = arith.subf %0, %12 : vector<32x128xf32>
    %cst_4 = arith.constant 9.99999996E-13 : f32
    %14 = vector.broadcast %cst_4 : f32 to vector<32x1xf32>
    %15 = arith.addf %11, %14 : vector<32x1xf32>
    %16 = math.rsqrt %15 : vector<32x1xf32>
    %17 = vector.broadcast %16 : vector<32x1xf32> to vector<32x128xf32>
    %18 = arith.mulf %13, %17 : vector<32x128xf32>
    %c0_5 = arith.constant 0 : index
    %c0_6 = arith.constant 0 : index
    %19 = vector.load %arg2[%c0_5, %c0_6] : memref<1x128xf32, #tpu.memory_space<vmem>>, vector<1x128xf32>
    %20 = vector.broadcast %19 : vector<1x128xf32> to vector<32x128xf32>
    %21 = arith.mulf %18, %20 : vector<32x128xf32>
    %c0_7 = arith.constant 0 : index
    %c0_8 = arith.constant 0 : index
    %22 = vector.load %arg3[%c0_7, %c0_8] : memref<1x128xf32, #tpu.memory_space<vmem>>, vector<1x128xf32>
    %23 = vector.broadcast %22 : vector<1x128xf32> to vector<32x128xf32>
    %24 = arith.addf %21, %23 : vector<32x128xf32>
    %25 = arith.truncf %24 : vector<32x128xf32> to vector<32x128xbf16>
    %c0_9 = arith.constant 0 : index
    %c0_10 = arith.constant 0 : index
    %26 = vector.load %arg4[%c0_9, %c0_10] : memref<32x128xbf16, #tpu.memory_space<vmem>>, vector<32x128xbf16>
    tpu.vector_store %arg4[%c0_9, %c0_10], %25 {strides = array<i32>} : memref<32x128xbf16, #tpu.memory_space<vmem>>, vector<32x128xbf16>,
    return
  }
  func.func @transform_0(%arg0: i32) -> (i32, i32) {
    %c0_i32 = arith.constant 0 : i32
    %c0_i32_0 = arith.constant 0 : i32
    return %arg0, %c0_i32 : i32, i32
  }
  func.func @transform_1(%arg0: i32) -> (i32, i32) {
    %c0_i32 = arith.constant 0 : i32
    %c0_i32_0 = arith.constant 0 : i32
    %c0_i32_1 = arith.constant 0 : i32
    return %c0_i32, %c0_i32_0 : i32, i32
  }
  func.func @transform_2(%arg0: i32) -> (i32, i32) {
    %c0_i32 = arith.constant 0 : i32
    %c0_i32_0 = arith.constant 0 : i32
    %c0_i32_1 = arith.constant 0 : i32
    return %c0_i32, %c0_i32_0 : i32, i32
  }
  func.func @transform_3(%arg0: i32) -> (i32, i32) {
    %c0_i32 = arith.constant 0 : i32
    %c0_i32_0 = arith.constant 0 : i32
    return %arg0, %c0_i32 : i32, i32
  }
}

module attributes {stable_mosaic.version = 11 : i64} {
  func.func @_linear_resident_kernel(%arg0: i32, %arg1: memref<32x128xbf16, #tpu.memory_space<vmem>>, %arg2: memref<128x384xbf16, #tpu.memory_space<vmem>>, %arg3: memref<1x384xf32, #tpu.memory_space<vmem>>, %arg4: memref<32x384xbf16, #tpu.memory_space<vmem>>) attributes {dimension_semantics = [#tpu.dimension_semantics<parallel>], iteration_bounds = array<i64: 1>, scalar_prefetch = 0 : i64, scratch_operands = 0 : i64, tpu.core_type = #tpu.core_type<tc>, window_params = [{transform_indices = @transform_0, window_bounds = array<i64: 32, 128>}, {pipeline_mode = #tpu.pipeline_mode<synchronous>, transform_indices = @transform_1, window_bounds = array<i64: 128, 384>}, {pipeline_mode = #tpu.pipeline_mode<synchronous>, transform_indices = @transform_2, window_bounds = array<i64: 1, 384>}, {transform_indices = @transform_3, window_bounds = array<i64: 32, 384>}]} {
    %c0 = arith.constant 0 : index
    %c0_0 = arith.constant 0 : index
    %0 = vector.load %arg1[%c0, %c0_0] : memref<32x128xbf16, #tpu.memory_space<vmem>>, vector<32x128xbf16>
    %c0_1 = arith.constant 0 : index
    %c0_2 = arith.constant 0 : index
    %1 = vector.load %arg2[%c0_1, %c0_2] : memref<128x384xbf16, #tpu.memory_space<vmem>>, vector<128x384xbf16>
    %cst = arith.constant dense<0.000000e+00> : vector<32x384xf32>
    %2 = tpu.matmul %0, %1, %cst {dimension_numbers = #tpu.dot_dimension_numbers<[1], [0], [0], [1], [0, 0, 1, 1], [], []>} : vector<32x128xbf16>, vector<128x384xbf16>, vector<32x384xf32> -> vector<32x384xf32>
    %c0_3 = arith.constant 0 : index
    %c0_4 = arith.constant 0 : index
    %3 = vector.load %arg3[%c0_3, %c0_4] : memref<1x384xf32, #tpu.memory_space<vmem>>, vector<1x384xf32>
    %4 = vector.broadcast %3 : vector<1x384xf32> to vector<32x384xf32>
    %5 = arith.addf %2, %4 : vector<32x384xf32>
    %6 = arith.truncf %5 : vector<32x384xf32> to vector<32x384xbf16>
    %c0_5 = arith.constant 0 : index
    %c0_6 = arith.constant 0 : index
    %7 = vector.load %arg4[%c0_5, %c0_6] : memref<32x384xbf16, #tpu.memory_space<vmem>>, vector<32x384xbf16>
    tpu.vector_store %arg4[%c0_5, %c0_6], %6 {strides = array<i32>} : memref<32x384xbf16, #tpu.memory_space<vmem>>, vector<32x384xbf16>,
    return
  }
  func.func @transform_0(%arg0: i32) -> (i32, i32) {
    %c0_i32 = arith.constant 0 : i32
    %c0_i32_0 = arith.constant 0 : i32
    return %arg0, %c0_i32 : i32, i32
  }
  func.func @transform_1(%arg0: i32) -> (i32, i32) {
    %c0_i32 = arith.constant 0 : i32
    %c0_i32_0 = arith.constant 0 : i32
    %c0_i32_1 = arith.constant 0 : i32
    return %c0_i32, %c0_i32_0 : i32, i32
  }
  func.func @transform_2(%arg0: i32) -> (i32, i32) {
    %c0_i32 = arith.constant 0 : i32
    %c0_i32_0 = arith.constant 0 : i32
    %c0_i32_1 = arith.constant 0 : i32
    return %c0_i32, %c0_i32_0 : i32, i32
  }
  func.func @transform_3(%arg0: i32) -> (i32, i32) {
    %c0_i32 = arith.constant 0 : i32
    %c0_i32_0 = arith.constant 0 : i32
    return %arg0, %c0_i32 : i32, i32
  }
}

module attributes {stable_mosaic.version = 11 : i64} {
  func.func @_attention_kernel(%arg0: i32, %arg1: memref<4x8x128xbf16, #tpu.memory_space<vmem>>, %arg2: memref<4x8x128xbf16, #tpu.memory_space<vmem>>, %arg3: memref<4x8x128xbf16, #tpu.memory_space<vmem>>, %arg4: memref<128x128xbf16, #tpu.memory_space<vmem>>, %arg5: memref<1x128xf32, #tpu.memory_space<vmem>>, %arg6: memref<4x8x128xbf16, #tpu.memory_space<vmem>>, %arg7: memref<1x128xf32, #tpu.memory_space<vmem>>, %arg8: memref<1x128xf32, #tpu.memory_space<vmem>>, %arg9: memref<4x8x128xbf16, #tpu.memory_space<vmem>>, %arg10: memref<4x8x128xf32, #tpu.memory_space<vmem>>) attributes {dimension_semantics = [#tpu.dimension_semantics<parallel>], iteration_bounds = array<i64: 1>, scalar_prefetch = 0 : i64, scratch_operands = 1 : i64, tpu.core_type = #tpu.core_type<tc>, window_params = [{transform_indices = @transform_0, window_bounds = array<i64: 4, 8, 128>}, {transform_indices = @transform_1, window_bounds = array<i64: 4, 8, 128>}, {transform_indices = @transform_2, window_bounds = array<i64: 4, 8, 128>}, {pipeline_mode = #tpu.pipeline_mode<synchronous>, transform_indices = @transform_3, window_bounds = array<i64: 128, 128>}, {pipeline_mode = #tpu.pipeline_mode<synchronous>, transform_indices = @transform_4, window_bounds = array<i64: 1, 128>}, {transform_indices = @transform_5, window_bounds = array<i64: 4, 8, 128>}, {pipeline_mode = #tpu.pipeline_mode<synchronous>, transform_indices = @transform_6, window_bounds = array<i64: 1, 128>}, {pipeline_mode = #tpu.pipeline_mode<synchronous>, transform_indices = @transform_7, window_bounds = array<i64: 1, 128>}, {transform_indices = @transform_8, window_bounds = array<i64: 4, 8, 128>}]} {
    %c0 = arith.constant 0 : index
    %c0_0 = arith.constant 0 : index
    %c0_1 = arith.constant 0 : index
    %0 = vector.load %arg1[%c0, %c0_0, %c0_1] : memref<4x8x128xbf16, #tpu.memory_space<vmem>>, vector<4x8x32xbf16>
    %c0_2 = arith.constant 0 : index
    %c0_3 = arith.constant 0 : index
    %c0_4 = arith.constant 0 : index
    %1 = vector.load %arg2[%c0_2, %c0_3, %c0_4] : memref<4x8x128xbf16, #tpu.memory_space<vmem>>, vector<4x8x32xbf16>
    "tpu.trace_start"() <{level = 10 : i32, message = "bqd,bkd->bqk"}> : () -> ()
    %cst = arith.constant dense<0.000000e+00> : vector<4x8x8xf32>
    %2 = tpu.matmul %0, %1, %cst {dimension_numbers = #tpu.dot_dimension_numbers<[2], [2], [1], [1], [0, 0, 0, 1, 1, 1], [0], [0]>} : vector<4x8x32xbf16>, vector<4x8x32xbf16>, vector<4x8x8xf32> -> vector<4x8x8xf32>
    "tpu.trace_stop"() : () -> ()
    %cst_5 = arith.constant 0.176776692 : f32
    %3 = vector.broadcast %cst_5 : f32 to vector<4x8x8xf32>
    %4 = arith.mulf %2, %3 : vector<4x8x8xf32>
    %cst_6 = arith.constant dense<0xFF800000> : vector<4x8xf32>
    %5 = vector.multi_reduction <maximumf>, %4, %cst_6 [2] : vector<4x8x8xf32> to vector<4x8xf32>
    %6 = vector.shape_cast %5 : vector<4x8xf32> to vector<4x8x1xf32>
    %7 = vector.broadcast %6 : vector<4x8x1xf32> to vector<4x8x8xf32>
    %8 = arith.subf %4, %7 : vector<4x8x8xf32>
    %9 = math.exp %8 : vector<4x8x8xf32>
    %cst_7 = arith.constant dense<0.000000e+00> : vector<4x8xf32>
    %10 = vector.multi_reduction <add>, %9, %cst_7 [2] : vector<4x8x8xf32> to vector<4x8xf32>
    %11 = vector.shape_cast %10 : vector<4x8xf32> to vector<4x8x1xf32>
    %12 = tpu.reciprocal %11 {approx = true} : vector<4x8x1xf32> -> vector<4x8x1xf32>
    %13 = vector.broadcast %12 : vector<4x8x1xf32> to vector<4x8x8xf32>
    %14 = arith.mulf %9, %13 : vector<4x8x8xf32>
    %15 = arith.truncf %14 : vector<4x8x8xf32> to vector<4x8x8xbf16>
    %c0_8 = arith.constant 0 : index
    %c0_9 = arith.constant 0 : index
    %c0_10 = arith.constant 0 : index
    %16 = vector.load %arg3[%c0_8, %c0_9, %c0_10] : memref<4x8x128xbf16, #tpu.memory_space<vmem>>, vector<4x8x32xbf16>
    "tpu.trace_start"() <{level = 10 : i32, message = "bqk,bkd->bqd"}> : () -> ()
    %cst_11 = arith.constant dense<0.000000e+00> : vector<4x8x32xf32>
    %17 = tpu.matmul %15, %16, %cst_11 {dimension_numbers = #tpu.dot_dimension_numbers<[2], [1], [1], [2], [0, 0, 0, 1, 1, 2], [0], [0]>} : vector<4x8x8xbf16>, vector<4x8x32xbf16>, vector<4x8x32xf32> -> vector<4x8x32xf32>
    "tpu.trace_stop"() : () -> ()
    %c0_12 = arith.constant 0 : index
    %c0_13 = arith.constant 0 : index
    %c0_14 = arith.constant 0 : index
    %18 = vector.load %arg10[%c0_12, %c0_13, %c0_14] : memref<4x8x128xf32, #tpu.memory_space<vmem>>, vector<4x8x32xf32>
    tpu.vector_store %arg10[%c0_12, %c0_13, %c0_14], %17 {strides = array<i32>} : memref<4x8x128xf32, #tpu.memory_space<vmem>>, vector<4x8x32xf32>,
    %c0_15 = arith.constant 0 : index
    %c0_16 = arith.constant 0 : index
    %c32 = arith.constant 32 : index
    %19 = vector.load %arg1[%c0_15, %c0_16, %c32] : memref<4x8x128xbf16, #tpu.memory_space<vmem>>, vector<4x8x32xbf16>
    %c0_17 = arith.constant 0 : index
    %c0_18 = arith.constant 0 : index
    %c32_19 = arith.constant 32 : index
    %20 = vector.load %arg2[%c0_17, %c0_18, %c32_19] : memref<4x8x128xbf16, #tpu.memory_space<vmem>>, vector<4x8x32xbf16>
    "tpu.trace_start"() <{level = 10 : i32, message = "bqd,bkd->bqk"}> : () -> ()
    %cst_20 = arith.constant dense<0.000000e+00> : vector<4x8x8xf32>
    %21 = tpu.matmul %19, %20, %cst_20 {dimension_numbers = #tpu.dot_dimension_numbers<[2], [2], [1], [1], [0, 0, 0, 1, 1, 1], [0], [0]>} : vector<4x8x32xbf16>, vector<4x8x32xbf16>, vector<4x8x8xf32> -> vector<4x8x8xf32>
    "tpu.trace_stop"() : () -> ()
    %cst_21 = arith.constant 0.176776692 : f32
    %22 = vector.broadcast %cst_21 : f32 to vector<4x8x8xf32>
    %23 = arith.mulf %21, %22 : vector<4x8x8xf32>
    %cst_22 = arith.constant dense<0xFF800000> : vector<4x8xf32>
    %24 = vector.multi_reduction <maximumf>, %23, %cst_22 [2] : vector<4x8x8xf32> to vector<4x8xf32>
    %25 = vector.shape_cast %24 : vector<4x8xf32> to vector<4x8x1xf32>
    %26 = vector.broadcast %25 : vector<4x8x1xf32> to vector<4x8x8xf32>
    %27 = arith.subf %23, %26 : vector<4x8x8xf32>
    %28 = math.exp %27 : vector<4x8x8xf32>
    %cst_23 = arith.constant dense<0.000000e+00> : vector<4x8xf32>
    %29 = vector.multi_reduction <add>, %28, %cst_23 [2] : vector<4x8x8xf32> to vector<4x8xf32>
    %30 = vector.shape_cast %29 : vector<4x8xf32> to vector<4x8x1xf32>
    %31 = tpu.reciprocal %30 {approx = true} : vector<4x8x1xf32> -> vector<4x8x1xf32>
    %32 = vector.broadcast %31 : vector<4x8x1xf32> to vector<4x8x8xf32>
    %33 = arith.mulf %28, %32 : vector<4x8x8xf32>
    %34 = arith.truncf %33 : vector<4x8x8xf32> to vector<4x8x8xbf16>
    %c0_24 = arith.constant 0 : index
    %c0_25 = arith.constant 0 : index
    %c32_26 = arith.constant 32 : index
    %35 = vector.load %arg3[%c0_24, %c0_25, %c32_26] : memref<4x8x128xbf16, #tpu.memory_space<vmem>>, vector<4x8x32xbf16>
    "tpu.trace_start"() <{level = 10 : i32, message = "bqk,bkd->bqd"}> : () -> ()
    %cst_27 = arith.constant dense<0.000000e+00> : vector<4x8x32xf32>
    %36 = tpu.matmul %34, %35, %cst_27 {dimension_numbers = #tpu.dot_dimension_numbers<[2], [1], [1], [2], [0, 0, 0, 1, 1, 2], [0], [0]>} : vector<4x8x8xbf16>, vector<4x8x32xbf16>, vector<4x8x32xf32> -> vector<4x8x32xf32>
    "tpu.trace_stop"() : () -> ()
    %c0_28 = arith.constant 0 : index
    %c0_29 = arith.constant 0 : index
    %c32_30 = arith.constant 32 : index
    %37 = vector.load %arg10[%c0_28, %c0_29, %c32_30] : memref<4x8x128xf32, #tpu.memory_space<vmem>>, vector<4x8x32xf32>
    tpu.vector_store %arg10[%c0_28, %c0_29, %c32_30], %36 {strides = array<i32>} : memref<4x8x128xf32, #tpu.memory_space<vmem>>, vector<4x8x32xf32>,
    %c0_31 = arith.constant 0 : index
    %c0_32 = arith.constant 0 : index
    %c64 = arith.constant 64 : index
    %38 = vector.load %arg1[%c0_31, %c0_32, %c64] : memref<4x8x128xbf16, #tpu.memory_space<vmem>>, vector<4x8x32xbf16>
    %c0_33 = arith.constant 0 : index
    %c0_34 = arith.constant 0 : index
    %c64_35 = arith.constant 64 : index
    %39 = vector.load %arg2[%c0_33, %c0_34, %c64_35] : memref<4x8x128xbf16, #tpu.memory_space<vmem>>, vector<4x8x32xbf16>
    "tpu.trace_start"() <{level = 10 : i32, message = "bqd,bkd->bqk"}> : () -> ()
    %cst_36 = arith.constant dense<0.000000e+00> : vector<4x8x8xf32>
    %40 = tpu.matmul %38, %39, %cst_36 {dimension_numbers = #tpu.dot_dimension_numbers<[2], [2], [1], [1], [0, 0, 0, 1, 1, 1], [0], [0]>} : vector<4x8x32xbf16>, vector<4x8x32xbf16>, vector<4x8x8xf32> -> vector<4x8x8xf32>
    "tpu.trace_stop"() : () -> ()
    %cst_37 = arith.constant 0.176776692 : f32
    %41 = vector.broadcast %cst_37 : f32 to vector<4x8x8xf32>
    %42 = arith.mulf %40, %41 : vector<4x8x8xf32>
    %cst_38 = arith.constant dense<0xFF800000> : vector<4x8xf32>
    %43 = vector.multi_reduction <maximumf>, %42, %cst_38 [2] : vector<4x8x8xf32> to vector<4x8xf32>
    %44 = vector.shape_cast %43 : vector<4x8xf32> to vector<4x8x1xf32>
    %45 = vector.broadcast %44 : vector<4x8x1xf32> to vector<4x8x8xf32>
    %46 = arith.subf %42, %45 : vector<4x8x8xf32>
    %47 = math.exp %46 : vector<4x8x8xf32>
    %cst_39 = arith.constant dense<0.000000e+00> : vector<4x8xf32>
    %48 = vector.multi_reduction <add>, %47, %cst_39 [2] : vector<4x8x8xf32> to vector<4x8xf32>
    %49 = vector.shape_cast %48 : vector<4x8xf32> to vector<4x8x1xf32>
    %50 = tpu.reciprocal %49 {approx = true} : vector<4x8x1xf32> -> vector<4x8x1xf32>
    %51 = vector.broadcast %50 : vector<4x8x1xf32> to vector<4x8x8xf32>
    %52 = arith.mulf %47, %51 : vector<4x8x8xf32>
    %53 = arith.truncf %52 : vector<4x8x8xf32> to vector<4x8x8xbf16>
    %c0_40 = arith.constant 0 : index
    %c0_41 = arith.constant 0 : index
    %c64_42 = arith.constant 64 : index
    %54 = vector.load %arg3[%c0_40, %c0_41, %c64_42] : memref<4x8x128xbf16, #tpu.memory_space<vmem>>, vector<4x8x32xbf16>
    "tpu.trace_start"() <{level = 10 : i32, message = "bqk,bkd->bqd"}> : () -> ()
    %cst_43 = arith.constant dense<0.000000e+00> : vector<4x8x32xf32>
    %55 = tpu.matmul %53, %54, %cst_43 {dimension_numbers = #tpu.dot_dimension_numbers<[2], [1], [1], [2], [0, 0, 0, 1, 1, 2], [0], [0]>} : vector<4x8x8xbf16>, vector<4x8x32xbf16>, vector<4x8x32xf32> -> vector<4x8x32xf32>
    "tpu.trace_stop"() : () -> ()
    %c0_44 = arith.constant 0 : index
    %c0_45 = arith.constant 0 : index
    %c64_46 = arith.constant 64 : index
    %56 = vector.load %arg10[%c0_44, %c0_45, %c64_46] : memref<4x8x128xf32, #tpu.memory_space<vmem>>, vector<4x8x32xf32>
    tpu.vector_store %arg10[%c0_44, %c0_45, %c64_46], %55 {strides = array<i32>} : memref<4x8x128xf32, #tpu.memory_space<vmem>>, vector<4x8x32xf32>,
    %c0_47 = arith.constant 0 : index
    %c0_48 = arith.constant 0 : index
    %c96 = arith.constant 96 : index
    %57 = vector.load %arg1[%c0_47, %c0_48, %c96] : memref<4x8x128xbf16, #tpu.memory_space<vmem>>, vector<4x8x32xbf16>
    %c0_49 = arith.constant 0 : index
    %c0_50 = arith.constant 0 : index
    %c96_51 = arith.constant 96 : index
    %58 = vector.load %arg2[%c0_49, %c0_50, %c96_51] : memref<4x8x128xbf16, #tpu.memory_space<vmem>>, vector<4x8x32xbf16>
    "tpu.trace_start"() <{level = 10 : i32, message = "bqd,bkd->bqk"}> : () -> ()
    %cst_52 = arith.constant dense<0.000000e+00> : vector<4x8x8xf32>
    %59 = tpu.matmul %57, %58, %cst_52 {dimension_numbers = #tpu.dot_dimension_numbers<[2], [2], [1], [1], [0, 0, 0, 1, 1, 1], [0], [0]>} : vector<4x8x32xbf16>, vector<4x8x32xbf16>, vector<4x8x8xf32> -> vector<4x8x8xf32>
    "tpu.trace_stop"() : () -> ()
    %cst_53 = arith.constant 0.176776692 : f32
    %60 = vector.broadcast %cst_53 : f32 to vector<4x8x8xf32>
    %61 = arith.mulf %59, %60 : vector<4x8x8xf32>
    %cst_54 = arith.constant dense<0xFF800000> : vector<4x8xf32>
    %62 = vector.multi_reduction <maximumf>, %61, %cst_54 [2] : vector<4x8x8xf32> to vector<4x8xf32>
    %63 = vector.shape_cast %62 : vector<4x8xf32> to vector<4x8x1xf32>
    %64 = vector.broadcast %63 : vector<4x8x1xf32> to vector<4x8x8xf32>
    %65 = arith.subf %61, %64 : vector<4x8x8xf32>
    %66 = math.exp %65 : vector<4x8x8xf32>
    %cst_55 = arith.constant dense<0.000000e+00> : vector<4x8xf32>
    %67 = vector.multi_reduction <add>, %66, %cst_55 [2] : vector<4x8x8xf32> to vector<4x8xf32>
    %68 = vector.shape_cast %67 : vector<4x8xf32> to vector<4x8x1xf32>
    %69 = tpu.reciprocal %68 {approx = true} : vector<4x8x1xf32> -> vector<4x8x1xf32>
    %70 = vector.broadcast %69 : vector<4x8x1xf32> to vector<4x8x8xf32>
    %71 = arith.mulf %66, %70 : vector<4x8x8xf32>
    %72 = arith.truncf %71 : vector<4x8x8xf32> to vector<4x8x8xbf16>
    %c0_56 = arith.constant 0 : index
    %c0_57 = arith.constant 0 : index
    %c96_58 = arith.constant 96 : index
    %73 = vector.load %arg3[%c0_56, %c0_57, %c96_58] : memref<4x8x128xbf16, #tpu.memory_space<vmem>>, vector<4x8x32xbf16>
    "tpu.trace_start"() <{level = 10 : i32, message = "bqk,bkd->bqd"}> : () -> ()
    %cst_59 = arith.constant dense<0.000000e+00> : vector<4x8x32xf32>
    %74 = tpu.matmul %72, %73, %cst_59 {dimension_numbers = #tpu.dot_dimension_numbers<[2], [1], [1], [2], [0, 0, 0, 1, 1, 2], [0], [0]>} : vector<4x8x8xbf16>, vector<4x8x32xbf16>, vector<4x8x32xf32> -> vector<4x8x32xf32>
    "tpu.trace_stop"() : () -> ()
    %c0_60 = arith.constant 0 : index
    %c0_61 = arith.constant 0 : index
    %c96_62 = arith.constant 96 : index
    %75 = vector.load %arg10[%c0_60, %c0_61, %c96_62] : memref<4x8x128xf32, #tpu.memory_space<vmem>>, vector<4x8x32xf32>
    tpu.vector_store %arg10[%c0_60, %c0_61, %c96_62], %74 {strides = array<i32>} : memref<4x8x128xf32, #tpu.memory_space<vmem>>, vector<4x8x32xf32>,
    %c0_63 = arith.constant 0 : index
    %c0_64 = arith.constant 0 : index
    %c0_65 = arith.constant 0 : index
    %76 = vector.load %arg10[%c0_63, %c0_64, %c0_65] : memref<4x8x128xf32, #tpu.memory_space<vmem>>, vector<4x8x128xf32>
    %77 = vector.shape_cast %76 : vector<4x8x128xf32> to vector<32x128xf32>
    %78 = arith.truncf %77 : vector<32x128xf32> to vector<32x128xbf16>
    %c0_66 = arith.constant 0 : index
    %c0_67 = arith.constant 0 : index
    %79 = vector.load %arg4[%c0_66, %c0_67] : memref<128x128xbf16, #tpu.memory_space<vmem>>, vector<128x128xbf16>
    %cst_68 = arith.constant dense<0.000000e+00> : vector<32x128xf32>
    %80 = tpu.matmul %78, %79, %cst_68 {dimension_numbers = #tpu.dot_dimension_numbers<[1], [0], [0], [1], [0, 0, 1, 1], [], []>} : vector<32x128xbf16>, vector<128x128xbf16>, vector<32x128xf32> -> vector<32x128xf32>
    %c0_69 = arith.constant 0 : index
    %c0_70 = arith.constant 0 : index
    %81 = vector.load %arg5[%c0_69, %c0_70] : memref<1x128xf32, #tpu.memory_space<vmem>>, vector<1x128xf32>
    %82 = vector.broadcast %81 : vector<1x128xf32> to vector<32x128xf32>
    %83 = arith.addf %80, %82 : vector<32x128xf32>
    %c0_71 = arith.constant 0 : index
    %c0_72 = arith.constant 0 : index
    %c0_73 = arith.constant 0 : index
    %84 = vector.load %arg6[%c0_71, %c0_72, %c0_73] : memref<4x8x128xbf16, #tpu.memory_space<vmem>>, vector<4x8x128xbf16>
    %85 = vector.shape_cast %84 : vector<4x8x128xbf16> to vector<32x128xbf16>
    %86 = arith.extf %85 : vector<32x128xbf16> to vector<32x128xf32>
    %87 = arith.addf %83, %86 : vector<32x128xf32>
    %cst_74 = arith.constant dense<0.000000e+00> : vector<32xf32>
    %88 = vector.multi_reduction <add>, %87, %cst_74 [1] : vector<32x128xf32> to vector<32xf32>
    %89 = vector.shape_cast %88 : vector<32xf32> to vector<32x1xf32>
    %cst_75 = arith.constant 1.280000e+02 : f32
    %90 = vector.broadcast %cst_75 : f32 to vector<32x1xf32>
    %91 = arith.divf %89, %90 : vector<32x1xf32>
    %92 = vector.broadcast %91 : vector<32x1xf32> to vector<32x128xf32>
    %93 = arith.subf %87, %92 : vector<32x128xf32>
    %94 = arith.mulf %93, %93 : vector<32x128xf32>
    %cst_76 = arith.constant dense<0.000000e+00> : vector<32xf32>
    %95 = vector.multi_reduction <add>, %94, %cst_76 [1] : vector<32x128xf32> to vector<32xf32>
    %96 = vector.shape_cast %95 : vector<32xf32> to vector<32x1xf32>
    %cst_77 = arith.constant 1.280000e+02 : f32
    %97 = vector.broadcast %cst_77 : f32 to vector<32x1xf32>
    %98 = arith.divf %96, %97 : vector<32x1xf32>
    %99 = vector.broadcast %91 : vector<32x1xf32> to vector<32x128xf32>
    %100 = arith.subf %87, %99 : vector<32x128xf32>
    %cst_78 = arith.constant 9.99999996E-13 : f32
    %101 = vector.broadcast %cst_78 : f32 to vector<32x1xf32>
    %102 = arith.addf %98, %101 : vector<32x1xf32>
    %103 = math.rsqrt %102 : vector<32x1xf32>
    %104 = vector.broadcast %103 : vector<32x1xf32> to vector<32x128xf32>
    %105 = arith.mulf %100, %104 : vector<32x128xf32>
    %c0_79 = arith.constant 0 : index
    %c0_80 = arith.constant 0 : index
    %106 = vector.load %arg7[%c0_79, %c0_80] : memref<1x128xf32, #tpu.memory_space<vmem>>, vector<1x128xf32>
    %107 = vector.broadcast %106 : vector<1x128xf32> to vector<32x128xf32>
    %108 = arith.mulf %105, %107 : vector<32x128xf32>
    %c0_81 = arith.constant 0 : index
    %c0_82 = arith.constant 0 : index
    %109 = vector.load %arg8[%c0_81, %c0_82] : memref<1x128xf32, #tpu.memory_space<vmem>>, vector<1x128xf32>
    %110 = vector.broadcast %109 : vector<1x128xf32> to vector<32x128xf32>
    %111 = arith.addf %108, %110 : vector<32x128xf32>
    %112 = vector.shape_cast %111 : vector<32x128xf32> to vector<4x8x128xf32>
    %113 = arith.truncf %112 : vector<4x8x128xf32> to vector<4x8x128xbf16>
    %c0_83 = arith.constant 0 : index
    %c0_84 = arith.constant 0 : index
    %c0_85 = arith.constant 0 : index
    %114 = vector.load %arg9[%c0_83, %c0_84, %c0_85] : memref<4x8x128xbf16, #tpu.memory_space<vmem>>, vector<4x8x128xbf16>
    tpu.vector_store %arg9[%c0_83, %c0_84, %c0_85], %113 {strides = array<i32>} : memref<4x8x128xbf16, #tpu.memory_space<vmem>>, vector<4x8x128xbf16>,
    return
  }
  func.func @transform_0(%arg0: i32) -> (i32, i32, i32) {
    %c0_i32 = arith.constant 0 : i32
    %c0_i32_0 = arith.constant 0 : i32
    %c0_i32_1 = arith.constant 0 : i32
    return %arg0, %c0_i32, %c0_i32_0 : i32, i32, i32
  }
  func.func @transform_1(%arg0: i32) -> (i32, i32, i32) {
    %c0_i32 = arith.constant 0 : i32
    %c1_i32 = arith.constant 1 : i32
    %c0_i32_0 = arith.constant 0 : i32
    return %arg0, %c0_i32, %c1_i32 : i32, i32, i32
  }
  func.func @transform_2(%arg0: i32) -> (i32, i32, i32) {
    %c0_i32 = arith.constant 0 : i32
    %c2_i32 = arith.constant 2 : i32
    %c0_i32_0 = arith.constant 0 : i32
    return %arg0, %c0_i32, %c2_i32 : i32, i32, i32
  }
  func.func @transform_3(%arg0: i32) -> (i32, i32) {
    %c0_i32 = arith.constant 0 : i32
    %c0_i32_0 = arith.constant 0 : i32
    %c0_i32_1 = arith.constant 0 : i32
    return %c0_i32, %c0_i32_0 : i32, i32
  }
  func.func @transform_4(%arg0: i32) -> (i32, i32) {
    %c0_i32 = arith.constant 0 : i32
    %c0_i32_0 = arith.constant 0 : i32
    %c0_i32_1 = arith.constant 0 : i32
    return %c0_i32, %c0_i32_0 : i32, i32
  }
  func.func @transform_5(%arg0: i32) -> (i32, i32, i32) {
    %c0_i32 = arith.constant 0 : i32
    %c0_i32_0 = arith.constant 0 : i32
    %c0_i32_1 = arith.constant 0 : i32
    return %arg0, %c0_i32, %c0_i32_0 : i32, i32, i32
  }
  func.func @transform_6(%arg0: i32) -> (i32, i32) {
    %c0_i32 = arith.constant 0 : i32
    %c0_i32_0 = arith.constant 0 : i32
    %c0_i32_1 = arith.constant 0 : i32
    return %c0_i32, %c0_i32_0 : i32, i32
  }
  func.func @transform_7(%arg0: i32) -> (i32, i32) {
    %c0_i32 = arith.constant 0 : i32
    %c0_i32_0 = arith.constant 0 : i32
    %c0_i32_1 = arith.constant 0 : i32
    return %c0_i32, %c0_i32_0 : i32, i32
  }
  func.func @transform_8(%arg0: i32) -> (i32, i32, i32) {
    %c0_i32 = arith.constant 0 : i32
    %c0_i32_0 = arith.constant 0 : i32
    %c0_i32_1 = arith.constant 0 : i32
    return %arg0, %c0_i32, %c0_i32_0 : i32, i32, i32
  }
}

module attributes {stable_mosaic.version = 11 : i64} {
  func.func @_linear_resident_kernel(%arg0: i32, %arg1: memref<32x128xbf16, #tpu.memory_space<vmem>>, %arg2: memref<128x256xbf16, #tpu.memory_space<vmem>>, %arg3: memref<1x256xf32, #tpu.memory_space<vmem>>, %arg4: memref<32x256xbf16, #tpu.memory_space<vmem>>) attributes {dimension_semantics = [#tpu.dimension_semantics<parallel>], iteration_bounds = array<i64: 1>, scalar_prefetch = 0 : i64, scratch_operands = 0 : i64, tpu.core_type = #tpu.core_type<tc>, window_params = [{transform_indices = @transform_0, window_bounds = array<i64: 32, 128>}, {pipeline_mode = #tpu.pipeline_mode<synchronous>, transform_indices = @transform_1, window_bounds = array<i64: 128, 256>}, {pipeline_mode = #tpu.pipeline_mode<synchronous>, transform_indices = @transform_2, window_bounds = array<i64: 1, 256>}, {transform_indices = @transform_3, window_bounds = array<i64: 32, 256>}]} {
    %c0 = arith.constant 0 : index
    %c0_0 = arith.constant 0 : index
    %0 = vector.load %arg1[%c0, %c0_0] : memref<32x128xbf16, #tpu.memory_space<vmem>>, vector<32x128xbf16>
    %c0_1 = arith.constant 0 : index
    %c0_2 = arith.constant 0 : index
    %1 = vector.load %arg2[%c0_1, %c0_2] : memref<128x256xbf16, #tpu.memory_space<vmem>>, vector<128x256xbf16>
    %cst = arith.constant dense<0.000000e+00> : vector<32x256xf32>
    %2 = tpu.matmul %0, %1, %cst {dimension_numbers = #tpu.dot_dimension_numbers<[1], [0], [0], [1], [0, 0, 1, 1], [], []>} : vector<32x128xbf16>, vector<128x256xbf16>, vector<32x256xf32> -> vector<32x256xf32>
    %c0_3 = arith.constant 0 : index
    %c0_4 = arith.constant 0 : index
    %3 = vector.load %arg3[%c0_3, %c0_4] : memref<1x256xf32, #tpu.memory_space<vmem>>, vector<1x256xf32>
    %4 = vector.broadcast %3 : vector<1x256xf32> to vector<32x256xf32>
    %5 = arith.addf %2, %4 : vector<32x256xf32>
    %cst_5 = arith.constant 5.000000e-01 : f32
    %6 = vector.broadcast %cst_5 : f32 to vector<32x256xf32>
    %7 = arith.mulf %6, %5 : vector<32x256xf32>
    %cst_6 = arith.constant 0.707106769 : f32
    %8 = vector.broadcast %cst_6 : f32 to vector<32x256xf32>
    %9 = arith.mulf %5, %8 : vector<32x256xf32>
    %10 = math.erf %9 : vector<32x256xf32>
    %cst_7 = arith.constant 1.000000e+00 : f32
    %11 = vector.broadcast %cst_7 : f32 to vector<32x256xf32>
    %12 = arith.addf %11, %10 : vector<32x256xf32>
    %13 = arith.mulf %7, %12 : vector<32x256xf32>
    %14 = arith.truncf %13 : vector<32x256xf32> to vector<32x256xbf16>
    %c0_8 = arith.constant 0 : index
    %c0_9 = arith.constant 0 : index
    %15 = vector.load %arg4[%c0_8, %c0_9] : memref<32x256xbf16, #tpu.memory_space<vmem>>, vector<32x256xbf16>
    tpu.vector_store %arg4[%c0_8, %c0_9], %14 {strides = array<i32>} : memref<32x256xbf16, #tpu.memory_space<vmem>>, vector<32x256xbf16>,
    return
  }
  func.func @transform_0(%arg0: i32) -> (i32, i32) {
    %c0_i32 = arith.constant 0 : i32
    %c0_i32_0 = arith.constant 0 : i32
    return %arg0, %c0_i32 : i32, i32
  }
  func.func @transform_1(%arg0: i32) -> (i32, i32) {
    %c0_i32 = arith.constant 0 : i32
    %c0_i32_0 = arith.constant 0 : i32
    %c0_i32_1 = arith.constant 0 : i32
    return %c0_i32, %c0_i32_0 : i32, i32
  }
  func.func @transform_2(%arg0: i32) -> (i32, i32) {
    %c0_i32 = arith.constant 0 : i32
    %c0_i32_0 = arith.constant 0 : i32
    %c0_i32_1 = arith.constant 0 : i32
    return %c0_i32, %c0_i32_0 : i32, i32
  }
  func.func @transform_3(%arg0: i32) -> (i32, i32) {
    %c0_i32 = arith.constant 0 : i32
    %c0_i32_0 = arith.constant 0 : i32
    return %arg0, %c0_i32 : i32, i32
  }
}

module attributes {stable_mosaic.version = 11 : i64} {
  func.func @_linear_resident_kernel(%arg0: i32, %arg1: memref<32x256xbf16, #tpu.memory_space<vmem>>, %arg2: memref<256x128xbf16, #tpu.memory_space<vmem>>, %arg3: memref<1x128xf32, #tpu.memory_space<vmem>>, %arg4: memref<32x128xbf16, #tpu.memory_space<vmem>>, %arg5: memref<1x128xf32, #tpu.memory_space<vmem>>, %arg6: memref<1x128xf32, #tpu.memory_space<vmem>>, %arg7: memref<32x128xbf16, #tpu.memory_space<vmem>>) attributes {dimension_semantics = [#tpu.dimension_semantics<parallel>], iteration_bounds = array<i64: 1>, scalar_prefetch = 0 : i64, scratch_operands = 0 : i64, tpu.core_type = #tpu.core_type<tc>, window_params = [{transform_indices = @transform_0, window_bounds = array<i64: 32, 256>}, {pipeline_mode = #tpu.pipeline_mode<synchronous>, transform_indices = @transform_1, window_bounds = array<i64: 256, 128>}, {pipeline_mode = #tpu.pipeline_mode<synchronous>, transform_indices = @transform_2, window_bounds = array<i64: 1, 128>}, {transform_indices = @transform_3, window_bounds = array<i64: 32, 128>}, {pipeline_mode = #tpu.pipeline_mode<synchronous>, transform_indices = @transform_4, window_bounds = array<i64: 1, 128>}, {pipeline_mode = #tpu.pipeline_mode<synchronous>, transform_indices = @transform_5, window_bounds = array<i64: 1, 128>}, {transform_indices = @transform_6, window_bounds = array<i64: 32, 128>}]} {
    %c0 = arith.constant 0 : index
    %c0_0 = arith.constant 0 : index
    %0 = vector.load %arg1[%c0, %c0_0] : memref<32x256xbf16, #tpu.memory_space<vmem>>, vector<32x256xbf16>
    %c0_1 = arith.constant 0 : index
    %c0_2 = arith.constant 0 : index
    %1 = vector.load %arg2[%c0_1, %c0_2] : memref<256x128xbf16, #tpu.memory_space<vmem>>, vector<256x128xbf16>
    %cst = arith.constant dense<0.000000e+00> : vector<32x128xf32>
    %2 = tpu.matmul %0, %1, %cst {dimension_numbers = #tpu.dot_dimension_numbers<[1], [0], [0], [1], [0, 0, 1, 1], [], []>} : vector<32x256xbf16>, vector<256x128xbf16>, vector<32x128xf32> -> vector<32x128xf32>
    %c0_3 = arith.constant 0 : index
    %c0_4 = arith.constant 0 : index
    %3 = vector.load %arg3[%c0_3, %c0_4] : memref<1x128xf32, #tpu.memory_space<vmem>>, vector<1x128xf32>
    %4 = vector.broadcast %3 : vector<1x128xf32> to vector<32x128xf32>
    %5 = arith.addf %2, %4 : vector<32x128xf32>
    %c0_5 = arith.constant 0 : index
    %c0_6 = arith.constant 0 : index
    %6 = vector.load %arg4[%c0_5, %c0_6] : memref<32x128xbf16, #tpu.memory_space<vmem>>, vector<32x128xbf16>
    %7 = arith.extf %6 : vector<32x128xbf16> to vector<32x128xf32>
    %8 = arith.addf %5, %7 : vector<32x128xf32>
    %cst_7 = arith.constant dense<0.000000e+00> : vector<32xf32>
    %9 = vector.multi_reduction <add>, %8, %cst_7 [1] : vector<32x128xf32> to vector<32xf32>
    %10 = vector.shape_cast %9 : vector<32xf32> to vector<32x1xf32>
    %cst_8 = arith.constant 1.280000e+02 : f32
    %11 = vector.broadcast %cst_8 : f32 to vector<32x1xf32>
    %12 = arith.divf %10, %11 : vector<32x1xf32>
    %13 = vector.broadcast %12 : vector<32x1xf32> to vector<32x128xf32>
    %14 = arith.subf %8, %13 : vector<32x128xf32>
    %15 = arith.mulf %14, %14 : vector<32x128xf32>
    %cst_9 = arith.constant dense<0.000000e+00> : vector<32xf32>
    %16 = vector.multi_reduction <add>, %15, %cst_9 [1] : vector<32x128xf32> to vector<32xf32>
    %17 = vector.shape_cast %16 : vector<32xf32> to vector<32x1xf32>
    %cst_10 = arith.constant 1.280000e+02 : f32
    %18 = vector.broadcast %cst_10 : f32 to vector<32x1xf32>
    %19 = arith.divf %17, %18 : vector<32x1xf32>
    %20 = vector.broadcast %12 : vector<32x1xf32> to vector<32x128xf32>
    %21 = arith.subf %8, %20 : vector<32x128xf32>
    %cst_11 = arith.constant 9.99999996E-13 : f32
    %22 = vector.broadcast %cst_11 : f32 to vector<32x1xf32>
    %23 = arith.addf %19, %22 : vector<32x1xf32>
    %24 = math.rsqrt %23 : vector<32x1xf32>
    %25 = vector.broadcast %24 : vector<32x1xf32> to vector<32x128xf32>
    %26 = arith.mulf %21, %25 : vector<32x128xf32>
    %c0_12 = arith.constant 0 : index
    %c0_13 = arith.constant 0 : index
    %27 = vector.load %arg5[%c0_12, %c0_13] : memref<1x128xf32, #tpu.memory_space<vmem>>, vector<1x128xf32>
    %28 = vector.broadcast %27 : vector<1x128xf32> to vector<32x128xf32>
    %29 = arith.mulf %26, %28 : vector<32x128xf32>
    %c0_14 = arith.constant 0 : index
    %c0_15 = arith.constant 0 : index
    %30 = vector.load %arg6[%c0_14, %c0_15] : memref<1x128xf32, #tpu.memory_space<vmem>>, vector<1x128xf32>
    %31 = vector.broadcast %30 : vector<1x128xf32> to vector<32x128xf32>
    %32 = arith.addf %29, %31 : vector<32x128xf32>
    %33 = arith.truncf %32 : vector<32x128xf32> to vector<32x128xbf16>
    %c0_16 = arith.constant 0 : index
    %c0_17 = arith.constant 0 : index
    %34 = vector.load %arg7[%c0_16, %c0_17] : memref<32x128xbf16, #tpu.memory_space<vmem>>, vector<32x128xbf16>
    tpu.vector_store %arg7[%c0_16, %c0_17], %33 {strides = array<i32>} : memref<32x128xbf16, #tpu.memory_space<vmem>>, vector<32x128xbf16>,
    return
  }
  func.func @transform_0(%arg0: i32) -> (i32, i32) {
    %c0_i32 = arith.constant 0 : i32
    %c0_i32_0 = arith.constant 0 : i32
    return %arg0, %c0_i32 : i32, i32
  }
  func.func @transform_1(%arg0: i32) -> (i32, i32) {
    %c0_i32 = arith.constant 0 : i32
    %c0_i32_0 = arith.constant 0 : i32
    %c0_i32_1 = arith.constant 0 : i32
    return %c0_i32, %c0_i32_0 : i32, i32
  }
  func.func @transform_2(%arg0: i32) -> (i32, i32) {
    %c0_i32 = arith.constant 0 : i32
    %c0_i32_0 = arith.constant 0 : i32
    %c0_i32_1 = arith.constant 0 : i32
    return %c0_i32, %c0_i32_0 : i32, i32
  }
  func.func @transform_3(%arg0: i32) -> (i32, i32) {
    %c0_i32 = arith.constant 0 : i32
    %c0_i32_0 = arith.constant 0 : i32
    return %arg0, %c0_i32 : i32, i32
  }
  func.func @transform_4(%arg0: i32) -> (i32, i32) {
    %c0_i32 = arith.constant 0 : i32
    %c0_i32_0 = arith.constant 0 : i32
    %c0_i32_1 = arith.constant 0 : i32
    return %c0_i32, %c0_i32_0 : i32, i32
  }
  func.func @transform_5(%arg0: i32) -> (i32, i32) {
    %c0_i32 = arith.constant 0 : i32
    %c0_i32_0 = arith.constant 0 : i32
    %c0_i32_1 = arith.constant 0 : i32
    return %c0_i32, %c0_i32_0 : i32, i32
  }
  func.func @transform_6(%arg0: i32) -> (i32, i32) {
    %c0_i32 = arith.constant 0 : i32
    %c0_i32_0 = arith.constant 0 : i32
    return %arg0, %c0_i32 : i32, i32
  }
}

module attributes {stable_mosaic.version = 11 : i64} {
  func.func @_lcf_fuse_kernel(%arg0: i32, %arg1: memref<16x128xbf16, #tpu.memory_space<vmem>>, %arg2: memref<16x128xbf16, #tpu.memory_space<vmem>>, %arg3: memref<16x128xbf16, #tpu.memory_space<vmem>>, %arg4: memref<128x128xbf16, #tpu.memory_space<vmem>>, %arg5: memref<128x128xbf16, #tpu.memory_space<vmem>>, %arg6: memref<1x128xf32, #tpu.memory_space<vmem>>, %arg7: memref<16x128xbf16, #tpu.memory_space<vmem>>) attributes {dimension_semantics = [#tpu.dimension_semantics<parallel>], iteration_bounds = array<i64: 1>, scalar_prefetch = 0 : i64, scratch_operands = 0 : i64, tpu.core_type = #tpu.core_type<tc>, window_params = [{transform_indices = @transform_0, window_bounds = array<i64: 16, 128>}, {transform_indices = @transform_1, window_bounds = array<i64: 16, 128>}, {transform_indices = @transform_2, window_bounds = array<i64: 16, 128>}, {pipeline_mode = #tpu.pipeline_mode<synchronous>, transform_indices = @transform_3, window_bounds = array<i64: 128, 128>}, {pipeline_mode = #tpu.pipeline_mode<synchronous>, transform_indices = @transform_4, window_bounds = array<i64: 128, 128>}, {pipeline_mode = #tpu.pipeline_mode<synchronous>, transform_indices = @transform_5, window_bounds = array<i64: 1, 128>}, {transform_indices = @transform_6, window_bounds = array<i64: 16, 128>}]} {
    %c0 = arith.constant 0 : index
    %c0_0 = arith.constant 0 : index
    %0 = vector.load %arg1[%c0, %c0_0] : memref<16x128xbf16, #tpu.memory_space<vmem>>, vector<16x128xbf16>
    %c0_1 = arith.constant 0 : index
    %c0_2 = arith.constant 0 : index
    %1 = vector.load %arg2[%c0_1, %c0_2] : memref<16x128xbf16, #tpu.memory_space<vmem>>, vector<16x128xbf16>
    %2 = arith.mulf %0, %1 : vector<16x128xbf16>
    %c0_3 = arith.constant 0 : index
    %c0_4 = arith.constant 0 : index
    %3 = vector.load %arg4[%c0_3, %c0_4] : memref<128x128xbf16, #tpu.memory_space<vmem>>, vector<128x128xbf16>
    %cst = arith.constant dense<0.000000e+00> : vector<16x128xf32>
    %4 = tpu.matmul %2, %3, %cst {dimension_numbers = #tpu.dot_dimension_numbers<[1], [0], [0], [1], [0, 0, 1, 1], [], []>} : vector<16x128xbf16>, vector<128x128xbf16>, vector<16x128xf32> -> vector<16x128xf32>
    %c0_5 = arith.constant 0 : index
    %c0_6 = arith.constant 0 : index
    %5 = vector.load %arg3[%c0_5, %c0_6] : memref<16x128xbf16, #tpu.memory_space<vmem>>, vector<16x128xbf16>
    %c0_7 = arith.constant 0 : index
    %c0_8 = arith.constant 0 : index
    %6 = vector.load %arg5[%c0_7, %c0_8] : memref<128x128xbf16, #tpu.memory_space<vmem>>, vector<128x128xbf16>
    %cst_9 = arith.constant dense<0.000000e+00> : vector<16x128xf32>
    %7 = tpu.matmul %5, %6, %cst_9 {dimension_numbers = #tpu.dot_dimension_numbers<[1], [0], [0], [1], [0, 0, 1, 1], [], []>} : vector<16x128xbf16>, vector<128x128xbf16>, vector<16x128xf32> -> vector<16x128xf32>
    %8 = arith.addf %4, %7 : vector<16x128xf32>
    %c0_10 = arith.constant 0 : index
    %c0_11 = arith.constant 0 : index
    %9 = vector.load %arg6[%c0_10, %c0_11] : memref<1x128xf32, #tpu.memory_space<vmem>>, vector<1x128xf32>
    %10 = vector.broadcast %9 : vector<1x128xf32> to vector<16x128xf32>
    %11 = arith.addf %8, %10 : vector<16x128xf32>
    %12 = arith.truncf %11 : vector<16x128xf32> to vector<16x128xbf16>
    %c0_12 = arith.constant 0 : index
    %c0_13 = arith.constant 0 : index
    %13 = vector.load %arg7[%c0_12, %c0_13] : memref<16x128xbf16, #tpu.memory_space<vmem>>, vector<16x128xbf16>
    tpu.vector_store %arg7[%c0_12, %c0_13], %12 {strides = array<i32>} : memref<16x128xbf16, #tpu.memory_space<vmem>>, vector<16x128xbf16>,
    return
  }
  func.func @transform_0(%arg0: i32) -> (i32, i32) {
    %c0_i32 = arith.constant 0 : i32
    %c0_i32_0 = arith.constant 0 : i32
    return %arg0, %c0_i32 : i32, i32
  }
  func.func @transform_1(%arg0: i32) -> (i32, i32) {
    %c0_i32 = arith.constant 0 : i32
    %c0_i32_0 = arith.constant 0 : i32
    return %arg0, %c0_i32 : i32, i32
  }
  func.func @transform_2(%arg0: i32) -> (i32, i32) {
    %c0_i32 = arith.constant 0 : i32
    %c0_i32_0 = arith.constant 0 : i32
    return %arg0, %c0_i32 : i32, i32
  }
  func.func @transform_3(%arg0: i32) -> (i32, i32) {
    %c0_i32 = arith.constant 0 : i32
    %c0_i32_0 = arith.constant 0 : i32
    %c0_i32_1 = arith.constant 0 : i32
    return %c0_i32, %c0_i32_0 : i32, i32
  }
  func.func @transform_4(%arg0: i32) -> (i32, i32) {
    %c0_i32 = arith.constant 0 : i32
    %c0_i32_0 = arith.constant 0 : i32
    %c0_i32_1 = arith.constant 0 : i32
    return %c0_i32, %c0_i32_0 : i32, i32
  }
  func.func @transform_5(%arg0: i32) -> (i32, i32) {
    %c0_i32 = arith.constant 0 : i32
    %c0_i32_0 = arith.constant 0 : i32
    %c0_i32_1 = arith.constant 0 : i32
    return %c0_i32, %c0_i32_0 : i32, i32
  }
  func.func @transform_6(%arg0: i32) -> (i32, i32) {
    %c0_i32 = arith.constant 0 : i32
    %c0_i32_0 = arith.constant 0 : i32
    return %arg0, %c0_i32 : i32, i32
  }
}

module attributes {stable_mosaic.version = 11 : i64} {
  func.func @_linear_resident_kernel(%arg0: i32, %arg1: memref<16x128xbf16, #tpu.memory_space<vmem>>, %arg2: memref<128x384xbf16, #tpu.memory_space<vmem>>, %arg3: memref<1x384xf32, #tpu.memory_space<vmem>>, %arg4: memref<16x384xbf16, #tpu.memory_space<vmem>>) attributes {dimension_semantics = [#tpu.dimension_semantics<parallel>], iteration_bounds = array<i64: 1>, scalar_prefetch = 0 : i64, scratch_operands = 0 : i64, tpu.core_type = #tpu.core_type<tc>, window_params = [{transform_indices = @transform_0, window_bounds = array<i64: 16, 128>}, {pipeline_mode = #tpu.pipeline_mode<synchronous>, transform_indices = @transform_1, window_bounds = array<i64: 128, 384>}, {pipeline_mode = #tpu.pipeline_mode<synchronous>, transform_indices = @transform_2, window_bounds = array<i64: 1, 384>}, {transform_indices = @transform_3, window_bounds = array<i64: 16, 384>}]} {
    %c0 = arith.constant 0 : index
    %c0_0 = arith.constant 0 : index
    %0 = vector.load %arg1[%c0, %c0_0] : memref<16x128xbf16, #tpu.memory_space<vmem>>, vector<16x128xbf16>
    %c0_1 = arith.constant 0 : index
    %c0_2 = arith.constant 0 : index
    %1 = vector.load %arg2[%c0_1, %c0_2] : memref<128x384xbf16, #tpu.memory_space<vmem>>, vector<128x384xbf16>
    %cst = arith.constant dense<0.000000e+00> : vector<16x384xf32>
    %2 = tpu.matmul %0, %1, %cst {dimension_numbers = #tpu.dot_dimension_numbers<[1], [0], [0], [1], [0, 0, 1, 1], [], []>} : vector<16x128xbf16>, vector<128x384xbf16>, vector<16x384xf32> -> vector<16x384xf32>
    %c0_3 = arith.constant 0 : index
    %c0_4 = arith.constant 0 : index
    %3 = vector.load %arg3[%c0_3, %c0_4] : memref<1x384xf32, #tpu.memory_space<vmem>>, vector<1x384xf32>
    %4 = vector.broadcast %3 : vector<1x384xf32> to vector<16x384xf32>
    %5 = arith.addf %2, %4 : vector<16x384xf32>
    %6 = arith.truncf %5 : vector<16x384xf32> to vector<16x384xbf16>
    %c0_5 = arith.constant 0 : index
    %c0_6 = arith.constant 0 : index
    %7 = vector.load %arg4[%c0_5, %c0_6] : memref<16x384xbf16, #tpu.memory_space<vmem>>, vector<16x384xbf16>
    tpu.vector_store %arg4[%c0_5, %c0_6], %6 {strides = array<i32>} : memref<16x384xbf16, #tpu.memory_space<vmem>>, vector<16x384xbf16>,
    return
  }
  func.func @transform_0(%arg0: i32) -> (i32, i32) {
    %c0_i32 = arith.constant 0 : i32
    %c0_i32_0 = arith.constant 0 : i32
    return %arg0, %c0_i32 : i32, i32
  }
  func.func @transform_1(%arg0: i32) -> (i32, i32) {
    %c0_i32 = arith.constant 0 : i32
    %c0_i32_0 = arith.constant 0 : i32
    %c0_i32_1 = arith.constant 0 : i32
    return %c0_i32, %c0_i32_0 : i32, i32
  }
  func.func @transform_2(%arg0: i32) -> (i32, i32) {
    %c0_i32 = arith.constant 0 : i32
    %c0_i32_0 = arith.constant 0 : i32
    %c0_i32_1 = arith.constant 0 : i32
    return %c0_i32, %c0_i32_0 : i32, i32
  }
  func.func @transform_3(%arg0: i32) -> (i32, i32) {
    %c0_i32 = arith.constant 0 : i32
    %c0_i32_0 = arith.constant 0 : i32
    return %arg0, %c0_i32 : i32, i32
  }
}

module attributes {stable_mosaic.version = 11 : i64} {
  func.func @_attention_kernel(%arg0: i32, %arg1: memref<2x8x128xbf16, #tpu.memory_space<vmem>>, %arg2: memref<2x8x128xbf16, #tpu.memory_space<vmem>>, %arg3: memref<2x8x128xbf16, #tpu.memory_space<vmem>>, %arg4: memref<2x8x128xbf16, #tpu.memory_space<vmem>>) attributes {dimension_semantics = [#tpu.dimension_semantics<parallel>], iteration_bounds = array<i64: 1>, scalar_prefetch = 0 : i64, scratch_operands = 0 : i64, tpu.core_type = #tpu.core_type<tc>, window_params = [{transform_indices = @transform_0, window_bounds = array<i64: 2, 8, 128>}, {transform_indices = @transform_1, window_bounds = array<i64: 2, 8, 128>}, {transform_indices = @transform_2, window_bounds = array<i64: 2, 8, 128>}, {transform_indices = @transform_3, window_bounds = array<i64: 2, 8, 128>}]} {
    %c0 = arith.constant 0 : index
    %c0_0 = arith.constant 0 : index
    %c0_1 = arith.constant 0 : index
    %0 = vector.load %arg1[%c0, %c0_0, %c0_1] : memref<2x8x128xbf16, #tpu.memory_space<vmem>>, vector<2x8x32xbf16>
    %c0_2 = arith.constant 0 : index
    %c0_3 = arith.constant 0 : index
    %c0_4 = arith.constant 0 : index
    %1 = vector.load %arg2[%c0_2, %c0_3, %c0_4] : memref<2x8x128xbf16, #tpu.memory_space<vmem>>, vector<2x8x32xbf16>
    "tpu.trace_start"() <{level = 10 : i32, message = "bqd,bkd->bqk"}> : () -> ()
    %cst = arith.constant dense<0.000000e+00> : vector<2x8x8xf32>
    %2 = tpu.matmul %0, %1, %cst {dimension_numbers = #tpu.dot_dimension_numbers<[2], [2], [1], [1], [0, 0, 0, 1, 1, 1], [0], [0]>} : vector<2x8x32xbf16>, vector<2x8x32xbf16>, vector<2x8x8xf32> -> vector<2x8x8xf32>
    "tpu.trace_stop"() : () -> ()
    %cst_5 = arith.constant 0.176776692 : f32
    %3 = vector.broadcast %cst_5 : f32 to vector<2x8x8xf32>
    %4 = arith.mulf %2, %3 : vector<2x8x8xf32>
    %cst_6 = arith.constant dense<0xFF800000> : vector<2x8xf32>
    %5 = vector.multi_reduction <maximumf>, %4, %cst_6 [2] : vector<2x8x8xf32> to vector<2x8xf32>
    %6 = vector.shape_cast %5 : vector<2x8xf32> to vector<2x8x1xf32>
    %7 = vector.broadcast %6 : vector<2x8x1xf32> to vector<2x8x8xf32>
    %8 = arith.subf %4, %7 : vector<2x8x8xf32>
    %9 = math.exp %8 : vector<2x8x8xf32>
    %cst_7 = arith.constant dense<0.000000e+00> : vector<2x8xf32>
    %10 = vector.multi_reduction <add>, %9, %cst_7 [2] : vector<2x8x8xf32> to vector<2x8xf32>
    %11 = vector.shape_cast %10 : vector<2x8xf32> to vector<2x8x1xf32>
    %12 = tpu.reciprocal %11 {approx = true} : vector<2x8x1xf32> -> vector<2x8x1xf32>
    %13 = vector.broadcast %12 : vector<2x8x1xf32> to vector<2x8x8xf32>
    %14 = arith.mulf %9, %13 : vector<2x8x8xf32>
    %15 = arith.truncf %14 : vector<2x8x8xf32> to vector<2x8x8xbf16>
    %c0_8 = arith.constant 0 : index
    %c0_9 = arith.constant 0 : index
    %c0_10 = arith.constant 0 : index
    %16 = vector.load %arg3[%c0_8, %c0_9, %c0_10] : memref<2x8x128xbf16, #tpu.memory_space<vmem>>, vector<2x8x32xbf16>
    "tpu.trace_start"() <{level = 10 : i32, message = "bqk,bkd->bqd"}> : () -> ()
    %cst_11 = arith.constant dense<0.000000e+00> : vector<2x8x32xf32>
    %17 = tpu.matmul %15, %16, %cst_11 {dimension_numbers = #tpu.dot_dimension_numbers<[2], [1], [1], [2], [0, 0, 0, 1, 1, 2], [0], [0]>} : vector<2x8x8xbf16>, vector<2x8x32xbf16>, vector<2x8x32xf32> -> vector<2x8x32xf32>
    "tpu.trace_stop"() : () -> ()
    %18 = math.tanh %17 : vector<2x8x32xf32>
    %19 = arith.truncf %18 : vector<2x8x32xf32> to vector<2x8x32xbf16>
    %c0_12 = arith.constant 0 : index
    %c0_13 = arith.constant 0 : index
    %c0_14 = arith.constant 0 : index
    %20 = vector.load %arg4[%c0_12, %c0_13, %c0_14] : memref<2x8x128xbf16, #tpu.memory_space<vmem>>, vector<2x8x32xbf16>
    tpu.vector_store %arg4[%c0_12, %c0_13, %c0_14], %19 {strides = array<i32>} : memref<2x8x128xbf16, #tpu.memory_space<vmem>>, vector<2x8x32xbf16>,
    %c0_15 = arith.constant 0 : index
    %c0_16 = arith.constant 0 : index
    %c32 = arith.constant 32 : index
    %21 = vector.load %arg1[%c0_15, %c0_16, %c32] : memref<2x8x128xbf16, #tpu.memory_space<vmem>>, vector<2x8x32xbf16>
    %c0_17 = arith.constant 0 : index
    %c0_18 = arith.constant 0 : index
    %c32_19 = arith.constant 32 : index
    %22 = vector.load %arg2[%c0_17, %c0_18, %c32_19] : memref<2x8x128xbf16, #tpu.memory_space<vmem>>, vector<2x8x32xbf16>
    "tpu.trace_start"() <{level = 10 : i32, message = "bqd,bkd->bqk"}> : () -> ()
    %cst_20 = arith.constant dense<0.000000e+00> : vector<2x8x8xf32>
    %23 = tpu.matmul %21, %22, %cst_20 {dimension_numbers = #tpu.dot_dimension_numbers<[2], [2], [1], [1], [0, 0, 0, 1, 1, 1], [0], [0]>} : vector<2x8x32xbf16>, vector<2x8x32xbf16>, vector<2x8x8xf32> -> vector<2x8x8xf32>
    "tpu.trace_stop"() : () -> ()
    %cst_21 = arith.constant 0.176776692 : f32
    %24 = vector.broadcast %cst_21 : f32 to vector<2x8x8xf32>
    %25 = arith.mulf %23, %24 : vector<2x8x8xf32>
    %cst_22 = arith.constant dense<0xFF800000> : vector<2x8xf32>
    %26 = vector.multi_reduction <maximumf>, %25, %cst_22 [2] : vector<2x8x8xf32> to vector<2x8xf32>
    %27 = vector.shape_cast %26 : vector<2x8xf32> to vector<2x8x1xf32>
    %28 = vector.broadcast %27 : vector<2x8x1xf32> to vector<2x8x8xf32>
    %29 = arith.subf %25, %28 : vector<2x8x8xf32>
    %30 = math.exp %29 : vector<2x8x8xf32>
    %cst_23 = arith.constant dense<0.000000e+00> : vector<2x8xf32>
    %31 = vector.multi_reduction <add>, %30, %cst_23 [2] : vector<2x8x8xf32> to vector<2x8xf32>
    %32 = vector.shape_cast %31 : vector<2x8xf32> to vector<2x8x1xf32>
    %33 = tpu.reciprocal %32 {approx = true} : vector<2x8x1xf32> -> vector<2x8x1xf32>
    %34 = vector.broadcast %33 : vector<2x8x1xf32> to vector<2x8x8xf32>
    %35 = arith.mulf %30, %34 : vector<2x8x8xf32>
    %36 = arith.truncf %35 : vector<2x8x8xf32> to vector<2x8x8xbf16>
    %c0_24 = arith.constant 0 : index
    %c0_25 = arith.constant 0 : index
    %c32_26 = arith.constant 32 : index
    %37 = vector.load %arg3[%c0_24, %c0_25, %c32_26] : memref<2x8x128xbf16, #tpu.memory_space<vmem>>, vector<2x8x32xbf16>
    "tpu.trace_start"() <{level = 10 : i32, message = "bqk,bkd->bqd"}> : () -> ()
    %cst_27 = arith.constant dense<0.000000e+00> : vector<2x8x32xf32>
    %38 = tpu.matmul %36, %37, %cst_27 {dimension_numbers = #tpu.dot_dimension_numbers<[2], [1], [1], [2], [0, 0, 0, 1, 1, 2], [0], [0]>} : vector<2x8x8xbf16>, vector<2x8x32xbf16>, vector<2x8x32xf32> -> vector<2x8x32xf32>
    "tpu.trace_stop"() : () -> ()
    %39 = math.tanh %38 : vector<2x8x32xf32>
    %40 = arith.truncf %39 : vector<2x8x32xf32> to vector<2x8x32xbf16>
    %c0_28 = arith.constant 0 : index
    %c0_29 = arith.constant 0 : index
    %c32_30 = arith.constant 32 : index
    %41 = vector.load %arg4[%c0_28, %c0_29, %c32_30] : memref<2x8x128xbf16, #tpu.memory_space<vmem>>, vector<2x8x32xbf16>
    tpu.vector_store %arg4[%c0_28, %c0_29, %c32_30], %40 {strides = array<i32>} : memref<2x8x128xbf16, #tpu.memory_space<vmem>>, vector<2x8x32xbf16>,
    %c0_31 = arith.constant 0 : index
    %c0_32 = arith.constant 0 : index
    %c64 = arith.constant 64 : index
    %42 = vector.load %arg1[%c0_31, %c0_32, %c64] : memref<2x8x128xbf16, #tpu.memory_space<vmem>>, vector<2x8x32xbf16>
    %c0_33 = arith.constant 0 : index
    %c0_34 = arith.constant 0 : index
    %c64_35 = arith.constant 64 : index
    %43 = vector.load %arg2[%c0_33, %c0_34, %c64_35] : memref<2x8x128xbf16, #tpu.memory_space<vmem>>, vector<2x8x32xbf16>
    "tpu.trace_start"() <{level = 10 : i32, message = "bqd,bkd->bqk"}> : () -> ()
    %cst_36 = arith.constant dense<0.000000e+00> : vector<2x8x8xf32>
    %44 = tpu.matmul %42, %43, %cst_36 {dimension_numbers = #tpu.dot_dimension_numbers<[2], [2], [1], [1], [0, 0, 0, 1, 1, 1], [0], [0]>} : vector<2x8x32xbf16>, vector<2x8x32xbf16>, vector<2x8x8xf32> -> vector<2x8x8xf32>
    "tpu.trace_stop"() : () -> ()
    %cst_37 = arith.constant 0.176776692 : f32
    %45 = vector.broadcast %cst_37 : f32 to vector<2x8x8xf32>
    %46 = arith.mulf %44, %45 : vector<2x8x8xf32>
    %cst_38 = arith.constant dense<0xFF800000> : vector<2x8xf32>
    %47 = vector.multi_reduction <maximumf>, %46, %cst_38 [2] : vector<2x8x8xf32> to vector<2x8xf32>
    %48 = vector.shape_cast %47 : vector<2x8xf32> to vector<2x8x1xf32>
    %49 = vector.broadcast %48 : vector<2x8x1xf32> to vector<2x8x8xf32>
    %50 = arith.subf %46, %49 : vector<2x8x8xf32>
    %51 = math.exp %50 : vector<2x8x8xf32>
    %cst_39 = arith.constant dense<0.000000e+00> : vector<2x8xf32>
    %52 = vector.multi_reduction <add>, %51, %cst_39 [2] : vector<2x8x8xf32> to vector<2x8xf32>
    %53 = vector.shape_cast %52 : vector<2x8xf32> to vector<2x8x1xf32>
    %54 = tpu.reciprocal %53 {approx = true} : vector<2x8x1xf32> -> vector<2x8x1xf32>
    %55 = vector.broadcast %54 : vector<2x8x1xf32> to vector<2x8x8xf32>
    %56 = arith.mulf %51, %55 : vector<2x8x8xf32>
    %57 = arith.truncf %56 : vector<2x8x8xf32> to vector<2x8x8xbf16>
    %c0_40 = arith.constant 0 : index
    %c0_41 = arith.constant 0 : index
    %c64_42 = arith.constant 64 : index
    %58 = vector.load %arg3[%c0_40, %c0_41, %c64_42] : memref<2x8x128xbf16, #tpu.memory_space<vmem>>, vector<2x8x32xbf16>
    "tpu.trace_start"() <{level = 10 : i32, message = "bqk,bkd->bqd"}> : () -> ()
    %cst_43 = arith.constant dense<0.000000e+00> : vector<2x8x32xf32>
    %59 = tpu.matmul %57, %58, %cst_43 {dimension_numbers = #tpu.dot_dimension_numbers<[2], [1], [1], [2], [0, 0, 0, 1, 1, 2], [0], [0]>} : vector<2x8x8xbf16>, vector<2x8x32xbf16>, vector<2x8x32xf32> -> vector<2x8x32xf32>
    "tpu.trace_stop"() : () -> ()
    %60 = math.tanh %59 : vector<2x8x32xf32>
    %61 = arith.truncf %60 : vector<2x8x32xf32> to vector<2x8x32xbf16>
    %c0_44 = arith.constant 0 : index
    %c0_45 = arith.constant 0 : index
    %c64_46 = arith.constant 64 : index
    %62 = vector.load %arg4[%c0_44, %c0_45, %c64_46] : memref<2x8x128xbf16, #tpu.memory_space<vmem>>, vector<2x8x32xbf16>
    tpu.vector_store %arg4[%c0_44, %c0_45, %c64_46], %61 {strides = array<i32>} : memref<2x8x128xbf16, #tpu.memory_space<vmem>>, vector<2x8x32xbf16>,
    %c0_47 = arith.constant 0 : index
    %c0_48 = arith.constant 0 : index
    %c96 = arith.constant 96 : index
    %63 = vector.load %arg1[%c0_47, %c0_48, %c96] : memref<2x8x128xbf16, #tpu.memory_space<vmem>>, vector<2x8x32xbf16>
    %c0_49 = arith.constant 0 : index
    %c0_50 = arith.constant 0 : index
    %c96_51 = arith.constant 96 : index
    %64 = vector.load %arg2[%c0_49, %c0_50, %c96_51] : memref<2x8x128xbf16, #tpu.memory_space<vmem>>, vector<2x8x32xbf16>
    "tpu.trace_start"() <{level = 10 : i32, message = "bqd,bkd->bqk"}> : () -> ()
    %cst_52 = arith.constant dense<0.000000e+00> : vector<2x8x8xf32>
    %65 = tpu.matmul %63, %64, %cst_52 {dimension_numbers = #tpu.dot_dimension_numbers<[2], [2], [1], [1], [0, 0, 0, 1, 1, 1], [0], [0]>} : vector<2x8x32xbf16>, vector<2x8x32xbf16>, vector<2x8x8xf32> -> vector<2x8x8xf32>
    "tpu.trace_stop"() : () -> ()
    %cst_53 = arith.constant 0.176776692 : f32
    %66 = vector.broadcast %cst_53 : f32 to vector<2x8x8xf32>
    %67 = arith.mulf %65, %66 : vector<2x8x8xf32>
    %cst_54 = arith.constant dense<0xFF800000> : vector<2x8xf32>
    %68 = vector.multi_reduction <maximumf>, %67, %cst_54 [2] : vector<2x8x8xf32> to vector<2x8xf32>
    %69 = vector.shape_cast %68 : vector<2x8xf32> to vector<2x8x1xf32>
    %70 = vector.broadcast %69 : vector<2x8x1xf32> to vector<2x8x8xf32>
    %71 = arith.subf %67, %70 : vector<2x8x8xf32>
    %72 = math.exp %71 : vector<2x8x8xf32>
    %cst_55 = arith.constant dense<0.000000e+00> : vector<2x8xf32>
    %73 = vector.multi_reduction <add>, %72, %cst_55 [2] : vector<2x8x8xf32> to vector<2x8xf32>
    %74 = vector.shape_cast %73 : vector<2x8xf32> to vector<2x8x1xf32>
    %75 = tpu.reciprocal %74 {approx = true} : vector<2x8x1xf32> -> vector<2x8x1xf32>
    %76 = vector.broadcast %75 : vector<2x8x1xf32> to vector<2x8x8xf32>
    %77 = arith.mulf %72, %76 : vector<2x8x8xf32>
    %78 = arith.truncf %77 : vector<2x8x8xf32> to vector<2x8x8xbf16>
    %c0_56 = arith.constant 0 : index
    %c0_57 = arith.constant 0 : index
    %c96_58 = arith.constant 96 : index
    %79 = vector.load %arg3[%c0_56, %c0_57, %c96_58] : memref<2x8x128xbf16, #tpu.memory_space<vmem>>, vector<2x8x32xbf16>
    "tpu.trace_start"() <{level = 10 : i32, message = "bqk,bkd->bqd"}> : () -> ()
    %cst_59 = arith.constant dense<0.000000e+00> : vector<2x8x32xf32>
    %80 = tpu.matmul %78, %79, %cst_59 {dimension_numbers = #tpu.dot_dimension_numbers<[2], [1], [1], [2], [0, 0, 0, 1, 1, 2], [0], [0]>} : vector<2x8x8xbf16>, vector<2x8x32xbf16>, vector<2x8x32xf32> -> vector<2x8x32xf32>
    "tpu.trace_stop"() : () -> ()
    %81 = math.tanh %80 : vector<2x8x32xf32>
    %82 = arith.truncf %81 : vector<2x8x32xf32> to vector<2x8x32xbf16>
    %c0_60 = arith.constant 0 : index
    %c0_61 = arith.constant 0 : index
    %c96_62 = arith.constant 96 : index
    %83 = vector.load %arg4[%c0_60, %c0_61, %c96_62] : memref<2x8x128xbf16, #tpu.memory_space<vmem>>, vector<2x8x32xbf16>
    tpu.vector_store %arg4[%c0_60, %c0_61, %c96_62], %82 {strides = array<i32>} : memref<2x8x128xbf16, #tpu.memory_space<vmem>>, vector<2x8x32xbf16>,
    return
  }
  func.func @transform_0(%arg0: i32) -> (i32, i32, i32) {
    %c0_i32 = arith.constant 0 : i32
    %c0_i32_0 = arith.constant 0 : i32
    %c0_i32_1 = arith.constant 0 : i32
    return %arg0, %c0_i32, %c0_i32_0 : i32, i32, i32
  }
  func.func @transform_1(%arg0: i32) -> (i32, i32, i32) {
    %c0_i32 = arith.constant 0 : i32
    %c1_i32 = arith.constant 1 : i32
    %c0_i32_0 = arith.constant 0 : i32
    return %arg0, %c0_i32, %c1_i32 : i32, i32, i32
  }
  func.func @transform_2(%arg0: i32) -> (i32, i32, i32) {
    %c0_i32 = arith.constant 0 : i32
    %c2_i32 = arith.constant 2 : i32
    %c0_i32_0 = arith.constant 0 : i32
    return %arg0, %c0_i32, %c2_i32 : i32, i32, i32
  }
  func.func @transform_3(%arg0: i32) -> (i32, i32, i32) {
    %c0_i32 = arith.constant 0 : i32
    %c0_i32_0 = arith.constant 0 : i32
    %c0_i32_1 = arith.constant 0 : i32
    return %arg0, %c0_i32, %c0_i32_0 : i32, i32, i32
  }
}

</mosaic_0001>

<llo_original>
// kernel: _lambda_.12
$region0: #{_lambda_.12}
  #allocation0 [shape = 'u32[]', space=smem, size = 0x4, offset = 0x4, fixed_abs, tag = 'smem constant byte address 0x4 - core index']
  #allocation1 [shape = 'u32[144,128]{1,0:T(1,128)}', space=vmem, size = 0x12000, scoped, tag = 'internal scratch']
  %s0 = inlined_call_operand.vmem [shape: f32[32,128], index: 0, kind: input, shape index: {}]
  %s1 = inlined_call_operand.vmem [shape: f32[1,128], index: 1, kind: input, shape index: {}]
  %s2 = inlined_call_operand.vmem [shape: f32[1,128], index: 2, kind: input, shape index: {}]
  %s3 = inlined_call_operand.vmem [shape: bf16[32,128], index: 3, kind: output, shape index: {}]
  %s4 = sld [smem:[#allocation0]]
  $region22: #{_lambda_.12} parent=0
    _
  %s6 = ssub.s32 1, %s4
  %s7 = scalar_select 0, %s6, %s4
  // Predicated region
  $region2: #{_lambda_.12} parent=0 // pred_check
    _
  $region3: #{_lambda_.12} parent=0 // pred_check_branch
    %9 = sbr.rel (0) target = $region5
  $region4: #{_lambda_.12} parent=0 // pred_region
    _
  $region5: #{_lambda_.12} parent=0 // pred_fallthru
    _
  // Predicated region
  $region6: #{_lambda_.12} parent=0 // pred_check
    _
  $region7: #{_lambda_.12} parent=0 // pred_check_branch
    %11 = sbr.rel (0) target = $region9
  $region8: #{_lambda_.12} parent=0 // pred_region
    _
  $region9: #{_lambda_.12} parent=0 // pred_fallthru
    _
  // Predicated region
  $region10: #{_lambda_.12} parent=0 // pred_check
    _
  $region11: #{_lambda_.12} parent=0 // pred_check_branch
    %13 = sbr.rel (0) target = $region13
  $region12: #{_lambda_.12} parent=0 // pred_region
    _
  $region13: #{_lambda_.12} parent=0 // pred_fallthru
    _
  %v14 = vld [vmem:[%s0] sm:$0xff]
  %v15 = vld [vmem:[%s0 + $0x8] sm:$0xff]
  %v16 = vld [vmem:[%s0 + $0x10] sm:$0xff]
  %v17 = vld [vmem:[%s0 + $0x18] sm:$0xff]
  %18 = vadd.xlane.f32.xlu0 %v14
  %v19 = vpop.xlane.xlu0 %18
  %20 = vadd.xlane.f32.xlu0 %v15
  %v21 = vpop.xlane.xlu0 %20
  %22 = vadd.xlane.f32.xlu0 %v16
  %v23 = vpop.xlane.xlu0 %22
  %24 = vadd.xlane.f32.xlu0 %v17
  %v25 = vpop.xlane.xlu0 %24
  %v26 = vrcp.pop 128.0
  %v27 = vmul.f32 %v19, %v26
  %v28 = vmul.f32 %v21, %v26
  %v29 = vmul.f32 %v23, %v26
  %v30 = vmul.f32 %v25, %v26
  %v31 = vsub.f32 %v14, %v27
  %v32 = vsub.f32 %v15, %v28
  %v33 = vsub.f32 %v16, %v29
  %v34 = vsub.f32 %v17, %v30
  %v35 = vmul.f32 %v31, %v31
  %v36 = vmul.f32 %v32, %v32
  %v37 = vmul.f32 %v33, %v33
  %v38 = vmul.f32 %v34, %v34
  %39 = vadd.xlane.f32.xlu0 %v35
  %v40 = vpop.xlane.xlu0 %39
  %41 = vadd.xlane.f32.xlu0 %v36
  %v42 = vpop.xlane.xlu0 %41
  %43 = vadd.xlane.f32.xlu0 %v37
  %v44 = vpop.xlane.xlu0 %43
  %45 = vadd.xlane.f32.xlu0 %v38
  %v46 = vpop.xlane.xlu0 %45
  %v47 = vmul.f32 %v40, %v26
  %v48 = vmul.f32 %v42, %v26
  %v49 = vmul.f32 %v44, %v26
  %v50 = vmul.f32 %v46, %v26
  %v51 = vadd.f32 %v47, 1e-12
  %v52 = vadd.f32 %v48, 1e-12
  %v53 = vadd.f32 %v49, 1e-12
  %v54 = vadd.f32 %v50, 1e-12
  %v55 = vrsqrt.pop %v51
  %v56 = vrsqrt.pop %v52
  %v57 = vrsqrt.pop %v53
  %v58 = vrsqrt.pop %v54
  %v59 = vmul.f32 %v31, %v55
  %v60 = vmul.f32 %v32, %v56
  %v61 = vmul.f32 %v33, %v57
  %v62 = vmul.f32 %v34, %v58
  %v63 = vld [vmem:[%s1] sm:$0x1]
  %v65 = vlaneseq
  %v66 = vshrl.u32 %v65, 7
  %v67 = vsub.s32 0, %v66
  %v68 = vrot.slane %v63, %v67
  %v70 = vmul.f32 %v59, %v68
  %v71 = vmul.f32 %v60, %v68
  %v72 = vmul.f32 %v61, %v68
  %v73 = vmul.f32 %v62, %v68
  %v74 = vld [vmem:[%s2] sm:$0x1]
  %v76 = vlaneseq
  %v77 = vshrl.u32 %v76, 7
  %v78 = vsub.s32 0, %v77
  %v79 = vrot.slane %v74, %v78
  %v81 = vadd.f32 %v70, %v79
  %v82 = vadd.f32 %v71, %v79
  %v83 = vadd.f32 %v72, %v79
  %v84 = vadd.f32 %v73, %v79
  %v85 = vpack.c.bf16 %v82, %v81
  %v86 = vpack.c.bf16 %v84, %v83
  %v89 = vunpack.c.l.b16 %v85
  %v90 = vunpack.c.h.b16 %v85
  %v91 = vunpack.c.l.b16 %v86
  %v92 = vunpack.c.h.b16 %v86
  %v93 = vpack.c.b16 %v89, %v89
  %v94 = vpack.c.b16 %v90, %v90
  %v95 = vpack.c.b16 %v91, %v91
  %v96 = vpack.c.b16 %v92, %v92
  %101 = vst [vmem:[%s3] sm:$0xf] %v93
  %102 = vst [vmem:[%s3 + $0x4] sm:$0xf] %v94
  %103 = vst [vmem:[%s3 + $0x8] sm:$0xf] %v95
  %104 = vst [vmem:[%s3 + $0xc] sm:$0xf] %v96
  // Predicated region
  $region14: #{_lambda_.12} parent=0 // pred_check
    _
  $region15: #{_lambda_.12} parent=0 // pred_check_branch
    %106 = sbr.rel (0) target = $region17
  $region16: #{_lambda_.12} parent=0 // pred_region
    _
  $region17: #{_lambda_.12} parent=0 // pred_fallthru
    _
  // Predicated region
  $region18: #{_lambda_.12} parent=0 // pred_check
    _
  $region19: #{_lambda_.12} parent=0 // pred_check_branch
    %108 = sbr.rel (0) target = $region21
  $region20: #{_lambda_.12} parent=0 // pred_region
    _
  $region21: #{_lambda_.12} parent=0 // pred_fallthru
    _

// kernel: _lambda_.15
$region0: #{_lambda_.15}
  #allocation0 [shape = 'u32[]', space=smem, size = 0x4, offset = 0x4, fixed_abs, tag = 'smem constant byte address 0x4 - core index']
  #allocation1 [shape = 'u32[144,128]{1,0:T(1,128)}', space=vmem, size = 0x12000, scoped, tag = 'internal scratch']
  %s0 = inlined_call_operand.vmem [shape: bf16[32,128], index: 0, kind: input, shape index: {}]
  %s1 = inlined_call_operand.vmem [shape: bf16[128,256], index: 1, kind: input, shape index: {}]
  %s2 = inlined_call_operand.vmem [shape: f32[1,256], index: 2, kind: input, shape index: {}]
  %s3 = inlined_call_operand.vmem [shape: bf16[32,256], index: 3, kind: output, shape index: {}]
  %s4 = sld [smem:[#allocation0]]
  $region22: #{_lambda_.15} parent=0
    _
  %s6 = ssub.s32 1, %s4
  %s7 = scalar_select 0, %s6, %s4
  // Predicated region
  $region2: #{_lambda_.15} parent=0 // pred_check
    _
  $region3: #{_lambda_.15} parent=0 // pred_check_branch
    %9 = sbr.rel (0) target = $region5
  $region4: #{_lambda_.15} parent=0 // pred_region
    _
  $region5: #{_lambda_.15} parent=0 // pred_fallthru
    _
  // Predicated region
  $region6: #{_lambda_.15} parent=0 // pred_check
    _
  $region7: #{_lambda_.15} parent=0 // pred_check_branch
    %11 = sbr.rel (0) target = $region9
  $region8: #{_lambda_.15} parent=0 // pred_region
    _
  $region9: #{_lambda_.15} parent=0 // pred_fallthru
    _
  // Predicated region
  $region10: #{_lambda_.15} parent=0 // pred_check
    _
  $region11: #{_lambda_.15} parent=0 // pred_check_branch
    %13 = sbr.rel (0) target = $region13
  $region12: #{_lambda_.15} parent=0 // pred_region
    _
  $region13: #{_lambda_.15} parent=0 // pred_fallthru
    _
  %v15 = vld [vmem:[%s0] sm:$0xf]
  %v16 = vld [vmem:[%s0 + $0x4] sm:$0xf]
  %v17 = vld [vmem:[%s0 + $0x8] sm:$0xf]
  %v18 = vld [vmem:[%s0 + $0xc] sm:$0xf]
  %v19 = vld [vmem:[%s1] sm:$0xff]
  %v20 = vld [vmem:[%s1 + $0x8] sm:$0xff]
  %v21 = vld [vmem:[%s1 + $0x10] sm:$0xff]
  %v22 = vld [vmem:[%s1 + $0x18] sm:$0xff]
  %v23 = vld [vmem:[%s1 + $0x20] sm:$0xff]
  %v24 = vld [vmem:[%s1 + $0x28] sm:$0xff]
  %v25 = vld [vmem:[%s1 + $0x30] sm:$0xff]
  %v26 = vld [vmem:[%s1 + $0x38] sm:$0xff]
  %v27 = vld [vmem:[%s1 + $0x40] sm:$0xff]
  %v28 = vld [vmem:[%s1 + $0x48] sm:$0xff]
  %v29 = vld [vmem:[%s1 + $0x50] sm:$0xff]
  %v30 = vld [vmem:[%s1 + $0x58] sm:$0xff]
  %v31 = vld [vmem:[%s1 + $0x60] sm:$0xff]
  %v32 = vld [vmem:[%s1 + $0x68] sm:$0xff]
  %v33 = vld [vmem:[%s1 + $0x70] sm:$0xff]
  %v34 = vld [vmem:[%s1 + $0x78] sm:$0xff]
  %v35 = vld [vmem:[%s2] sm:$0x3]
  %v37 = vlaneseq
  %v38 = vshrl.u32 %v37, 7
  %v39 = vsub.s32 0, %v38
  %v40 = vrot.slane %v35, %v39
  %v41 = vlaneseq
  %v42 = vshrl.u32 %v41, 7
  %v43 = vsub.s32 1, %v42
  %v44 = vrot.slane %v35, %v43
  %v51 = vunpack.c.l.b16 %v15
  %v52 = vunpack.c.l.b16 %v16
  %v53 = vunpack.c.l.b16 %v17
  %v54 = vunpack.c.l.b16 %v18
  %v55 = vpack.c.b16 %v52, %v51
  %v56 = vpack.c.b16 %v54, %v53
  %v75 = vunpack.c.l.b16 %v19
  %v76 = vunpack.c.h.b16 %v19
  %v77 = vunpack.c.l.b16 %v20
  %v78 = vunpack.c.h.b16 %v20
  %v79 = vunpack.c.l.b16 %v21
  %v80 = vunpack.c.h.b16 %v21
  %v81 = vunpack.c.l.b16 %v22
  %v82 = vunpack.c.h.b16 %v22
  %v83 = vunpack.c.l.b16 %v23
  %v84 = vunpack.c.h.b16 %v23
  %v85 = vunpack.c.l.b16 %v24
  %v86 = vunpack.c.h.b16 %v24
  %v87 = vunpack.c.l.b16 %v25
  %v88 = vunpack.c.h.b16 %v25
  %v89 = vunpack.c.l.b16 %v26
  %v90 = vunpack.c.h.b16 %v26
  %v91 = vunpack.c.l.b16 %v27
  %v92 = vunpack.c.h.b16 %v27
  %v93 = vunpack.c.l.b16 %v28
  %v94 = vunpack.c.h.b16 %v28
  %v95 = vunpack.c.l.b16 %v29
  %v96 = vunpack.c.h.b16 %v29
  %v97 = vunpack.c.l.b16 %v30
  %v98 = vunpack.c.h.b16 %v30
  %v99 = vunpack.c.l.b16 %v31
  %v100 = vunpack.c.h.b16 %v31
  %v101 = vunpack.c.l.b16 %v32
  %v102 = vunpack.c.h.b16 %v32
  %v103 = vunpack.c.l.b16 %v33
  %v104 = vunpack.c.h.b16 %v33
  %v105 = vunpack.c.l.b16 %v34
  %v106 = vunpack.c.h.b16 %v34
  %v107 = vpack.c.b16 %v77, %v75
  %v108 = vpack.c.b16 %v78, %v76
  %v109 = vpack.c.b16 %v81, %v79
  %v110 = vpack.c.b16 %v82, %v80
  %v111 = vpack.c.b16 %v85, %v83
  %v112 = vpack.c.b16 %v86, %v84
  %v113 = vpack.c.b16 %v89, %v87
  %v114 = vpack.c.b16 %v90, %v88
  %v115 = vpack.c.b16 %v93, %v91
  %v116 = vpack.c.b16 %v94, %v92
  %v117 = vpack.c.b16 %v97, %v95
  %v118 = vpack.c.b16 %v98, %v96
  %v119 = vpack.c.b16 %v101, %v99
  %v120 = vpack.c.b16 %v102, %v100
  %v121 = vpack.c.b16 %v105, %v103
  %v122 = vpack.c.b16 %v106, %v104
  %139 = vmatprep.subr.bf16.mxu0 %v108
  %140 = vmatpush1.bf16.msra.mxu0 %v107
  %141 = vmatprep.subr.bf16.mxu0 %v110
  %142 = vmatpush1.bf16.msra.mxu0 %v109
  %143 = vmatprep.subr.bf16.mxu0 %v112
  %144 = vmatpush1.bf16.msra.mxu0 %v111
  %145 = vmatprep.subr.bf16.mxu0 %v114
  %146 = vmatpush1.bf16.msra.mxu0 %v113
  %147 = vmatprep.subr.bf16.mxu0 %v116
  %148 = vmatpush1.bf16.msra.mxu0 %v115
  %149 = vmatprep.subr.bf16.mxu0 %v118
  %150 = vmatpush1.bf16.msra.mxu0 %v117
  %151 = vmatprep.subr.bf16.mxu0 %v120
  %152 = vmatpush1.bf16.msra.mxu0 %v119
  %153 = vmatprep.subr.bf16.mxu0 %v122
  %154 = vmatpush1.bf16.msra.mxu0 %v121
  %155 = vmatprep.subr.bf16.mxu0 0
  %156 = vmatpush1.bf16.msra.mxu0 0
  %157 = vmatprep.subr.bf16.mxu0 0
  %158 = vmatpush1.bf16.msra.mxu0 0
  %159 = vmatprep.subr.bf16.mxu0 0
  %160 = vmatpush1.bf16.msra.mxu0 0
  %161 = vmatprep.subr.bf16.mxu0 0
  %162 = vmatpush1.bf16.msra.mxu0 0
  %163 = vmatprep.subr.bf16.mxu0 0
  %164 = vmatpush1.bf16.msra.mxu0 0
  %165 = vmatprep.subr.bf16.mxu0 0
  %166 = vmatpush1.bf16.msra.mxu0 0
  %167 = vmatprep.subr.bf16.mxu0 0
  %168 = vmatpush1.bf16.msra.mxu0 0
  %169 = vmatprep.subr.bf16.mxu0 0
  %170 = vmatpush1.bf16.msra.mxu0 0
  %171 = vmatprep.mubr.bf16.mxu0 0
  %172 = vmatmul.mubr.bf16.gmra.mrb[0].mxu0 %v55
  %v173 = vpop.f32.mrb[0].mxu0
  %v174 = vadd.f32 %v40, %v173
  %v175 = vpop.f32.mrb[0].mxu0
  %v176 = vadd.f32 %v44, %v175
  %v177 = vpop.f32.mrb[0].mxu0
  %v178 = vadd.f32 %v40, %v177
  %v179 = vpop.f32.mrb[0].mxu0
  %v180 = vadd.f32 %v44, %v179
  %181 = vmatprep.mubr.bf16.mxu0 0
  %182 = vmatmul.mubr.bf16.gmra.mrb[0].mxu0 %v56
  %v183 = vpop.f32.mrb[0].mxu0
  %v184 = vadd.f32 %v40, %v183
  %v185 = vpop.f32.mrb[0].mxu0
  %v186 = vadd.f32 %v44, %v185
  %v187 = vpop.f32.mrb[0].mxu0
  %v188 = vadd.f32 %v40, %v187
  %v189 = vpop.f32.mrb[0].mxu0
  %v190 = vadd.f32 %v44, %v189
  %191 = vdwg.mxu0
  %v192 = vmul.f32 %v174, 0.5
  %v193 = vmul.f32 %v176, 0.5
  %v194 = vmul.f32 %v178, 0.5
  %v195 = vmul.f32 %v180, 0.5
  %v196 = vmul.f32 %v184, 0.5
  %v197 = vmul.f32 %v186, 0.5
  %v198 = vmul.f32 %v188, 0.5
  %v199 = vmul.f32 %v190, 0.5
  %v200 = vmul.f32 %v174, 0.70710677
  %v201 = vmul.f32 %v176, 0.70710677
  %v202 = vmul.f32 %v178, 0.70710677
  %v203 = vmul.f32 %v180, 0.70710677
  %v204 = vmul.f32 %v184, 0.70710677
  %v205 = vmul.f32 %v186, 0.70710677
  %v206 = vmul.f32 %v188, 0.70710677
  %v207 = vmul.f32 %v190, 0.70710677
  %v208 = verf.f32.pop %v200
  %v209 = verf.f32.pop %v201
  %v210 = verf.f32.pop %v202
  %v211 = verf.f32.pop %v203
  %v212 = verf.f32.pop %v204
  %v213 = verf.f32.pop %v205
  %v214 = verf.f32.pop %v206
  %v215 = verf.f32.pop %v207
  %v216 = vadd.f32 %v208, 1.0
  %v217 = vadd.f32 %v209, 1.0
  %v218 = vadd.f32 %v210, 1.0
  %v219 = vadd.f32 %v211, 1.0
  %v220 = vadd.f32 %v212, 1.0
  %v221 = vadd.f32 %v213, 1.0
  %v222 = vadd.f32 %v214, 1.0
  %v223 = vadd.f32 %v215, 1.0
  %v224 = vmul.f32 %v192, %v216
  %v225 = vmul.f32 %v193, %v217
  %v226 = vmul.f32 %v194, %v218
  %v227 = vmul.f32 %v195, %v219
  %v228 = vmul.f32 %v196, %v220
  %v229 = vmul.f32 %v197, %v221
  %v230 = vmul.f32 %v198, %v222
  %v231 = vmul.f32 %v199, %v223
  %v232 = vpack.c.bf16 %v226, %v224
  %v233 = vpack.c.bf16 %v227, %v225
  %v234 = vpack.c.bf16 %v230, %v228
  %v235 = vpack.c.bf16 %v231, %v229
  %v240 = vunpack.c.l.b16 %v232
  %v241 = vunpack.c.l.b16 %v233
  %v242 = vunpack.c.h.b16 %v232
  %v243 = vunpack.c.h.b16 %v233
  %v244 = vunpack.c.l.b16 %v234
  %v245 = vunpack.c.l.b16 %v235
  %v246 = vunpack.c.h.b16 %v234
  %v247 = vunpack.c.h.b16 %v235
  %v248 = vpack.c.b16 %v241, %v240
  %v249 = vpack.c.b16 %v243, %v242
  %v250 = vpack.c.b16 %v245, %v244
  %v251 = vpack.c.b16 %v247, %v246
  %256 = vst [vmem:[%s3] sm:$0xff] %v248
  %257 = vst [vmem:[%s3 + $0x8] sm:$0xff] %v249
  %258 = vst [vmem:[%s3 + $0x10] sm:$0xff] %v250
  %259 = vst [vmem:[%s3 + $0x18] sm:$0xff] %v251
  // Predicated region
  $region14: #{_lambda_.15} parent=0 // pred_check
    _
  $region15: #{_lambda_.15} parent=0 // pred_check_branch
    %261 = sbr.rel (0) target = $region17
  $region16: #{_lambda_.15} parent=0 // pred_region
    _
  $region17: #{_lambda_.15} parent=0 // pred_fallthru
    _
  // Predicated region
  $region18: #{_lambda_.15} parent=0 // pred_check
    _
  $region19: #{_lambda_.15} parent=0 // pred_check_branch
    %263 = sbr.rel (0) target = $region21
  $region20: #{_lambda_.15} parent=0 // pred_region
    _
  $region21: #{_lambda_.15} parent=0 // pred_fallthru
    _

// kernel: _lambda_.13
$region0: #{_lambda_.13}
  #allocation0 [shape = 'u32[]', space=smem, size = 0x4, offset = 0x4, fixed_abs, tag = 'smem constant byte address 0x4 - core index']
  #allocation1 [shape = 'u32[144,128]{1,0:T(1,128)}', space=vmem, size = 0x12000, scoped, tag = 'internal scratch']
  %s0 = inlined_call_operand.vmem [shape: bf16[32,128], index: 0, kind: input, shape index: {}]
  %s1 = inlined_call_operand.vmem [shape: bf16[128,384], index: 1, kind: input, shape index: {}]
  %s2 = inlined_call_operand.vmem [shape: f32[1,384], index: 2, kind: input, shape index: {}]
  %s3 = inlined_call_operand.vmem [shape: bf16[32,384], index: 3, kind: output, shape index: {}]
  %s4 = sld [smem:[#allocation0]]
  $region22: #{_lambda_.13} parent=0
    _
  %s6 = ssub.s32 1, %s4
  %s7 = scalar_select 0, %s6, %s4
  // Predicated region
  $region2: #{_lambda_.13} parent=0 // pred_check
    _
  $region3: #{_lambda_.13} parent=0 // pred_check_branch
    %9 = sbr.rel (0) target = $region5
  $region4: #{_lambda_.13} parent=0 // pred_region
    _
  $region5: #{_lambda_.13} parent=0 // pred_fallthru
    _
  // Predicated region
  $region6: #{_lambda_.13} parent=0 // pred_check
    _
  $region7: #{_lambda_.13} parent=0 // pred_check_branch
    %11 = sbr.rel (0) target = $region9
  $region8: #{_lambda_.13} parent=0 // pred_region
    _
  $region9: #{_lambda_.13} parent=0 // pred_fallthru
    _
  // Predicated region
  $region10: #{_lambda_.13} parent=0 // pred_check
    _
  $region11: #{_lambda_.13} parent=0 // pred_check_branch
    %13 = sbr.rel (0) target = $region13
  $region12: #{_lambda_.13} parent=0 // pred_region
    _
  $region13: #{_lambda_.13} parent=0 // pred_fallthru
    _
  %v15 = vld [vmem:[%s0] sm:$0xf]
  %v16 = vld [vmem:[%s0 + $0x4] sm:$0xf]
  %v17 = vld [vmem:[%s0 + $0x8] sm:$0xf]
  %v18 = vld [vmem:[%s0 + $0xc] sm:$0xf]
  %v19 = vld [vmem:[%s1] sm:$0xff]
  %v20 = vld [vmem:[%s1 + $0x8] sm:$0xf]
  %v21 = vld [vmem:[%s1 + $0xc] sm:$0xff]
  %v22 = vld [vmem:[%s1 + $0x14] sm:$0xf]
  %v23 = vld [vmem:[%s1 + $0x18] sm:$0xff]
  %v24 = vld [vmem:[%s1 + $0x20] sm:$0xf]
  %v25 = vld [vmem:[%s1 + $0x24] sm:$0xff]
  %v26 = vld [vmem:[%s1 + $0x2c] sm:$0xf]
  %v27 = vld [vmem:[%s1 + $0x30] sm:$0xff]
  %v28 = vld [vmem:[%s1 + $0x38] sm:$0xf]
  %v29 = vld [vmem:[%s1 + $0x3c] sm:$0xff]
  %v30 = vld [vmem:[%s1 + $0x44] sm:$0xf]
  %v31 = vld [vmem:[%s1 + $0x48] sm:$0xff]
  %v32 = vld [vmem:[%s1 + $0x50] sm:$0xf]
  %v33 = vld [vmem:[%s1 + $0x54] sm:$0xff]
  %v34 = vld [vmem:[%s1 + $0x5c] sm:$0xf]
  %v35 = vld [vmem:[%s1 + $0x60] sm:$0xff]
  %v36 = vld [vmem:[%s1 + $0x68] sm:$0xf]
  %v37 = vld [vmem:[%s1 + $0x6c] sm:$0xff]
  %v38 = vld [vmem:[%s1 + $0x74] sm:$0xf]
  %v39 = vld [vmem:[%s1 + $0x78] sm:$0xff]
  %v40 = vld [vmem:[%s1 + $0x80] sm:$0xf]
  %v41 = vld [vmem:[%s1 + $0x84] sm:$0xff]
  %v42 = vld [vmem:[%s1 + $0x8c] sm:$0xf]
  %v43 = vld [vmem:[%s1 + $0x90] sm:$0xff]
  %v44 = vld [vmem:[%s1 + $0x98] sm:$0xf]
  %v45 = vld [vmem:[%s1 + $0x9c] sm:$0xff]
  %v46 = vld [vmem:[%s1 + $0xa4] sm:$0xf]
  %v47 = vld [vmem:[%s1 + $0xa8] sm:$0xff]
  %v48 = vld [vmem:[%s1 + $0xb0] sm:$0xf]
  %v49 = vld [vmem:[%s1 + $0xb4] sm:$0xff]
  %v50 = vld [vmem:[%s1 + $0xbc] sm:$0xf]
  %v51 = vld [vmem:[%s2] sm:$0x7]
  %v53 = vlaneseq
  %v54 = vshrl.u32 %v53, 7
  %v55 = vsub.s32 0, %v54
  %v56 = vrot.slane %v51, %v55
  %v57 = vlaneseq
  %v58 = vshrl.u32 %v57, 7
  %v59 = vsub.s32 1, %v58
  %v60 = vrot.slane %v51, %v59
  %v61 = vlaneseq
  %v62 = vshrl.u32 %v61, 7
  %v63 = vsub.s32 2, %v62
  %v64 = vrot.slane %v51, %v63
  %v72 = vunpack.c.l.b16 %v15
  %v73 = vunpack.c.l.b16 %v16
  %v74 = vunpack.c.l.b16 %v17
  %v75 = vunpack.c.l.b16 %v18
  %v76 = vpack.c.b16 %v73, %v72
  %v77 = vpack.c.b16 %v75, %v74
  %v112 = vunpack.c.l.b16 %v19
  %v113 = vunpack.c.h.b16 %v19
  %v114 = vunpack.c.l.b16 %v20
  %v115 = vunpack.c.l.b16 %v21
  %v116 = vunpack.c.h.b16 %v21
  %v117 = vunpack.c.l.b16 %v22
  %v118 = vunpack.c.l.b16 %v23
  %v119 = vunpack.c.h.b16 %v23
  %v120 = vunpack.c.l.b16 %v24
  %v121 = vunpack.c.l.b16 %v25
  %v122 = vunpack.c.h.b16 %v25
  %v123 = vunpack.c.l.b16 %v26
  %v124 = vunpack.c.l.b16 %v27
  %v125 = vunpack.c.h.b16 %v27
  %v126 = vunpack.c.l.b16 %v28
  %v127 = vunpack.c.l.b16 %v29
  %v128 = vunpack.c.h.b16 %v29
  %v129 = vunpack.c.l.b16 %v30
  %v130 = vunpack.c.l.b16 %v31
  %v131 = vunpack.c.h.b16 %v31
  %v132 = vunpack.c.l.b16 %v32
  %v133 = vunpack.c.l.b16 %v33
  %v134 = vunpack.c.h.b16 %v33
  %v135 = vunpack.c.l.b16 %v34
  %v136 = vunpack.c.l.b16 %v35
  %v137 = vunpack.c.h.b16 %v35
  %v138 = vunpack.c.l.b16 %v36
  %v139 = vunpack.c.l.b16 %v37
  %v140 = vunpack.c.h.b16 %v37
  %v141 = vunpack.c.l.b16 %v38
  %v142 = vunpack.c.l.b16 %v39
  %v143 = vunpack.c.h.b16 %v39
  %v144 = vunpack.c.l.b16 %v40
  %v145 = vunpack.c.l.b16 %v41
  %v146 = vunpack.c.h.b16 %v41
  %v147 = vunpack.c.l.b16 %v42
  %v148 = vunpack.c.l.b16 %v43
  %v149 = vunpack.c.h.b16 %v43
  %v150 = vunpack.c.l.b16 %v44
  %v151 = vunpack.c.l.b16 %v45
  %v152 = vunpack.c.h.b16 %v45
  %v153 = vunpack.c.l.b16 %v46
  %v154 = vunpack.c.l.b16 %v47
  %v155 = vunpack.c.h.b16 %v47
  %v156 = vunpack.c.l.b16 %v48
  %v157 = vunpack.c.l.b16 %v49
  %v158 = vunpack.c.h.b16 %v49
  %v159 = vunpack.c.l.b16 %v50
  %v160 = vpack.c.b16 %v115, %v112
  %v161 = vpack.c.b16 %v116, %v113
  %v162 = vpack.c.b16 %v117, %v114
  %v163 = vpack.c.b16 %v121, %v118
  %v164 = vpack.c.b16 %v122, %v119
  %v165 = vpack.c.b16 %v123, %v120
  %v166 = vpack.c.b16 %v127, %v124
  %v167 = vpack.c.b16 %v128, %v125
  %v168 = vpack.c.b16 %v129, %v126
  %v169 = vpack.c.b16 %v133, %v130
  %v170 = vpack.c.b16 %v134, %v131
  %v171 = vpack.c.b16 %v135, %v132
  %v172 = vpack.c.b16 %v139, %v136
  %v173 = vpack.c.b16 %v140, %v137
  %v174 = vpack.c.b16 %v141, %v138
  %v175 = vpack.c.b16 %v145, %v142
  %v176 = vpack.c.b16 %v146, %v143
  %v177 = vpack.c.b16 %v147, %v144
  %v178 = vpack.c.b16 %v151, %v148
  %v179 = vpack.c.b16 %v152, %v149
  %v180 = vpack.c.b16 %v153, %v150
  %v181 = vpack.c.b16 %v157, %v154
  %v182 = vpack.c.b16 %v158, %v155
  %v183 = vpack.c.b16 %v159, %v156
  %208 = vmatprep.subr.bf16.mxu0 %v161
  %209 = vmatpush1.bf16.msra.mxu0 %v160
  %210 = vmatprep.subr.bf16.mxu0 %v164
  %211 = vmatpush1.bf16.msra.mxu0 %v163
  %212 = vmatprep.subr.bf16.mxu0 %v167
  %213 = vmatpush1.bf16.msra.mxu0 %v166
  %214 = vmatprep.subr.bf16.mxu0 %v170
  %215 = vmatpush1.bf16.msra.mxu0 %v169
  %216 = vmatprep.subr.bf16.mxu0 %v173
  %217 = vmatpush1.bf16.msra.mxu0 %v172
  %218 = vmatprep.subr.bf16.mxu0 %v176
  %219 = vmatpush1.bf16.msra.mxu0 %v175
  %220 = vmatprep.subr.bf16.mxu0 %v179
  %221 = vmatpush1.bf16.msra.mxu0 %v178
  %222 = vmatprep.subr.bf16.mxu0 %v182
  %223 = vmatpush1.bf16.msra.mxu0 %v181
  %224 = vmatprep.subr.bf16.mxu0 0
  %225 = vmatpush1.bf16.msra.mxu0 0
  %226 = vmatprep.subr.bf16.mxu0 0
  %227 = vmatpush1.bf16.msra.mxu0 0
  %228 = vmatprep.subr.bf16.mxu0 0
  %229 = vmatpush1.bf16.msra.mxu0 0
  %230 = vmatprep.subr.bf16.mxu0 0
  %231 = vmatpush1.bf16.msra.mxu0 0
  %232 = vmatprep.subr.bf16.mxu0 0
  %233 = vmatpush1.bf16.msra.mxu0 0
  %234 = vmatprep.subr.bf16.mxu0 0
  %235 = vmatpush1.bf16.msra.mxu0 0
  %236 = vmatprep.subr.bf16.mxu0 0
  %237 = vmatpush1.bf16.msra.mxu0 0
  %238 = vmatprep.subr.bf16.mxu0 0
  %239 = vmatpush1.bf16.msra.mxu0 0
  %240 = vmatprep.mubr.bf16.mxu0 0
  %241 = vmatmul.mubr.bf16.gmra.mrb[0].mxu0 %v76
  %v242 = vpop.f32.mrb[0].mxu0
  %v243 = vadd.f32 %v56, %v242
  %v244 = vpop.f32.mrb[0].mxu0
  %v245 = vadd.f32 %v60, %v244
  %v246 = vpop.f32.mrb[0].mxu0
  %v247 = vadd.f32 %v56, %v246
  %v248 = vpop.f32.mrb[0].mxu0
  %v249 = vadd.f32 %v60, %v248
  %250 = vmatprep.mubr.bf16.mxu0 0
  %251 = vmatmul.mubr.bf16.gmra.mrb[0].mxu0 %v77
  %v252 = vpop.f32.mrb[0].mxu0
  %v253 = vadd.f32 %v56, %v252
  %v254 = vpop.f32.mrb[0].mxu0
  %v255 = vadd.f32 %v60, %v254
  %v256 = vpop.f32.mrb[0].mxu0
  %v257 = vadd.f32 %v56, %v256
  %v258 = vpop.f32.mrb[0].mxu0
  %v259 = vadd.f32 %v60, %v258
  %260 = vdwg.mxu0
  %261 = vmatprep.subr.bf16.mxu0 0
  %262 = vmatpush1.bf16.msra.mxu0 %v162
  %263 = vmatprep.subr.bf16.mxu0 0
  %264 = vmatpush1.bf16.msra.mxu0 %v165
  %265 = vmatprep.subr.bf16.mxu0 0
  %266 = vmatpush1.bf16.msra.mxu0 %v168
  %267 = vmatprep.subr.bf16.mxu0 0
  %268 = vmatpush1.bf16.msra.mxu0 %v171
  %269 = vmatprep.subr.bf16.mxu0 0
  %270 = vmatpush1.bf16.msra.mxu0 %v174
  %271 = vmatprep.subr.bf16.mxu0 0
  %272 = vmatpush1.bf16.msra.mxu0 %v177
  %273 = vmatprep.subr.bf16.mxu0 0
  %274 = vmatpush1.bf16.msra.mxu0 %v180
  %275 = vmatprep.subr.bf16.mxu0 0
  %276 = vmatpush1.bf16.msra.mxu0 %v183
  %277 = vmatprep.subr.bf16.mxu0 0
  %278 = vmatpush1.bf16.msra.mxu0 0
  %279 = vmatprep.subr.bf16.mxu0 0
  %280 = vmatpush1.bf16.msra.mxu0 0
  %281 = vmatprep.subr.bf16.mxu0 0
  %282 = vmatpush1.bf16.msra.mxu0 0
  %283 = vmatprep.subr.bf16.mxu0 0
  %284 = vmatpush1.bf16.msra.mxu0 0
  %285 = vmatprep.subr.bf16.mxu0 0
  %286 = vmatpush1.bf16.msra.mxu0 0
  %287 = vmatprep.subr.bf16.mxu0 0
  %288 = vmatpush1.bf16.msra.mxu0 0
  %289 = vmatprep.subr.bf16.mxu0 0
  %290 = vmatpush1.bf16.msra.mxu0 0
  %291 = vmatprep.subr.bf16.mxu0 0
  %292 = vmatpush1.bf16.msra.mxu0 0
  %293 = vmatprep.mubr.bf16.mxu0 0
  %294 = vmatmul.mubr.bf16.gmra.mrb[0].mxu0 %v76
  %v295 = vpop.f32.mrb[0].mxu0
  %v296 = vadd.f32 %v64, %v295
  %v297 = vpop.f32.mrb[0].mxu0
  %v298 = vpop.f32.mrb[0].mxu0
  %v299 = vadd.f32 %v64, %v298
  %v300 = vpop.f32.mrb[0].mxu0
  %301 = vmatprep.mubr.bf16.mxu0 0
  %302 = vmatmul.mubr.bf16.gmra.mrb[0].mxu0 %v77
  %v303 = vpop.f32.mrb[0].mxu0
  %v304 = vadd.f32 %v64, %v303
  %v305 = vpop.f32.mrb[0].mxu0
  %v306 = vpop.f32.mrb[0].mxu0
  %v307 = vadd.f32 %v64, %v306
  %v308 = vpop.f32.mrb[0].mxu0
  %309 = vdwg.mxu0
  %v310 = vpack.c.bf16 %v247, %v243
  %v311 = vpack.c.bf16 %v249, %v245
  %v312 = vpack.c.bf16 %v299, %v296
  %v313 = vpack.c.bf16 %v257, %v253
  %v314 = vpack.c.bf16 %v259, %v255
  %v315 = vpack.c.bf16 %v307, %v304
  %v322 = vunpack.c.l.b16 %v310
  %v323 = vunpack.c.l.b16 %v311
  %v324 = vunpack.c.l.b16 %v312
  %v325 = vunpack.c.h.b16 %v310
  %v326 = vunpack.c.h.b16 %v311
  %v327 = vunpack.c.h.b16 %v312
  %v328 = vunpack.c.l.b16 %v313
  %v329 = vunpack.c.l.b16 %v314
  %v330 = vunpack.c.l.b16 %v315
  %v331 = vunpack.c.h.b16 %v313
  %v332 = vunpack.c.h.b16 %v314
  %v333 = vunpack.c.h.b16 %v315
  %v334 = vpack.c.b16 %v323, %v322
  %v335 = vpack.c.b16 %v324, %v324
  %v336 = vpack.c.b16 %v326, %v325
  %v337 = vpack.c.b16 %v327, %v327
  %v338 = vpack.c.b16 %v329, %v328
  %v339 = vpack.c.b16 %v330, %v330
  %v340 = vpack.c.b16 %v332, %v331
  %v341 = vpack.c.b16 %v333, %v333
  %350 = vst [vmem:[%s3] sm:$0xff] %v334
  %351 = vst [vmem:[%s3 + $0x8] sm:$0xf] %v335
  %352 = vst [vmem:[%s3 + $0xc] sm:$0xff] %v336
  %353 = vst [vmem:[%s3 + $0x14] sm:$0xf] %v337
  %354 = vst [vmem:[%s3 + $0x18] sm:$0xff] %v338
  %355 = vst [vmem:[%s3 + $0x20] sm:$0xf] %v339
  %356 = vst [vmem:[%s3 + $0x24] sm:$0xff] %v340
  %357 = vst [vmem:[%s3 + $0x2c] sm:$0xf] %v341
  // Predicated region
  $region14: #{_lambda_.13} parent=0 // pred_check
    _
  $region15: #{_lambda_.13} parent=0 // pred_check_branch
    %359 = sbr.rel (0) target = $region17
  $region16: #{_lambda_.13} parent=0 // pred_region
    _
  $region17: #{_lambda_.13} parent=0 // pred_fallthru
    _
  // Predicated region
  $region18: #{_lambda_.13} parent=0 // pred_check
    _
  $region19: #{_lambda_.13} parent=0 // pred_check_branch
    %361 = sbr.rel (0) target = $region21
  $region20: #{_lambda_.13} parent=0 // pred_region
    _
  $region21: #{_lambda_.13} parent=0 // pred_fallthru
    _

// kernel: _lambda_.16
$region0: #{_lambda_.16}
  #allocation0 [shape = 'u32[]', space=smem, size = 0x4, offset = 0x4, fixed_abs, tag = 'smem constant byte address 0x4 - core index']
  #allocation1 [shape = 'u32[144,128]{1,0:T(1,128)}', space=vmem, size = 0x12000, scoped, tag = 'internal scratch']
  %s0 = inlined_call_operand.vmem [shape: bf16[32,256], index: 0, kind: input, shape index: {}]
  %s1 = inlined_call_operand.vmem [shape: bf16[256,128], index: 1, kind: input, shape index: {}]
  %s2 = inlined_call_operand.vmem [shape: f32[1,128], index: 2, kind: input, shape index: {}]
  %s3 = inlined_call_operand.vmem [shape: bf16[32,128], index: 3, kind: input, shape index: {}]
  %s4 = inlined_call_operand.vmem [shape: f32[1,128], index: 4, kind: input, shape index: {}]
  %s5 = inlined_call_operand.vmem [shape: f32[1,128], index: 5, kind: input, shape index: {}]
  %s6 = inlined_call_operand.vmem [shape: bf16[32,128], index: 6, kind: output, shape index: {}]
  %s7 = sld [smem:[#allocation0]]
  $region34: #{_lambda_.16} parent=0
    _
  %s9 = ssub.s32 1, %s7
  %s10 = scalar_select 0, %s9, %s7
  // Predicated region
  $region2: #{_lambda_.16} parent=0 // pred_check
    _
  $region3: #{_lambda_.16} parent=0 // pred_check_branch
    %12 = sbr.rel (0) target = $region5
  $region4: #{_lambda_.16} parent=0 // pred_region
    _
  $region5: #{_lambda_.16} parent=0 // pred_fallthru
    _
  // Predicated region
  $region6: #{_lambda_.16} parent=0 // pred_check
    _
  $region7: #{_lambda_.16} parent=0 // pred_check_branch
    %14 = sbr.rel (0) target = $region9
  $region8: #{_lambda_.16} parent=0 // pred_region
    _
  $region9: #{_lambda_.16} parent=0 // pred_fallthru
    _
  // Predicated region
  $region10: #{_lambda_.16} parent=0 // pred_check
    _
  $region11: #{_lambda_.16} parent=0 // pred_check_branch
    %16 = sbr.rel (0) target = $region13
  $region12: #{_lambda_.16} parent=0 // pred_region
    _
  $region13: #{_lambda_.16} parent=0 // pred_fallthru
    _
  // Predicated region
  $region14: #{_lambda_.16} parent=0 // pred_check
    _
  $region15: #{_lambda_.16} parent=0 // pred_check_branch
    %18 = sbr.rel (0) target = $region17
  $region16: #{_lambda_.16} parent=0 // pred_region
    _
  $region17: #{_lambda_.16} parent=0 // pred_fallthru
    _
  // Predicated region
  $region18: #{_lambda_.16} parent=0 // pred_check
    _
  $region19: #{_lambda_.16} parent=0 // pred_check_branch
    %20 = sbr.rel (0) target = $region21
  $region20: #{_lambda_.16} parent=0 // pred_region
    _
  $region21: #{_lambda_.16} parent=0 // pred_fallthru
    _
  // Predicated region
  $region22: #{_lambda_.16} parent=0 // pred_check
    _
  $region23: #{_lambda_.16} parent=0 // pred_check_branch
    %22 = sbr.rel (0) target = $region25
  $region24: #{_lambda_.16} parent=0 // pred_region
    _
  $region25: #{_lambda_.16} parent=0 // pred_fallthru
    _
  %v24 = vld [vmem:[%s0] sm:$0xff]
  %v25 = vld [vmem:[%s0 + $0x8] sm:$0xff]
  %v26 = vld [vmem:[%s0 + $0x10] sm:$0xff]
  %v27 = vld [vmem:[%s0 + $0x18] sm:$0xff]
  %v28 = vld [vmem:[%s1] sm:$0xf]
  %v29 = vld [vmem:[%s1 + $0x4] sm:$0xf]
  %v30 = vld [vmem:[%s1 + $0x8] sm:$0xf]
  %v31 = vld [vmem:[%s1 + $0xc] sm:$0xf]
  %v32 = vld [vmem:[%s1 + $0x10] sm:$0xf]
  %v33 = vld [vmem:[%s1 + $0x14] sm:$0xf]
  %v34 = vld [vmem:[%s1 + $0x18] sm:$0xf]
  %v35 = vld [vmem:[%s1 + $0x1c] sm:$0xf]
  %v36 = vld [vmem:[%s1 + $0x20] sm:$0xf]
  %v37 = vld [vmem:[%s1 + $0x24] sm:$0xf]
  %v38 = vld [vmem:[%s1 + $0x28] sm:$0xf]
  %v39 = vld [vmem:[%s1 + $0x2c] sm:$0xf]
  %v40 = vld [vmem:[%s1 + $0x30] sm:$0xf]
  %v41 = vld [vmem:[%s1 + $0x34] sm:$0xf]
  %v42 = vld [vmem:[%s1 + $0x38] sm:$0xf]
  %v43 = vld [vmem:[%s1 + $0x3c] sm:$0xf]
  %v44 = vld [vmem:[%s1 + $0x40] sm:$0xf]
  %v45 = vld [vmem:[%s1 + $0x44] sm:$0xf]
  %v46 = vld [vmem:[%s1 + $0x48] sm:$0xf]
  %v47 = vld [vmem:[%s1 + $0x4c] sm:$0xf]
  %v48 = vld [vmem:[%s1 + $0x50] sm:$0xf]
  %v49 = vld [vmem:[%s1 + $0x54] sm:$0xf]
  %v50 = vld [vmem:[%s1 + $0x58] sm:$0xf]
  %v51 = vld [vmem:[%s1 + $0x5c] sm:$0xf]
  %v52 = vld [vmem:[%s1 + $0x60] sm:$0xf]
  %v53 = vld [vmem:[%s1 + $0x64] sm:$0xf]
  %v54 = vld [vmem:[%s1 + $0x68] sm:$0xf]
  %v55 = vld [vmem:[%s1 + $0x6c] sm:$0xf]
  %v56 = vld [vmem:[%s1 + $0x70] sm:$0xf]
  %v57 = vld [vmem:[%s1 + $0x74] sm:$0xf]
  %v58 = vld [vmem:[%s1 + $0x78] sm:$0xf]
  %v59 = vld [vmem:[%s1 + $0x7c] sm:$0xf]
  %v60 = vld [vmem:[%s2] sm:$0x1]
  %v62 = vlaneseq
  %v63 = vshrl.u32 %v62, 7
  %v64 = vsub.s32 0, %v63
  %v65 = vrot.slane %v60, %v64
  %v71 = vunpack.c.l.b16 %v24
  %v72 = vunpack.c.h.b16 %v24
  %v73 = vunpack.c.l.b16 %v25
  %v74 = vunpack.c.h.b16 %v25
  %v75 = vunpack.c.l.b16 %v26
  %v76 = vunpack.c.h.b16 %v26
  %v77 = vunpack.c.l.b16 %v27
  %v78 = vunpack.c.h.b16 %v27
  %v79 = vpack.c.b16 %v73, %v71
  %v80 = vpack.c.b16 %v74, %v72
  %v81 = vpack.c.b16 %v77, %v75
  %v82 = vpack.c.b16 %v78, %v76
  %v119 = vunpack.c.l.b16 %v28
  %v120 = vunpack.c.l.b16 %v29
  %v121 = vunpack.c.l.b16 %v30
  %v122 = vunpack.c.l.b16 %v31
  %v123 = vunpack.c.l.b16 %v32
  %v124 = vunpack.c.l.b16 %v33
  %v125 = vunpack.c.l.b16 %v34
  %v126 = vunpack.c.l.b16 %v35
  %v127 = vunpack.c.l.b16 %v36
  %v128 = vunpack.c.l.b16 %v37
  %v129 = vunpack.c.l.b16 %v38
  %v130 = vunpack.c.l.b16 %v39
  %v131 = vunpack.c.l.b16 %v40
  %v132 = vunpack.c.l.b16 %v41
  %v133 = vunpack.c.l.b16 %v42
  %v134 = vunpack.c.l.b16 %v43
  %v135 = vunpack.c.l.b16 %v44
  %v136 = vunpack.c.l.b16 %v45
  %v137 = vunpack.c.l.b16 %v46
  %v138 = vunpack.c.l.b16 %v47
  %v139 = vunpack.c.l.b16 %v48
  %v140 = vunpack.c.l.b16 %v49
  %v141 = vunpack.c.l.b16 %v50
  %v142 = vunpack.c.l.b16 %v51
  %v143 = vunpack.c.l.b16 %v52
  %v144 = vunpack.c.l.b16 %v53
  %v145 = vunpack.c.l.b16 %v54
  %v146 = vunpack.c.l.b16 %v55
  %v147 = vunpack.c.l.b16 %v56
  %v148 = vunpack.c.l.b16 %v57
  %v149 = vunpack.c.l.b16 %v58
  %v150 = vunpack.c.l.b16 %v59
  %v151 = vpack.c.b16 %v120, %v119
  %v152 = vpack.c.b16 %v122, %v121
  %v153 = vpack.c.b16 %v124, %v123
  %v154 = vpack.c.b16 %v126, %v125
  %v155 = vpack.c.b16 %v128, %v127
  %v156 = vpack.c.b16 %v130, %v129
  %v157 = vpack.c.b16 %v132, %v131
  %v158 = vpack.c.b16 %v134, %v133
  %v159 = vpack.c.b16 %v136, %v135
  %v160 = vpack.c.b16 %v138, %v137
  %v161 = vpack.c.b16 %v140, %v139
  %v162 = vpack.c.b16 %v142, %v141
  %v163 = vpack.c.b16 %v144, %v143
  %v164 = vpack.c.b16 %v146, %v145
  %v165 = vpack.c.b16 %v148, %v147
  %v166 = vpack.c.b16 %v150, %v149
  %183 = vmatprep.subr.bf16.mxu0 0
  %184 = vmatpush1.bf16.msra.mxu0 %v151
  %185 = vmatprep.subr.bf16.mxu0 0
  %186 = vmatpush1.bf16.msra.mxu0 %v152
  %187 = vmatprep.subr.bf16.mxu0 0
  %188 = vmatpush1.bf16.msra.mxu0 %v153
  %189 = vmatprep.subr.bf16.mxu0 0
  %190 = vmatpush1.bf16.msra.mxu0 %v154
  %191 = vmatprep.subr.bf16.mxu0 0
  %192 = vmatpush1.bf16.msra.mxu0 %v155
  %193 = vmatprep.subr.bf16.mxu0 0
  %194 = vmatpush1.bf16.msra.mxu0 %v156
  %195 = vmatprep.subr.bf16.mxu0 0
  %196 = vmatpush1.bf16.msra.mxu0 %v157
  %197 = vmatprep.subr.bf16.mxu0 0
  %198 = vmatpush1.bf16.msra.mxu0 %v158
  %199 = vmatprep.subr.bf16.mxu0 0
  %200 = vmatpush1.bf16.msra.mxu0 %v159
  %201 = vmatprep.subr.bf16.mxu0 0
  %202 = vmatpush1.bf16.msra.mxu0 %v160
  %203 = vmatprep.subr.bf16.mxu0 0
  %204 = vmatpush1.bf16.msra.mxu0 %v161
  %205 = vmatprep.subr.bf16.mxu0 0
  %206 = vmatpush1.bf16.msra.mxu0 %v162
  %207 = vmatprep.subr.bf16.mxu0 0
  %208 = vmatpush1.bf16.msra.mxu0 %v163
  %209 = vmatprep.subr.bf16.mxu0 0
  %210 = vmatpush1.bf16.msra.mxu0 %v164
  %211 = vmatprep.subr.bf16.mxu0 0
  %212 = vmatpush1.bf16.msra.mxu0 %v165
  %213 = vmatprep.subr.bf16.mxu0 0
  %214 = vmatpush1.bf16.msra.mxu0 %v166
  %215 = vmatprep.mubr.bf16.mxu0 %v80
  %216 = vmatmul.mubr.bf16.gmra.mrb[0].mxu0 %v79
  %v217 = vpop.f32.mrb[0].mxu0
  %v218 = vadd.f32 %v65, %v217
  %v219 = vpop.f32.mrb[0].mxu0
  %v220 = vpop.f32.mrb[0].mxu0
  %v221 = vadd.f32 %v65, %v220
  %v222 = vpop.f32.mrb[0].mxu0
  %223 = vmatprep.mubr.bf16.mxu0 %v82
  %224 = vmatmul.mubr.bf16.gmra.mrb[0].mxu0 %v81
  %v225 = vpop.f32.mrb[0].mxu0
  %v226 = vadd.f32 %v65, %v225
  %v227 = vpop.f32.mrb[0].mxu0
  %v228 = vpop.f32.mrb[0].mxu0
  %v229 = vadd.f32 %v65, %v228
  %v230 = vpop.f32.mrb[0].mxu0
  %231 = vdwg.mxu0
  %v232 = vld [vmem:[%s3] sm:$0xf]
  %v233 = vld [vmem:[%s3 + $0x4] sm:$0xf]
  %v234 = vld [vmem:[%s3 + $0x8] sm:$0xf]
  %v235 = vld [vmem:[%s3 + $0xc] sm:$0xf]
  %v236 = vunpack.c.l.bf16 %v232
  %v237 = vunpack.c.l.bf16 %v233
  %v238 = vunpack.c.l.bf16 %v234
  %v239 = vunpack.c.l.bf16 %v235
  %v240 = vadd.f32 %v218, %v236
  %v241 = vadd.f32 %v221, %v237
  %v242 = vadd.f32 %v226, %v238
  %v243 = vadd.f32 %v229, %v239
  %244 = vadd.xlane.f32.xlu0 %v240
  %v245 = vpop.xlane.xlu0 %244
  %246 = vadd.xlane.f32.xlu0 %v241
  %v247 = vpop.xlane.xlu0 %246
  %248 = vadd.xlane.f32.xlu0 %v242
  %v249 = vpop.xlane.xlu0 %248
  %250 = vadd.xlane.f32.xlu0 %v243
  %v251 = vpop.xlane.xlu0 %250
  %v252 = vrcp.pop 128.0
  %v253 = vmul.f32 %v245, %v252
  %v254 = vmul.f32 %v247, %v252
  %v255 = vmul.f32 %v249, %v252
  %v256 = vmul.f32 %v251, %v252
  %v257 = vsub.f32 %v240, %v253
  %v258 = vsub.f32 %v241, %v254
  %v259 = vsub.f32 %v242, %v255
  %v260 = vsub.f32 %v243, %v256
  %v261 = vmul.f32 %v257, %v257
  %v262 = vmul.f32 %v258, %v258
  %v263 = vmul.f32 %v259, %v259
  %v264 = vmul.f32 %v260, %v260
  %265 = vadd.xlane.f32.xlu0 %v261
  %v266 = vpop.xlane.xlu0 %265
  %267 = vadd.xlane.f32.xlu0 %v262
  %v268 = vpop.xlane.xlu0 %267
  %269 = vadd.xlane.f32.xlu0 %v263
  %v270 = vpop.xlane.xlu0 %269
  %271 = vadd.xlane.f32.xlu0 %v264
  %v272 = vpop.xlane.xlu0 %271
  %v273 = vmul.f32 %v266, %v252
  %v274 = vmul.f32 %v268, %v252
  %v275 = vmul.f32 %v270, %v252
  %v276 = vmul.f32 %v272, %v252
  %v277 = vadd.f32 %v273, 1e-12
  %v278 = vadd.f32 %v274, 1e-12
  %v279 = vadd.f32 %v275, 1e-12
  %v280 = vadd.f32 %v276, 1e-12
  %v281 = vrsqrt.pop %v277
  %v282 = vrsqrt.pop %v278
  %v283 = vrsqrt.pop %v279
  %v284 = vrsqrt.pop %v280
  %v285 = vmul.f32 %v257, %v281
  %v286 = vmul.f32 %v258, %v282
  %v287 = vmul.f32 %v259, %v283
  %v288 = vmul.f32 %v260, %v284
  %v289 = vld [vmem:[%s4] sm:$0x1]
  %v291 = vlaneseq
  %v292 = vshrl.u32 %v291, 7
  %v293 = vsub.s32 0, %v292
  %v294 = vrot.slane %v289, %v293
  %v296 = vmul.f32 %v285, %v294
  %v297 = vmul.f32 %v286, %v294
  %v298 = vmul.f32 %v287, %v294
  %v299 = vmul.f32 %v288, %v294
  %v300 = vld [vmem:[%s5] sm:$0x1]
  %v302 = vlaneseq
  %v303 = vshrl.u32 %v302, 7
  %v304 = vsub.s32 0, %v303
  %v305 = vrot.slane %v300, %v304
  %v307 = vadd.f32 %v296, %v305
  %v308 = vadd.f32 %v297, %v305
  %v309 = vadd.f32 %v298, %v305
  %v310 = vadd.f32 %v299, %v305
  %v311 = vpack.c.bf16 %v308, %v307
  %v312 = vpack.c.bf16 %v310, %v309
  %v315 = vunpack.c.l.b16 %v311
  %v316 = vunpack.c.h.b16 %v311
  %v317 = vunpack.c.l.b16 %v312
  %v318 = vunpack.c.h.b16 %v312
  %v319 = vpack.c.b16 %v315, %v315
  %v320 = vpack.c.b16 %v316, %v316
  %v321 = vpack.c.b16 %v317, %v317
  %v322 = vpack.c.b16 %v318, %v318
  %327 = vst [vmem:[%s6] sm:$0xf] %v319
  %328 = vst [vmem:[%s6 + $0x4] sm:$0xf] %v320
  %329 = vst [vmem:[%s6 + $0x8] sm:$0xf] %v321
  %330 = vst [vmem:[%s6 + $0xc] sm:$0xf] %v322
  // Predicated region
  $region26: #{_lambda_.16} parent=0 // pred_check
    _
  $region27: #{_lambda_.16} parent=0 // pred_check_branch
    %332 = sbr.rel (0) target = $region29
  $region28: #{_lambda_.16} parent=0 // pred_region
    _
  $region29: #{_lambda_.16} parent=0 // pred_fallthru
    _
  // Predicated region
  $region30: #{_lambda_.16} parent=0 // pred_check
    _
  $region31: #{_lambda_.16} parent=0 // pred_check_branch
    %334 = sbr.rel (0) target = $region33
  $region32: #{_lambda_.16} parent=0 // pred_region
    _
  $region33: #{_lambda_.16} parent=0 // pred_fallthru
    _

// kernel: _lambda_.21
$region0: #{_lambda_.21}
  #allocation0 [shape = 'u32[]', space=smem, size = 0x4, offset = 0x4, fixed_abs, tag = 'smem constant byte address 0x4 - core index']
  #allocation1 [shape = 'u32[144,128]{1,0:T(1,128)}', space=vmem, size = 0x12000, scoped, tag = 'internal scratch']
  %s0 = inlined_call_operand.vmem [shape: bf16[16,128], index: 0, kind: input, shape index: {}]
  %s1 = inlined_call_operand.vmem [shape: bf16[16,128], index: 1, kind: input, shape index: {}]
  %s2 = inlined_call_operand.vmem [shape: bf16[16,128], index: 2, kind: input, shape index: {}]
  %s3 = inlined_call_operand.vmem [shape: bf16[128,128], index: 3, kind: input, shape index: {}]
  %s4 = inlined_call_operand.vmem [shape: bf16[128,128], index: 4, kind: input, shape index: {}]
  %s5 = inlined_call_operand.vmem [shape: f32[1,128], index: 5, kind: input, shape index: {}]
  %s6 = inlined_call_operand.vmem [shape: bf16[16,128], index: 6, kind: output, shape index: {}]
  %s7 = sld [smem:[#allocation0]]
  $region34: #{_lambda_.21} parent=0
    _
  %s9 = ssub.s32 1, %s7
  %s10 = scalar_select 0, %s9, %s7
  // Predicated region
  $region2: #{_lambda_.21} parent=0 // pred_check
    _
  $region3: #{_lambda_.21} parent=0 // pred_check_branch
    %12 = sbr.rel (0) target = $region5
  $region4: #{_lambda_.21} parent=0 // pred_region
    _
  $region5: #{_lambda_.21} parent=0 // pred_fallthru
    _
  // Predicated region
  $region6: #{_lambda_.21} parent=0 // pred_check
    _
  $region7: #{_lambda_.21} parent=0 // pred_check_branch
    %14 = sbr.rel (0) target = $region9
  $region8: #{_lambda_.21} parent=0 // pred_region
    _
  $region9: #{_lambda_.21} parent=0 // pred_fallthru
    _
  // Predicated region
  $region10: #{_lambda_.21} parent=0 // pred_check
    _
  $region11: #{_lambda_.21} parent=0 // pred_check_branch
    %16 = sbr.rel (0) target = $region13
  $region12: #{_lambda_.21} parent=0 // pred_region
    _
  $region13: #{_lambda_.21} parent=0 // pred_fallthru
    _
  // Predicated region
  $region14: #{_lambda_.21} parent=0 // pred_check
    _
  $region15: #{_lambda_.21} parent=0 // pred_check_branch
    %18 = sbr.rel (0) target = $region17
  $region16: #{_lambda_.21} parent=0 // pred_region
    _
  $region17: #{_lambda_.21} parent=0 // pred_fallthru
    _
  // Predicated region
  $region18: #{_lambda_.21} parent=0 // pred_check
    _
  $region19: #{_lambda_.21} parent=0 // pred_check_branch
    %20 = sbr.rel (0) target = $region21
  $region20: #{_lambda_.21} parent=0 // pred_region
    _
  $region21: #{_lambda_.21} parent=0 // pred_fallthru
    _
  // Predicated region
  $region22: #{_lambda_.21} parent=0 // pred_check
    _
  $region23: #{_lambda_.21} parent=0 // pred_check_branch
    %22 = sbr.rel (0) target = $region25
  $region24: #{_lambda_.21} parent=0 // pred_region
    _
  $region25: #{_lambda_.21} parent=0 // pred_fallthru
    _
  %v24 = vld [vmem:[%s0] sm:$0xf]
  %v25 = vld [vmem:[%s0 + $0x4] sm:$0xf]
  %v26 = vld [vmem:[%s1] sm:$0xf]
  %v27 = vld [vmem:[%s1 + $0x4] sm:$0xf]
  %v28 = vmul.bf16 %v24, %v26
  %v29 = vmul.bf16 %v25, %v27
  %v30 = vld [vmem:[%s3] sm:$0xf]
  %v31 = vld [vmem:[%s3 + $0x4] sm:$0xf]
  %v32 = vld [vmem:[%s3 + $0x8] sm:$0xf]
  %v33 = vld [vmem:[%s3 + $0xc] sm:$0xf]
  %v34 = vld [vmem:[%s3 + $0x10] sm:$0xf]
  %v35 = vld [vmem:[%s3 + $0x14] sm:$0xf]
  %v36 = vld [vmem:[%s3 + $0x18] sm:$0xf]
  %v37 = vld [vmem:[%s3 + $0x1c] sm:$0xf]
  %v38 = vld [vmem:[%s3 + $0x20] sm:$0xf]
  %v39 = vld [vmem:[%s3 + $0x24] sm:$0xf]
  %v40 = vld [vmem:[%s3 + $0x28] sm:$0xf]
  %v41 = vld [vmem:[%s3 + $0x2c] sm:$0xf]
  %v42 = vld [vmem:[%s3 + $0x30] sm:$0xf]
  %v43 = vld [vmem:[%s3 + $0x34] sm:$0xf]
  %v44 = vld [vmem:[%s3 + $0x38] sm:$0xf]
  %v45 = vld [vmem:[%s3 + $0x3c] sm:$0xf]
  %v46 = vld [vmem:[%s2] sm:$0xf]
  %v47 = vld [vmem:[%s2 + $0x4] sm:$0xf]
  %v48 = vld [vmem:[%s4] sm:$0xf]
  %v49 = vld [vmem:[%s4 + $0x4] sm:$0xf]
  %v50 = vld [vmem:[%s4 + $0x8] sm:$0xf]
  %v51 = vld [vmem:[%s4 + $0xc] sm:$0xf]
  %v52 = vld [vmem:[%s4 + $0x10] sm:$0xf]
  %v53 = vld [vmem:[%s4 + $0x14] sm:$0xf]
  %v54 = vld [vmem:[%s4 + $0x18] sm:$0xf]
  %v55 = vld [vmem:[%s4 + $0x1c] sm:$0xf]
  %v56 = vld [vmem:[%s4 + $0x20] sm:$0xf]
  %v57 = vld [vmem:[%s4 + $0x24] sm:$0xf]
  %v58 = vld [vmem:[%s4 + $0x28] sm:$0xf]
  %v59 = vld [vmem:[%s4 + $0x2c] sm:$0xf]
  %v60 = vld [vmem:[%s4 + $0x30] sm:$0xf]
  %v61 = vld [vmem:[%s4 + $0x34] sm:$0xf]
  %v62 = vld [vmem:[%s4 + $0x38] sm:$0xf]
  %v63 = vld [vmem:[%s4 + $0x3c] sm:$0xf]
  %v66 = vunpack.c.l.b16 %v46
  %v67 = vunpack.c.l.b16 %v47
  %v68 = vpack.c.b16 %v67, %v66
  %v86 = vunpack.c.l.b16 %v48
  %v87 = vunpack.c.l.b16 %v49
  %v88 = vunpack.c.l.b16 %v50
  %v89 = vunpack.c.l.b16 %v51
  %v90 = vunpack.c.l.b16 %v52
  %v91 = vunpack.c.l.b16 %v53
  %v92 = vunpack.c.l.b16 %v54
  %v93 = vunpack.c.l.b16 %v55
  %v94 = vunpack.c.l.b16 %v56
  %v95 = vunpack.c.l.b16 %v57
  %v96 = vunpack.c.l.b16 %v58
  %v97 = vunpack.c.l.b16 %v59
  %v98 = vunpack.c.l.b16 %v60
  %v99 = vunpack.c.l.b16 %v61
  %v100 = vunpack.c.l.b16 %v62
  %v101 = vunpack.c.l.b16 %v63
  %v102 = vpack.c.b16 %v87, %v86
  %v103 = vpack.c.b16 %v89, %v88
  %v104 = vpack.c.b16 %v91, %v90
  %v105 = vpack.c.b16 %v93, %v92
  %v106 = vpack.c.b16 %v95, %v94
  %v107 = vpack.c.b16 %v97, %v96
  %v108 = vpack.c.b16 %v99, %v98
  %v109 = vpack.c.b16 %v101, %v100
  %118 = vmatprep.subr.bf16.mxu0 0
  %119 = vmatpush1.bf16.msra.mxu0 %v102
  %120 = vmatprep.subr.bf16.mxu0 0
  %121 = vmatpush1.bf16.msra.mxu0 %v103
  %122 = vmatprep.subr.bf16.mxu0 0
  %123 = vmatpush1.bf16.msra.mxu0 %v104
  %124 = vmatprep.subr.bf16.mxu0 0
  %125 = vmatpush1.bf16.msra.mxu0 %v105
  %126 = vmatprep.subr.bf16.mxu0 0
  %127 = vmatpush1.bf16.msra.mxu0 %v106
  %128 = vmatprep.subr.bf16.mxu0 0
  %129 = vmatpush1.bf16.msra.mxu0 %v107
  %130 = vmatprep.subr.bf16.mxu0 0
  %131 = vmatpush1.bf16.msra.mxu0 %v108
  %132 = vmatprep.subr.bf16.mxu0 0
  %133 = vmatpush1.bf16.msra.mxu0 %v109
  %134 = vmatprep.subr.bf16.mxu0 0
  %135 = vmatpush1.bf16.msra.mxu0 0
  %136 = vmatprep.subr.bf16.mxu0 0
  %137 = vmatpush1.bf16.msra.mxu0 0
  %138 = vmatprep.subr.bf16.mxu0 0
  %139 = vmatpush1.bf16.msra.mxu0 0
  %140 = vmatprep.subr.bf16.mxu0 0
  %141 = vmatpush1.bf16.msra.mxu0 0
  %142 = vmatprep.subr.bf16.mxu0 0
  %143 = vmatpush1.bf16.msra.mxu0 0
  %144 = vmatprep.subr.bf16.mxu0 0
  %145 = vmatpush1.bf16.msra.mxu0 0
  %146 = vmatprep.subr.bf16.mxu0 0
  %147 = vmatpush1.bf16.msra.mxu0 0
  %148 = vmatprep.subr.bf16.mxu0 0
  %149 = vmatpush1.bf16.msra.mxu0 0
  %150 = vmatprep.mubr.bf16.mxu0 0
  %151 = vmatmul.mubr.bf16.gmra.mrb[0].mxu0 %v68
  %v152 = vpop.f32.mrb[0].mxu0
  %v153 = vadd.f32 0.0, %v152
  %v154 = vpop.f32.mrb[0].mxu0
  %v155 = vpop.f32.mrb[0].mxu0
  %v156 = vadd.f32 0.0, %v155
  %v157 = vpop.f32.mrb[0].mxu0
  %158 = vdwg.mxu0
  %v161 = vunpack.c.l.b16 %v28
  %v162 = vunpack.c.l.b16 %v29
  %v163 = vpack.c.b16 %v162, %v161
  %v181 = vunpack.c.l.b16 %v30
  %v182 = vunpack.c.l.b16 %v31
  %v183 = vunpack.c.l.b16 %v32
  %v184 = vunpack.c.l.b16 %v33
  %v185 = vunpack.c.l.b16 %v34
  %v186 = vunpack.c.l.b16 %v35
  %v187 = vunpack.c.l.b16 %v36
  %v188 = vunpack.c.l.b16 %v37
  %v189 = vunpack.c.l.b16 %v38
  %v190 = vunpack.c.l.b16 %v39
  %v191 = vunpack.c.l.b16 %v40
  %v192 = vunpack.c.l.b16 %v41
  %v193 = vunpack.c.l.b16 %v42
  %v194 = vunpack.c.l.b16 %v43
  %v195 = vunpack.c.l.b16 %v44
  %v196 = vunpack.c.l.b16 %v45
  %v197 = vpack.c.b16 %v182, %v181
  %v198 = vpack.c.b16 %v184, %v183
  %v199 = vpack.c.b16 %v186, %v185
  %v200 = vpack.c.b16 %v188, %v187
  %v201 = vpack.c.b16 %v190, %v189
  %v202 = vpack.c.b16 %v192, %v191
  %v203 = vpack.c.b16 %v194, %v193
  %v204 = vpack.c.b16 %v196, %v195
  %213 = vmatprep.subr.bf16.mxu0 0
  %214 = vmatpush1.bf16.msra.mxu0 %v197
  %215 = vmatprep.subr.bf16.mxu0 0
  %216 = vmatpush1.bf16.msra.mxu0 %v198
  %217 = vmatprep.subr.bf16.mxu0 0
  %218 = vmatpush1.bf16.msra.mxu0 %v199
  %219 = vmatprep.subr.bf16.mxu0 0
  %220 = vmatpush1.bf16.msra.mxu0 %v200
  %221 = vmatprep.subr.bf16.mxu0 0
  %222 = vmatpush1.bf16.msra.mxu0 %v201
  %223 = vmatprep.subr.bf16.mxu0 0
  %224 = vmatpush1.bf16.msra.mxu0 %v202
  %225 = vmatprep.subr.bf16.mxu0 0
  %226 = vmatpush1.bf16.msra.mxu0 %v203
  %227 = vmatprep.subr.bf16.mxu0 0
  %228 = vmatpush1.bf16.msra.mxu0 %v204
  %229 = vmatprep.subr.bf16.mxu0 0
  %230 = vmatpush1.bf16.msra.mxu0 0
  %231 = vmatprep.subr.bf16.mxu0 0
  %232 = vmatpush1.bf16.msra.mxu0 0
  %233 = vmatprep.subr.bf16.mxu0 0
  %234 = vmatpush1.bf16.msra.mxu0 0
  %235 = vmatprep.subr.bf16.mxu0 0
  %236 = vmatpush1.bf16.msra.mxu0 0
  %237 = vmatprep.subr.bf16.mxu0 0
  %238 = vmatpush1.bf16.msra.mxu0 0
  %239 = vmatprep.subr.bf16.mxu0 0
  %240 = vmatpush1.bf16.msra.mxu0 0
  %241 = vmatprep.subr.bf16.mxu0 0
  %242 = vmatpush1.bf16.msra.mxu0 0
  %243 = vmatprep.subr.bf16.mxu0 0
  %244 = vmatpush1.bf16.msra.mxu0 0
  %245 = vmatprep.mubr.bf16.mxu0 0
  %246 = vmatmul.mubr.bf16.gmra.mrb[0].mxu0 %v163
  %v247 = vpop.f32.mrb[0].mxu0
  %v248 = vadd.f32 %v153, %v247
  %v249 = vpop.f32.mrb[0].mxu0
  %v250 = vpop.f32.mrb[0].mxu0
  %v251 = vadd.f32 %v156, %v250
  %v252 = vpop.f32.mrb[0].mxu0
  %253 = vdwg.mxu0
  %v254 = vld [vmem:[%s5] sm:$0x1]
  %v256 = vlaneseq
  %v257 = vshrl.u32 %v256, 7
  %v258 = vsub.s32 0, %v257
  %v259 = vrot.slane %v254, %v258
  %v261 = vadd.f32 %v248, %v259
  %v262 = vadd.f32 %v251, %v259
  %v263 = vpack.c.bf16 %v262, %v261
  %v265 = vunpack.c.l.b16 %v263
  %v266 = vunpack.c.h.b16 %v263
  %v267 = vpack.c.b16 %v265, %v265
  %v268 = vpack.c.b16 %v266, %v266
  %271 = vst [vmem:[%s6] sm:$0xf] %v267
  %272 = vst [vmem:[%s6 + $0x4] sm:$0xf] %v268
  // Predicated region
  $region26: #{_lambda_.21} parent=0 // pred_check
    _
  $region27: #{_lambda_.21} parent=0 // pred_check_branch
    %274 = sbr.rel (0) target = $region29
  $region28: #{_lambda_.21} parent=0 // pred_region
    _
  $region29: #{_lambda_.21} parent=0 // pred_fallthru
    _
  // Predicated region
  $region30: #{_lambda_.21} parent=0 // pred_check
    _
  $region31: #{_lambda_.21} parent=0 // pred_check_branch
    %276 = sbr.rel (0) target = $region33
  $region32: #{_lambda_.21} parent=0 // pred_region
    _
  $region33: #{_lambda_.21} parent=0 // pred_fallthru
    _

// kernel: _lambda_.14
$region0: #{_lambda_.14}
  #allocation0 [shape = 'u32[]', space=smem, size = 0x4, offset = 0x4, fixed_abs, tag = 'smem constant byte address 0x4 - core index']
  #allocation1 [shape = 'u32[144,128]{1,0:T(1,128)}', space=vmem, size = 0x12000, scoped, tag = 'internal scratch']
  #allocation2 [shape = 'f32[4,8,128]{2,1,0:T(8,128)}', space=vmem, size = 0x4000, scoped, tag = 'scratch operand']
  %s0 = inlined_call_operand.vmem [shape: bf16[4,8,384], index: 0, kind: input, shape index: {}, may-alias: {0,1,2}]
  %s1 = inlined_call_operand.vmem [shape: bf16[4,8,384], index: 1, kind: input, shape index: {}, may-alias: {0,1,2}]
  %s2 = inlined_call_operand.vmem [shape: bf16[4,8,384], index: 2, kind: input, shape index: {}, may-alias: {0,1,2}]
  %s3 = inlined_call_operand.vmem [shape: bf16[128,128], index: 3, kind: input, shape index: {}]
  %s4 = inlined_call_operand.vmem [shape: f32[1,128], index: 4, kind: input, shape index: {}]
  %s5 = inlined_call_operand.vmem [shape: bf16[4,8,128], index: 5, kind: input, shape index: {}]
  %s6 = inlined_call_operand.vmem [shape: f32[1,128], index: 6, kind: input, shape index: {}]
  %s7 = inlined_call_operand.vmem [shape: f32[1,128], index: 7, kind: input, shape index: {}]
  %s8 = inlined_call_operand.vmem [shape: bf16[4,8,128], index: 8, kind: output, shape index: {}]
  %s9 = sld [smem:[#allocation0]]
  $region165: #{_lambda_.14} parent=0
    _
  %s11 = ssub.s32 1, %s9
  %s12 = scalar_select 0, %s11, %s9
  $region1: #{_lambda_.14} parent=0
    #allocation3 [shape = 'u8[8192]{0}', space=vmem, size = 0x2000, scoped, tag = 'input window, operand 0, single buffered']
    #allocation4 [shape = 'u8[8192]{0}', space=vmem, size = 0x2000, scoped, tag = 'input window, operand 1, single buffered']
    #allocation5 [shape = 'u8[8192]{0}', space=vmem, size = 0x2000, scoped, tag = 'input window, operand 2, single buffered']
    // Predicated region
    $region2: #{_lambda_.14} parent=1 // pred_check
      _
    $region3: #{_lambda_.14} parent=1 // pred_check_branch
      %14 = sbr.rel (0) target = $region5
    $region4: #{_lambda_.14} parent=1 // pred_region
      // Predicated region
      $region6: #{_lambda_.14} parent=4 // pred_check
        _
      $region7: #{_lambda_.14} parent=4 // pred_check_branch
        %16 = sbr.rel (0) target = $region9
      $region8: #{_lambda_.14} parent=4 // pred_region
        // Predicated region
        $region10: #{_lambda_.14} parent=8 // pred_check
          _
        $region11: #{_lambda_.14} parent=8 // pred_check_branch
          %18 = sbr.rel target = $region13
        $region12: #{_lambda_.14} parent=8 // pred_region
          // Predicated region
          $region25: #{_lambda_.14} parent=12 // pred_check
            _
          $region26: #{_lambda_.14} parent=12 // pred_check_branch
            %39 = sbr.rel (0) target = $region28
          $region27: #{_lambda_.14} parent=12 // pred_region
            loop: start=0, step=1, limit=1
            $region29: #{_lambda_.14} parent=27 // loop_pre_header
              _
            $region30: #{_lambda_.14} parent=27 // loop_header
              %s41 = sphi 0, %s45
              %p42 = scmp.ge.s32.totalorder %s41, 1
              %s46 = sphi %s0, %s0
              %s47 = sphi [#allocation3], [#allocation3]
            $region31: #{_lambda_.14} parent=27 // loop_header_branch
              %44 = sbr.rel (%p42) target = $region35
            $region32: #{_lambda_.14} parent=27 // loop_body
              _
            $region33: #{_lambda_.14} parent=27 // loop_footer
              %s45 = sadd.s32 1, %s41
            $region34: #{_lambda_.14} parent=27 // loop_footer_branch
              %40 = sbr.rel target = $region30
            $region35: #{_lambda_.14} parent=27 // loop_exit
              _
            loop: start=0, step=1, limit=1
            $region36: #{_lambda_.14} parent=27 // loop_pre_header
              _
            $region37: #{_lambda_.14} parent=27 // loop_header
              %s50 = sphi 0, %s54
              %p51 = scmp.ge.s32.totalorder %s50, 1
              %s55 = sphi %s0, %s0
              %s56 = sphi [#allocation3], [#allocation3]
            $region38: #{_lambda_.14} parent=27 // loop_header_branch
              %53 = sbr.rel (%p51) target = $region42
            $region39: #{_lambda_.14} parent=27 // loop_body
              %v57 = vld [vmem:[%s55] sm:$0xf]
              %58 = vst [vmem:[%s56] sm:$0xf] %v57
              %v59 = vld [vmem:[%s55 + $0xc] sm:$0xf]
              %60 = vst [vmem:[%s56 + $0x4] sm:$0xf] %v59
              %v61 = vld [vmem:[%s55 + $0x18] sm:$0xf]
              %62 = vst [vmem:[%s56 + $0x8] sm:$0xf] %v61
              %v63 = vld [vmem:[%s55 + $0x24] sm:$0xf]
              %64 = vst [vmem:[%s56 + $0xc] sm:$0xf] %v63
            $region40: #{_lambda_.14} parent=27 // loop_footer
              %s54 = sadd.s32 1, %s50
            $region41: #{_lambda_.14} parent=27 // loop_footer_branch
              %49 = sbr.rel target = $region37
            $region42: #{_lambda_.14} parent=27 // loop_exit
              _
          $region28: #{_lambda_.14} parent=12 // pred_fallthru
            _
        $region13: #{_lambda_.14} parent=8 // pred_fallthru
          _
        // Predicated region
        $region14: #{_lambda_.14} parent=8 // pred_check
          _
        $region15: #{_lambda_.14} parent=8 // pred_check_branch
          %20 = sbr.rel (0) target = $region17
        $region16: #{_lambda_.14} parent=8 // pred_region
          loop: start=0, step=1, limit=1
          $region18: #{_lambda_.14} parent=16 // loop_pre_header
            _
          $region19: #{_lambda_.14} parent=16 // loop_header
            %s23 = sphi 0, %s27
            %p24 = scmp.ge.s32.totalorder %s23, 1
            %s28 = sphi %s0, %s0
            %s29 = sphi [#allocation3], [#allocation3]
          $region20: #{_lambda_.14} parent=16 // loop_header_branch
            %26 = sbr.rel (%p24) target = $region24
          $region21: #{_lambda_.14} parent=16 // loop_body
            %v30 = vld [vmem:[%s28] sm:$0xf]
            %31 = vst [vmem:[%s29] sm:$0xf] %v30
            %v32 = vld [vmem:[%s28 + $0xc] sm:$0xf]
            %33 = vst [vmem:[%s29 + $0x4] sm:$0xf] %v32
            %v34 = vld [vmem:[%s28 + $0x18] sm:$0xf]
            %35 = vst [vmem:[%s29 + $0x8] sm:$0xf] %v34
            %v36 = vld [vmem:[%s28 + $0x24] sm:$0xf]
            %37 = vst [vmem:[%s29 + $0xc] sm:$0xf] %v36
          $region22: #{_lambda_.14} parent=16 // loop_footer
            %s27 = sadd.s32 1, %s23
          $region23: #{_lambda_.14} parent=16 // loop_footer_branch
            %22 = sbr.rel target = $region19
          $region24: #{_lambda_.14} parent=16 // loop_exit
            _
        $region17: #{_lambda_.14} parent=8 // pred_fallthru
          _
      $region9: #{_lambda_.14} parent=4 // pred_fallthru
        _
      %65 = vnop
    $region5: #{_lambda_.14} parent=1 // pred_fallthru
      _
    // Predicated region
    $region43: #{_lambda_.14} parent=1 // pred_check
      _
    $region44: #{_lambda_.14} parent=1 // pred_check_branch
      %67 = sbr.rel (0) target = $region46
    $region45: #{_lambda_.14} parent=1 // pred_region
      %s68 = scalar_lea.vmem %s1, 4
      // Predicated region
      $region47: #{_lambda_.14} parent=45 // pred_check
        _
      $region48: #{_lambda_.14} parent=45 // pred_check_branch
        %70 = sbr.rel (0) target = $region50
      $region49: #{_lambda_.14} parent=45 // pred_region
        // Predicated region
        $region51: #{_lambda_.14} parent=49 // pred_check
          _
        $region52: #{_lambda_.14} parent=49 // pred_check_branch
          %72 = sbr.rel target = $region54
        $region53: #{_lambda_.14} parent=49 // pred_region
          // Predicated region
          $region66: #{_lambda_.14} parent=53 // pred_check
            _
          $region67: #{_lambda_.14} parent=53 // pred_check_branch
            %93 = sbr.rel (0) target = $region69
          $region68: #{_lambda_.14} parent=53 // pred_region
            loop: start=0, step=1, limit=1
            $region70: #{_lambda_.14} parent=68 // loop_pre_header
              _
            $region71: #{_lambda_.14} parent=68 // loop_header
              %s95 = sphi 0, %s99
              %p96 = scmp.ge.s32.totalorder %s95, 1
              %s100 = sphi %s68, %s68
              %s101 = sphi [#allocation4], [#allocation4]
            $region72: #{_lambda_.14} parent=68 // loop_header_branch
              %98 = sbr.rel (%p96) target = $region76
            $region73: #{_lambda_.14} parent=68 // loop_body
              _
            $region74: #{_lambda_.14} parent=68 // loop_footer
              %s99 = sadd.s32 1, %s95
            $region75: #{_lambda_.14} parent=68 // loop_footer_branch
              %94 = sbr.rel target = $region71
            $region76: #{_lambda_.14} parent=68 // loop_exit
              _
            loop: start=0, step=1, limit=1
            $region77: #{_lambda_.14} parent=68 // loop_pre_header
              _
            $region78: #{_lambda_.14} parent=68 // loop_header
              %s104 = sphi 0, %s108
              %p105 = scmp.ge.s32.totalorder %s104, 1
              %s109 = sphi %s68, %s68
              %s110 = sphi [#allocation4], [#allocation4]
            $region79: #{_lambda_.14} parent=68 // loop_header_branch
              %107 = sbr.rel (%p105) target = $region83
            $region80: #{_lambda_.14} parent=68 // loop_body
              %v111 = vld [vmem:[%s109] sm:$0xf]
              %112 = vst [vmem:[%s110] sm:$0xf] %v111
              %v113 = vld [vmem:[%s109 + $0xc] sm:$0xf]
              %114 = vst [vmem:[%s110 + $0x4] sm:$0xf] %v113
              %v115 = vld [vmem:[%s109 + $0x18] sm:$0xf]
              %116 = vst [vmem:[%s110 + $0x8] sm:$0xf] %v115
              %v117 = vld [vmem:[%s109 + $0x24] sm:$0xf]
              %118 = vst [vmem:[%s110 + $0xc] sm:$0xf] %v117
            $region81: #{_lambda_.14} parent=68 // loop_footer
              %s108 = sadd.s32 1, %s104
            $region82: #{_lambda_.14} parent=68 // loop_footer_branch
              %103 = sbr.rel target = $region78
            $region83: #{_lambda_.14} parent=68 // loop_exit
              _
          $region69: #{_lambda_.14} parent=53 // pred_fallthru
            _
        $region54: #{_lambda_.14} parent=49 // pred_fallthru
          _
        // Predicated region
        $region55: #{_lambda_.14} parent=49 // pred_check
          _
        $region56: #{_lambda_.14} parent=49 // pred_check_branch
          %74 = sbr.rel (0) target = $region58
        $region57: #{_lambda_.14} parent=49 // pred_region
          loop: start=0, step=1, limit=1
          $region59: #{_lambda_.14} parent=57 // loop_pre_header
            _
          $region60: #{_lambda_.14} parent=57 // loop_header
            %s77 = sphi 0, %s81
            %p78 = scmp.ge.s32.totalorder %s77, 1
            %s82 = sphi %s68, %s68
            %s83 = sphi [#allocation4], [#allocation4]
          $region61: #{_lambda_.14} parent=57 // loop_header_branch
            %80 = sbr.rel (%p78) target = $region65
          $region62: #{_lambda_.14} parent=57 // loop_body
            %v84 = vld [vmem:[%s82] sm:$0xf]
            %85 = vst [vmem:[%s83] sm:$0xf] %v84
            %v86 = vld [vmem:[%s82 + $0xc] sm:$0xf]
            %87 = vst [vmem:[%s83 + $0x4] sm:$0xf] %v86
            %v88 = vld [vmem:[%s82 + $0x18] sm:$0xf]
            %89 = vst [vmem:[%s83 + $0x8] sm:$0xf] %v88
            %v90 = vld [vmem:[%s82 + $0x24] sm:$0xf]
            %91 = vst [vmem:[%s83 + $0xc] sm:$0xf] %v90
          $region63: #{_lambda_.14} parent=57 // loop_footer
            %s81 = sadd.s32 1, %s77
          $region64: #{_lambda_.14} parent=57 // loop_footer_branch
            %76 = sbr.rel target = $region60
          $region65: #{_lambda_.14} parent=57 // loop_exit
            _
        $region58: #{_lambda_.14} parent=49 // pred_fallthru
          _
      $region50: #{_lambda_.14} parent=45 // pred_fallthru
        _
      %119 = vnop
    $region46: #{_lambda_.14} parent=1 // pred_fallthru
      _
    // Predicated region
    $region84: #{_lambda_.14} parent=1 // pred_check
      _
    $region85: #{_lambda_.14} parent=1 // pred_check_branch
      %121 = sbr.rel (0) target = $region87
    $region86: #{_lambda_.14} parent=1 // pred_region
      %s122 = scalar_lea.vmem %s2, 8
      // Predicated region
      $region88: #{_lambda_.14} parent=86 // pred_check
        _
      $region89: #{_lambda_.14} parent=86 // pred_check_branch
        %124 = sbr.rel (0) target = $region91
      $region90: #{_lambda_.14} parent=86 // pred_region
        // Predicated region
        $region92: #{_lambda_.14} parent=90 // pred_check
          _
        $region93: #{_lambda_.14} parent=90 // pred_check_branch
          %126 = sbr.rel target = $region95
        $region94: #{_lambda_.14} parent=90 // pred_region
          // Predicated region
          $region107: #{_lambda_.14} parent=94 // pred_check
            _
          $region108: #{_lambda_.14} parent=94 // pred_check_branch
            %147 = sbr.rel (0) target = $region110
          $region109: #{_lambda_.14} parent=94 // pred_region
            loop: start=0, step=1, limit=1
            $region111: #{_lambda_.14} parent=109 // loop_pre_header
              _
            $region112: #{_lambda_.14} parent=109 // loop_header
              %s149 = sphi 0, %s153
              %p150 = scmp.ge.s32.totalorder %s149, 1
              %s154 = sphi %s122, %s122
              %s155 = sphi [#allocation5], [#allocation5]
            $region113: #{_lambda_.14} parent=109 // loop_header_branch
              %152 = sbr.rel (%p150) target = $region117
            $region114: #{_lambda_.14} parent=109 // loop_body
              _
            $region115: #{_lambda_.14} parent=109 // loop_footer
              %s153 = sadd.s32 1, %s149
            $region116: #{_lambda_.14} parent=109 // loop_footer_branch
              %148 = sbr.rel target = $region112
            $region117: #{_lambda_.14} parent=109 // loop_exit
              _
            loop: start=0, step=1, limit=1
            $region118: #{_lambda_.14} parent=109 // loop_pre_header
              _
            $region119: #{_lambda_.14} parent=109 // loop_header
              %s158 = sphi 0, %s162
              %p159 = scmp.ge.s32.totalorder %s158, 1
              %s163 = sphi %s122, %s122
              %s164 = sphi [#allocation5], [#allocation5]
            $region120: #{_lambda_.14} parent=109 // loop_header_branch
              %161 = sbr.rel (%p159) target = $region124
            $region121: #{_lambda_.14} parent=109 // loop_body
              %v165 = vld [vmem:[%s163] sm:$0xf]
              %166 = vst [vmem:[%s164] sm:$0xf] %v165
              %v167 = vld [vmem:[%s163 + $0xc] sm:$0xf]
              %168 = vst [vmem:[%s164 + $0x4] sm:$0xf] %v167
              %v169 = vld [vmem:[%s163 + $0x18] sm:$0xf]
              %170 = vst [vmem:[%s164 + $0x8] sm:$0xf] %v169
              %v171 = vld [vmem:[%s163 + $0x24] sm:$0xf]
              %172 = vst [vmem:[%s164 + $0xc] sm:$0xf] %v171
            $region122: #{_lambda_.14} parent=109 // loop_footer
              %s162 = sadd.s32 1, %s158
            $region123: #{_lambda_.14} parent=109 // loop_footer_branch
              %157 = sbr.rel target = $region119
            $region124: #{_lambda_.14} parent=109 // loop_exit
              _
          $region110: #{_lambda_.14} parent=94 // pred_fallthru
            _
        $region95: #{_lambda_.14} parent=90 // pred_fallthru
          _
        // Predicated region
        $region96: #{_lambda_.14} parent=90 // pred_check
          _
        $region97: #{_lambda_.14} parent=90 // pred_check_branch
          %128 = sbr.rel (0) target = $region99
        $region98: #{_lambda_.14} parent=90 // pred_region
          loop: start=0, step=1, limit=1
          $region100: #{_lambda_.14} parent=98 // loop_pre_header
            _
          $region101: #{_lambda_.14} parent=98 // loop_header
            %s131 = sphi 0, %s135
            %p132 = scmp.ge.s32.totalorder %s131, 1
            %s136 = sphi %s122, %s122
            %s137 = sphi [#allocation5], [#allocation5]
          $region102: #{_lambda_.14} parent=98 // loop_header_branch
            %134 = sbr.rel (%p132) target = $region106
          $region103: #{_lambda_.14} parent=98 // loop_body
            %v138 = vld [vmem:[%s136] sm:$0xf]
            %139 = vst [vmem:[%s137] sm:$0xf] %v138
            %v140 = vld [vmem:[%s136 + $0xc] sm:$0xf]
            %141 = vst [vmem:[%s137 + $0x4] sm:$0xf] %v140
            %v142 = vld [vmem:[%s136 + $0x18] sm:$0xf]
            %143 = vst [vmem:[%s137 + $0x8] sm:$0xf] %v142
            %v144 = vld [vmem:[%s136 + $0x24] sm:$0xf]
            %145 = vst [vmem:[%s137 + $0xc] sm:$0xf] %v144
          $region104: #{_lambda_.14} parent=98 // loop_footer
            %s135 = sadd.s32 1, %s131
          $region105: #{_lambda_.14} parent=98 // loop_footer_branch
            %130 = sbr.rel target = $region101
          $region106: #{_lambda_.14} parent=98 // loop_exit
            _
        $region99: #{_lambda_.14} parent=90 // pred_fallthru
          _
      $region91: #{_lambda_.14} parent=86 // pred_fallthru
        _
      %173 = vnop
    $region87: #{_lambda_.14} parent=1 // pred_fallthru
      _
    // Predicated region
    $region125: #{_lambda_.14} parent=1 // pred_check
      _
    $region126: #{_lambda_.14} parent=1 // pred_check_branch
      %175 = sbr.rel (0) target = $region128
    $region127: #{_lambda_.14} parent=1 // pred_region
      _
    $region128: #{_lambda_.14} parent=1 // pred_fallthru
      _
    // Predicated region
    $region129: #{_lambda_.14} parent=1 // pred_check
      _
    $region130: #{_lambda_.14} parent=1 // pred_check_branch
      %177 = sbr.rel (0) target = $region132
    $region131: #{_lambda_.14} parent=1 // pred_region
      _
    $region132: #{_lambda_.14} parent=1 // pred_fallthru
      _
    // Predicated region
    $region133: #{_lambda_.14} parent=1 // pred_check
      _
    $region134: #{_lambda_.14} parent=1 // pred_check_branch
      %179 = sbr.rel (0) target = $region136
    $region135: #{_lambda_.14} parent=1 // pred_region
      _
    $region136: #{_lambda_.14} parent=1 // pred_fallthru
      _
    // Predicated region
    $region137: #{_lambda_.14} parent=1 // pred_check
      _
    $region138: #{_lambda_.14} parent=1 // pred_check_branch
      %181 = sbr.rel (0) target = $region140
    $region139: #{_lambda_.14} parent=1 // pred_region
      _
    $region140: #{_lambda_.14} parent=1 // pred_fallthru
      _
    // Predicated region
    $region141: #{_lambda_.14} parent=1 // pred_check
      _
    $region142: #{_lambda_.14} parent=1 // pred_check_branch
      %183 = sbr.rel (0) target = $region144
    $region143: #{_lambda_.14} parent=1 // pred_region
      _
    $region144: #{_lambda_.14} parent=1 // pred_fallthru
      _
    // Predicated region
    $region145: #{_lambda_.14} parent=1 // pred_check
      _
    $region146: #{_lambda_.14} parent=1 // pred_check_branch
      %185 = sbr.rel (0) target = $region148
    $region147: #{_lambda_.14} parent=1 // pred_region
      _
    $region148: #{_lambda_.14} parent=1 // pred_fallthru
      _
    // Predicated region
    $region149: #{_lambda_.14} parent=1 // pred_check
      _
    $region150: #{_lambda_.14} parent=1 // pred_check_branch
      %187 = sbr.rel (0) target = $region152
    $region151: #{_lambda_.14} parent=1 // pred_region
      _
    $region152: #{_lambda_.14} parent=1 // pred_fallthru
      _
    // Predicated region
    $region153: #{_lambda_.14} parent=1 // pred_check
      _
    $region154: #{_lambda_.14} parent=1 // pred_check_branch
      %189 = sbr.rel (0) target = $region156
    $region155: #{_lambda_.14} parent=1 // pred_region
      _
    $region156: #{_lambda_.14} parent=1 // pred_fallthru
      _
    %v191 = vld [vmem:[#allocation3] sm:$0xf]
    %v192 = vld [vmem:[#allocation3 + $0x4] sm:$0xf]
    %v193 = vld [vmem:[#allocation3 + $0x8] sm:$0xf]
    %v194 = vld [vmem:[#allocation3 + $0xc] sm:$0xf]
    %v195 = vld [vmem:[#allocation4] sm:$0xf]
    %v196 = vld [vmem:[#allocation4 + $0x4] sm:$0xf]
    %v197 = vld [vmem:[#allocation4 + $0x8] sm:$0xf]
    %v198 = vld [vmem:[#allocation4 + $0xc] sm:$0xf]
    %vm199 = vcmask 261120
    %v201 = vsel %vm199, %v191, 0
    %v204 = vsel %vm199, %v195, 0
    %206 = vmatprep.subr.bf16.mxu0 0
    %207 = vmatpush1.bf16.xpose.msra.mxu0 %v204
    %208 = vmatprep.subr.bf16.mxu0 0
    %209 = vmatpush1.bf16.xpose.msra.mxu0 0
    %210 = vmatprep.subr.bf16.mxu0 0
    %211 = vmatpush1.bf16.xpose.msra.mxu0 0
    %212 = vmatprep.subr.bf16.mxu0 0
    %213 = vmatpush1.bf16.xpose.msra.mxu0 0
    %214 = vmatprep.subr.bf16.mxu0 0
    %215 = vmatpush1.bf16.xpose.msra.mxu0 0
    %216 = vmatprep.subr.bf16.mxu0 0
    %217 = vmatpush1.bf16.xpose.msra.mxu0 0
    %218 = vmatprep.subr.bf16.mxu0 0
    %219 = vmatpush1.bf16.xpose.msra.mxu0 0
    %220 = vmatprep.subr.bf16.mxu0 0
    %221 = vmatpush1.bf16.xpose.msra.mxu0 0
    %222 = vmatprep.subr.bf16.mxu0 0
    %223 = vmatpush1.bf16.xpose.msra.mxu0 0
    %224 = vmatprep.subr.bf16.mxu0 0
    %225 = vmatpush1.bf16.xpose.msra.mxu0 0
    %226 = vmatprep.subr.bf16.mxu0 0
    %227 = vmatpush1.bf16.xpose.msra.mxu0 0
    %228 = vmatprep.subr.bf16.mxu0 0
    %229 = vmatpush1.bf16.xpose.msra.mxu0 0
    %230 = vmatprep.subr.bf16.mxu0 0
    %231 = vmatpush1.bf16.xpose.msra.mxu0 0
    %232 = vmatprep.subr.bf16.mxu0 0
    %233 = vmatpush1.bf16.xpose.msra.mxu0 0
    %234 = vmatprep.subr.bf16.mxu0 0
    %235 = vmatpush1.bf16.xpose.msra.mxu0 0
    %236 = vmatprep.subr.bf16.mxu0 0
    %237 = vmatpush1.bf16.xpose.msra.mxu0 0
    %238 = vmatprep.mubr.bf16.mxu0 0
    %239 = vmatmul.mubr.bf16.gmra.mrb[0].mxu0 %v201
    %v240 = vpop.f32.mrb[0].mxu0
    %v241 = vadd.f32 0.0, %v240
    %v242 = vpop.f32.mrb[0].mxu0
    %v243 = vpop.f32.mrb[0].mxu0
    %v244 = vpop.f32.mrb[0].mxu0
    %245 = vdwg.mxu0
    %v247 = vsel %vm199, %v192, 0
    %v250 = vsel %vm199, %v196, 0
    %252 = vmatprep.subr.bf16.mxu0 0
    %253 = vmatpush1.bf16.xpose.msra.mxu0 %v250
    %254 = vmatprep.subr.bf16.mxu0 0
    %255 = vmatpush1.bf16.xpose.msra.mxu0 0
    %256 = vmatprep.subr.bf16.mxu0 0
    %257 = vmatpush1.bf16.xpose.msra.mxu0 0
    %258 = vmatprep.subr.bf16.mxu0 0
    %259 = vmatpush1.bf16.xpose.msra.mxu0 0
    %260 = vmatprep.subr.bf16.mxu0 0
    %261 = vmatpush1.bf16.xpose.msra.mxu0 0
    %262 = vmatprep.subr.bf16.mxu0 0
    %263 = vmatpush1.bf16.xpose.msra.mxu0 0
    %264 = vmatprep.subr.bf16.mxu0 0
    %265 = vmatpush1.bf16.xpose.msra.mxu0 0
    %266 = vmatprep.subr.bf16.mxu0 0
    %267 = vmatpush1.bf16.xpose.msra.mxu0 0
    %268 = vmatprep.subr.bf16.mxu0 0
    %269 = vmatpush1.bf16.xpose.msra.mxu0 0
    %270 = vmatprep.subr.bf16.mxu0 0
    %271 = vmatpush1.bf16.xpose.msra.mxu0 0
    %272 = vmatprep.subr.bf16.mxu0 0
    %273 = vmatpush1.bf16.xpose.msra.mxu0 0
    %274 = vmatprep.subr.bf16.mxu0 0
    %275 = vmatpush1.bf16.xpose.msra.mxu0 0
    %276 = vmatprep.subr.bf16.mxu0 0
    %277 = vmatpush1.bf16.xpose.msra.mxu0 0
    %278 = vmatprep.subr.bf16.mxu0 0
    %279 = vmatpush1.bf16.xpose.msra.mxu0 0
    %280 = vmatprep.subr.bf16.mxu0 0
    %281 = vmatpush1.bf16.xpose.msra.mxu0 0
    %282 = vmatprep.subr.bf16.mxu0 0
    %283 = vmatpush1.bf16.xpose.msra.mxu0 0
    %284 = vmatprep.mubr.bf16.mxu0 0
    %285 = vmatmul.mubr.bf16.gmra.mrb[0].mxu0 %v247
    %v286 = vpop.f32.mrb[0].mxu0
    %v287 = vadd.f32 0.0, %v286
    %v288 = vpop.f32.mrb[0].mxu0
    %v289 = vpop.f32.mrb[0].mxu0
    %v290 = vpop.f32.mrb[0].mxu0
    %291 = vdwg.mxu0
    %v293 = vsel %vm199, %v193, 0
    %v296 = vsel %vm199, %v197, 0
    %298 = vmatprep.subr.bf16.mxu0 0
    %299 = vmatpush1.bf16.xpose.msra.mxu0 %v296
    %300 = vmatprep.subr.bf16.mxu0 0
    %301 = vmatpush1.bf16.xpose.msra.mxu0 0
    %302 = vmatprep.subr.bf16.mxu0 0
    %303 = vmatpush1.bf16.xpose.msra.mxu0 0
    %304 = vmatprep.subr.bf16.mxu0 0
    %305 = vmatpush1.bf16.xpose.msra.mxu0 0
    %306 = vmatprep.subr.bf16.mxu0 0
    %307 = vmatpush1.bf16.xpose.msra.mxu0 0
    %308 = vmatprep.subr.bf16.mxu0 0
    %309 = vmatpush1.bf16.xpose.msra.mxu0 0
    %310 = vmatprep.subr.bf16.mxu0 0
    %311 = vmatpush1.bf16.xpose.msra.mxu0 0
    %312 = vmatprep.subr.bf16.mxu0 0
    %313 = vmatpush1.bf16.xpose.msra.mxu0 0
    %314 = vmatprep.subr.bf16.mxu0 0
    %315 = vmatpush1.bf16.xpose.msra.mxu0 0
    %316 = vmatprep.subr.bf16.mxu0 0
    %317 = vmatpush1.bf16.xpose.msra.mxu0 0
    %318 = vmatprep.subr.bf16.mxu0 0
    %319 = vmatpush1.bf16.xpose.msra.mxu0 0
    %320 = vmatprep.subr.bf16.mxu0 0
    %321 = vmatpush1.bf16.xpose.msra.mxu0 0
    %322 = vmatprep.subr.bf16.mxu0 0
    %323 = vmatpush1.bf16.xpose.msra.mxu0 0
    %324 = vmatprep.subr.bf16.mxu0 0
    %325 = vmatpush1.bf16.xpose.msra.mxu0 0
    %326 = vmatprep.subr.bf16.mxu0 0
    %327 = vmatpush1.bf16.xpose.msra.mxu0 0
    %328 = vmatprep.subr.bf16.mxu0 0
    %329 = vmatpush1.bf16.xpose.msra.mxu0 0
    %330 = vmatprep.mubr.bf16.mxu0 0
    %331 = vmatmul.mubr.bf16.gmra.mrb[0].mxu0 %v293
    %v332 = vpop.f32.mrb[0].mxu0
    %v333 = vadd.f32 0.0, %v332
    %v334 = vpop.f32.mrb[0].mxu0
    %v335 = vpop.f32.mrb[0].mxu0
    %v336 = vpop.f32.mrb[0].mxu0
    %337 = vdwg.mxu0
    %v339 = vsel %vm199, %v194, 0
    %v342 = vsel %vm199, %v198, 0
    %344 = vmatprep.subr.bf16.mxu0 0
    %345 = vmatpush1.bf16.xpose.msra.mxu0 %v342
    %346 = vmatprep.subr.bf16.mxu0 0
    %347 = vmatpush1.bf16.xpose.msra.mxu0 0
    %348 = vmatprep.subr.bf16.mxu0 0
    %349 = vmatpush1.bf16.xpose.msra.mxu0 0
    %350 = vmatprep.subr.bf16.mxu0 0
    %351 = vmatpush1.bf16.xpose.msra.mxu0 0
    %352 = vmatprep.subr.bf16.mxu0 0
    %353 = vmatpush1.bf16.xpose.msra.mxu0 0
    %354 = vmatprep.subr.bf16.mxu0 0
    %355 = vmatpush1.bf16.xpose.msra.mxu0 0
    %356 = vmatprep.subr.bf16.mxu0 0
    %357 = vmatpush1.bf16.xpose.msra.mxu0 0
    %358 = vmatprep.subr.bf16.mxu0 0
    %359 = vmatpush1.bf16.xpose.msra.mxu0 0
    %360 = vmatprep.subr.bf16.mxu0 0
    %361 = vmatpush1.bf16.xpose.msra.mxu0 0
    %362 = vmatprep.subr.bf16.mxu0 0
    %363 = vmatpush1.bf16.xpose.msra.mxu0 0
    %364 = vmatprep.subr.bf16.mxu0 0
    %365 = vmatpush1.bf16.xpose.msra.mxu0 0
    %366 = vmatprep.subr.bf16.mxu0 0
    %367 = vmatpush1.bf16.xpose.msra.mxu0 0
    %368 = vmatprep.subr.bf16.mxu0 0
    %369 = vmatpush1.bf16.xpose.msra.mxu0 0
    %370 = vmatprep.subr.bf16.mxu0 0
    %371 = vmatpush1.bf16.xpose.msra.mxu0 0
    %372 = vmatprep.subr.bf16.mxu0 0
    %373 = vmatpush1.bf16.xpose.msra.mxu0 0
    %374 = vmatprep.subr.bf16.mxu0 0
    %375 = vmatpush1.bf16.xpose.msra.mxu0 0
    %376 = vmatprep.mubr.bf16.mxu0 0
    %377 = vmatmul.mubr.bf16.gmra.mrb[0].mxu0 %v339
    %v378 = vpop.f32.mrb[0].mxu0
    %v379 = vadd.f32 0.0, %v378
    %v380 = vpop.f32.mrb[0].mxu0
    %v381 = vpop.f32.mrb[0].mxu0
    %v382 = vpop.f32.mrb[0].mxu0
    %383 = vdwg.mxu0
    %v384 = vmul.f32 %v241, 0.17677669
    %v385 = vmul.f32 %v287, 0.17677669
    %v386 = vmul.f32 %v333, 0.17677669
    %v387 = vmul.f32 %v379, 0.17677669
    %vm388 = vcmask 64512
    %v389 = vsel %vm388, %v384, -inf
    %390 = vmax.xlane.f32.xlu0 %v389
    %v391 = vpop.xlane.xlu0 %390
    %v392 = vsel %vm388, %v385, -inf
    %393 = vmax.xlane.f32.xlu0 %v392
    %v394 = vpop.xlane.xlu0 %393
    %v395 = vsel %vm388, %v386, -inf
    %396 = vmax.xlane.f32.xlu0 %v395
    %v397 = vpop.xlane.xlu0 %396
    %v398 = vsel %vm388, %v387, -inf
    %399 = vmax.xlane.f32.xlu0 %v398
    %v400 = vpop.xlane.xlu0 %399
    %v401 = vsub.f32 %v384, %v391
    %v402 = vsub.f32 %v385, %v394
    %v403 = vsub.f32 %v386, %v397
    %v404 = vsub.f32 %v387, %v400
    %v405 = vmul.f32 %v401, 1.442695
    %v406 = vpow.pop %v405
    %v407 = vmul.f32 %v402, 1.442695
    %v408 = vpow.pop %v407
    %v409 = vmul.f32 %v403, 1.442695
    %v410 = vpow.pop %v409
    %v411 = vmul.f32 %v404, 1.442695
    %v412 = vpow.pop %v411
    %v413 = vsel %vm388, %v406, 0.0
    %414 = vadd.xlane.f32.xlu0 %v413
    %v415 = vpop.xlane.xlu0 %414
    %v416 = vsel %vm388, %v408, 0.0
    %417 = vadd.xlane.f32.xlu0 %v416
    %v418 = vpop.xlane.xlu0 %417
    %v419 = vsel %vm388, %v410, 0.0
    %420 = vadd.xlane.f32.xlu0 %v419
    %v421 = vpop.xlane.xlu0 %420
    %v422 = vsel %vm388, %v412, 0.0
    %423 = vadd.xlane.f32.xlu0 %v422
    %v424 = vpop.xlane.xlu0 %423
    %v425 = vrcp.pop %v415
    %v426 = vrcp.pop %v418
    %v427 = vrcp.pop %v421
    %v428 = vrcp.pop %v424
    %v429 = vmul.f32 %v406, %v425
    %v430 = vmul.f32 %v408, %v426
    %v431 = vmul.f32 %v410, %v427
    %v432 = vmul.f32 %v412, %v428
    %v433 = vpack.c.bf16 %v429, %v429
    %v434 = vpack.c.bf16 %v430, %v430
    %v435 = vpack.c.bf16 %v431, %v431
    %v436 = vpack.c.bf16 %v432, %v432
    %v437 = vld [vmem:[#allocation5] sm:$0xf]
    %v438 = vld [vmem:[#allocation5 + $0x4] sm:$0xf]
    %v439 = vld [vmem:[#allocation5 + $0x8] sm:$0xf]
    %v440 = vld [vmem:[#allocation5 + $0xc] sm:$0xf]
    %v442 = vsel %vm388, %v433, 0
    %vm444 = vcmask 1043456
    %v446 = vsel %vm444, %v437, 0
    %448 = vmatprep.subr.bf16.mxu0 0
    %449 = vmatpush1.bf16.msra.mxu0 %v446
    %450 = vmatprep.subr.bf16.mxu0 0
    %451 = vmatpush1.bf16.msra.mxu0 0
    %452 = vmatprep.subr.bf16.mxu0 0
    %453 = vmatpush1.bf16.msra.mxu0 0
    %454 = vmatprep.subr.bf16.mxu0 0
    %455 = vmatpush1.bf16.msra.mxu0 0
    %456 = vmatprep.subr.bf16.mxu0 0
    %457 = vmatpush1.bf16.msra.mxu0 0
    %458 = vmatprep.subr.bf16.mxu0 0
    %459 = vmatpush1.bf16.msra.mxu0 0
    %460 = vmatprep.subr.bf16.mxu0 0
    %461 = vmatpush1.bf16.msra.mxu0 0
    %462 = vmatprep.subr.bf16.mxu0 0
    %463 = vmatpush1.bf16.msra.mxu0 0
    %464 = vmatprep.subr.bf16.mxu0 0
    %465 = vmatpush1.bf16.msra.mxu0 0
    %466 = vmatprep.subr.bf16.mxu0 0
    %467 = vmatpush1.bf16.msra.mxu0 0
    %468 = vmatprep.subr.bf16.mxu0 0
    %469 = vmatpush1.bf16.msra.mxu0 0
    %470 = vmatprep.subr.bf16.mxu0 0
    %471 = vmatpush1.bf16.msra.mxu0 0
    %472 = vmatprep.subr.bf16.mxu0 0
    %473 = vmatpush1.bf16.msra.mxu0 0
    %474 = vmatprep.subr.bf16.mxu0 0
    %475 = vmatpush1.bf16.msra.mxu0 0
    %476 = vmatprep.subr.bf16.mxu0 0
    %477 = vmatpush1.bf16.msra.mxu0 0
    %478 = vmatprep.subr.bf16.mxu0 0
    %479 = vmatpush1.bf16.msra.mxu0 0
    %480 = vmatprep.mubr.bf16.mxu0 0
    %481 = vmatmul.mubr.bf16.gmra.mrb[0].mxu0 %v442
    %v482 = vpop.f32.mrb[0].mxu0
    %v483 = vadd.f32 0.0, %v482
    %v484 = vpop.f32.mrb[0].mxu0
    %v485 = vpop.f32.mrb[0].mxu0
    %v486 = vpop.f32.mrb[0].mxu0
    %487 = vdwg.mxu0
    %v489 = vsel %vm388, %v434, 0
    %v492 = vsel %vm444, %v438, 0
    %494 = vmatprep.subr.bf16.mxu0 0
    %495 = vmatpush1.bf16.msra.mxu0 %v492
    %496 = vmatprep.subr.bf16.mxu0 0
    %497 = vmatpush1.bf16.msra.mxu0 0
    %498 = vmatprep.subr.bf16.mxu0 0
    %499 = vmatpush1.bf16.msra.mxu0 0
    %500 = vmatprep.subr.bf16.mxu0 0
    %501 = vmatpush1.bf16.msra.mxu0 0
    %502 = vmatprep.subr.bf16.mxu0 0
    %503 = vmatpush1.bf16.msra.mxu0 0
    %504 = vmatprep.subr.bf16.mxu0 0
    %505 = vmatpush1.bf16.msra.mxu0 0
    %506 = vmatprep.subr.bf16.mxu0 0
    %507 = vmatpush1.bf16.msra.mxu0 0
    %508 = vmatprep.subr.bf16.mxu0 0
    %509 = vmatpush1.bf16.msra.mxu0 0
    %510 = vmatprep.subr.bf16.mxu0 0
    %511 = vmatpush1.bf16.msra.mxu0 0
    %512 = vmatprep.subr.bf16.mxu0 0
    %513 = vmatpush1.bf16.msra.mxu0 0
    %514 = vmatprep.subr.bf16.mxu0 0
    %515 = vmatpush1.bf16.msra.mxu0 0
    %516 = vmatprep.subr.bf16.mxu0 0
    %517 = vmatpush1.bf16.msra.mxu0 0
    %518 = vmatprep.subr.bf16.mxu0 0
    %519 = vmatpush1.bf16.msra.mxu0 0
    %520 = vmatprep.subr.bf16.mxu0 0
    %521 = vmatpush1.bf16.msra.mxu0 0
    %522 = vmatprep.subr.bf16.mxu0 0
    %523 = vmatpush1.bf16.msra.mxu0 0
    %524 = vmatprep.subr.bf16.mxu0 0
    %525 = vmatpush1.bf16.msra.mxu0 0
    %526 = vmatprep.mubr.bf16.mxu0 0
    %527 = vmatmul.mubr.bf16.gmra.mrb[0].mxu0 %v489
    %v528 = vpop.f32.mrb[0].mxu0
    %v529 = vadd.f32 0.0, %v528
    %v530 = vpop.f32.mrb[0].mxu0
    %v531 = vpop.f32.mrb[0].mxu0
    %v532 = vpop.f32.mrb[0].mxu0
    %533 = vdwg.mxu0
    %v535 = vsel %vm388, %v435, 0
    %v538 = vsel %vm444, %v439, 0
    %540 = vmatprep.subr.bf16.mxu0 0
    %541 = vmatpush1.bf16.msra.mxu0 %v538
    %542 = vmatprep.subr.bf16.mxu0 0
    %543 = vmatpush1.bf16.msra.mxu0 0
    %544 = vmatprep.subr.bf16.mxu0 0
    %545 = vmatpush1.bf16.msra.mxu0 0
    %546 = vmatprep.subr.bf16.mxu0 0
    %547 = vmatpush1.bf16.msra.mxu0 0
    %548 = vmatprep.subr.bf16.mxu0 0
    %549 = vmatpush1.bf16.msra.mxu0 0
    %550 = vmatprep.subr.bf16.mxu0 0
    %551 = vmatpush1.bf16.msra.mxu0 0
    %552 = vmatprep.subr.bf16.mxu0 0
    %553 = vmatpush1.bf16.msra.mxu0 0
    %554 = vmatprep.subr.bf16.mxu0 0
    %555 = vmatpush1.bf16.msra.mxu0 0
    %556 = vmatprep.subr.bf16.mxu0 0
    %557 = vmatpush1.bf16.msra.mxu0 0
    %558 = vmatprep.subr.bf16.mxu0 0
    %559 = vmatpush1.bf16.msra.mxu0 0
    %560 = vmatprep.subr.bf16.mxu0 0
    %561 = vmatpush1.bf16.msra.mxu0 0
    %562 = vmatprep.subr.bf16.mxu0 0
    %563 = vmatpush1.bf16.msra.mxu0 0
    %564 = vmatprep.subr.bf16.mxu0 0
    %565 = vmatpush1.bf16.msra.mxu0 0
    %566 = vmatprep.subr.bf16.mxu0 0
    %567 = vmatpush1.bf16.msra.mxu0 0
    %568 = vmatprep.subr.bf16.mxu0 0
    %569 = vmatpush1.bf16.msra.mxu0 0
    %570 = vmatprep.subr.bf16.mxu0 0
    %571 = vmatpush1.bf16.msra.mxu0 0
    %572 = vmatprep.mubr.bf16.mxu0 0
    %573 = vmatmul.mubr.bf16.gmra.mrb[0].mxu0 %v535
    %v574 = vpop.f32.mrb[0].mxu0
    %v575 = vadd.f32 0.0, %v574
    %v576 = vpop.f32.mrb[0].mxu0
    %v577 = vpop.f32.mrb[0].mxu0
    %v578 = vpop.f32.mrb[0].mxu0
    %579 = vdwg.mxu0
    %v581 = vsel %vm388, %v436, 0
    %v584 = vsel %vm444, %v440, 0
    %586 = vmatprep.subr.bf16.mxu0 0
    %587 = vmatpush1.bf16.msra.mxu0 %v584
    %588 = vmatprep.subr.bf16.mxu0 0
    %589 = vmatpush1.bf16.msra.mxu0 0
    %590 = vmatprep.subr.bf16.mxu0 0
    %591 = vmatpush1.bf16.msra.mxu0 0
    %592 = vmatprep.subr.bf16.mxu0 0
    %593 = vmatpush1.bf16.msra.mxu0 0
    %594 = vmatprep.subr.bf16.mxu0 0
    %595 = vmatpush1.bf16.msra.mxu0 0
    %596 = vmatprep.subr.bf16.mxu0 0
    %597 = vmatpush1.bf16.msra.mxu0 0
    %598 = vmatprep.subr.bf16.mxu0 0
    %599 = vmatpush1.bf16.msra.mxu0 0
    %600 = vmatprep.subr.bf16.mxu0 0
    %601 = vmatpush1.bf16.msra.mxu0 0
    %602 = vmatprep.subr.bf16.mxu0 0
    %603 = vmatpush1.bf16.msra.mxu0 0
    %604 = vmatprep.subr.bf16.mxu0 0
    %605 = vmatpush1.bf16.msra.mxu0 0
    %606 = vmatprep.subr.bf16.mxu0 0
    %607 = vmatpush1.bf16.msra.mxu0 0
    %608 = vmatprep.subr.bf16.mxu0 0
    %609 = vmatpush1.bf16.msra.mxu0 0
    %610 = vmatprep.subr.bf16.mxu0 0
    %611 = vmatpush1.bf16.msra.mxu0 0
    %612 = vmatprep.subr.bf16.mxu0 0
    %613 = vmatpush1.bf16.msra.mxu0 0
    %614 = vmatprep.subr.bf16.mxu0 0
    %615 = vmatpush1.bf16.msra.mxu0 0
    %616 = vmatprep.subr.bf16.mxu0 0
    %617 = vmatpush1.bf16.msra.mxu0 0
    %618 = vmatprep.mubr.bf16.mxu0 0
    %619 = vmatmul.mubr.bf16.gmra.mrb[0].mxu0 %v581
    %v620 = vpop.f32.mrb[0].mxu0
    %v621 = vadd.f32 0.0, %v620
    %v622 = vpop.f32.mrb[0].mxu0
    %v623 = vpop.f32.mrb[0].mxu0
    %v624 = vpop.f32.mrb[0].mxu0
    %625 = vdwg.mxu0
    %626 = vst.msk [vmem:[#allocation2] sm:$0xff] %vm199, %v483
    %627 = vst.msk [vmem:[#allocation2 + $0x8] sm:$0xff] %vm199, %v529
    %628 = vst.msk [vmem:[#allocation2 + $0x10] sm:$0xff] %vm199, %v575
    %629 = vst.msk [vmem:[#allocation2 + $0x18] sm:$0xff] %vm199, %v621
    %v630 = vld [vmem:[#allocation3] sm:$0xf]
    %v631 = vld [vmem:[#allocation3 + $0x4] sm:$0xf]
    %v632 = vld [vmem:[#allocation3 + $0x8] sm:$0xf]
    %v633 = vld [vmem:[#allocation3 + $0xc] sm:$0xf]
    %v634 = vld [vmem:[#allocation4] sm:$0xf]
    %v635 = vld [vmem:[#allocation4 + $0x4] sm:$0xf]
    %v636 = vld [vmem:[#allocation4 + $0x8] sm:$0xf]
    %v637 = vld [vmem:[#allocation4 + $0xc] sm:$0xf]
    %v639 = vunpack.c.l.b16 %v630
    %v640 = vpack.c.b16 %v639, %v639
    %641 = vrot.lane.b32.xlu0 %v640, 96
    %v642 = vpop.permute.xlu0 %641
    %v644 = vunpack.c.l.b16 %v634
    %v645 = vpack.c.b16 %v644, %v644
    %646 = vrot.lane.b32.xlu0 %v645, 96
    %v647 = vpop.permute.xlu0 %646
    %v649 = vsel %vm199, %v642, 0
    %v652 = vsel %vm199, %v647, 0
    %654 = vmatprep.subr.bf16.mxu0 0
    %655 = vmatpush1.bf16.xpose.msra.mxu0 %v652
    %656 = vmatprep.subr.bf16.mxu0 0
    %657 = vmatpush1.bf16.xpose.msra.mxu0 0
    %658 = vmatprep.subr.bf16.mxu0 0
    %659 = vmatpush1.bf16.xpose.msra.mxu0 0
    %660 = vmatprep.subr.bf16.mxu0 0
    %661 = vmatpush1.bf16.xpose.msra.mxu0 0
    %662 = vmatprep.subr.bf16.mxu0 0
    %663 = vmatpush1.bf16.xpose.msra.mxu0 0
    %664 = vmatprep.subr.bf16.mxu0 0
    %665 = vmatpush1.bf16.xpose.msra.mxu0 0
    %666 = vmatprep.subr.bf16.mxu0 0
    %667 = vmatpush1.bf16.xpose.msra.mxu0 0
    %668 = vmatprep.subr.bf16.mxu0 0
    %669 = vmatpush1.bf16.xpose.msra.mxu0 0
    %670 = vmatprep.subr.bf16.mxu0 0
    %671 = vmatpush1.bf16.xpose.msra.mxu0 0
    %672 = vmatprep.subr.bf16.mxu0 0
    %673 = vmatpush1.bf16.xpose.msra.mxu0 0
    %674 = vmatprep.subr.bf16.mxu0 0
    %675 = vmatpush1.bf16.xpose.msra.mxu0 0
    %676 = vmatprep.subr.bf16.mxu0 0
    %677 = vmatpush1.bf16.xpose.msra.mxu0 0
    %678 = vmatprep.subr.bf16.mxu0 0
    %679 = vmatpush1.bf16.xpose.msra.mxu0 0
    %680 = vmatprep.subr.bf16.mxu0 0
    %681 = vmatpush1.bf16.xpose.msra.mxu0 0
    %682 = vmatprep.subr.bf16.mxu0 0
    %683 = vmatpush1.bf16.xpose.msra.mxu0 0
    %684 = vmatprep.subr.bf16.mxu0 0
    %685 = vmatpush1.bf16.xpose.msra.mxu0 0
    %686 = vmatprep.mubr.bf16.mxu0 0
    %687 = vmatmul.mubr.bf16.gmra.mrb[0].mxu0 %v649
    %v688 = vpop.f32.mrb[0].mxu0
    %v689 = vadd.f32 0.0, %v688
    %v690 = vpop.f32.mrb[0].mxu0
    %v691 = vpop.f32.mrb[0].mxu0
    %v692 = vpop.f32.mrb[0].mxu0
    %693 = vdwg.mxu0
    %v695 = vunpack.c.l.b16 %v631
    %v696 = vpack.c.b16 %v695, %v695
    %697 = vrot.lane.b32.xlu0 %v696, 96
    %v698 = vpop.permute.xlu0 %697
    %v700 = vunpack.c.l.b16 %v635
    %v701 = vpack.c.b16 %v700, %v700
    %702 = vrot.lane.b32.xlu0 %v701, 96
    %v703 = vpop.permute.xlu0 %702
    %v705 = vsel %vm199, %v698, 0
    %v708 = vsel %vm199, %v703, 0
    %710 = vmatprep.subr.bf16.mxu0 0
    %711 = vmatpush1.bf16.xpose.msra.mxu0 %v708
    %712 = vmatprep.subr.bf16.mxu0 0
    %713 = vmatpush1.bf16.xpose.msra.mxu0 0
    %714 = vmatprep.subr.bf16.mxu0 0
    %715 = vmatpush1.bf16.xpose.msra.mxu0 0
    %716 = vmatprep.subr.bf16.mxu0 0
    %717 = vmatpush1.bf16.xpose.msra.mxu0 0
    %718 = vmatprep.subr.bf16.mxu0 0
    %719 = vmatpush1.bf16.xpose.msra.mxu0 0
    %720 = vmatprep.subr.bf16.mxu0 0
    %721 = vmatpush1.bf16.xpose.msra.mxu0 0
    %722 = vmatprep.subr.bf16.mxu0 0
    %723 = vmatpush1.bf16.xpose.msra.mxu0 0
    %724 = vmatprep.subr.bf16.mxu0 0
    %725 = vmatpush1.bf16.xpose.msra.mxu0 0
    %726 = vmatprep.subr.bf16.mxu0 0
    %727 = vmatpush1.bf16.xpose.msra.mxu0 0
    %728 = vmatprep.subr.bf16.mxu0 0
    %729 = vmatpush1.bf16.xpose.msra.mxu0 0
    %730 = vmatprep.subr.bf16.mxu0 0
    %731 = vmatpush1.bf16.xpose.msra.mxu0 0
    %732 = vmatprep.subr.bf16.mxu0 0
    %733 = vmatpush1.bf16.xpose.msra.mxu0 0
    %734 = vmatprep.subr.bf16.mxu0 0
    %735 = vmatpush1.bf16.xpose.msra.mxu0 0
    %736 = vmatprep.subr.bf16.mxu0 0
    %737 = vmatpush1.bf16.xpose.msra.mxu0 0
    %738 = vmatprep.subr.bf16.mxu0 0
    %739 = vmatpush1.bf16.xpose.msra.mxu0 0
    %740 = vmatprep.subr.bf16.mxu0 0
    %741 = vmatpush1.bf16.xpose.msra.mxu0 0
    %742 = vmatprep.mubr.bf16.mxu0 0
    %743 = vmatmul.mubr.bf16.gmra.mrb[0].mxu0 %v705
    %v744 = vpop.f32.mrb[0].mxu0
    %v745 = vadd.f32 0.0, %v744
    %v746 = vpop.f32.mrb[0].mxu0
    %v747 = vpop.f32.mrb[0].mxu0
    %v748 = vpop.f32.mrb[0].mxu0
    %749 = vdwg.mxu0
    %v751 = vunpack.c.l.b16 %v632
    %v752 = vpack.c.b16 %v751, %v751
    %753 = vrot.lane.b32.xlu0 %v752, 96
    %v754 = vpop.permute.xlu0 %753
    %v756 = vunpack.c.l.b16 %v636
    %v757 = vpack.c.b16 %v756, %v756
    %758 = vrot.lane.b32.xlu0 %v757, 96
    %v759 = vpop.permute.xlu0 %758
    %v761 = vsel %vm199, %v754, 0
    %v764 = vsel %vm199, %v759, 0
    %766 = vmatprep.subr.bf16.mxu0 0
    %767 = vmatpush1.bf16.xpose.msra.mxu0 %v764
    %768 = vmatprep.subr.bf16.mxu0 0
    %769 = vmatpush1.bf16.xpose.msra.mxu0 0
    %770 = vmatprep.subr.bf16.mxu0 0
    %771 = vmatpush1.bf16.xpose.msra.mxu0 0
    %772 = vmatprep.subr.bf16.mxu0 0
    %773 = vmatpush1.bf16.xpose.msra.mxu0 0
    %774 = vmatprep.subr.bf16.mxu0 0
    %775 = vmatpush1.bf16.xpose.msra.mxu0 0
    %776 = vmatprep.subr.bf16.mxu0 0
    %777 = vmatpush1.bf16.xpose.msra.mxu0 0
    %778 = vmatprep.subr.bf16.mxu0 0
    %779 = vmatpush1.bf16.xpose.msra.mxu0 0
    %780 = vmatprep.subr.bf16.mxu0 0
    %781 = vmatpush1.bf16.xpose.msra.mxu0 0
    %782 = vmatprep.subr.bf16.mxu0 0
    %783 = vmatpush1.bf16.xpose.msra.mxu0 0
    %784 = vmatprep.subr.bf16.mxu0 0
    %785 = vmatpush1.bf16.xpose.msra.mxu0 0
    %786 = vmatprep.subr.bf16.mxu0 0
    %787 = vmatpush1.bf16.xpose.msra.mxu0 0
    %788 = vmatprep.subr.bf16.mxu0 0
    %789 = vmatpush1.bf16.xpose.msra.mxu0 0
    %790 = vmatprep.subr.bf16.mxu0 0
    %791 = vmatpush1.bf16.xpose.msra.mxu0 0
    %792 = vmatprep.subr.bf16.mxu0 0
    %793 = vmatpush1.bf16.xpose.msra.mxu0 0
    %794 = vmatprep.subr.bf16.mxu0 0
    %795 = vmatpush1.bf16.xpose.msra.mxu0 0
    %796 = vmatprep.subr.bf16.mxu0 0
    %797 = vmatpush1.bf16.xpose.msra.mxu0 0
    %798 = vmatprep.mubr.bf16.mxu0 0
    %799 = vmatmul.mubr.bf16.gmra.mrb[0].mxu0 %v761
    %v800 = vpop.f32.mrb[0].mxu0
    %v801 = vadd.f32 0.0, %v800
    %v802 = vpop.f32.mrb[0].mxu0
    %v803 = vpop.f32.mrb[0].mxu0
    %v804 = vpop.f32.mrb[0].mxu0
    %805 = vdwg.mxu0
    %v807 = vunpack.c.l.b16 %v633
    %v808 = vpack.c.b16 %v807, %v807
    %809 = vrot.lane.b32.xlu0 %v808, 96
    %v810 = vpop.permute.xlu0 %809
    %v812 = vunpack.c.l.b16 %v637
    %v813 = vpack.c.b16 %v812, %v812
    %814 = vrot.lane.b32.xlu0 %v813, 96
    %v815 = vpop.permute.xlu0 %814
    %v817 = vsel %vm199, %v810, 0
    %v820 = vsel %vm199, %v815, 0
    %822 = vmatprep.subr.bf16.mxu0 0
    %823 = vmatpush1.bf16.xpose.msra.mxu0 %v820
    %824 = vmatprep.subr.bf16.mxu0 0
    %825 = vmatpush1.bf16.xpose.msra.mxu0 0
    %826 = vmatprep.subr.bf16.mxu0 0
    %827 = vmatpush1.bf16.xpose.msra.mxu0 0
    %828 = vmatprep.subr.bf16.mxu0 0
    %829 = vmatpush1.bf16.xpose.msra.mxu0 0
    %830 = vmatprep.subr.bf16.mxu0 0
    %831 = vmatpush1.bf16.xpose.msra.mxu0 0
    %832 = vmatprep.subr.bf16.mxu0 0
    %833 = vmatpush1.bf16.xpose.msra.mxu0 0
    %834 = vmatprep.subr.bf16.mxu0 0
    %835 = vmatpush1.bf16.xpose.msra.mxu0 0
    %836 = vmatprep.subr.bf16.mxu0 0
    %837 = vmatpush1.bf16.xpose.msra.mxu0 0
    %838 = vmatprep.subr.bf16.mxu0 0
    %839 = vmatpush1.bf16.xpose.msra.mxu0 0
    %840 = vmatprep.subr.bf16.mxu0 0
    %841 = vmatpush1.bf16.xpose.msra.mxu0 0
    %842 = vmatprep.subr.bf16.mxu0 0
    %843 = vmatpush1.bf16.xpose.msra.mxu0 0
    %844 = vmatprep.subr.bf16.mxu0 0
    %845 = vmatpush1.bf16.xpose.msra.mxu0 0
    %846 = vmatprep.subr.bf16.mxu0 0
    %847 = vmatpush1.bf16.xpose.msra.mxu0 0
    %848 = vmatprep.subr.bf16.mxu0 0
    %849 = vmatpush1.bf16.xpose.msra.mxu0 0
    %850 = vmatprep.subr.bf16.mxu0 0
    %851 = vmatpush1.bf16.xpose.msra.mxu0 0
    %852 = vmatprep.subr.bf16.mxu0 0
    %853 = vmatpush1.bf16.xpose.msra.mxu0 0
    %854 = vmatprep.mubr.bf16.mxu0 0
    %855 = vmatmul.mubr.bf16.gmra.mrb[0].mxu0 %v817
    %v856 = vpop.f32.mrb[0].mxu0
    %v857 = vadd.f32 0.0, %v856
    %v858 = vpop.f32.mrb[0].mxu0
    %v859 = vpop.f32.mrb[0].mxu0
    %v860 = vpop.f32.mrb[0].mxu0
    %861 = vdwg.mxu0
    %v862 = vmul.f32 %v689, 0.17677669
    %v863 = vmul.f32 %v745, 0.17677669
    %v864 = vmul.f32 %v801, 0.17677669
    %v865 = vmul.f32 %v857, 0.17677669
    %v866 = vsel %vm388, %v862, -inf
    %867 = vmax.xlane.f32.xlu0 %v866
    %v868 = vpop.xlane.xlu0 %867
    %v869 = vsel %vm388, %v863, -inf
    %870 = vmax.xlane.f32.xlu0 %v869
    %v871 = vpop.xlane.xlu0 %870
    %v872 = vsel %vm388, %v864, -inf
    %873 = vmax.xlane.f32.xlu0 %v872
    %v874 = vpop.xlane.xlu0 %873
    %v875 = vsel %vm388, %v865, -inf
    %876 = vmax.xlane.f32.xlu0 %v875
    %v877 = vpop.xlane.xlu0 %876
    %v878 = vsub.f32 %v862, %v868
    %v879 = vsub.f32 %v863, %v871
    %v880 = vsub.f32 %v864, %v874
    %v881 = vsub.f32 %v865, %v877
    %v882 = vmul.f32 %v878, 1.442695
    %v883 = vpow.pop %v882
    %v884 = vmul.f32 %v879, 1.442695
    %v885 = vpow.pop %v884
    %v886 = vmul.f32 %v880, 1.442695
    %v887 = vpow.pop %v886
    %v888 = vmul.f32 %v881, 1.442695
    %v889 = vpow.pop %v888
    %v890 = vsel %vm388, %v883, 0.0
    %891 = vadd.xlane.f32.xlu0 %v890
    %v892 = vpop.xlane.xlu0 %891
    %v893 = vsel %vm388, %v885, 0.0
    %894 = vadd.xlane.f32.xlu0 %v893
    %v895 = vpop.xlane.xlu0 %894
    %v896 = vsel %vm388, %v887, 0.0
    %897 = vadd.xlane.f32.xlu0 %v896
    %v898 = vpop.xlane.xlu0 %897
    %v899 = vsel %vm388, %v889, 0.0
    %900 = vadd.xlane.f32.xlu0 %v899
    %v901 = vpop.xlane.xlu0 %900
    %v902 = vrcp.pop %v892
    %v903 = vrcp.pop %v895
    %v904 = vrcp.pop %v898
    %v905 = vrcp.pop %v901
    %v906 = vmul.f32 %v883, %v902
    %v907 = vmul.f32 %v885, %v903
    %v908 = vmul.f32 %v887, %v904
    %v909 = vmul.f32 %v889, %v905
    %v910 = vpack.c.bf16 %v906, %v906
    %v911 = vpack.c.bf16 %v907, %v907
    %v912 = vpack.c.bf16 %v908, %v908
    %v913 = vpack.c.bf16 %v909, %v909
    %v914 = vld [vmem:[#allocation5] sm:$0xf]
    %v915 = vld [vmem:[#allocation5 + $0x4] sm:$0xf]
    %v916 = vld [vmem:[#allocation5 + $0x8] sm:$0xf]
    %v917 = vld [vmem:[#allocation5 + $0xc] sm:$0xf]
    %v919 = vunpack.c.l.b16 %v914
    %v920 = vpack.c.b16 %v919, %v919
    %921 = vrot.lane.b32.xlu0 %v920, 96
    %v922 = vpop.permute.xlu0 %921
    %v924 = vsel %vm388, %v910, 0
    %v927 = vsel %vm444, %v922, 0
    %929 = vmatprep.subr.bf16.mxu0 0
    %930 = vmatpush1.bf16.msra.mxu0 %v927
    %931 = vmatprep.subr.bf16.mxu0 0
    %932 = vmatpush1.bf16.msra.mxu0 0
    %933 = vmatprep.subr.bf16.mxu0 0
    %934 = vmatpush1.bf16.msra.mxu0 0
    %935 = vmatprep.subr.bf16.mxu0 0
    %936 = vmatpush1.bf16.msra.mxu0 0
    %937 = vmatprep.subr.bf16.mxu0 0
    %938 = vmatpush1.bf16.msra.mxu0 0
    %939 = vmatprep.subr.bf16.mxu0 0
    %940 = vmatpush1.bf16.msra.mxu0 0
    %941 = vmatprep.subr.bf16.mxu0 0
    %942 = vmatpush1.bf16.msra.mxu0 0
    %943 = vmatprep.subr.bf16.mxu0 0
    %944 = vmatpush1.bf16.msra.mxu0 0
    %945 = vmatprep.subr.bf16.mxu0 0
    %946 = vmatpush1.bf16.msra.mxu0 0
    %947 = vmatprep.subr.bf16.mxu0 0
    %948 = vmatpush1.bf16.msra.mxu0 0
    %949 = vmatprep.subr.bf16.mxu0 0
    %950 = vmatpush1.bf16.msra.mxu0 0
    %951 = vmatprep.subr.bf16.mxu0 0
    %952 = vmatpush1.bf16.msra.mxu0 0
    %953 = vmatprep.subr.bf16.mxu0 0
    %954 = vmatpush1.bf16.msra.mxu0 0
    %955 = vmatprep.subr.bf16.mxu0 0
    %956 = vmatpush1.bf16.msra.mxu0 0
    %957 = vmatprep.subr.bf16.mxu0 0
    %958 = vmatpush1.bf16.msra.mxu0 0
    %959 = vmatprep.subr.bf16.mxu0 0
    %960 = vmatpush1.bf16.msra.mxu0 0
    %961 = vmatprep.mubr.bf16.mxu0 0
    %962 = vmatmul.mubr.bf16.gmra.mrb[0].mxu0 %v924
    %v963 = vpop.f32.mrb[0].mxu0
    %v964 = vadd.f32 0.0, %v963
    %v965 = vpop.f32.mrb[0].mxu0
    %v966 = vpop.f32.mrb[0].mxu0
    %v967 = vpop.f32.mrb[0].mxu0
    %968 = vdwg.mxu0
    %v970 = vunpack.c.l.b16 %v915
    %v971 = vpack.c.b16 %v970, %v970
    %972 = vrot.lane.b32.xlu0 %v971, 96
    %v973 = vpop.permute.xlu0 %972
    %v975 = vsel %vm388, %v911, 0
    %v978 = vsel %vm444, %v973, 0
    %980 = vmatprep.subr.bf16.mxu0 0
    %981 = vmatpush1.bf16.msra.mxu0 %v978
    %982 = vmatprep.subr.bf16.mxu0 0
    %983 = vmatpush1.bf16.msra.mxu0 0
    %984 = vmatprep.subr.bf16.mxu0 0
    %985 = vmatpush1.bf16.msra.mxu0 0
    %986 = vmatprep.subr.bf16.mxu0 0
    %987 = vmatpush1.bf16.msra.mxu0 0
    %988 = vmatprep.subr.bf16.mxu0 0
    %989 = vmatpush1.bf16.msra.mxu0 0
    %990 = vmatprep.subr.bf16.mxu0 0
    %991 = vmatpush1.bf16.msra.mxu0 0
    %992 = vmatprep.subr.bf16.mxu0 0
    %993 = vmatpush1.bf16.msra.mxu0 0
    %994 = vmatprep.subr.bf16.mxu0 0
    %995 = vmatpush1.bf16.msra.mxu0 0
    %996 = vmatprep.subr.bf16.mxu0 0
    %997 = vmatpush1.bf16.msra.mxu0 0
    %998 = vmatprep.subr.bf16.mxu0 0
    %999 = vmatpush1.bf16.msra.mxu0 0
    %1000 = vmatprep.subr.bf16.mxu0 0
    %1001 = vmatpush1.bf16.msra.mxu0 0
    %1002 = vmatprep.subr.bf16.mxu0 0
    %1003 = vmatpush1.bf16.msra.mxu0 0
    %1004 = vmatprep.subr.bf16.mxu0 0
    %1005 = vmatpush1.bf16.msra.mxu0 0
    %1006 = vmatprep.subr.bf16.mxu0 0
    %1007 = vmatpush1.bf16.msra.mxu0 0
    %1008 = vmatprep.subr.bf16.mxu0 0
    %1009 = vmatpush1.bf16.msra.mxu0 0
    %1010 = vmatprep.subr.bf16.mxu0 0
    %1011 = vmatpush1.bf16.msra.mxu0 0
    %1012 = vmatprep.mubr.bf16.mxu0 0
    %1013 = vmatmul.mubr.bf16.gmra.mrb[0].mxu0 %v975
    %v1014 = vpop.f32.mrb[0].mxu0
    %v1015 = vadd.f32 0.0, %v1014
    %v1016 = vpop.f32.mrb[0].mxu0
    %v1017 = vpop.f32.mrb[0].mxu0
    %v1018 = vpop.f32.mrb[0].mxu0
    %1019 = vdwg.mxu0
    %v1021 = vunpack.c.l.b16 %v916
    %v1022 = vpack.c.b16 %v1021, %v1021
    %1023 = vrot.lane.b32.xlu0 %v1022, 96
    %v1024 = vpop.permute.xlu0 %1023
    %v1026 = vsel %vm388, %v912, 0
    %v1029 = vsel %vm444, %v1024, 0
    %1031 = vmatprep.subr.bf16.mxu0 0
    %1032 = vmatpush1.bf16.msra.mxu0 %v1029
    %1033 = vmatprep.subr.bf16.mxu0 0
    %1034 = vmatpush1.bf16.msra.mxu0 0
    %1035 = vmatprep.subr.bf16.mxu0 0
    %1036 = vmatpush1.bf16.msra.mxu0 0
    %1037 = vmatprep.subr.bf16.mxu0 0
    %1038 = vmatpush1.bf16.msra.mxu0 0
    %1039 = vmatprep.subr.bf16.mxu0 0
    %1040 = vmatpush1.bf16.msra.mxu0 0
    %1041 = vmatprep.subr.bf16.mxu0 0
    %1042 = vmatpush1.bf16.msra.mxu0 0
    %1043 = vmatprep.subr.bf16.mxu0 0
    %1044 = vmatpush1.bf16.msra.mxu0 0
    %1045 = vmatprep.subr.bf16.mxu0 0
    %1046 = vmatpush1.bf16.msra.mxu0 0
    %1047 = vmatprep.subr.bf16.mxu0 0
    %1048 = vmatpush1.bf16.msra.mxu0 0
    %1049 = vmatprep.subr.bf16.mxu0 0
    %1050 = vmatpush1.bf16.msra.mxu0 0
    %1051 = vmatprep.subr.bf16.mxu0 0
    %1052 = vmatpush1.bf16.msra.mxu0 0
    %1053 = vmatprep.subr.bf16.mxu0 0
    %1054 = vmatpush1.bf16.msra.mxu0 0
    %1055 = vmatprep.subr.bf16.mxu0 0
    %1056 = vmatpush1.bf16.msra.mxu0 0
    %1057 = vmatprep.subr.bf16.mxu0 0
    %1058 = vmatpush1.bf16.msra.mxu0 0
    %1059 = vmatprep.subr.bf16.mxu0 0
    %1060 = vmatpush1.bf16.msra.mxu0 0
    %1061 = vmatprep.subr.bf16.mxu0 0
    %1062 = vmatpush1.bf16.msra.mxu0 0
    %1063 = vmatprep.mubr.bf16.mxu0 0
    %1064 = vmatmul.mubr.bf16.gmra.mrb[0].mxu0 %v1026
    %v1065 = vpop.f32.mrb[0].mxu0
    %v1066 = vadd.f32 0.0, %v1065
    %v1067 = vpop.f32.mrb[0].mxu0
    %v1068 = vpop.f32.mrb[0].mxu0
    %v1069 = vpop.f32.mrb[0].mxu0
    %1070 = vdwg.mxu0
    %v1072 = vunpack.c.l.b16 %v917
    %v1073 = vpack.c.b16 %v1072, %v1072
    %1074 = vrot.lane.b32.xlu0 %v1073, 96
    %v1075 = vpop.permute.xlu0 %1074
    %v1077 = vsel %vm388, %v913, 0
    %v1080 = vsel %vm444, %v1075, 0
    %1082 = vmatprep.subr.bf16.mxu0 0
    %1083 = vmatpush1.bf16.msra.mxu0 %v1080
    %1084 = vmatprep.subr.bf16.mxu0 0
    %1085 = vmatpush1.bf16.msra.mxu0 0
    %1086 = vmatprep.subr.bf16.mxu0 0
    %1087 = vmatpush1.bf16.msra.mxu0 0
    %1088 = vmatprep.subr.bf16.mxu0 0
    %1089 = vmatpush1.bf16.msra.mxu0 0
    %1090 = vmatprep.subr.bf16.mxu0 0
    %1091 = vmatpush1.bf16.msra.mxu0 0
    %1092 = vmatprep.subr.bf16.mxu0 0
    %1093 = vmatpush1.bf16.msra.mxu0 0
    %1094 = vmatprep.subr.bf16.mxu0 0
    %1095 = vmatpush1.bf16.msra.mxu0 0
    %1096 = vmatprep.subr.bf16.mxu0 0
    %1097 = vmatpush1.bf16.msra.mxu0 0
    %1098 = vmatprep.subr.bf16.mxu0 0
    %1099 = vmatpush1.bf16.msra.mxu0 0
    %1100 = vmatprep.subr.bf16.mxu0 0
    %1101 = vmatpush1.bf16.msra.mxu0 0
    %1102 = vmatprep.subr.bf16.mxu0 0
    %1103 = vmatpush1.bf16.msra.mxu0 0
    %1104 = vmatprep.subr.bf16.mxu0 0
    %1105 = vmatpush1.bf16.msra.mxu0 0
    %1106 = vmatprep.subr.bf16.mxu0 0
    %1107 = vmatpush1.bf16.msra.mxu0 0
    %1108 = vmatprep.subr.bf16.mxu0 0
    %1109 = vmatpush1.bf16.msra.mxu0 0
    %1110 = vmatprep.subr.bf16.mxu0 0
    %1111 = vmatpush1.bf16.msra.mxu0 0
    %1112 = vmatprep.subr.bf16.mxu0 0
    %1113 = vmatpush1.bf16.msra.mxu0 0
    %1114 = vmatprep.mubr.bf16.mxu0 0
    %1115 = vmatmul.mubr.bf16.gmra.mrb[0].mxu0 %v1077
    %v1116 = vpop.f32.mrb[0].mxu0
    %v1117 = vadd.f32 0.0, %v1116
    %v1118 = vpop.f32.mrb[0].mxu0
    %v1119 = vpop.f32.mrb[0].mxu0
    %v1120 = vpop.f32.mrb[0].mxu0
    %1121 = vdwg.mxu0
    %1126 = vrot.lane.b32.xlu0 %v964, 32
    %v1127 = vpop.permute.xlu0 %1126
    %1128 = vrot.lane.b32.xlu0 %v1015, 32
    %v1129 = vpop.permute.xlu0 %1128
    %1130 = vrot.lane.b32.xlu0 %v1066, 32
    %v1131 = vpop.permute.xlu0 %1130
    %1132 = vrot.lane.b32.xlu0 %v1117, 32
    %v1133 = vpop.permute.xlu0 %1132
    %vm1138 = vcmask 523520
    %1139 = vst.msk [vmem:[#allocation2] sm:$0xff] %vm1138, %v1127
    %1140 = vst.msk [vmem:[#allocation2 + $0x8] sm:$0xff] %vm1138, %v1129
    %1141 = vst.msk [vmem:[#allocation2 + $0x10] sm:$0xff] %vm1138, %v1131
    %1142 = vst.msk [vmem:[#allocation2 + $0x18] sm:$0xff] %vm1138, %v1133
    %v1143 = vld [vmem:[#allocation3] sm:$0xf]
    %v1144 = vld [vmem:[#allocation3 + $0x4] sm:$0xf]
    %v1145 = vld [vmem:[#allocation3 + $0x8] sm:$0xf]
    %v1146 = vld [vmem:[#allocation3 + $0xc] sm:$0xf]
    %v1147 = vld [vmem:[#allocation4] sm:$0xf]
    %v1148 = vld [vmem:[#allocation4 + $0x4] sm:$0xf]
    %v1149 = vld [vmem:[#allocation4 + $0x8] sm:$0xf]
    %v1150 = vld [vmem:[#allocation4 + $0xc] sm:$0xf]
    %v1152 = vunpack.c.l.b16 %v1143
    %v1153 = vpack.c.b16 %v1152, %v1152
    %1154 = vrot.lane.b32.xlu0 %v1153, 64
    %v1155 = vpop.permute.xlu0 %1154
    %v1157 = vunpack.c.l.b16 %v1147
    %v1158 = vpack.c.b16 %v1157, %v1157
    %1159 = vrot.lane.b32.xlu0 %v1158, 64
    %v1160 = vpop.permute.xlu0 %1159
    %v1162 = vsel %vm199, %v1155, 0
    %v1165 = vsel %vm199, %v1160, 0
    %1167 = vmatprep.subr.bf16.mxu0 0
    %1168 = vmatpush1.bf16.xpose.msra.mxu0 %v1165
    %1169 = vmatprep.subr.bf16.mxu0 0
    %1170 = vmatpush1.bf16.xpose.msra.mxu0 0
    %1171 = vmatprep.subr.bf16.mxu0 0
    %1172 = vmatpush1.bf16.xpose.msra.mxu0 0
    %1173 = vmatprep.subr.bf16.mxu0 0
    %1174 = vmatpush1.bf16.xpose.msra.mxu0 0
    %1175 = vmatprep.subr.bf16.mxu0 0
    %1176 = vmatpush1.bf16.xpose.msra.mxu0 0
    %1177 = vmatprep.subr.bf16.mxu0 0
    %1178 = vmatpush1.bf16.xpose.msra.mxu0 0
    %1179 = vmatprep.subr.bf16.mxu0 0
    %1180 = vmatpush1.bf16.xpose.msra.mxu0 0
    %1181 = vmatprep.subr.bf16.mxu0 0
    %1182 = vmatpush1.bf16.xpose.msra.mxu0 0
    %1183 = vmatprep.subr.bf16.mxu0 0
    %1184 = vmatpush1.bf16.xpose.msra.mxu0 0
    %1185 = vmatprep.subr.bf16.mxu0 0
    %1186 = vmatpush1.bf16.xpose.msra.mxu0 0
    %1187 = vmatprep.subr.bf16.mxu0 0
    %1188 = vmatpush1.bf16.xpose.msra.mxu0 0
    %1189 = vmatprep.subr.bf16.mxu0 0
    %1190 = vmatpush1.bf16.xpose.msra.mxu0 0
    %1191 = vmatprep.subr.bf16.mxu0 0
    %1192 = vmatpush1.bf16.xpose.msra.mxu0 0
    %1193 = vmatprep.subr.bf16.mxu0 0
    %1194 = vmatpush1.bf16.xpose.msra.mxu0 0
    %1195 = vmatprep.subr.bf16.mxu0 0
    %1196 = vmatpush1.bf16.xpose.msra.mxu0 0
    %1197 = vmatprep.subr.bf16.mxu0 0
    %1198 = vmatpush1.bf16.xpose.msra.mxu0 0
    %1199 = vmatprep.mubr.bf16.mxu0 0
    %1200 = vmatmul.mubr.bf16.gmra.mrb[0].mxu0 %v1162
    %v1201 = vpop.f32.mrb[0].mxu0
    %v1202 = vadd.f32 0.0, %v1201
    %v1203 = vpop.f32.mrb[0].mxu0
    %v1204 = vpop.f32.mrb[0].mxu0
    %v1205 = vpop.f32.mrb[0].mxu0
    %1206 = vdwg.mxu0
    %v1208 = vunpack.c.l.b16 %v1144
    %v1209 = vpack.c.b16 %v1208, %v1208
    %1210 = vrot.lane.b32.xlu0 %v1209, 64
    %v1211 = vpop.permute.xlu0 %1210
    %v1213 = vunpack.c.l.b16 %v1148
    %v1214 = vpack.c.b16 %v1213, %v1213
    %1215 = vrot.lane.b32.xlu0 %v1214, 64
    %v1216 = vpop.permute.xlu0 %1215
    %v1218 = vsel %vm199, %v1211, 0
    %v1221 = vsel %vm199, %v1216, 0
    %1223 = vmatprep.subr.bf16.mxu0 0
    %1224 = vmatpush1.bf16.xpose.msra.mxu0 %v1221
    %1225 = vmatprep.subr.bf16.mxu0 0
    %1226 = vmatpush1.bf16.xpose.msra.mxu0 0
    %1227 = vmatprep.subr.bf16.mxu0 0
    %1228 = vmatpush1.bf16.xpose.msra.mxu0 0
    %1229 = vmatprep.subr.bf16.mxu0 0
    %1230 = vmatpush1.bf16.xpose.msra.mxu0 0
    %1231 = vmatprep.subr.bf16.mxu0 0
    %1232 = vmatpush1.bf16.xpose.msra.mxu0 0
    %1233 = vmatprep.subr.bf16.mxu0 0
    %1234 = vmatpush1.bf16.xpose.msra.mxu0 0
    %1235 = vmatprep.subr.bf16.mxu0 0
    %1236 = vmatpush1.bf16.xpose.msra.mxu0 0
    %1237 = vmatprep.subr.bf16.mxu0 0
    %1238 = vmatpush1.bf16.xpose.msra.mxu0 0
    %1239 = vmatprep.subr.bf16.mxu0 0
    %1240 = vmatpush1.bf16.xpose.msra.mxu0 0
    %1241 = vmatprep.subr.bf16.mxu0 0
    %1242 = vmatpush1.bf16.xpose.msra.mxu0 0
    %1243 = vmatprep.subr.bf16.mxu0 0
    %1244 = vmatpush1.bf16.xpose.msra.mxu0 0
    %1245 = vmatprep.subr.bf16.mxu0 0
    %1246 = vmatpush1.bf16.xpose.msra.mxu0 0
    %1247 = vmatprep.subr.bf16.mxu0 0
    %1248 = vmatpush1.bf16.xpose.msra.mxu0 0
    %1249 = vmatprep.subr.bf16.mxu0 0
    %1250 = vmatpush1.bf16.xpose.msra.mxu0 0
    %1251 = vmatprep.subr.bf16.mxu0 0
    %1252 = vmatpush1.bf16.xpose.msra.mxu0 0
    %1253 = vmatprep.subr.bf16.mxu0 0
    %1254 = vmatpush1.bf16.xpose.msra.mxu0 0
    %1255 = vmatprep.mubr.bf16.mxu0 0
    %1256 = vmatmul.mubr.bf16.gmra.mrb[0].mxu0 %v1218
    %v1257 = vpop.f32.mrb[0].mxu0
    %v1258 = vadd.f32 0.0, %v1257
    %v1259 = vpop.f32.mrb[0].mxu0
    %v1260 = vpop.f32.mrb[0].mxu0
    %v1261 = vpop.f32.mrb[0].mxu0
    %1262 = vdwg.mxu0
    %v1264 = vunpack.c.l.b16 %v1145
    %v1265 = vpack.c.b16 %v1264, %v1264
    %1266 = vrot.lane.b32.xlu0 %v1265, 64
    %v1267 = vpop.permute.xlu0 %1266
    %v1269 = vunpack.c.l.b16 %v1149
    %v1270 = vpack.c.b16 %v1269, %v1269
    %1271 = vrot.lane.b32.xlu0 %v1270, 64
    %v1272 = vpop.permute.xlu0 %1271
    %v1274 = vsel %vm199, %v1267, 0
    %v1277 = vsel %vm199, %v1272, 0
    %1279 = vmatprep.subr.bf16.mxu0 0
    %1280 = vmatpush1.bf16.xpose.msra.mxu0 %v1277
    %1281 = vmatprep.subr.bf16.mxu0 0
    %1282 = vmatpush1.bf16.xpose.msra.mxu0 0
    %1283 = vmatprep.subr.bf16.mxu0 0
    %1284 = vmatpush1.bf16.xpose.msra.mxu0 0
    %1285 = vmatprep.subr.bf16.mxu0 0
    %1286 = vmatpush1.bf16.xpose.msra.mxu0 0
    %1287 = vmatprep.subr.bf16.mxu0 0
    %1288 = vmatpush1.bf16.xpose.msra.mxu0 0
    %1289 = vmatprep.subr.bf16.mxu0 0
    %1290 = vmatpush1.bf16.xpose.msra.mxu0 0
    %1291 = vmatprep.subr.bf16.mxu0 0
    %1292 = vmatpush1.bf16.xpose.msra.mxu0 0
    %1293 = vmatprep.subr.bf16.mxu0 0
    %1294 = vmatpush1.bf16.xpose.msra.mxu0 0
    %1295 = vmatprep.subr.bf16.mxu0 0
    %1296 = vmatpush1.bf16.xpose.msra.mxu0 0
    %1297 = vmatprep.subr.bf16.mxu0 0
    %1298 = vmatpush1.bf16.xpose.msra.mxu0 0
    %1299 = vmatprep.subr.bf16.mxu0 0
    %1300 = vmatpush1.bf16.xpose.msra.mxu0 0
    %1301 = vmatprep.subr.bf16.mxu0 0
    %1302 = vmatpush1.bf16.xpose.msra.mxu0 0
    %1303 = vmatprep.subr.bf16.mxu0 0
    %1304 = vmatpush1.bf16.xpose.msra.mxu0 0
    %1305 = vmatprep.subr.bf16.mxu0 0
    %1306 = vmatpush1.bf16.xpose.msra.mxu0 0
    %1307 = vmatprep.subr.bf16.mxu0 0
    %1308 = vmatpush1.bf16.xpose.msra.mxu0 0
    %1309 = vmatprep.subr.bf16.mxu0 0
    %1310 = vmatpush1.bf16.xpose.msra.mxu0 0
    %1311 = vmatprep.mubr.bf16.mxu0 0
    %1312 = vmatmul.mubr.bf16.gmra.mrb[0].mxu0 %v1274
    %v1313 = vpop.f32.mrb[0].mxu0
    %v1314 = vadd.f32 0.0, %v1313
    %v1315 = vpop.f32.mrb[0].mxu0
    %v1316 = vpop.f32.mrb[0].mxu0
    %v1317 = vpop.f32.mrb[0].mxu0
    %1318 = vdwg.mxu0
    %v1320 = vunpack.c.l.b16 %v1146
    %v1321 = vpack.c.b16 %v1320, %v1320
    %1322 = vrot.lane.b32.xlu0 %v1321, 64
    %v1323 = vpop.permute.xlu0 %1322
    %v1325 = vunpack.c.l.b16 %v1150
    %v1326 = vpack.c.b16 %v1325, %v1325
    %1327 = vrot.lane.b32.xlu0 %v1326, 64
    %v1328 = vpop.permute.xlu0 %1327
    %v1330 = vsel %vm199, %v1323, 0
    %v1333 = vsel %vm199, %v1328, 0
    %1335 = vmatprep.subr.bf16.mxu0 0
    %1336 = vmatpush1.bf16.xpose.msra.mxu0 %v1333
    %1337 = vmatprep.subr.bf16.mxu0 0
    %1338 = vmatpush1.bf16.xpose.msra.mxu0 0
    %1339 = vmatprep.subr.bf16.mxu0 0
    %1340 = vmatpush1.bf16.xpose.msra.mxu0 0
    %1341 = vmatprep.subr.bf16.mxu0 0
    %1342 = vmatpush1.bf16.xpose.msra.mxu0 0
    %1343 = vmatprep.subr.bf16.mxu0 0
    %1344 = vmatpush1.bf16.xpose.msra.mxu0 0
    %1345 = vmatprep.subr.bf16.mxu0 0
    %1346 = vmatpush1.bf16.xpose.msra.mxu0 0
    %1347 = vmatprep.subr.bf16.mxu0 0
    %1348 = vmatpush1.bf16.xpose.msra.mxu0 0
    %1349 = vmatprep.subr.bf16.mxu0 0
    %1350 = vmatpush1.bf16.xpose.msra.mxu0 0
    %1351 = vmatprep.subr.bf16.mxu0 0
    %1352 = vmatpush1.bf16.xpose.msra.mxu0 0
    %1353 = vmatprep.subr.bf16.mxu0 0
    %1354 = vmatpush1.bf16.xpose.msra.mxu0 0
    %1355 = vmatprep.subr.bf16.mxu0 0
    %1356 = vmatpush1.bf16.xpose.msra.mxu0 0
    %1357 = vmatprep.subr.bf16.mxu0 0
    %1358 = vmatpush1.bf16.xpose.msra.mxu0 0
    %1359 = vmatprep.subr.bf16.mxu0 0
    %1360 = vmatpush1.bf16.xpose.msra.mxu0 0
    %1361 = vmatprep.subr.bf16.mxu0 0
    %1362 = vmatpush1.bf16.xpose.msra.mxu0 0
    %1363 = vmatprep.subr.bf16.mxu0 0
    %1364 = vmatpush1.bf16.xpose.msra.mxu0 0
    %1365 = vmatprep.subr.bf16.mxu0 0
    %1366 = vmatpush1.bf16.xpose.msra.mxu0 0
    %1367 = vmatprep.mubr.bf16.mxu0 0
    %1368 = vmatmul.mubr.bf16.gmra.mrb[0].mxu0 %v1330
    %v1369 = vpop.f32.mrb[0].mxu0
    %v1370 = vadd.f32 0.0, %v1369
    %v1371 = vpop.f32.mrb[0].mxu0
    %v1372 = vpop.f32.mrb[0].mxu0
    %v1373 = vpop.f32.mrb[0].mxu0
    %1374 = vdwg.mxu0
    %v1375 = vmul.f32 %v1202, 0.17677669
    %v1376 = vmul.f32 %v1258, 0.17677669
    %v1377 = vmul.f32 %v1314, 0.17677669
    %v1378 = vmul.f32 %v1370, 0.17677669
    %v1379 = vsel %vm388, %v1375, -inf
    %1380 = vmax.xlane.f32.xlu0 %v1379
    %v1381 = vpop.xlane.xlu0 %1380
    %v1382 = vsel %vm388, %v1376, -inf
    %1383 = vmax.xlane.f32.xlu0 %v1382
    %v1384 = vpop.xlane.xlu0 %1383
    %v1385 = vsel %vm388, %v1377, -inf
    %1386 = vmax.xlane.f32.xlu0 %v1385
    %v1387 = vpop.xlane.xlu0 %1386
    %v1388 = vsel %vm388, %v1378, -inf
    %1389 = vmax.xlane.f32.xlu0 %v1388
    %v1390 = vpop.xlane.xlu0 %1389
    %v1391 = vsub.f32 %v1375, %v1381
    %v1392 = vsub.f32 %v1376, %v1384
    %v1393 = vsub.f32 %v1377, %v1387
    %v1394 = vsub.f32 %v1378, %v1390
    %v1395 = vmul.f32 %v1391, 1.442695
    %v1396 = vpow.pop %v1395
    %v1397 = vmul.f32 %v1392, 1.442695
    %v1398 = vpow.pop %v1397
    %v1399 = vmul.f32 %v1393, 1.442695
    %v1400 = vpow.pop %v1399
    %v1401 = vmul.f32 %v1394, 1.442695
    %v1402 = vpow.pop %v1401
    %v1403 = vsel %vm388, %v1396, 0.0
    %1404 = vadd.xlane.f32.xlu0 %v1403
    %v1405 = vpop.xlane.xlu0 %1404
    %v1406 = vsel %vm388, %v1398, 0.0
    %1407 = vadd.xlane.f32.xlu0 %v1406
    %v1408 = vpop.xlane.xlu0 %1407
    %v1409 = vsel %vm388, %v1400, 0.0
    %1410 = vadd.xlane.f32.xlu0 %v1409
    %v1411 = vpop.xlane.xlu0 %1410
    %v1412 = vsel %vm388, %v1402, 0.0
    %1413 = vadd.xlane.f32.xlu0 %v1412
    %v1414 = vpop.xlane.xlu0 %1413
    %v1415 = vrcp.pop %v1405
    %v1416 = vrcp.pop %v1408
    %v1417 = vrcp.pop %v1411
    %v1418 = vrcp.pop %v1414
    %v1419 = vmul.f32 %v1396, %v1415
    %v1420 = vmul.f32 %v1398, %v1416
    %v1421 = vmul.f32 %v1400, %v1417
    %v1422 = vmul.f32 %v1402, %v1418
    %v1423 = vpack.c.bf16 %v1419, %v1419
    %v1424 = vpack.c.bf16 %v1420, %v1420
    %v1425 = vpack.c.bf16 %v1421, %v1421
    %v1426 = vpack.c.bf16 %v1422, %v1422
    %v1427 = vld [vmem:[#allocation5] sm:$0xf]
    %v1428 = vld [vmem:[#allocation5 + $0x4] sm:$0xf]
    %v1429 = vld [vmem:[#allocation5 + $0x8] sm:$0xf]
    %v1430 = vld [vmem:[#allocation5 + $0xc] sm:$0xf]
    %v1432 = vunpack.c.l.b16 %v1427
    %v1433 = vpack.c.b16 %v1432, %v1432
    %1434 = vrot.lane.b32.xlu0 %v1433, 64
    %v1435 = vpop.permute.xlu0 %1434
    %v1437 = vsel %vm388, %v1423, 0
    %v1440 = vsel %vm444, %v1435, 0
    %1442 = vmatprep.subr.bf16.mxu0 0
    %1443 = vmatpush1.bf16.msra.mxu0 %v1440
    %1444 = vmatprep.subr.bf16.mxu0 0
    %1445 = vmatpush1.bf16.msra.mxu0 0
    %1446 = vmatprep.subr.bf16.mxu0 0
    %1447 = vmatpush1.bf16.msra.mxu0 0
    %1448 = vmatprep.subr.bf16.mxu0 0
    %1449 = vmatpush1.bf16.msra.mxu0 0
    %1450 = vmatprep.subr.bf16.mxu0 0
    %1451 = vmatpush1.bf16.msra.mxu0 0
    %1452 = vmatprep.subr.bf16.mxu0 0
    %1453 = vmatpush1.bf16.msra.mxu0 0
    %1454 = vmatprep.subr.bf16.mxu0 0
    %1455 = vmatpush1.bf16.msra.mxu0 0
    %1456 = vmatprep.subr.bf16.mxu0 0
    %1457 = vmatpush1.bf16.msra.mxu0 0
    %1458 = vmatprep.subr.bf16.mxu0 0
    %1459 = vmatpush1.bf16.msra.mxu0 0
    %1460 = vmatprep.subr.bf16.mxu0 0
    %1461 = vmatpush1.bf16.msra.mxu0 0
    %1462 = vmatprep.subr.bf16.mxu0 0
    %1463 = vmatpush1.bf16.msra.mxu0 0
    %1464 = vmatprep.subr.bf16.mxu0 0
    %1465 = vmatpush1.bf16.msra.mxu0 0
    %1466 = vmatprep.subr.bf16.mxu0 0
    %1467 = vmatpush1.bf16.msra.mxu0 0
    %1468 = vmatprep.subr.bf16.mxu0 0
    %1469 = vmatpush1.bf16.msra.mxu0 0
    %1470 = vmatprep.subr.bf16.mxu0 0
    %1471 = vmatpush1.bf16.msra.mxu0 0
    %1472 = vmatprep.subr.bf16.mxu0 0
    %1473 = vmatpush1.bf16.msra.mxu0 0
    %1474 = vmatprep.mubr.bf16.mxu0 0
    %1475 = vmatmul.mubr.bf16.gmra.mrb[0].mxu0 %v1437
    %v1476 = vpop.f32.mrb[0].mxu0
    %v1477 = vadd.f32 0.0, %v1476
    %v1478 = vpop.f32.mrb[0].mxu0
    %v1479 = vpop.f32.mrb[0].mxu0
    %v1480 = vpop.f32.mrb[0].mxu0
    %1481 = vdwg.mxu0
    %v1483 = vunpack.c.l.b16 %v1428
    %v1484 = vpack.c.b16 %v1483, %v1483
    %1485 = vrot.lane.b32.xlu0 %v1484, 64
    %v1486 = vpop.permute.xlu0 %1485
    %v1488 = vsel %vm388, %v1424, 0
    %v1491 = vsel %vm444, %v1486, 0
    %1493 = vmatprep.subr.bf16.mxu0 0
    %1494 = vmatpush1.bf16.msra.mxu0 %v1491
    %1495 = vmatprep.subr.bf16.mxu0 0
    %1496 = vmatpush1.bf16.msra.mxu0 0
    %1497 = vmatprep.subr.bf16.mxu0 0
    %1498 = vmatpush1.bf16.msra.mxu0 0
    %1499 = vmatprep.subr.bf16.mxu0 0
    %1500 = vmatpush1.bf16.msra.mxu0 0
    %1501 = vmatprep.subr.bf16.mxu0 0
    %1502 = vmatpush1.bf16.msra.mxu0 0
    %1503 = vmatprep.subr.bf16.mxu0 0
    %1504 = vmatpush1.bf16.msra.mxu0 0
    %1505 = vmatprep.subr.bf16.mxu0 0
    %1506 = vmatpush1.bf16.msra.mxu0 0
    %1507 = vmatprep.subr.bf16.mxu0 0
    %1508 = vmatpush1.bf16.msra.mxu0 0
    %1509 = vmatprep.subr.bf16.mxu0 0
    %1510 = vmatpush1.bf16.msra.mxu0 0
    %1511 = vmatprep.subr.bf16.mxu0 0
    %1512 = vmatpush1.bf16.msra.mxu0 0
    %1513 = vmatprep.subr.bf16.mxu0 0
    %1514 = vmatpush1.bf16.msra.mxu0 0
    %1515 = vmatprep.subr.bf16.mxu0 0
    %1516 = vmatpush1.bf16.msra.mxu0 0
    %1517 = vmatprep.subr.bf16.mxu0 0
    %1518 = vmatpush1.bf16.msra.mxu0 0
    %1519 = vmatprep.subr.bf16.mxu0 0
    %1520 = vmatpush1.bf16.msra.mxu0 0
    %1521 = vmatprep.subr.bf16.mxu0 0
    %1522 = vmatpush1.bf16.msra.mxu0 0
    %1523 = vmatprep.subr.bf16.mxu0 0
    %1524 = vmatpush1.bf16.msra.mxu0 0
    %1525 = vmatprep.mubr.bf16.mxu0 0
    %1526 = vmatmul.mubr.bf16.gmra.mrb[0].mxu0 %v1488
    %v1527 = vpop.f32.mrb[0].mxu0
    %v1528 = vadd.f32 0.0, %v1527
    %v1529 = vpop.f32.mrb[0].mxu0
    %v1530 = vpop.f32.mrb[0].mxu0
    %v1531 = vpop.f32.mrb[0].mxu0
    %1532 = vdwg.mxu0
    %v1534 = vunpack.c.l.b16 %v1429
    %v1535 = vpack.c.b16 %v1534, %v1534
    %1536 = vrot.lane.b32.xlu0 %v1535, 64
    %v1537 = vpop.permute.xlu0 %1536
    %v1539 = vsel %vm388, %v1425, 0
    %v1542 = vsel %vm444, %v1537, 0
    %1544 = vmatprep.subr.bf16.mxu0 0
    %1545 = vmatpush1.bf16.msra.mxu0 %v1542
    %1546 = vmatprep.subr.bf16.mxu0 0
    %1547 = vmatpush1.bf16.msra.mxu0 0
    %1548 = vmatprep.subr.bf16.mxu0 0
    %1549 = vmatpush1.bf16.msra.mxu0 0
    %1550 = vmatprep.subr.bf16.mxu0 0
    %1551 = vmatpush1.bf16.msra.mxu0 0
    %1552 = vmatprep.subr.bf16.mxu0 0
    %1553 = vmatpush1.bf16.msra.mxu0 0
    %1554 = vmatprep.subr.bf16.mxu0 0
    %1555 = vmatpush1.bf16.msra.mxu0 0
    %1556 = vmatprep.subr.bf16.mxu0 0
    %1557 = vmatpush1.bf16.msra.mxu0 0
    %1558 = vmatprep.subr.bf16.mxu0 0
    %1559 = vmatpush1.bf16.msra.mxu0 0
    %1560 = vmatprep.subr.bf16.mxu0 0
    %1561 = vmatpush1.bf16.msra.mxu0 0
    %1562 = vmatprep.subr.bf16.mxu0 0
    %1563 = vmatpush1.bf16.msra.mxu0 0
    %1564 = vmatprep.subr.bf16.mxu0 0
    %1565 = vmatpush1.bf16.msra.mxu0 0
    %1566 = vmatprep.subr.bf16.mxu0 0
    %1567 = vmatpush1.bf16.msra.mxu0 0
    %1568 = vmatprep.subr.bf16.mxu0 0
    %1569 = vmatpush1.bf16.msra.mxu0 0
    %1570 = vmatprep.subr.bf16.mxu0 0
    %1571 = vmatpush1.bf16.msra.mxu0 0
    %1572 = vmatprep.subr.bf16.mxu0 0
    %1573 = vmatpush1.bf16.msra.mxu0 0
    %1574 = vmatprep.subr.bf16.mxu0 0
    %1575 = vmatpush1.bf16.msra.mxu0 0
    %1576 = vmatprep.mubr.bf16.mxu0 0
    %1577 = vmatmul.mubr.bf16.gmra.mrb[0].mxu0 %v1539
    %v1578 = vpop.f32.mrb[0].mxu0
    %v1579 = vadd.f32 0.0, %v1578
    %v1580 = vpop.f32.mrb[0].mxu0
    %v1581 = vpop.f32.mrb[0].mxu0
    %v1582 = vpop.f32.mrb[0].mxu0
    %1583 = vdwg.mxu0
    %v1585 = vunpack.c.l.b16 %v1430
    %v1586 = vpack.c.b16 %v1585, %v1585
    %1587 = vrot.lane.b32.xlu0 %v1586, 64
    %v1588 = vpop.permute.xlu0 %1587
    %v1590 = vsel %vm388, %v1426, 0
    %v1593 = vsel %vm444, %v1588, 0
    %1595 = vmatprep.subr.bf16.mxu0 0
    %1596 = vmatpush1.bf16.msra.mxu0 %v1593
    %1597 = vmatprep.subr.bf16.mxu0 0
    %1598 = vmatpush1.bf16.msra.mxu0 0
    %1599 = vmatprep.subr.bf16.mxu0 0
    %1600 = vmatpush1.bf16.msra.mxu0 0
    %1601 = vmatprep.subr.bf16.mxu0 0
    %1602 = vmatpush1.bf16.msra.mxu0 0
    %1603 = vmatprep.subr.bf16.mxu0 0
    %1604 = vmatpush1.bf16.msra.mxu0 0
    %1605 = vmatprep.subr.bf16.mxu0 0
    %1606 = vmatpush1.bf16.msra.mxu0 0
    %1607 = vmatprep.subr.bf16.mxu0 0
    %1608 = vmatpush1.bf16.msra.mxu0 0
    %1609 = vmatprep.subr.bf16.mxu0 0
    %1610 = vmatpush1.bf16.msra.mxu0 0
    %1611 = vmatprep.subr.bf16.mxu0 0
    %1612 = vmatpush1.bf16.msra.mxu0 0
    %1613 = vmatprep.subr.bf16.mxu0 0
    %1614 = vmatpush1.bf16.msra.mxu0 0
    %1615 = vmatprep.subr.bf16.mxu0 0
    %1616 = vmatpush1.bf16.msra.mxu0 0
    %1617 = vmatprep.subr.bf16.mxu0 0
    %1618 = vmatpush1.bf16.msra.mxu0 0
    %1619 = vmatprep.subr.bf16.mxu0 0
    %1620 = vmatpush1.bf16.msra.mxu0 0
    %1621 = vmatprep.subr.bf16.mxu0 0
    %1622 = vmatpush1.bf16.msra.mxu0 0
    %1623 = vmatprep.subr.bf16.mxu0 0
    %1624 = vmatpush1.bf16.msra.mxu0 0
    %1625 = vmatprep.subr.bf16.mxu0 0
    %1626 = vmatpush1.bf16.msra.mxu0 0
    %1627 = vmatprep.mubr.bf16.mxu0 0
    %1628 = vmatmul.mubr.bf16.gmra.mrb[0].mxu0 %v1590
    %v1629 = vpop.f32.mrb[0].mxu0
    %v1630 = vadd.f32 0.0, %v1629
    %v1631 = vpop.f32.mrb[0].mxu0
    %v1632 = vpop.f32.mrb[0].mxu0
    %v1633 = vpop.f32.mrb[0].mxu0
    %1634 = vdwg.mxu0
    %1639 = vrot.lane.b32.xlu0 %v1477, 64
    %v1640 = vpop.permute.xlu0 %1639
    %1641 = vrot.lane.b32.xlu0 %v1528, 64
    %v1642 = vpop.permute.xlu0 %1641
    %1643 = vrot.lane.b32.xlu0 %v1579, 64
    %v1644 = vpop.permute.xlu0 %1643
    %1645 = vrot.lane.b32.xlu0 %v1630, 64
    %v1646 = vpop.permute.xlu0 %1645
    %vm1651 = vcmask 785920
    %1652 = vst.msk [vmem:[#allocation2] sm:$0xff] %vm1651, %v1640
    %1653 = vst.msk [vmem:[#allocation2 + $0x8] sm:$0xff] %vm1651, %v1642
    %1654 = vst.msk [vmem:[#allocation2 + $0x10] sm:$0xff] %vm1651, %v1644
    %1655 = vst.msk [vmem:[#allocation2 + $0x18] sm:$0xff] %vm1651, %v1646
    %v1656 = vld [vmem:[#allocation3] sm:$0xf]
    %v1657 = vld [vmem:[#allocation3 + $0x4] sm:$0xf]
    %v1658 = vld [vmem:[#allocation3 + $0x8] sm:$0xf]
    %v1659 = vld [vmem:[#allocation3 + $0xc] sm:$0xf]
    %v1660 = vld [vmem:[#allocation4] sm:$0xf]
    %v1661 = vld [vmem:[#allocation4 + $0x4] sm:$0xf]
    %v1662 = vld [vmem:[#allocation4 + $0x8] sm:$0xf]
    %v1663 = vld [vmem:[#allocation4 + $0xc] sm:$0xf]
    %v1665 = vunpack.c.l.b16 %v1656
    %v1666 = vpack.c.b16 %v1665, %v1665
    %1667 = vrot.lane.b32.xlu0 %v1666, 32
    %v1668 = vpop.permute.xlu0 %1667
    %v1670 = vunpack.c.l.b16 %v1660
    %v1671 = vpack.c.b16 %v1670, %v1670
    %1672 = vrot.lane.b32.xlu0 %v1671, 32
    %v1673 = vpop.permute.xlu0 %1672
    %v1675 = vsel %vm199, %v1668, 0
    %v1678 = vsel %vm199, %v1673, 0
    %1680 = vmatprep.subr.bf16.mxu0 0
    %1681 = vmatpush1.bf16.xpose.msra.mxu0 %v1678
    %1682 = vmatprep.subr.bf16.mxu0 0
    %1683 = vmatpush1.bf16.xpose.msra.mxu0 0
    %1684 = vmatprep.subr.bf16.mxu0 0
    %1685 = vmatpush1.bf16.xpose.msra.mxu0 0
    %1686 = vmatprep.subr.bf16.mxu0 0
    %1687 = vmatpush1.bf16.xpose.msra.mxu0 0
    %1688 = vmatprep.subr.bf16.mxu0 0
    %1689 = vmatpush1.bf16.xpose.msra.mxu0 0
    %1690 = vmatprep.subr.bf16.mxu0 0
    %1691 = vmatpush1.bf16.xpose.msra.mxu0 0
    %1692 = vmatprep.subr.bf16.mxu0 0
    %1693 = vmatpush1.bf16.xpose.msra.mxu0 0
    %1694 = vmatprep.subr.bf16.mxu0 0
    %1695 = vmatpush1.bf16.xpose.msra.mxu0 0
    %1696 = vmatprep.subr.bf16.mxu0 0
    %1697 = vmatpush1.bf16.xpose.msra.mxu0 0
    %1698 = vmatprep.subr.bf16.mxu0 0
    %1699 = vmatpush1.bf16.xpose.msra.mxu0 0
    %1700 = vmatprep.subr.bf16.mxu0 0
    %1701 = vmatpush1.bf16.xpose.msra.mxu0 0
    %1702 = vmatprep.subr.bf16.mxu0 0
    %1703 = vmatpush1.bf16.xpose.msra.mxu0 0
    %1704 = vmatprep.subr.bf16.mxu0 0
    %1705 = vmatpush1.bf16.xpose.msra.mxu0 0
    %1706 = vmatprep.subr.bf16.mxu0 0
    %1707 = vmatpush1.bf16.xpose.msra.mxu0 0
    %1708 = vmatprep.subr.bf16.mxu0 0
    %1709 = vmatpush1.bf16.xpose.msra.mxu0 0
    %1710 = vmatprep.subr.bf16.mxu0 0
    %1711 = vmatpush1.bf16.xpose.msra.mxu0 0
    %1712 = vmatprep.mubr.bf16.mxu0 0
    %1713 = vmatmul.mubr.bf16.gmra.mrb[0].mxu0 %v1675
    %v1714 = vpop.f32.mrb[0].mxu0
    %v1715 = vadd.f32 0.0, %v1714
    %v1716 = vpop.f32.mrb[0].mxu0
    %v1717 = vpop.f32.mrb[0].mxu0
    %v1718 = vpop.f32.mrb[0].mxu0
    %1719 = vdwg.mxu0
    %v1721 = vunpack.c.l.b16 %v1657
    %v1722 = vpack.c.b16 %v1721, %v1721
    %1723 = vrot.lane.b32.xlu0 %v1722, 32
    %v1724 = vpop.permute.xlu0 %1723
    %v1726 = vunpack.c.l.b16 %v1661
    %v1727 = vpack.c.b16 %v1726, %v1726
    %1728 = vrot.lane.b32.xlu0 %v1727, 32
    %v1729 = vpop.permute.xlu0 %1728
    %v1731 = vsel %vm199, %v1724, 0
    %v1734 = vsel %vm199, %v1729, 0
    %1736 = vmatprep.subr.bf16.mxu0 0
    %1737 = vmatpush1.bf16.xpose.msra.mxu0 %v1734
    %1738 = vmatprep.subr.bf16.mxu0 0
    %1739 = vmatpush1.bf16.xpose.msra.mxu0 0
    %1740 = vmatprep.subr.bf16.mxu0 0
    %1741 = vmatpush1.bf16.xpose.msra.mxu0 0
    %1742 = vmatprep.subr.bf16.mxu0 0
    %1743 = vmatpush1.bf16.xpose.msra.mxu0 0
    %1744 = vmatprep.subr.bf16.mxu0 0
    %1745 = vmatpush1.bf16.xpose.msra.mxu0 0
    %1746 = vmatprep.subr.bf16.mxu0 0
    %1747 = vmatpush1.bf16.xpose.msra.mxu0 0
    %1748 = vmatprep.subr.bf16.mxu0 0
    %1749 = vmatpush1.bf16.xpose.msra.mxu0 0
    %1750 = vmatprep.subr.bf16.mxu0 0
    %1751 = vmatpush1.bf16.xpose.msra.mxu0 0
    %1752 = vmatprep.subr.bf16.mxu0 0
    %1753 = vmatpush1.bf16.xpose.msra.mxu0 0
    %1754 = vmatprep.subr.bf16.mxu0 0
    %1755 = vmatpush1.bf16.xpose.msra.mxu0 0
    %1756 = vmatprep.subr.bf16.mxu0 0
    %1757 = vmatpush1.bf16.xpose.msra.mxu0 0
    %1758 = vmatprep.subr.bf16.mxu0 0
    %1759 = vmatpush1.bf16.xpose.msra.mxu0 0
    %1760 = vmatprep.subr.bf16.mxu0 0
    %1761 = vmatpush1.bf16.xpose.msra.mxu0 0
    %1762 = vmatprep.subr.bf16.mxu0 0
    %1763 = vmatpush1.bf16.xpose.msra.mxu0 0
    %1764 = vmatprep.subr.bf16.mxu0 0
    %1765 = vmatpush1.bf16.xpose.msra.mxu0 0
    %1766 = vmatprep.subr.bf16.mxu0 0
    %1767 = vmatpush1.bf16.xpose.msra.mxu0 0
    %1768 = vmatprep.mubr.bf16.mxu0 0
    %1769 = vmatmul.mubr.bf16.gmra.mrb[0].mxu0 %v1731
    %v1770 = vpop.f32.mrb[0].mxu0
    %v1771 = vadd.f32 0.0, %v1770
    %v1772 = vpop.f32.mrb[0].mxu0
    %v1773 = vpop.f32.mrb[0].mxu0
    %v1774 = vpop.f32.mrb[0].mxu0
    %1775 = vdwg.mxu0
    %v1777 = vunpack.c.l.b16 %v1658
    %v1778 = vpack.c.b16 %v1777, %v1777
    %1779 = vrot.lane.b32.xlu0 %v1778, 32
    %v1780 = vpop.permute.xlu0 %1779
    %v1782 = vunpack.c.l.b16 %v1662
    %v1783 = vpack.c.b16 %v1782, %v1782
    %1784 = vrot.lane.b32.xlu0 %v1783, 32
    %v1785 = vpop.permute.xlu0 %1784
    %v1787 = vsel %vm199, %v1780, 0
    %v1790 = vsel %vm199, %v1785, 0
    %1792 = vmatprep.subr.bf16.mxu0 0
    %1793 = vmatpush1.bf16.xpose.msra.mxu0 %v1790
    %1794 = vmatprep.subr.bf16.mxu0 0
    %1795 = vmatpush1.bf16.xpose.msra.mxu0 0
    %1796 = vmatprep.subr.bf16.mxu0 0
    %1797 = vmatpush1.bf16.xpose.msra.mxu0 0
    %1798 = vmatprep.subr.bf16.mxu0 0
    %1799 = vmatpush1.bf16.xpose.msra.mxu0 0
    %1800 = vmatprep.subr.bf16.mxu0 0
    %1801 = vmatpush1.bf16.xpose.msra.mxu0 0
    %1802 = vmatprep.subr.bf16.mxu0 0
    %1803 = vmatpush1.bf16.xpose.msra.mxu0 0
    %1804 = vmatprep.subr.bf16.mxu0 0
    %1805 = vmatpush1.bf16.xpose.msra.mxu0 0
    %1806 = vmatprep.subr.bf16.mxu0 0
    %1807 = vmatpush1.bf16.xpose.msra.mxu0 0
    %1808 = vmatprep.subr.bf16.mxu0 0
    %1809 = vmatpush1.bf16.xpose.msra.mxu0 0
    %1810 = vmatprep.subr.bf16.mxu0 0
    %1811 = vmatpush1.bf16.xpose.msra.mxu0 0
    %1812 = vmatprep.subr.bf16.mxu0 0
    %1813 = vmatpush1.bf16.xpose.msra.mxu0 0
    %1814 = vmatprep.subr.bf16.mxu0 0
    %1815 = vmatpush1.bf16.xpose.msra.mxu0 0
    %1816 = vmatprep.subr.bf16.mxu0 0
    %1817 = vmatpush1.bf16.xpose.msra.mxu0 0
    %1818 = vmatprep.subr.bf16.mxu0 0
    %1819 = vmatpush1.bf16.xpose.msra.mxu0 0
    %1820 = vmatprep.subr.bf16.mxu0 0
    %1821 = vmatpush1.bf16.xpose.msra.mxu0 0
    %1822 = vmatprep.subr.bf16.mxu0 0
    %1823 = vmatpush1.bf16.xpose.msra.mxu0 0
    %1824 = vmatprep.mubr.bf16.mxu0 0
    %1825 = vmatmul.mubr.bf16.gmra.mrb[0].mxu0 %v1787
    %v1826 = vpop.f32.mrb[0].mxu0
    %v1827 = vadd.f32 0.0, %v1826
    %v1828 = vpop.f32.mrb[0].mxu0
    %v1829 = vpop.f32.mrb[0].mxu0
    %v1830 = vpop.f32.mrb[0].mxu0
    %1831 = vdwg.mxu0
    %v1833 = vunpack.c.l.b16 %v1659
    %v1834 = vpack.c.b16 %v1833, %v1833
    %1835 = vrot.lane.b32.xlu0 %v1834, 32
    %v1836 = vpop.permute.xlu0 %1835
    %v1838 = vunpack.c.l.b16 %v1663
    %v1839 = vpack.c.b16 %v1838, %v1838
    %1840 = vrot.lane.b32.xlu0 %v1839, 32
    %v1841 = vpop.permute.xlu0 %1840
    %v1843 = vsel %vm199, %v1836, 0
    %v1846 = vsel %vm199, %v1841, 0
    %1848 = vmatprep.subr.bf16.mxu0 0
    %1849 = vmatpush1.bf16.xpose.msra.mxu0 %v1846
    %1850 = vmatprep.subr.bf16.mxu0 0
    %1851 = vmatpush1.bf16.xpose.msra.mxu0 0
    %1852 = vmatprep.subr.bf16.mxu0 0
    %1853 = vmatpush1.bf16.xpose.msra.mxu0 0
    %1854 = vmatprep.subr.bf16.mxu0 0
    %1855 = vmatpush1.bf16.xpose.msra.mxu0 0
    %1856 = vmatprep.subr.bf16.mxu0 0
    %1857 = vmatpush1.bf16.xpose.msra.mxu0 0
    %1858 = vmatprep.subr.bf16.mxu0 0
    %1859 = vmatpush1.bf16.xpose.msra.mxu0 0
    %1860 = vmatprep.subr.bf16.mxu0 0
    %1861 = vmatpush1.bf16.xpose.msra.mxu0 0
    %1862 = vmatprep.subr.bf16.mxu0 0
    %1863 = vmatpush1.bf16.xpose.msra.mxu0 0
    %1864 = vmatprep.subr.bf16.mxu0 0
    %1865 = vmatpush1.bf16.xpose.msra.mxu0 0
    %1866 = vmatprep.subr.bf16.mxu0 0
    %1867 = vmatpush1.bf16.xpose.msra.mxu0 0
    %1868 = vmatprep.subr.bf16.mxu0 0
    %1869 = vmatpush1.bf16.xpose.msra.mxu0 0
    %1870 = vmatprep.subr.bf16.mxu0 0
    %1871 = vmatpush1.bf16.xpose.msra.mxu0 0
    %1872 = vmatprep.subr.bf16.mxu0 0
    %1873 = vmatpush1.bf16.xpose.msra.mxu0 0
    %1874 = vmatprep.subr.bf16.mxu0 0
    %1875 = vmatpush1.bf16.xpose.msra.mxu0 0
    %1876 = vmatprep.subr.bf16.mxu0 0
    %1877 = vmatpush1.bf16.xpose.msra.mxu0 0
    %1878 = vmatprep.subr.bf16.mxu0 0
    %1879 = vmatpush1.bf16.xpose.msra.mxu0 0
    %1880 = vmatprep.mubr.bf16.mxu0 0
    %1881 = vmatmul.mubr.bf16.gmra.mrb[0].mxu0 %v1843
    %v1882 = vpop.f32.mrb[0].mxu0
    %v1883 = vadd.f32 0.0, %v1882
    %v1884 = vpop.f32.mrb[0].mxu0
    %v1885 = vpop.f32.mrb[0].mxu0
    %v1886 = vpop.f32.mrb[0].mxu0
    %1887 = vdwg.mxu0
    %v1888 = vmul.f32 %v1715, 0.17677669
    %v1889 = vmul.f32 %v1771, 0.17677669
    %v1890 = vmul.f32 %v1827, 0.17677669
    %v1891 = vmul.f32 %v1883, 0.17677669
    %v1892 = vsel %vm388, %v1888, -inf
    %1893 = vmax.xlane.f32.xlu0 %v1892
    %v1894 = vpop.xlane.xlu0 %1893
    %v1895 = vsel %vm388, %v1889, -inf
    %1896 = vmax.xlane.f32.xlu0 %v1895
    %v1897 = vpop.xlane.xlu0 %1896
    %v1898 = vsel %vm388, %v1890, -inf
    %1899 = vmax.xlane.f32.xlu0 %v1898
    %v1900 = vpop.xlane.xlu0 %1899
    %v1901 = vsel %vm388, %v1891, -inf
    %1902 = vmax.xlane.f32.xlu0 %v1901
    %v1903 = vpop.xlane.xlu0 %1902
    %v1904 = vsub.f32 %v1888, %v1894
    %v1905 = vsub.f32 %v1889, %v1897
    %v1906 = vsub.f32 %v1890, %v1900
    %v1907 = vsub.f32 %v1891, %v1903
    %v1908 = vmul.f32 %v1904, 1.442695
    %v1909 = vpow.pop %v1908
    %v1910 = vmul.f32 %v1905, 1.442695
    %v1911 = vpow.pop %v1910
    %v1912 = vmul.f32 %v1906, 1.442695
    %v1913 = vpow.pop %v1912
    %v1914 = vmul.f32 %v1907, 1.442695
    %v1915 = vpow.pop %v1914
    %v1916 = vsel %vm388, %v1909, 0.0
    %1917 = vadd.xlane.f32.xlu0 %v1916
    %v1918 = vpop.xlane.xlu0 %1917
    %v1919 = vsel %vm388, %v1911, 0.0
    %1920 = vadd.xlane.f32.xlu0 %v1919
    %v1921 = vpop.xlane.xlu0 %1920
    %v1922 = vsel %vm388, %v1913, 0.0
    %1923 = vadd.xlane.f32.xlu0 %v1922
    %v1924 = vpop.xlane.xlu0 %1923
    %v1925 = vsel %vm388, %v1915, 0.0
    %1926 = vadd.xlane.f32.xlu0 %v1925
    %v1927 = vpop.xlane.xlu0 %1926
    %v1928 = vrcp.pop %v1918
    %v1929 = vrcp.pop %v1921
    %v1930 = vrcp.pop %v1924
    %v1931 = vrcp.pop %v1927
    %v1932 = vmul.f32 %v1909, %v1928
    %v1933 = vmul.f32 %v1911, %v1929
    %v1934 = vmul.f32 %v1913, %v1930
    %v1935 = vmul.f32 %v1915, %v1931
    %v1936 = vpack.c.bf16 %v1932, %v1932
    %v1937 = vpack.c.bf16 %v1933, %v1933
    %v1938 = vpack.c.bf16 %v1934, %v1934
    %v1939 = vpack.c.bf16 %v1935, %v1935
    %v1940 = vld [vmem:[#allocation5] sm:$0xf]
    %v1941 = vld [vmem:[#allocation5 + $0x4] sm:$0xf]
    %v1942 = vld [vmem:[#allocation5 + $0x8] sm:$0xf]
    %v1943 = vld [vmem:[#allocation5 + $0xc] sm:$0xf]
    %v1945 = vunpack.c.l.b16 %v1940
    %v1946 = vpack.c.b16 %v1945, %v1945
    %1947 = vrot.lane.b32.xlu0 %v1946, 32
    %v1948 = vpop.permute.xlu0 %1947
    %v1950 = vsel %vm388, %v1936, 0
    %v1953 = vsel %vm444, %v1948, 0
    %1955 = vmatprep.subr.bf16.mxu0 0
    %1956 = vmatpush1.bf16.msra.mxu0 %v1953
    %1957 = vmatprep.subr.bf16.mxu0 0
    %1958 = vmatpush1.bf16.msra.mxu0 0
    %1959 = vmatprep.subr.bf16.mxu0 0
    %1960 = vmatpush1.bf16.msra.mxu0 0
    %1961 = vmatprep.subr.bf16.mxu0 0
    %1962 = vmatpush1.bf16.msra.mxu0 0
    %1963 = vmatprep.subr.bf16.mxu0 0
    %1964 = vmatpush1.bf16.msra.mxu0 0
    %1965 = vmatprep.subr.bf16.mxu0 0
    %1966 = vmatpush1.bf16.msra.mxu0 0
    %1967 = vmatprep.subr.bf16.mxu0 0
    %1968 = vmatpush1.bf16.msra.mxu0 0
    %1969 = vmatprep.subr.bf16.mxu0 0
    %1970 = vmatpush1.bf16.msra.mxu0 0
    %1971 = vmatprep.subr.bf16.mxu0 0
    %1972 = vmatpush1.bf16.msra.mxu0 0
    %1973 = vmatprep.subr.bf16.mxu0 0
    %1974 = vmatpush1.bf16.msra.mxu0 0
    %1975 = vmatprep.subr.bf16.mxu0 0
    %1976 = vmatpush1.bf16.msra.mxu0 0
    %1977 = vmatprep.subr.bf16.mxu0 0
    %1978 = vmatpush1.bf16.msra.mxu0 0
    %1979 = vmatprep.subr.bf16.mxu0 0
    %1980 = vmatpush1.bf16.msra.mxu0 0
    %1981 = vmatprep.subr.bf16.mxu0 0
    %1982 = vmatpush1.bf16.msra.mxu0 0
    %1983 = vmatprep.subr.bf16.mxu0 0
    %1984 = vmatpush1.bf16.msra.mxu0 0
    %1985 = vmatprep.subr.bf16.mxu0 0
    %1986 = vmatpush1.bf16.msra.mxu0 0
    %1987 = vmatprep.mubr.bf16.mxu0 0
    %1988 = vmatmul.mubr.bf16.gmra.mrb[0].mxu0 %v1950
    %v1989 = vpop.f32.mrb[0].mxu0
    %v1990 = vadd.f32 0.0, %v1989
    %v1991 = vpop.f32.mrb[0].mxu0
    %v1992 = vpop.f32.mrb[0].mxu0
    %v1993 = vpop.f32.mrb[0].mxu0
    %1994 = vdwg.mxu0
    %v1996 = vunpack.c.l.b16 %v1941
    %v1997 = vpack.c.b16 %v1996, %v1996
    %1998 = vrot.lane.b32.xlu0 %v1997, 32
    %v1999 = vpop.permute.xlu0 %1998
    %v2001 = vsel %vm388, %v1937, 0
    %v2004 = vsel %vm444, %v1999, 0
    %2006 = vmatprep.subr.bf16.mxu0 0
    %2007 = vmatpush1.bf16.msra.mxu0 %v2004
    %2008 = vmatprep.subr.bf16.mxu0 0
    %2009 = vmatpush1.bf16.msra.mxu0 0
    %2010 = vmatprep.subr.bf16.mxu0 0
    %2011 = vmatpush1.bf16.msra.mxu0 0
    %2012 = vmatprep.subr.bf16.mxu0 0
    %2013 = vmatpush1.bf16.msra.mxu0 0
    %2014 = vmatprep.subr.bf16.mxu0 0
    %2015 = vmatpush1.bf16.msra.mxu0 0
    %2016 = vmatprep.subr.bf16.mxu0 0
    %2017 = vmatpush1.bf16.msra.mxu0 0
    %2018 = vmatprep.subr.bf16.mxu0 0
    %2019 = vmatpush1.bf16.msra.mxu0 0
    %2020 = vmatprep.subr.bf16.mxu0 0
    %2021 = vmatpush1.bf16.msra.mxu0 0
    %2022 = vmatprep.subr.bf16.mxu0 0
    %2023 = vmatpush1.bf16.msra.mxu0 0
    %2024 = vmatprep.subr.bf16.mxu0 0
    %2025 = vmatpush1.bf16.msra.mxu0 0
    %2026 = vmatprep.subr.bf16.mxu0 0
    %2027 = vmatpush1.bf16.msra.mxu0 0
    %2028 = vmatprep.subr.bf16.mxu0 0
    %2029 = vmatpush1.bf16.msra.mxu0 0
    %2030 = vmatprep.subr.bf16.mxu0 0
    %2031 = vmatpush1.bf16.msra.mxu0 0
    %2032 = vmatprep.subr.bf16.mxu0 0
    %2033 = vmatpush1.bf16.msra.mxu0 0
    %2034 = vmatprep.subr.bf16.mxu0 0
    %2035 = vmatpush1.bf16.msra.mxu0 0
    %2036 = vmatprep.subr.bf16.mxu0 0
    %2037 = vmatpush1.bf16.msra.mxu0 0
    %2038 = vmatprep.mubr.bf16.mxu0 0
    %2039 = vmatmul.mubr.bf16.gmra.mrb[0].mxu0 %v2001
    %v2040 = vpop.f32.mrb[0].mxu0
    %v2041 = vadd.f32 0.0, %v2040
    %v2042 = vpop.f32.mrb[0].mxu0
    %v2043 = vpop.f32.mrb[0].mxu0
    %v2044 = vpop.f32.mrb[0].mxu0
    %2045 = vdwg.mxu0
    %v2047 = vunpack.c.l.b16 %v1942
    %v2048 = vpack.c.b16 %v2047, %v2047
    %2049 = vrot.lane.b32.xlu0 %v2048, 32
    %v2050 = vpop.permute.xlu0 %2049
    %v2052 = vsel %vm388, %v1938, 0
    %v2055 = vsel %vm444, %v2050, 0
    %2057 = vmatprep.subr.bf16.mxu0 0
    %2058 = vmatpush1.bf16.msra.mxu0 %v2055
    %2059 = vmatprep.subr.bf16.mxu0 0
    %2060 = vmatpush1.bf16.msra.mxu0 0
    %2061 = vmatprep.subr.bf16.mxu0 0
    %2062 = vmatpush1.bf16.msra.mxu0 0
    %2063 = vmatprep.subr.bf16.mxu0 0
    %2064 = vmatpush1.bf16.msra.mxu0 0
    %2065 = vmatprep.subr.bf16.mxu0 0
    %2066 = vmatpush1.bf16.msra.mxu0 0
    %2067 = vmatprep.subr.bf16.mxu0 0
    %2068 = vmatpush1.bf16.msra.mxu0 0
    %2069 = vmatprep.subr.bf16.mxu0 0
    %2070 = vmatpush1.bf16.msra.mxu0 0
    %2071 = vmatprep.subr.bf16.mxu0 0
    %2072 = vmatpush1.bf16.msra.mxu0 0
    %2073 = vmatprep.subr.bf16.mxu0 0
    %2074 = vmatpush1.bf16.msra.mxu0 0
    %2075 = vmatprep.subr.bf16.mxu0 0
    %2076 = vmatpush1.bf16.msra.mxu0 0
    %2077 = vmatprep.subr.bf16.mxu0 0
    %2078 = vmatpush1.bf16.msra.mxu0 0
    %2079 = vmatprep.subr.bf16.mxu0 0
    %2080 = vmatpush1.bf16.msra.mxu0 0
    %2081 = vmatprep.subr.bf16.mxu0 0
    %2082 = vmatpush1.bf16.msra.mxu0 0
    %2083 = vmatprep.subr.bf16.mxu0 0
    %2084 = vmatpush1.bf16.msra.mxu0 0
    %2085 = vmatprep.subr.bf16.mxu0 0
    %2086 = vmatpush1.bf16.msra.mxu0 0
    %2087 = vmatprep.subr.bf16.mxu0 0
    %2088 = vmatpush1.bf16.msra.mxu0 0
    %2089 = vmatprep.mubr.bf16.mxu0 0
    %2090 = vmatmul.mubr.bf16.gmra.mrb[0].mxu0 %v2052
    %v2091 = vpop.f32.mrb[0].mxu0
    %v2092 = vadd.f32 0.0, %v2091
    %v2093 = vpop.f32.mrb[0].mxu0
    %v2094 = vpop.f32.mrb[0].mxu0
    %v2095 = vpop.f32.mrb[0].mxu0
    %2096 = vdwg.mxu0
    %v2098 = vunpack.c.l.b16 %v1943
    %v2099 = vpack.c.b16 %v2098, %v2098
    %2100 = vrot.lane.b32.xlu0 %v2099, 32
    %v2101 = vpop.permute.xlu0 %2100
    %v2103 = vsel %vm388, %v1939, 0
    %v2106 = vsel %vm444, %v2101, 0
    %2108 = vmatprep.subr.bf16.mxu0 0
    %2109 = vmatpush1.bf16.msra.mxu0 %v2106
    %2110 = vmatprep.subr.bf16.mxu0 0
    %2111 = vmatpush1.bf16.msra.mxu0 0
    %2112 = vmatprep.subr.bf16.mxu0 0
    %2113 = vmatpush1.bf16.msra.mxu0 0
    %2114 = vmatprep.subr.bf16.mxu0 0
    %2115 = vmatpush1.bf16.msra.mxu0 0
    %2116 = vmatprep.subr.bf16.mxu0 0
    %2117 = vmatpush1.bf16.msra.mxu0 0
    %2118 = vmatprep.subr.bf16.mxu0 0
    %2119 = vmatpush1.bf16.msra.mxu0 0
    %2120 = vmatprep.subr.bf16.mxu0 0
    %2121 = vmatpush1.bf16.msra.mxu0 0
    %2122 = vmatprep.subr.bf16.mxu0 0
    %2123 = vmatpush1.bf16.msra.mxu0 0
    %2124 = vmatprep.subr.bf16.mxu0 0
    %2125 = vmatpush1.bf16.msra.mxu0 0
    %2126 = vmatprep.subr.bf16.mxu0 0
    %2127 = vmatpush1.bf16.msra.mxu0 0
    %2128 = vmatprep.subr.bf16.mxu0 0
    %2129 = vmatpush1.bf16.msra.mxu0 0
    %2130 = vmatprep.subr.bf16.mxu0 0
    %2131 = vmatpush1.bf16.msra.mxu0 0
    %2132 = vmatprep.subr.bf16.mxu0 0
    %2133 = vmatpush1.bf16.msra.mxu0 0
    %2134 = vmatprep.subr.bf16.mxu0 0
    %2135 = vmatpush1.bf16.msra.mxu0 0
    %2136 = vmatprep.subr.bf16.mxu0 0
    %2137 = vmatpush1.bf16.msra.mxu0 0
    %2138 = vmatprep.subr.bf16.mxu0 0
    %2139 = vmatpush1.bf16.msra.mxu0 0
    %2140 = vmatprep.mubr.bf16.mxu0 0
    %2141 = vmatmul.mubr.bf16.gmra.mrb[0].mxu0 %v2103
    %v2142 = vpop.f32.mrb[0].mxu0
    %v2143 = vadd.f32 0.0, %v2142
    %v2144 = vpop.f32.mrb[0].mxu0
    %v2145 = vpop.f32.mrb[0].mxu0
    %v2146 = vpop.f32.mrb[0].mxu0
    %2147 = vdwg.mxu0
    %2152 = vrot.lane.b32.xlu0 %v1990, 96
    %v2153 = vpop.permute.xlu0 %2152
    %2154 = vrot.lane.b32.xlu0 %v2041, 96
    %v2155 = vpop.permute.xlu0 %2154
    %2156 = vrot.lane.b32.xlu0 %v2092, 96
    %v2157 = vpop.permute.xlu0 %2156
    %2158 = vrot.lane.b32.xlu0 %v2143, 96
    %v2159 = vpop.permute.xlu0 %2158
    %vm2164 = vcmask 1048320
    %2165 = vst.msk [vmem:[#allocation2] sm:$0xff] %vm2164, %v2153
    %2166 = vst.msk [vmem:[#allocation2 + $0x8] sm:$0xff] %vm2164, %v2155
    %2167 = vst.msk [vmem:[#allocation2 + $0x10] sm:$0xff] %vm2164, %v2157
    %2168 = vst.msk [vmem:[#allocation2 + $0x18] sm:$0xff] %vm2164, %v2159
    %v2169 = vld [vmem:[#allocation2] sm:$0xff]
    %v2170 = vld [vmem:[#allocation2 + $0x8] sm:$0xff]
    %v2171 = vld [vmem:[#allocation2 + $0x10] sm:$0xff]
    %v2172 = vld [vmem:[#allocation2 + $0x18] sm:$0xff]
    %v2173 = vpack.c.bf16 %v2170, %v2169
    %v2174 = vpack.c.bf16 %v2172, %v2171
    %v2175 = vld [vmem:[%s3] sm:$0xf]
    %v2176 = vld [vmem:[%s3 + $0x4] sm:$0xf]
    %v2177 = vld [vmem:[%s3 + $0x8] sm:$0xf]
    %v2178 = vld [vmem:[%s3 + $0xc] sm:$0xf]
    %v2179 = vld [vmem:[%s3 + $0x10] sm:$0xf]
    %v2180 = vld [vmem:[%s3 + $0x14] sm:$0xf]
    %v2181 = vld [vmem:[%s3 + $0x18] sm:$0xf]
    %v2182 = vld [vmem:[%s3 + $0x1c] sm:$0xf]
    %v2183 = vld [vmem:[%s3 + $0x20] sm:$0xf]
    %v2184 = vld [vmem:[%s3 + $0x24] sm:$0xf]
    %v2185 = vld [vmem:[%s3 + $0x28] sm:$0xf]
    %v2186 = vld [vmem:[%s3 + $0x2c] sm:$0xf]
    %v2187 = vld [vmem:[%s3 + $0x30] sm:$0xf]
    %v2188 = vld [vmem:[%s3 + $0x34] sm:$0xf]
    %v2189 = vld [vmem:[%s3 + $0x38] sm:$0xf]
    %v2190 = vld [vmem:[%s3 + $0x3c] sm:$0xf]
    %v2191 = vld [vmem:[%s4] sm:$0x1]
    %v2193 = vlaneseq
    %v2194 = vshrl.u32 %v2193, 7
    %v2195 = vsub.s32 0, %v2194
    %v2196 = vrot.slane %v2191, %v2195
    %v2214 = vunpack.c.l.b16 %v2175
    %v2215 = vunpack.c.l.b16 %v2176
    %v2216 = vunpack.c.l.b16 %v2177
    %v2217 = vunpack.c.l.b16 %v2178
    %v2218 = vunpack.c.l.b16 %v2179
    %v2219 = vunpack.c.l.b16 %v2180
    %v2220 = vunpack.c.l.b16 %v2181
    %v2221 = vunpack.c.l.b16 %v2182
    %v2222 = vunpack.c.l.b16 %v2183
    %v2223 = vunpack.c.l.b16 %v2184
    %v2224 = vunpack.c.l.b16 %v2185
    %v2225 = vunpack.c.l.b16 %v2186
    %v2226 = vunpack.c.l.b16 %v2187
    %v2227 = vunpack.c.l.b16 %v2188
    %v2228 = vunpack.c.l.b16 %v2189
    %v2229 = vunpack.c.l.b16 %v2190
    %v2230 = vpack.c.b16 %v2215, %v2214
    %v2231 = vpack.c.b16 %v2217, %v2216
    %v2232 = vpack.c.b16 %v2219, %v2218
    %v2233 = vpack.c.b16 %v2221, %v2220
    %v2234 = vpack.c.b16 %v2223, %v2222
    %v2235 = vpack.c.b16 %v2225, %v2224
    %v2236 = vpack.c.b16 %v2227, %v2226
    %v2237 = vpack.c.b16 %v2229, %v2228
    %2246 = vmatprep.subr.bf16.mxu0 0
    %2247 = vmatpush1.bf16.msra.mxu0 %v2230
    %2248 = vmatprep.subr.bf16.mxu0 0
    %2249 = vmatpush1.bf16.msra.mxu0 %v2231
    %2250 = vmatprep.subr.bf16.mxu0 0
    %2251 = vmatpush1.bf16.msra.mxu0 %v2232
    %2252 = vmatprep.subr.bf16.mxu0 0
    %2253 = vmatpush1.bf16.msra.mxu0 %v2233
    %2254 = vmatprep.subr.bf16.mxu0 0
    %2255 = vmatpush1.bf16.msra.mxu0 %v2234
    %2256 = vmatprep.subr.bf16.mxu0 0
    %2257 = vmatpush1.bf16.msra.mxu0 %v2235
    %2258 = vmatprep.subr.bf16.mxu0 0
    %2259 = vmatpush1.bf16.msra.mxu0 %v2236
    %2260 = vmatprep.subr.bf16.mxu0 0
    %2261 = vmatpush1.bf16.msra.mxu0 %v2237
    %2262 = vmatprep.subr.bf16.mxu0 0
    %2263 = vmatpush1.bf16.msra.mxu0 0
    %2264 = vmatprep.subr.bf16.mxu0 0
    %2265 = vmatpush1.bf16.msra.mxu0 0
    %2266 = vmatprep.subr.bf16.mxu0 0
    %2267 = vmatpush1.bf16.msra.mxu0 0
    %2268 = vmatprep.subr.bf16.mxu0 0
    %2269 = vmatpush1.bf16.msra.mxu0 0
    %2270 = vmatprep.subr.bf16.mxu0 0
    %2271 = vmatpush1.bf16.msra.mxu0 0
    %2272 = vmatprep.subr.bf16.mxu0 0
    %2273 = vmatpush1.bf16.msra.mxu0 0
    %2274 = vmatprep.subr.bf16.mxu0 0
    %2275 = vmatpush1.bf16.msra.mxu0 0
    %2276 = vmatprep.subr.bf16.mxu0 0
    %2277 = vmatpush1.bf16.msra.mxu0 0
    %2278 = vmatprep.mubr.bf16.mxu0 0
    %2279 = vmatmul.mubr.bf16.gmra.mrb[0].mxu0 %v2173
    %v2280 = vpop.f32.mrb[0].mxu0
    %v2281 = vadd.f32 %v2196, %v2280
    %v2282 = vpop.f32.mrb[0].mxu0
    %v2283 = vpop.f32.mrb[0].mxu0
    %v2284 = vadd.f32 %v2196, %v2283
    %v2285 = vpop.f32.mrb[0].mxu0
    %2286 = vmatprep.mubr.bf16.mxu0 0
    %2287 = vmatmul.mubr.bf16.gmra.mrb[0].mxu0 %v2174
    %v2288 = vpop.f32.mrb[0].mxu0
    %v2289 = vadd.f32 %v2196, %v2288
    %v2290 = vpop.f32.mrb[0].mxu0
    %v2291 = vpop.f32.mrb[0].mxu0
    %v2292 = vadd.f32 %v2196, %v2291
    %v2293 = vpop.f32.mrb[0].mxu0
    %2294 = vdwg.mxu0
    %v2295 = vld [vmem:[%s5] sm:$0xf]
    %v2296 = vld [vmem:[%s5 + $0x4] sm:$0xf]
    %v2297 = vld [vmem:[%s5 + $0x8] sm:$0xf]
    %v2298 = vld [vmem:[%s5 + $0xc] sm:$0xf]
    %v2299 = vunpack.c.l.bf16 %v2295
    %v2300 = vunpack.c.l.bf16 %v2296
    %v2301 = vunpack.c.l.bf16 %v2297
    %v2302 = vunpack.c.l.bf16 %v2298
    %v2303 = vadd.f32 %v2281, %v2299
    %v2304 = vadd.f32 %v2284, %v2300
    %v2305 = vadd.f32 %v2289, %v2301
    %v2306 = vadd.f32 %v2292, %v2302
    %2307 = vadd.xlane.f32.xlu0 %v2303
    %v2308 = vpop.xlane.xlu0 %2307
    %2309 = vadd.xlane.f32.xlu0 %v2304
    %v2310 = vpop.xlane.xlu0 %2309
    %2311 = vadd.xlane.f32.xlu0 %v2305
    %v2312 = vpop.xlane.xlu0 %2311
    %2313 = vadd.xlane.f32.xlu0 %v2306
    %v2314 = vpop.xlane.xlu0 %2313
    %v2315 = vrcp.pop 128.0
    %v2316 = vmul.f32 %v2308, %v2315
    %v2317 = vmul.f32 %v2310, %v2315
    %v2318 = vmul.f32 %v2312, %v2315
    %v2319 = vmul.f32 %v2314, %v2315
    %v2320 = vsub.f32 %v2303, %v2316
    %v2321 = vsub.f32 %v2304, %v2317
    %v2322 = vsub.f32 %v2305, %v2318
    %v2323 = vsub.f32 %v2306, %v2319
    %v2324 = vmul.f32 %v2320, %v2320
    %v2325 = vmul.f32 %v2321, %v2321
    %v2326 = vmul.f32 %v2322, %v2322
    %v2327 = vmul.f32 %v2323, %v2323
    %2328 = vadd.xlane.f32.xlu0 %v2324
    %v2329 = vpop.xlane.xlu0 %2328
    %2330 = vadd.xlane.f32.xlu0 %v2325
    %v2331 = vpop.xlane.xlu0 %2330
    %2332 = vadd.xlane.f32.xlu0 %v2326
    %v2333 = vpop.xlane.xlu0 %2332
    %2334 = vadd.xlane.f32.xlu0 %v2327
    %v2335 = vpop.xlane.xlu0 %2334
    %v2336 = vmul.f32 %v2329, %v2315
    %v2337 = vmul.f32 %v2331, %v2315
    %v2338 = vmul.f32 %v2333, %v2315
    %v2339 = vmul.f32 %v2335, %v2315
    %v2340 = vadd.f32 %v2336, 1e-12
    %v2341 = vadd.f32 %v2337, 1e-12
    %v2342 = vadd.f32 %v2338, 1e-12
    %v2343 = vadd.f32 %v2339, 1e-12
    %v2344 = vrsqrt.pop %v2340
    %v2345 = vrsqrt.pop %v2341
    %v2346 = vrsqrt.pop %v2342
    %v2347 = vrsqrt.pop %v2343
    %v2348 = vmul.f32 %v2320, %v2344
    %v2349 = vmul.f32 %v2321, %v2345
    %v2350 = vmul.f32 %v2322, %v2346
    %v2351 = vmul.f32 %v2323, %v2347
    %v2352 = vld [vmem:[%s6] sm:$0x1]
    %v2354 = vlaneseq
    %v2355 = vshrl.u32 %v2354, 7
    %v2356 = vsub.s32 0, %v2355
    %v2357 = vrot.slane %v2352, %v2356
    %v2359 = vmul.f32 %v2348, %v2357
    %v2360 = vmul.f32 %v2349, %v2357
    %v2361 = vmul.f32 %v2350, %v2357
    %v2362 = vmul.f32 %v2351, %v2357
    %v2363 = vld [vmem:[%s7] sm:$0x1]
    %v2365 = vlaneseq
    %v2366 = vshrl.u32 %v2365, 7
    %v2367 = vsub.s32 0, %v2366
    %v2368 = vrot.slane %v2363, %v2367
    %v2370 = vadd.f32 %v2359, %v2368
    %v2371 = vadd.f32 %v2360, %v2368
    %v2372 = vadd.f32 %v2361, %v2368
    %v2373 = vadd.f32 %v2362, %v2368
    %v2374 = vpack.c.bf16 %v2370, %v2370
    %v2375 = vpack.c.bf16 %v2371, %v2371
    %v2376 = vpack.c.bf16 %v2372, %v2372
    %v2377 = vpack.c.bf16 %v2373, %v2373
    %2378 = vst [vmem:[%s8] sm:$0xf] %v2374
    %2379 = vst [vmem:[%s8 + $0x4] sm:$0xf] %v2375
    %2380 = vst [vmem:[%s8 + $0x8] sm:$0xf] %v2376
    %2381 = vst [vmem:[%s8 + $0xc] sm:$0xf] %v2377
    // Predicated region
    $region157: #{_lambda_.14} parent=1 // pred_check
      _
    $region158: #{_lambda_.14} parent=1 // pred_check_branch
      %2383 = sbr.rel (0) target = $region160
    $region159: #{_lambda_.14} parent=1 // pred_region
      _
    $region160: #{_lambda_.14} parent=1 // pred_fallthru
      _
    // Predicated region
    $region161: #{_lambda_.14} parent=1 // pred_check
      _
    $region162: #{_lambda_.14} parent=1 // pred_check_branch
      %2385 = sbr.rel (0) target = $region164
    $region163: #{_lambda_.14} parent=1 // pred_region
      _
    $region164: #{_lambda_.14} parent=1 // pred_fallthru
      _

// kernel: _lambda_.22
$region0: #{_lambda_.22}
  #allocation0 [shape = 'u32[]', space=smem, size = 0x4, offset = 0x4, fixed_abs, tag = 'smem constant byte address 0x4 - core index']
  #allocation1 [shape = 'u32[144,128]{1,0:T(1,128)}', space=vmem, size = 0x12000, scoped, tag = 'internal scratch']
  %s0 = inlined_call_operand.vmem [shape: bf16[16,128], index: 0, kind: input, shape index: {}]
  %s1 = inlined_call_operand.vmem [shape: bf16[128,384], index: 1, kind: input, shape index: {}]
  %s2 = inlined_call_operand.vmem [shape: f32[1,384], index: 2, kind: input, shape index: {}]
  %s3 = inlined_call_operand.vmem [shape: bf16[16,384], index: 3, kind: output, shape index: {}]
  %s4 = sld [smem:[#allocation0]]
  $region22: #{_lambda_.22} parent=0
    _
  %s6 = ssub.s32 1, %s4
  %s7 = scalar_select 0, %s6, %s4
  // Predicated region
  $region2: #{_lambda_.22} parent=0 // pred_check
    _
  $region3: #{_lambda_.22} parent=0 // pred_check_branch
    %9 = sbr.rel (0) target = $region5
  $region4: #{_lambda_.22} parent=0 // pred_region
    _
  $region5: #{_lambda_.22} parent=0 // pred_fallthru
    _
  // Predicated region
  $region6: #{_lambda_.22} parent=0 // pred_check
    _
  $region7: #{_lambda_.22} parent=0 // pred_check_branch
    %11 = sbr.rel (0) target = $region9
  $region8: #{_lambda_.22} parent=0 // pred_region
    _
  $region9: #{_lambda_.22} parent=0 // pred_fallthru
    _
  // Predicated region
  $region10: #{_lambda_.22} parent=0 // pred_check
    _
  $region11: #{_lambda_.22} parent=0 // pred_check_branch
    %13 = sbr.rel (0) target = $region13
  $region12: #{_lambda_.22} parent=0 // pred_region
    _
  $region13: #{_lambda_.22} parent=0 // pred_fallthru
    _
  %v15 = vld [vmem:[%s0] sm:$0xf]
  %v16 = vld [vmem:[%s0 + $0x4] sm:$0xf]
  %v17 = vld [vmem:[%s1] sm:$0xff]
  %v18 = vld [vmem:[%s1 + $0x8] sm:$0xf]
  %v19 = vld [vmem:[%s1 + $0xc] sm:$0xff]
  %v20 = vld [vmem:[%s1 + $0x14] sm:$0xf]
  %v21 = vld [vmem:[%s1 + $0x18] sm:$0xff]
  %v22 = vld [vmem:[%s1 + $0x20] sm:$0xf]
  %v23 = vld [vmem:[%s1 + $0x24] sm:$0xff]
  %v24 = vld [vmem:[%s1 + $0x2c] sm:$0xf]
  %v25 = vld [vmem:[%s1 + $0x30] sm:$0xff]
  %v26 = vld [vmem:[%s1 + $0x38] sm:$0xf]
  %v27 = vld [vmem:[%s1 + $0x3c] sm:$0xff]
  %v28 = vld [vmem:[%s1 + $0x44] sm:$0xf]
  %v29 = vld [vmem:[%s1 + $0x48] sm:$0xff]
  %v30 = vld [vmem:[%s1 + $0x50] sm:$0xf]
  %v31 = vld [vmem:[%s1 + $0x54] sm:$0xff]
  %v32 = vld [vmem:[%s1 + $0x5c] sm:$0xf]
  %v33 = vld [vmem:[%s1 + $0x60] sm:$0xff]
  %v34 = vld [vmem:[%s1 + $0x68] sm:$0xf]
  %v35 = vld [vmem:[%s1 + $0x6c] sm:$0xff]
  %v36 = vld [vmem:[%s1 + $0x74] sm:$0xf]
  %v37 = vld [vmem:[%s1 + $0x78] sm:$0xff]
  %v38 = vld [vmem:[%s1 + $0x80] sm:$0xf]
  %v39 = vld [vmem:[%s1 + $0x84] sm:$0xff]
  %v40 = vld [vmem:[%s1 + $0x8c] sm:$0xf]
  %v41 = vld [vmem:[%s1 + $0x90] sm:$0xff]
  %v42 = vld [vmem:[%s1 + $0x98] sm:$0xf]
  %v43 = vld [vmem:[%s1 + $0x9c] sm:$0xff]
  %v44 = vld [vmem:[%s1 + $0xa4] sm:$0xf]
  %v45 = vld [vmem:[%s1 + $0xa8] sm:$0xff]
  %v46 = vld [vmem:[%s1 + $0xb0] sm:$0xf]
  %v47 = vld [vmem:[%s1 + $0xb4] sm:$0xff]
  %v48 = vld [vmem:[%s1 + $0xbc] sm:$0xf]
  %v49 = vld [vmem:[%s2] sm:$0x7]
  %v51 = vlaneseq
  %v52 = vshrl.u32 %v51, 7
  %v53 = vsub.s32 0, %v52
  %v54 = vrot.slane %v49, %v53
  %v55 = vlaneseq
  %v56 = vshrl.u32 %v55, 7
  %v57 = vsub.s32 1, %v56
  %v58 = vrot.slane %v49, %v57
  %v59 = vlaneseq
  %v60 = vshrl.u32 %v59, 7
  %v61 = vsub.s32 2, %v60
  %v62 = vrot.slane %v49, %v61
  %v68 = vunpack.c.l.b16 %v15
  %v69 = vunpack.c.l.b16 %v16
  %v70 = vpack.c.b16 %v69, %v68
  %v104 = vunpack.c.l.b16 %v17
  %v105 = vunpack.c.h.b16 %v17
  %v106 = vunpack.c.l.b16 %v18
  %v107 = vunpack.c.l.b16 %v19
  %v108 = vunpack.c.h.b16 %v19
  %v109 = vunpack.c.l.b16 %v20
  %v110 = vunpack.c.l.b16 %v21
  %v111 = vunpack.c.h.b16 %v21
  %v112 = vunpack.c.l.b16 %v22
  %v113 = vunpack.c.l.b16 %v23
  %v114 = vunpack.c.h.b16 %v23
  %v115 = vunpack.c.l.b16 %v24
  %v116 = vunpack.c.l.b16 %v25
  %v117 = vunpack.c.h.b16 %v25
  %v118 = vunpack.c.l.b16 %v26
  %v119 = vunpack.c.l.b16 %v27
  %v120 = vunpack.c.h.b16 %v27
  %v121 = vunpack.c.l.b16 %v28
  %v122 = vunpack.c.l.b16 %v29
  %v123 = vunpack.c.h.b16 %v29
  %v124 = vunpack.c.l.b16 %v30
  %v125 = vunpack.c.l.b16 %v31
  %v126 = vunpack.c.h.b16 %v31
  %v127 = vunpack.c.l.b16 %v32
  %v128 = vunpack.c.l.b16 %v33
  %v129 = vunpack.c.h.b16 %v33
  %v130 = vunpack.c.l.b16 %v34
  %v131 = vunpack.c.l.b16 %v35
  %v132 = vunpack.c.h.b16 %v35
  %v133 = vunpack.c.l.b16 %v36
  %v134 = vunpack.c.l.b16 %v37
  %v135 = vunpack.c.h.b16 %v37
  %v136 = vunpack.c.l.b16 %v38
  %v137 = vunpack.c.l.b16 %v39
  %v138 = vunpack.c.h.b16 %v39
  %v139 = vunpack.c.l.b16 %v40
  %v140 = vunpack.c.l.b16 %v41
  %v141 = vunpack.c.h.b16 %v41
  %v142 = vunpack.c.l.b16 %v42
  %v143 = vunpack.c.l.b16 %v43
  %v144 = vunpack.c.h.b16 %v43
  %v145 = vunpack.c.l.b16 %v44
  %v146 = vunpack.c.l.b16 %v45
  %v147 = vunpack.c.h.b16 %v45
  %v148 = vunpack.c.l.b16 %v46
  %v149 = vunpack.c.l.b16 %v47
  %v150 = vunpack.c.h.b16 %v47
  %v151 = vunpack.c.l.b16 %v48
  %v152 = vpack.c.b16 %v107, %v104
  %v153 = vpack.c.b16 %v108, %v105
  %v154 = vpack.c.b16 %v109, %v106
  %v155 = vpack.c.b16 %v113, %v110
  %v156 = vpack.c.b16 %v114, %v111
  %v157 = vpack.c.b16 %v115, %v112
  %v158 = vpack.c.b16 %v119, %v116
  %v159 = vpack.c.b16 %v120, %v117
  %v160 = vpack.c.b16 %v121, %v118
  %v161 = vpack.c.b16 %v125, %v122
  %v162 = vpack.c.b16 %v126, %v123
  %v163 = vpack.c.b16 %v127, %v124
  %v164 = vpack.c.b16 %v131, %v128
  %v165 = vpack.c.b16 %v132, %v129
  %v166 = vpack.c.b16 %v133, %v130
  %v167 = vpack.c.b16 %v137, %v134
  %v168 = vpack.c.b16 %v138, %v135
  %v169 = vpack.c.b16 %v139, %v136
  %v170 = vpack.c.b16 %v143, %v140
  %v171 = vpack.c.b16 %v144, %v141
  %v172 = vpack.c.b16 %v145, %v142
  %v173 = vpack.c.b16 %v149, %v146
  %v174 = vpack.c.b16 %v150, %v147
  %v175 = vpack.c.b16 %v151, %v148
  %200 = vmatprep.subr.bf16.mxu0 %v153
  %201 = vmatpush1.bf16.msra.mxu0 %v152
  %202 = vmatprep.subr.bf16.mxu0 %v156
  %203 = vmatpush1.bf16.msra.mxu0 %v155
  %204 = vmatprep.subr.bf16.mxu0 %v159
  %205 = vmatpush1.bf16.msra.mxu0 %v158
  %206 = vmatprep.subr.bf16.mxu0 %v162
  %207 = vmatpush1.bf16.msra.mxu0 %v161
  %208 = vmatprep.subr.bf16.mxu0 %v165
  %209 = vmatpush1.bf16.msra.mxu0 %v164
  %210 = vmatprep.subr.bf16.mxu0 %v168
  %211 = vmatpush1.bf16.msra.mxu0 %v167
  %212 = vmatprep.subr.bf16.mxu0 %v171
  %213 = vmatpush1.bf16.msra.mxu0 %v170
  %214 = vmatprep.subr.bf16.mxu0 %v174
  %215 = vmatpush1.bf16.msra.mxu0 %v173
  %216 = vmatprep.subr.bf16.mxu0 0
  %217 = vmatpush1.bf16.msra.mxu0 0
  %218 = vmatprep.subr.bf16.mxu0 0
  %219 = vmatpush1.bf16.msra.mxu0 0
  %220 = vmatprep.subr.bf16.mxu0 0
  %221 = vmatpush1.bf16.msra.mxu0 0
  %222 = vmatprep.subr.bf16.mxu0 0
  %223 = vmatpush1.bf16.msra.mxu0 0
  %224 = vmatprep.subr.bf16.mxu0 0
  %225 = vmatpush1.bf16.msra.mxu0 0
  %226 = vmatprep.subr.bf16.mxu0 0
  %227 = vmatpush1.bf16.msra.mxu0 0
  %228 = vmatprep.subr.bf16.mxu0 0
  %229 = vmatpush1.bf16.msra.mxu0 0
  %230 = vmatprep.subr.bf16.mxu0 0
  %231 = vmatpush1.bf16.msra.mxu0 0
  %232 = vmatprep.mubr.bf16.mxu0 0
  %233 = vmatmul.mubr.bf16.gmra.mrb[0].mxu0 %v70
  %v234 = vpop.f32.mrb[0].mxu0
  %v235 = vadd.f32 %v54, %v234
  %v236 = vpop.f32.mrb[0].mxu0
  %v237 = vadd.f32 %v58, %v236
  %v238 = vpop.f32.mrb[0].mxu0
  %v239 = vadd.f32 %v54, %v238
  %v240 = vpop.f32.mrb[0].mxu0
  %v241 = vadd.f32 %v58, %v240
  %242 = vdwg.mxu0
  %243 = vmatprep.subr.bf16.mxu0 0
  %244 = vmatpush1.bf16.msra.mxu0 %v154
  %245 = vmatprep.subr.bf16.mxu0 0
  %246 = vmatpush1.bf16.msra.mxu0 %v157
  %247 = vmatprep.subr.bf16.mxu0 0
  %248 = vmatpush1.bf16.msra.mxu0 %v160
  %249 = vmatprep.subr.bf16.mxu0 0
  %250 = vmatpush1.bf16.msra.mxu0 %v163
  %251 = vmatprep.subr.bf16.mxu0 0
  %252 = vmatpush1.bf16.msra.mxu0 %v166
  %253 = vmatprep.subr.bf16.mxu0 0
  %254 = vmatpush1.bf16.msra.mxu0 %v169
  %255 = vmatprep.subr.bf16.mxu0 0
  %256 = vmatpush1.bf16.msra.mxu0 %v172
  %257 = vmatprep.subr.bf16.mxu0 0
  %258 = vmatpush1.bf16.msra.mxu0 %v175
  %259 = vmatprep.subr.bf16.mxu0 0
  %260 = vmatpush1.bf16.msra.mxu0 0
  %261 = vmatprep.subr.bf16.mxu0 0
  %262 = vmatpush1.bf16.msra.mxu0 0
  %263 = vmatprep.subr.bf16.mxu0 0
  %264 = vmatpush1.bf16.msra.mxu0 0
  %265 = vmatprep.subr.bf16.mxu0 0
  %266 = vmatpush1.bf16.msra.mxu0 0
  %267 = vmatprep.subr.bf16.mxu0 0
  %268 = vmatpush1.bf16.msra.mxu0 0
  %269 = vmatprep.subr.bf16.mxu0 0
  %270 = vmatpush1.bf16.msra.mxu0 0
  %271 = vmatprep.subr.bf16.mxu0 0
  %272 = vmatpush1.bf16.msra.mxu0 0
  %273 = vmatprep.subr.bf16.mxu0 0
  %274 = vmatpush1.bf16.msra.mxu0 0
  %275 = vmatprep.mubr.bf16.mxu0 0
  %276 = vmatmul.mubr.bf16.gmra.mrb[0].mxu0 %v70
  %v277 = vpop.f32.mrb[0].mxu0
  %v278 = vadd.f32 %v62, %v277
  %v279 = vpop.f32.mrb[0].mxu0
  %v280 = vpop.f32.mrb[0].mxu0
  %v281 = vadd.f32 %v62, %v280
  %v282 = vpop.f32.mrb[0].mxu0
  %283 = vdwg.mxu0
  %v284 = vpack.c.bf16 %v239, %v235
  %v285 = vpack.c.bf16 %v241, %v237
  %v286 = vpack.c.bf16 %v281, %v278
  %v290 = vunpack.c.l.b16 %v284
  %v291 = vunpack.c.l.b16 %v285
  %v292 = vunpack.c.l.b16 %v286
  %v293 = vunpack.c.h.b16 %v284
  %v294 = vunpack.c.h.b16 %v285
  %v295 = vunpack.c.h.b16 %v286
  %v296 = vpack.c.b16 %v291, %v290
  %v297 = vpack.c.b16 %v292, %v292
  %v298 = vpack.c.b16 %v294, %v293
  %v299 = vpack.c.b16 %v295, %v295
  %304 = vst [vmem:[%s3] sm:$0xff] %v296
  %305 = vst [vmem:[%s3 + $0x8] sm:$0xf] %v297
  %306 = vst [vmem:[%s3 + $0xc] sm:$0xff] %v298
  %307 = vst [vmem:[%s3 + $0x14] sm:$0xf] %v299
  // Predicated region
  $region14: #{_lambda_.22} parent=0 // pred_check
    _
  $region15: #{_lambda_.22} parent=0 // pred_check_branch
    %309 = sbr.rel (0) target = $region17
  $region16: #{_lambda_.22} parent=0 // pred_region
    _
  $region17: #{_lambda_.22} parent=0 // pred_fallthru
    _
  // Predicated region
  $region18: #{_lambda_.22} parent=0 // pred_check
    _
  $region19: #{_lambda_.22} parent=0 // pred_check_branch
    %311 = sbr.rel (0) target = $region21
  $region20: #{_lambda_.22} parent=0 // pred_region
    _
  $region21: #{_lambda_.22} parent=0 // pred_fallthru
    _

// kernel: _lambda_.23
$region0: #{_lambda_.23}
  #allocation0 [shape = 'u32[]', space=smem, size = 0x4, offset = 0x4, fixed_abs, tag = 'smem constant byte address 0x4 - core index']
  #allocation1 [shape = 'u32[144,128]{1,0:T(1,128)}', space=vmem, size = 0x12000, scoped, tag = 'internal scratch']
  %s0 = inlined_call_operand.vmem [shape: bf16[2,8,384], index: 0, kind: input, shape index: {}, may-alias: {0,1,2}]
  %s1 = inlined_call_operand.vmem [shape: bf16[2,8,384], index: 1, kind: input, shape index: {}, may-alias: {0,1,2}]
  %s2 = inlined_call_operand.vmem [shape: bf16[2,8,384], index: 2, kind: input, shape index: {}, may-alias: {0,1,2}]
  %s3 = inlined_call_operand.vmem [shape: bf16[2,8,128], index: 3, kind: output, shape index: {}]
  %s4 = sld [smem:[#allocation0]]
  $region145: #{_lambda_.23} parent=0
    _
  %s6 = ssub.s32 1, %s4
  %s7 = scalar_select 0, %s6, %s4
  $region1: #{_lambda_.23} parent=0
    #allocation2 [shape = 'u8[4096]{0}', space=vmem, size = 0x1000, scoped, tag = 'input window, operand 0, single buffered']
    #allocation3 [shape = 'u8[4096]{0}', space=vmem, size = 0x1000, scoped, tag = 'input window, operand 1, single buffered']
    #allocation4 [shape = 'u8[4096]{0}', space=vmem, size = 0x1000, scoped, tag = 'input window, operand 2, single buffered']
    // Predicated region
    $region2: #{_lambda_.23} parent=1 // pred_check
      _
    $region3: #{_lambda_.23} parent=1 // pred_check_branch
      %9 = sbr.rel (0) target = $region5
    $region4: #{_lambda_.23} parent=1 // pred_region
      // Predicated region
      $region6: #{_lambda_.23} parent=4 // pred_check
        _
      $region7: #{_lambda_.23} parent=4 // pred_check_branch
        %11 = sbr.rel (0) target = $region9
      $region8: #{_lambda_.23} parent=4 // pred_region
        // Predicated region
        $region10: #{_lambda_.23} parent=8 // pred_check
          _
        $region11: #{_lambda_.23} parent=8 // pred_check_branch
          %13 = sbr.rel target = $region13
        $region12: #{_lambda_.23} parent=8 // pred_region
          // Predicated region
          $region25: #{_lambda_.23} parent=12 // pred_check
            _
          $region26: #{_lambda_.23} parent=12 // pred_check_branch
            %30 = sbr.rel (0) target = $region28
          $region27: #{_lambda_.23} parent=12 // pred_region
            loop: start=0, step=1, limit=1
            $region29: #{_lambda_.23} parent=27 // loop_pre_header
              _
            $region30: #{_lambda_.23} parent=27 // loop_header
              %s32 = sphi 0, %s36
              %p33 = scmp.ge.s32.totalorder %s32, 1
              %s37 = sphi %s0, %s0
              %s38 = sphi [#allocation2], [#allocation2]
            $region31: #{_lambda_.23} parent=27 // loop_header_branch
              %35 = sbr.rel (%p33) target = $region35
            $region32: #{_lambda_.23} parent=27 // loop_body
              _
            $region33: #{_lambda_.23} parent=27 // loop_footer
              %s36 = sadd.s32 1, %s32
            $region34: #{_lambda_.23} parent=27 // loop_footer_branch
              %31 = sbr.rel target = $region30
            $region35: #{_lambda_.23} parent=27 // loop_exit
              _
            loop: start=0, step=1, limit=1
            $region36: #{_lambda_.23} parent=27 // loop_pre_header
              _
            $region37: #{_lambda_.23} parent=27 // loop_header
              %s41 = sphi 0, %s45
              %p42 = scmp.ge.s32.totalorder %s41, 1
              %s46 = sphi %s0, %s0
              %s47 = sphi [#allocation2], [#allocation2]
            $region38: #{_lambda_.23} parent=27 // loop_header_branch
              %44 = sbr.rel (%p42) target = $region42
            $region39: #{_lambda_.23} parent=27 // loop_body
              %v48 = vld [vmem:[%s46] sm:$0xf]
              %49 = vst [vmem:[%s47] sm:$0xf] %v48
              %v50 = vld [vmem:[%s46 + $0xc] sm:$0xf]
              %51 = vst [vmem:[%s47 + $0x4] sm:$0xf] %v50
            $region40: #{_lambda_.23} parent=27 // loop_footer
              %s45 = sadd.s32 1, %s41
            $region41: #{_lambda_.23} parent=27 // loop_footer_branch
              %40 = sbr.rel target = $region37
            $region42: #{_lambda_.23} parent=27 // loop_exit
              _
          $region28: #{_lambda_.23} parent=12 // pred_fallthru
            _
        $region13: #{_lambda_.23} parent=8 // pred_fallthru
          _
        // Predicated region
        $region14: #{_lambda_.23} parent=8 // pred_check
          _
        $region15: #{_lambda_.23} parent=8 // pred_check_branch
          %15 = sbr.rel (0) target = $region17
        $region16: #{_lambda_.23} parent=8 // pred_region
          loop: start=0, step=1, limit=1
          $region18: #{_lambda_.23} parent=16 // loop_pre_header
            _
          $region19: #{_lambda_.23} parent=16 // loop_header
            %s18 = sphi 0, %s22
            %p19 = scmp.ge.s32.totalorder %s18, 1
            %s23 = sphi %s0, %s0
            %s24 = sphi [#allocation2], [#allocation2]
          $region20: #{_lambda_.23} parent=16 // loop_header_branch
            %21 = sbr.rel (%p19) target = $region24
          $region21: #{_lambda_.23} parent=16 // loop_body
            %v25 = vld [vmem:[%s23] sm:$0xf]
            %26 = vst [vmem:[%s24] sm:$0xf] %v25
            %v27 = vld [vmem:[%s23 + $0xc] sm:$0xf]
            %28 = vst [vmem:[%s24 + $0x4] sm:$0xf] %v27
          $region22: #{_lambda_.23} parent=16 // loop_footer
            %s22 = sadd.s32 1, %s18
          $region23: #{_lambda_.23} parent=16 // loop_footer_branch
            %17 = sbr.rel target = $region19
          $region24: #{_lambda_.23} parent=16 // loop_exit
            _
        $region17: #{_lambda_.23} parent=8 // pred_fallthru
          _
      $region9: #{_lambda_.23} parent=4 // pred_fallthru
        _
      %52 = vnop
    $region5: #{_lambda_.23} parent=1 // pred_fallthru
      _
    // Predicated region
    $region43: #{_lambda_.23} parent=1 // pred_check
      _
    $region44: #{_lambda_.23} parent=1 // pred_check_branch
      %54 = sbr.rel (0) target = $region46
    $region45: #{_lambda_.23} parent=1 // pred_region
      %s55 = scalar_lea.vmem %s1, 4
      // Predicated region
      $region47: #{_lambda_.23} parent=45 // pred_check
        _
      $region48: #{_lambda_.23} parent=45 // pred_check_branch
        %57 = sbr.rel (0) target = $region50
      $region49: #{_lambda_.23} parent=45 // pred_region
        // Predicated region
        $region51: #{_lambda_.23} parent=49 // pred_check
          _
        $region52: #{_lambda_.23} parent=49 // pred_check_branch
          %59 = sbr.rel target = $region54
        $region53: #{_lambda_.23} parent=49 // pred_region
          // Predicated region
          $region66: #{_lambda_.23} parent=53 // pred_check
            _
          $region67: #{_lambda_.23} parent=53 // pred_check_branch
            %76 = sbr.rel (0) target = $region69
          $region68: #{_lambda_.23} parent=53 // pred_region
            loop: start=0, step=1, limit=1
            $region70: #{_lambda_.23} parent=68 // loop_pre_header
              _
            $region71: #{_lambda_.23} parent=68 // loop_header
              %s78 = sphi 0, %s82
              %p79 = scmp.ge.s32.totalorder %s78, 1
              %s83 = sphi %s55, %s55
              %s84 = sphi [#allocation3], [#allocation3]
            $region72: #{_lambda_.23} parent=68 // loop_header_branch
              %81 = sbr.rel (%p79) target = $region76
            $region73: #{_lambda_.23} parent=68 // loop_body
              _
            $region74: #{_lambda_.23} parent=68 // loop_footer
              %s82 = sadd.s32 1, %s78
            $region75: #{_lambda_.23} parent=68 // loop_footer_branch
              %77 = sbr.rel target = $region71
            $region76: #{_lambda_.23} parent=68 // loop_exit
              _
            loop: start=0, step=1, limit=1
            $region77: #{_lambda_.23} parent=68 // loop_pre_header
              _
            $region78: #{_lambda_.23} parent=68 // loop_header
              %s87 = sphi 0, %s91
              %p88 = scmp.ge.s32.totalorder %s87, 1
              %s92 = sphi %s55, %s55
              %s93 = sphi [#allocation3], [#allocation3]
            $region79: #{_lambda_.23} parent=68 // loop_header_branch
              %90 = sbr.rel (%p88) target = $region83
            $region80: #{_lambda_.23} parent=68 // loop_body
              %v94 = vld [vmem:[%s92] sm:$0xf]
              %95 = vst [vmem:[%s93] sm:$0xf] %v94
              %v96 = vld [vmem:[%s92 + $0xc] sm:$0xf]
              %97 = vst [vmem:[%s93 + $0x4] sm:$0xf] %v96
            $region81: #{_lambda_.23} parent=68 // loop_footer
              %s91 = sadd.s32 1, %s87
            $region82: #{_lambda_.23} parent=68 // loop_footer_branch
              %86 = sbr.rel target = $region78
            $region83: #{_lambda_.23} parent=68 // loop_exit
              _
          $region69: #{_lambda_.23} parent=53 // pred_fallthru
            _
        $region54: #{_lambda_.23} parent=49 // pred_fallthru
          _
        // Predicated region
        $region55: #{_lambda_.23} parent=49 // pred_check
          _
        $region56: #{_lambda_.23} parent=49 // pred_check_branch
          %61 = sbr.rel (0) target = $region58
        $region57: #{_lambda_.23} parent=49 // pred_region
          loop: start=0, step=1, limit=1
          $region59: #{_lambda_.23} parent=57 // loop_pre_header
            _
          $region60: #{_lambda_.23} parent=57 // loop_header
            %s64 = sphi 0, %s68
            %p65 = scmp.ge.s32.totalorder %s64, 1
            %s69 = sphi %s55, %s55
            %s70 = sphi [#allocation3], [#allocation3]
          $region61: #{_lambda_.23} parent=57 // loop_header_branch
            %67 = sbr.rel (%p65) target = $region65
          $region62: #{_lambda_.23} parent=57 // loop_body
            %v71 = vld [vmem:[%s69] sm:$0xf]
            %72 = vst [vmem:[%s70] sm:$0xf] %v71
            %v73 = vld [vmem:[%s69 + $0xc] sm:$0xf]
            %74 = vst [vmem:[%s70 + $0x4] sm:$0xf] %v73
          $region63: #{_lambda_.23} parent=57 // loop_footer
            %s68 = sadd.s32 1, %s64
          $region64: #{_lambda_.23} parent=57 // loop_footer_branch
            %63 = sbr.rel target = $region60
          $region65: #{_lambda_.23} parent=57 // loop_exit
            _
        $region58: #{_lambda_.23} parent=49 // pred_fallthru
          _
      $region50: #{_lambda_.23} parent=45 // pred_fallthru
        _
      %98 = vnop
    $region46: #{_lambda_.23} parent=1 // pred_fallthru
      _
    // Predicated region
    $region84: #{_lambda_.23} parent=1 // pred_check
      _
    $region85: #{_lambda_.23} parent=1 // pred_check_branch
      %100 = sbr.rel (0) target = $region87
    $region86: #{_lambda_.23} parent=1 // pred_region
      %s101 = scalar_lea.vmem %s2, 8
      // Predicated region
      $region88: #{_lambda_.23} parent=86 // pred_check
        _
      $region89: #{_lambda_.23} parent=86 // pred_check_branch
        %103 = sbr.rel (0) target = $region91
      $region90: #{_lambda_.23} parent=86 // pred_region
        // Predicated region
        $region92: #{_lambda_.23} parent=90 // pred_check
          _
        $region93: #{_lambda_.23} parent=90 // pred_check_branch
          %105 = sbr.rel target = $region95
        $region94: #{_lambda_.23} parent=90 // pred_region
          // Predicated region
          $region107: #{_lambda_.23} parent=94 // pred_check
            _
          $region108: #{_lambda_.23} parent=94 // pred_check_branch
            %122 = sbr.rel (0) target = $region110
          $region109: #{_lambda_.23} parent=94 // pred_region
            loop: start=0, step=1, limit=1
            $region111: #{_lambda_.23} parent=109 // loop_pre_header
              _
            $region112: #{_lambda_.23} parent=109 // loop_header
              %s124 = sphi 0, %s128
              %p125 = scmp.ge.s32.totalorder %s124, 1
              %s129 = sphi %s101, %s101
              %s130 = sphi [#allocation4], [#allocation4]
            $region113: #{_lambda_.23} parent=109 // loop_header_branch
              %127 = sbr.rel (%p125) target = $region117
            $region114: #{_lambda_.23} parent=109 // loop_body
              _
            $region115: #{_lambda_.23} parent=109 // loop_footer
              %s128 = sadd.s32 1, %s124
            $region116: #{_lambda_.23} parent=109 // loop_footer_branch
              %123 = sbr.rel target = $region112
            $region117: #{_lambda_.23} parent=109 // loop_exit
              _
            loop: start=0, step=1, limit=1
            $region118: #{_lambda_.23} parent=109 // loop_pre_header
              _
            $region119: #{_lambda_.23} parent=109 // loop_header
              %s133 = sphi 0, %s137
              %p134 = scmp.ge.s32.totalorder %s133, 1
              %s138 = sphi %s101, %s101
              %s139 = sphi [#allocation4], [#allocation4]
            $region120: #{_lambda_.23} parent=109 // loop_header_branch
              %136 = sbr.rel (%p134) target = $region124
            $region121: #{_lambda_.23} parent=109 // loop_body
              %v140 = vld [vmem:[%s138] sm:$0xf]
              %141 = vst [vmem:[%s139] sm:$0xf] %v140
              %v142 = vld [vmem:[%s138 + $0xc] sm:$0xf]
              %143 = vst [vmem:[%s139 + $0x4] sm:$0xf] %v142
            $region122: #{_lambda_.23} parent=109 // loop_footer
              %s137 = sadd.s32 1, %s133
            $region123: #{_lambda_.23} parent=109 // loop_footer_branch
              %132 = sbr.rel target = $region119
            $region124: #{_lambda_.23} parent=109 // loop_exit
              _
          $region110: #{_lambda_.23} parent=94 // pred_fallthru
            _
        $region95: #{_lambda_.23} parent=90 // pred_fallthru
          _
        // Predicated region
        $region96: #{_lambda_.23} parent=90 // pred_check
          _
        $region97: #{_lambda_.23} parent=90 // pred_check_branch
          %107 = sbr.rel (0) target = $region99
        $region98: #{_lambda_.23} parent=90 // pred_region
          loop: start=0, step=1, limit=1
          $region100: #{_lambda_.23} parent=98 // loop_pre_header
            _
          $region101: #{_lambda_.23} parent=98 // loop_header
            %s110 = sphi 0, %s114
            %p111 = scmp.ge.s32.totalorder %s110, 1
            %s115 = sphi %s101, %s101
            %s116 = sphi [#allocation4], [#allocation4]
          $region102: #{_lambda_.23} parent=98 // loop_header_branch
            %113 = sbr.rel (%p111) target = $region106
          $region103: #{_lambda_.23} parent=98 // loop_body
            %v117 = vld [vmem:[%s115] sm:$0xf]
            %118 = vst [vmem:[%s116] sm:$0xf] %v117
            %v119 = vld [vmem:[%s115 + $0xc] sm:$0xf]
            %120 = vst [vmem:[%s116 + $0x4] sm:$0xf] %v119
          $region104: #{_lambda_.23} parent=98 // loop_footer
            %s114 = sadd.s32 1, %s110
          $region105: #{_lambda_.23} parent=98 // loop_footer_branch
            %109 = sbr.rel target = $region101
          $region106: #{_lambda_.23} parent=98 // loop_exit
            _
        $region99: #{_lambda_.23} parent=90 // pred_fallthru
          _
      $region91: #{_lambda_.23} parent=86 // pred_fallthru
        _
      %144 = vnop
    $region87: #{_lambda_.23} parent=1 // pred_fallthru
      _
    // Predicated region
    $region125: #{_lambda_.23} parent=1 // pred_check
      _
    $region126: #{_lambda_.23} parent=1 // pred_check_branch
      %146 = sbr.rel (0) target = $region128
    $region127: #{_lambda_.23} parent=1 // pred_region
      _
    $region128: #{_lambda_.23} parent=1 // pred_fallthru
      _
    // Predicated region
    $region129: #{_lambda_.23} parent=1 // pred_check
      _
    $region130: #{_lambda_.23} parent=1 // pred_check_branch
      %148 = sbr.rel (0) target = $region132
    $region131: #{_lambda_.23} parent=1 // pred_region
      _
    $region132: #{_lambda_.23} parent=1 // pred_fallthru
      _
    // Predicated region
    $region133: #{_lambda_.23} parent=1 // pred_check
      _
    $region134: #{_lambda_.23} parent=1 // pred_check_branch
      %150 = sbr.rel (0) target = $region136
    $region135: #{_lambda_.23} parent=1 // pred_region
      _
    $region136: #{_lambda_.23} parent=1 // pred_fallthru
      _
    %v152 = vld [vmem:[#allocation2] sm:$0xf]
    %v153 = vld [vmem:[#allocation2 + $0x4] sm:$0xf]
    %v154 = vld [vmem:[#allocation3] sm:$0xf]
    %v155 = vld [vmem:[#allocation3 + $0x4] sm:$0xf]
    %vm156 = vcmask 261120
    %v158 = vsel %vm156, %v152, 0
    %v161 = vsel %vm156, %v154, 0
    %163 = vmatprep.subr.bf16.mxu0 0
    %164 = vmatpush1.bf16.xpose.msra.mxu0 %v161
    %165 = vmatprep.subr.bf16.mxu0 0
    %166 = vmatpush1.bf16.xpose.msra.mxu0 0
    %167 = vmatprep.subr.bf16.mxu0 0
    %168 = vmatpush1.bf16.xpose.msra.mxu0 0
    %169 = vmatprep.subr.bf16.mxu0 0
    %170 = vmatpush1.bf16.xpose.msra.mxu0 0
    %171 = vmatprep.subr.bf16.mxu0 0
    %172 = vmatpush1.bf16.xpose.msra.mxu0 0
    %173 = vmatprep.subr.bf16.mxu0 0
    %174 = vmatpush1.bf16.xpose.msra.mxu0 0
    %175 = vmatprep.subr.bf16.mxu0 0
    %176 = vmatpush1.bf16.xpose.msra.mxu0 0
    %177 = vmatprep.subr.bf16.mxu0 0
    %178 = vmatpush1.bf16.xpose.msra.mxu0 0
    %179 = vmatprep.subr.bf16.mxu0 0
    %180 = vmatpush1.bf16.xpose.msra.mxu0 0
    %181 = vmatprep.subr.bf16.mxu0 0
    %182 = vmatpush1.bf16.xpose.msra.mxu0 0
    %183 = vmatprep.subr.bf16.mxu0 0
    %184 = vmatpush1.bf16.xpose.msra.mxu0 0
    %185 = vmatprep.subr.bf16.mxu0 0
    %186 = vmatpush1.bf16.xpose.msra.mxu0 0
    %187 = vmatprep.subr.bf16.mxu0 0
    %188 = vmatpush1.bf16.xpose.msra.mxu0 0
    %189 = vmatprep.subr.bf16.mxu0 0
    %190 = vmatpush1.bf16.xpose.msra.mxu0 0
    %191 = vmatprep.subr.bf16.mxu0 0
    %192 = vmatpush1.bf16.xpose.msra.mxu0 0
    %193 = vmatprep.subr.bf16.mxu0 0
    %194 = vmatpush1.bf16.xpose.msra.mxu0 0
    %195 = vmatprep.mubr.bf16.mxu0 0
    %196 = vmatmul.mubr.bf16.gmra.mrb[0].mxu0 %v158
    %v197 = vpop.f32.mrb[0].mxu0
    %v198 = vadd.f32 0.0, %v197
    %v199 = vpop.f32.mrb[0].mxu0
    %v200 = vpop.f32.mrb[0].mxu0
    %v201 = vpop.f32.mrb[0].mxu0
    %202 = vdwg.mxu0
    %v204 = vsel %vm156, %v153, 0
    %v207 = vsel %vm156, %v155, 0
    %209 = vmatprep.subr.bf16.mxu0 0
    %210 = vmatpush1.bf16.xpose.msra.mxu0 %v207
    %211 = vmatprep.subr.bf16.mxu0 0
    %212 = vmatpush1.bf16.xpose.msra.mxu0 0
    %213 = vmatprep.subr.bf16.mxu0 0
    %214 = vmatpush1.bf16.xpose.msra.mxu0 0
    %215 = vmatprep.subr.bf16.mxu0 0
    %216 = vmatpush1.bf16.xpose.msra.mxu0 0
    %217 = vmatprep.subr.bf16.mxu0 0
    %218 = vmatpush1.bf16.xpose.msra.mxu0 0
    %219 = vmatprep.subr.bf16.mxu0 0
    %220 = vmatpush1.bf16.xpose.msra.mxu0 0
    %221 = vmatprep.subr.bf16.mxu0 0
    %222 = vmatpush1.bf16.xpose.msra.mxu0 0
    %223 = vmatprep.subr.bf16.mxu0 0
    %224 = vmatpush1.bf16.xpose.msra.mxu0 0
    %225 = vmatprep.subr.bf16.mxu0 0
    %226 = vmatpush1.bf16.xpose.msra.mxu0 0
    %227 = vmatprep.subr.bf16.mxu0 0
    %228 = vmatpush1.bf16.xpose.msra.mxu0 0
    %229 = vmatprep.subr.bf16.mxu0 0
    %230 = vmatpush1.bf16.xpose.msra.mxu0 0
    %231 = vmatprep.subr.bf16.mxu0 0
    %232 = vmatpush1.bf16.xpose.msra.mxu0 0
    %233 = vmatprep.subr.bf16.mxu0 0
    %234 = vmatpush1.bf16.xpose.msra.mxu0 0
    %235 = vmatprep.subr.bf16.mxu0 0
    %236 = vmatpush1.bf16.xpose.msra.mxu0 0
    %237 = vmatprep.subr.bf16.mxu0 0
    %238 = vmatpush1.bf16.xpose.msra.mxu0 0
    %239 = vmatprep.subr.bf16.mxu0 0
    %240 = vmatpush1.bf16.xpose.msra.mxu0 0
    %241 = vmatprep.mubr.bf16.mxu0 0
    %242 = vmatmul.mubr.bf16.gmra.mrb[0].mxu0 %v204
    %v243 = vpop.f32.mrb[0].mxu0
    %v244 = vadd.f32 0.0, %v243
    %v245 = vpop.f32.mrb[0].mxu0
    %v246 = vpop.f32.mrb[0].mxu0
    %v247 = vpop.f32.mrb[0].mxu0
    %248 = vdwg.mxu0
    %v249 = vmul.f32 %v198, 0.17677669
    %v250 = vmul.f32 %v244, 0.17677669
    %vm251 = vcmask 64512
    %v252 = vsel %vm251, %v249, -inf
    %253 = vmax.xlane.f32.xlu0 %v252
    %v254 = vpop.xlane.xlu0 %253
    %v255 = vsel %vm251, %v250, -inf
    %256 = vmax.xlane.f32.xlu0 %v255
    %v257 = vpop.xlane.xlu0 %256
    %v258 = vsub.f32 %v249, %v254
    %v259 = vsub.f32 %v250, %v257
    %v260 = vmul.f32 %v258, 1.442695
    %v261 = vpow.pop %v260
    %v262 = vmul.f32 %v259, 1.442695
    %v263 = vpow.pop %v262
    %v264 = vsel %vm251, %v261, 0.0
    %265 = vadd.xlane.f32.xlu0 %v264
    %v266 = vpop.xlane.xlu0 %265
    %v267 = vsel %vm251, %v263, 0.0
    %268 = vadd.xlane.f32.xlu0 %v267
    %v269 = vpop.xlane.xlu0 %268
    %v270 = vrcp.pop %v266
    %v271 = vrcp.pop %v269
    %v272 = vmul.f32 %v261, %v270
    %v273 = vmul.f32 %v263, %v271
    %v274 = vpack.c.bf16 %v272, %v272
    %v275 = vpack.c.bf16 %v273, %v273
    %v276 = vld [vmem:[#allocation4] sm:$0xf]
    %v277 = vld [vmem:[#allocation4 + $0x4] sm:$0xf]
    %v279 = vsel %vm251, %v274, 0
    %vm281 = vcmask 1043456
    %v283 = vsel %vm281, %v276, 0
    %285 = vmatprep.subr.bf16.mxu0 0
    %286 = vmatpush1.bf16.msra.mxu0 %v283
    %287 = vmatprep.subr.bf16.mxu0 0
    %288 = vmatpush1.bf16.msra.mxu0 0
    %289 = vmatprep.subr.bf16.mxu0 0
    %290 = vmatpush1.bf16.msra.mxu0 0
    %291 = vmatprep.subr.bf16.mxu0 0
    %292 = vmatpush1.bf16.msra.mxu0 0
    %293 = vmatprep.subr.bf16.mxu0 0
    %294 = vmatpush1.bf16.msra.mxu0 0
    %295 = vmatprep.subr.bf16.mxu0 0
    %296 = vmatpush1.bf16.msra.mxu0 0
    %297 = vmatprep.subr.bf16.mxu0 0
    %298 = vmatpush1.bf16.msra.mxu0 0
    %299 = vmatprep.subr.bf16.mxu0 0
    %300 = vmatpush1.bf16.msra.mxu0 0
    %301 = vmatprep.subr.bf16.mxu0 0
    %302 = vmatpush1.bf16.msra.mxu0 0
    %303 = vmatprep.subr.bf16.mxu0 0
    %304 = vmatpush1.bf16.msra.mxu0 0
    %305 = vmatprep.subr.bf16.mxu0 0
    %306 = vmatpush1.bf16.msra.mxu0 0
    %307 = vmatprep.subr.bf16.mxu0 0
    %308 = vmatpush1.bf16.msra.mxu0 0
    %309 = vmatprep.subr.bf16.mxu0 0
    %310 = vmatpush1.bf16.msra.mxu0 0
    %311 = vmatprep.subr.bf16.mxu0 0
    %312 = vmatpush1.bf16.msra.mxu0 0
    %313 = vmatprep.subr.bf16.mxu0 0
    %314 = vmatpush1.bf16.msra.mxu0 0
    %315 = vmatprep.subr.bf16.mxu0 0
    %316 = vmatpush1.bf16.msra.mxu0 0
    %317 = vmatprep.mubr.bf16.mxu0 0
    %318 = vmatmul.mubr.bf16.gmra.mrb[0].mxu0 %v279
    %v319 = vpop.f32.mrb[0].mxu0
    %v320 = vadd.f32 0.0, %v319
    %v321 = vpop.f32.mrb[0].mxu0
    %v322 = vpop.f32.mrb[0].mxu0
    %v323 = vpop.f32.mrb[0].mxu0
    %324 = vdwg.mxu0
    %v326 = vsel %vm251, %v275, 0
    %v329 = vsel %vm281, %v277, 0
    %331 = vmatprep.subr.bf16.mxu0 0
    %332 = vmatpush1.bf16.msra.mxu0 %v329
    %333 = vmatprep.subr.bf16.mxu0 0
    %334 = vmatpush1.bf16.msra.mxu0 0
    %335 = vmatprep.subr.bf16.mxu0 0
    %336 = vmatpush1.bf16.msra.mxu0 0
    %337 = vmatprep.subr.bf16.mxu0 0
    %338 = vmatpush1.bf16.msra.mxu0 0
    %339 = vmatprep.subr.bf16.mxu0 0
    %340 = vmatpush1.bf16.msra.mxu0 0
    %341 = vmatprep.subr.bf16.mxu0 0
    %342 = vmatpush1.bf16.msra.mxu0 0
    %343 = vmatprep.subr.bf16.mxu0 0
    %344 = vmatpush1.bf16.msra.mxu0 0
    %345 = vmatprep.subr.bf16.mxu0 0
    %346 = vmatpush1.bf16.msra.mxu0 0
    %347 = vmatprep.subr.bf16.mxu0 0
    %348 = vmatpush1.bf16.msra.mxu0 0
    %349 = vmatprep.subr.bf16.mxu0 0
    %350 = vmatpush1.bf16.msra.mxu0 0
    %351 = vmatprep.subr.bf16.mxu0 0
    %352 = vmatpush1.bf16.msra.mxu0 0
    %353 = vmatprep.subr.bf16.mxu0 0
    %354 = vmatpush1.bf16.msra.mxu0 0
    %355 = vmatprep.subr.bf16.mxu0 0
    %356 = vmatpush1.bf16.msra.mxu0 0
    %357 = vmatprep.subr.bf16.mxu0 0
    %358 = vmatpush1.bf16.msra.mxu0 0
    %359 = vmatprep.subr.bf16.mxu0 0
    %360 = vmatpush1.bf16.msra.mxu0 0
    %361 = vmatprep.subr.bf16.mxu0 0
    %362 = vmatpush1.bf16.msra.mxu0 0
    %363 = vmatprep.mubr.bf16.mxu0 0
    %364 = vmatmul.mubr.bf16.gmra.mrb[0].mxu0 %v326
    %v365 = vpop.f32.mrb[0].mxu0
    %v366 = vadd.f32 0.0, %v365
    %v367 = vpop.f32.mrb[0].mxu0
    %v368 = vpop.f32.mrb[0].mxu0
    %v369 = vpop.f32.mrb[0].mxu0
    %370 = vdwg.mxu0
    %v371 = vtanh.pop %v320
    %v372 = vtanh.pop %v366
    %v373 = vpack.c.bf16 %v371, %v371
    %v374 = vpack.c.bf16 %v372, %v372
    %vm375 = vcmask 257024
    %376 = vst.msk [vmem:[%s3] sm:$0xf] %vm375, %v373
    %377 = vst.msk [vmem:[%s3 + $0x4] sm:$0xf] %vm375, %v374
    %v378 = vld [vmem:[#allocation2] sm:$0xf]
    %v379 = vld [vmem:[#allocation2 + $0x4] sm:$0xf]
    %v380 = vld [vmem:[#allocation3] sm:$0xf]
    %v381 = vld [vmem:[#allocation3 + $0x4] sm:$0xf]
    %v383 = vunpack.c.l.b16 %v378
    %v384 = vpack.c.b16 %v383, %v383
    %385 = vrot.lane.b32.xlu0 %v384, 96
    %v386 = vpop.permute.xlu0 %385
    %v388 = vunpack.c.l.b16 %v380
    %v389 = vpack.c.b16 %v388, %v388
    %390 = vrot.lane.b32.xlu0 %v389, 96
    %v391 = vpop.permute.xlu0 %390
    %v393 = vsel %vm156, %v386, 0
    %v396 = vsel %vm156, %v391, 0
    %398 = vmatprep.subr.bf16.mxu0 0
    %399 = vmatpush1.bf16.xpose.msra.mxu0 %v396
    %400 = vmatprep.subr.bf16.mxu0 0
    %401 = vmatpush1.bf16.xpose.msra.mxu0 0
    %402 = vmatprep.subr.bf16.mxu0 0
    %403 = vmatpush1.bf16.xpose.msra.mxu0 0
    %404 = vmatprep.subr.bf16.mxu0 0
    %405 = vmatpush1.bf16.xpose.msra.mxu0 0
    %406 = vmatprep.subr.bf16.mxu0 0
    %407 = vmatpush1.bf16.xpose.msra.mxu0 0
    %408 = vmatprep.subr.bf16.mxu0 0
    %409 = vmatpush1.bf16.xpose.msra.mxu0 0
    %410 = vmatprep.subr.bf16.mxu0 0
    %411 = vmatpush1.bf16.xpose.msra.mxu0 0
    %412 = vmatprep.subr.bf16.mxu0 0
    %413 = vmatpush1.bf16.xpose.msra.mxu0 0
    %414 = vmatprep.subr.bf16.mxu0 0
    %415 = vmatpush1.bf16.xpose.msra.mxu0 0
    %416 = vmatprep.subr.bf16.mxu0 0
    %417 = vmatpush1.bf16.xpose.msra.mxu0 0
    %418 = vmatprep.subr.bf16.mxu0 0
    %419 = vmatpush1.bf16.xpose.msra.mxu0 0
    %420 = vmatprep.subr.bf16.mxu0 0
    %421 = vmatpush1.bf16.xpose.msra.mxu0 0
    %422 = vmatprep.subr.bf16.mxu0 0
    %423 = vmatpush1.bf16.xpose.msra.mxu0 0
    %424 = vmatprep.subr.bf16.mxu0 0
    %425 = vmatpush1.bf16.xpose.msra.mxu0 0
    %426 = vmatprep.subr.bf16.mxu0 0
    %427 = vmatpush1.bf16.xpose.msra.mxu0 0
    %428 = vmatprep.subr.bf16.mxu0 0
    %429 = vmatpush1.bf16.xpose.msra.mxu0 0
    %430 = vmatprep.mubr.bf16.mxu0 0
    %431 = vmatmul.mubr.bf16.gmra.mrb[0].mxu0 %v393
    %v432 = vpop.f32.mrb[0].mxu0
    %v433 = vadd.f32 0.0, %v432
    %v434 = vpop.f32.mrb[0].mxu0
    %v435 = vpop.f32.mrb[0].mxu0
    %v436 = vpop.f32.mrb[0].mxu0
    %437 = vdwg.mxu0
    %v439 = vunpack.c.l.b16 %v379
    %v440 = vpack.c.b16 %v439, %v439
    %441 = vrot.lane.b32.xlu0 %v440, 96
    %v442 = vpop.permute.xlu0 %441
    %v444 = vunpack.c.l.b16 %v381
    %v445 = vpack.c.b16 %v444, %v444
    %446 = vrot.lane.b32.xlu0 %v445, 96
    %v447 = vpop.permute.xlu0 %446
    %v449 = vsel %vm156, %v442, 0
    %v452 = vsel %vm156, %v447, 0
    %454 = vmatprep.subr.bf16.mxu0 0
    %455 = vmatpush1.bf16.xpose.msra.mxu0 %v452
    %456 = vmatprep.subr.bf16.mxu0 0
    %457 = vmatpush1.bf16.xpose.msra.mxu0 0
    %458 = vmatprep.subr.bf16.mxu0 0
    %459 = vmatpush1.bf16.xpose.msra.mxu0 0
    %460 = vmatprep.subr.bf16.mxu0 0
    %461 = vmatpush1.bf16.xpose.msra.mxu0 0
    %462 = vmatprep.subr.bf16.mxu0 0
    %463 = vmatpush1.bf16.xpose.msra.mxu0 0
    %464 = vmatprep.subr.bf16.mxu0 0
    %465 = vmatpush1.bf16.xpose.msra.mxu0 0
    %466 = vmatprep.subr.bf16.mxu0 0
    %467 = vmatpush1.bf16.xpose.msra.mxu0 0
    %468 = vmatprep.subr.bf16.mxu0 0
    %469 = vmatpush1.bf16.xpose.msra.mxu0 0
    %470 = vmatprep.subr.bf16.mxu0 0
    %471 = vmatpush1.bf16.xpose.msra.mxu0 0
    %472 = vmatprep.subr.bf16.mxu0 0
    %473 = vmatpush1.bf16.xpose.msra.mxu0 0
    %474 = vmatprep.subr.bf16.mxu0 0
    %475 = vmatpush1.bf16.xpose.msra.mxu0 0
    %476 = vmatprep.subr.bf16.mxu0 0
    %477 = vmatpush1.bf16.xpose.msra.mxu0 0
    %478 = vmatprep.subr.bf16.mxu0 0
    %479 = vmatpush1.bf16.xpose.msra.mxu0 0
    %480 = vmatprep.subr.bf16.mxu0 0
    %481 = vmatpush1.bf16.xpose.msra.mxu0 0
    %482 = vmatprep.subr.bf16.mxu0 0
    %483 = vmatpush1.bf16.xpose.msra.mxu0 0
    %484 = vmatprep.subr.bf16.mxu0 0
    %485 = vmatpush1.bf16.xpose.msra.mxu0 0
    %486 = vmatprep.mubr.bf16.mxu0 0
    %487 = vmatmul.mubr.bf16.gmra.mrb[0].mxu0 %v449
    %v488 = vpop.f32.mrb[0].mxu0
    %v489 = vadd.f32 0.0, %v488
    %v490 = vpop.f32.mrb[0].mxu0
    %v491 = vpop.f32.mrb[0].mxu0
    %v492 = vpop.f32.mrb[0].mxu0
    %493 = vdwg.mxu0
    %v494 = vmul.f32 %v433, 0.17677669
    %v495 = vmul.f32 %v489, 0.17677669
    %v496 = vsel %vm251, %v494, -inf
    %497 = vmax.xlane.f32.xlu0 %v496
    %v498 = vpop.xlane.xlu0 %497
    %v499 = vsel %vm251, %v495, -inf
    %500 = vmax.xlane.f32.xlu0 %v499
    %v501 = vpop.xlane.xlu0 %500
    %v502 = vsub.f32 %v494, %v498
    %v503 = vsub.f32 %v495, %v501
    %v504 = vmul.f32 %v502, 1.442695
    %v505 = vpow.pop %v504
    %v506 = vmul.f32 %v503, 1.442695
    %v507 = vpow.pop %v506
    %v508 = vsel %vm251, %v505, 0.0
    %509 = vadd.xlane.f32.xlu0 %v508
    %v510 = vpop.xlane.xlu0 %509
    %v511 = vsel %vm251, %v507, 0.0
    %512 = vadd.xlane.f32.xlu0 %v511
    %v513 = vpop.xlane.xlu0 %512
    %v514 = vrcp.pop %v510
    %v515 = vrcp.pop %v513
    %v516 = vmul.f32 %v505, %v514
    %v517 = vmul.f32 %v507, %v515
    %v518 = vpack.c.bf16 %v516, %v516
    %v519 = vpack.c.bf16 %v517, %v517
    %v520 = vld [vmem:[#allocation4] sm:$0xf]
    %v521 = vld [vmem:[#allocation4 + $0x4] sm:$0xf]
    %v523 = vunpack.c.l.b16 %v520
    %v524 = vpack.c.b16 %v523, %v523
    %525 = vrot.lane.b32.xlu0 %v524, 96
    %v526 = vpop.permute.xlu0 %525
    %v528 = vsel %vm251, %v518, 0
    %v531 = vsel %vm281, %v526, 0
    %533 = vmatprep.subr.bf16.mxu0 0
    %534 = vmatpush1.bf16.msra.mxu0 %v531
    %535 = vmatprep.subr.bf16.mxu0 0
    %536 = vmatpush1.bf16.msra.mxu0 0
    %537 = vmatprep.subr.bf16.mxu0 0
    %538 = vmatpush1.bf16.msra.mxu0 0
    %539 = vmatprep.subr.bf16.mxu0 0
    %540 = vmatpush1.bf16.msra.mxu0 0
    %541 = vmatprep.subr.bf16.mxu0 0
    %542 = vmatpush1.bf16.msra.mxu0 0
    %543 = vmatprep.subr.bf16.mxu0 0
    %544 = vmatpush1.bf16.msra.mxu0 0
    %545 = vmatprep.subr.bf16.mxu0 0
    %546 = vmatpush1.bf16.msra.mxu0 0
    %547 = vmatprep.subr.bf16.mxu0 0
    %548 = vmatpush1.bf16.msra.mxu0 0
    %549 = vmatprep.subr.bf16.mxu0 0
    %550 = vmatpush1.bf16.msra.mxu0 0
    %551 = vmatprep.subr.bf16.mxu0 0
    %552 = vmatpush1.bf16.msra.mxu0 0
    %553 = vmatprep.subr.bf16.mxu0 0
    %554 = vmatpush1.bf16.msra.mxu0 0
    %555 = vmatprep.subr.bf16.mxu0 0
    %556 = vmatpush1.bf16.msra.mxu0 0
    %557 = vmatprep.subr.bf16.mxu0 0
    %558 = vmatpush1.bf16.msra.mxu0 0
    %559 = vmatprep.subr.bf16.mxu0 0
    %560 = vmatpush1.bf16.msra.mxu0 0
    %561 = vmatprep.subr.bf16.mxu0 0
    %562 = vmatpush1.bf16.msra.mxu0 0
    %563 = vmatprep.subr.bf16.mxu0 0
    %564 = vmatpush1.bf16.msra.mxu0 0
    %565 = vmatprep.mubr.bf16.mxu0 0
    %566 = vmatmul.mubr.bf16.gmra.mrb[0].mxu0 %v528
    %v567 = vpop.f32.mrb[0].mxu0
    %v568 = vadd.f32 0.0, %v567
    %v569 = vpop.f32.mrb[0].mxu0
    %v570 = vpop.f32.mrb[0].mxu0
    %v571 = vpop.f32.mrb[0].mxu0
    %572 = vdwg.mxu0
    %v574 = vunpack.c.l.b16 %v521
    %v575 = vpack.c.b16 %v574, %v574
    %576 = vrot.lane.b32.xlu0 %v575, 96
    %v577 = vpop.permute.xlu0 %576
    %v579 = vsel %vm251, %v519, 0
    %v582 = vsel %vm281, %v577, 0
    %584 = vmatprep.subr.bf16.mxu0 0
    %585 = vmatpush1.bf16.msra.mxu0 %v582
    %586 = vmatprep.subr.bf16.mxu0 0
    %587 = vmatpush1.bf16.msra.mxu0 0
    %588 = vmatprep.subr.bf16.mxu0 0
    %589 = vmatpush1.bf16.msra.mxu0 0
    %590 = vmatprep.subr.bf16.mxu0 0
    %591 = vmatpush1.bf16.msra.mxu0 0
    %592 = vmatprep.subr.bf16.mxu0 0
    %593 = vmatpush1.bf16.msra.mxu0 0
    %594 = vmatprep.subr.bf16.mxu0 0
    %595 = vmatpush1.bf16.msra.mxu0 0
    %596 = vmatprep.subr.bf16.mxu0 0
    %597 = vmatpush1.bf16.msra.mxu0 0
    %598 = vmatprep.subr.bf16.mxu0 0
    %599 = vmatpush1.bf16.msra.mxu0 0
    %600 = vmatprep.subr.bf16.mxu0 0
    %601 = vmatpush1.bf16.msra.mxu0 0
    %602 = vmatprep.subr.bf16.mxu0 0
    %603 = vmatpush1.bf16.msra.mxu0 0
    %604 = vmatprep.subr.bf16.mxu0 0
    %605 = vmatpush1.bf16.msra.mxu0 0
    %606 = vmatprep.subr.bf16.mxu0 0
    %607 = vmatpush1.bf16.msra.mxu0 0
    %608 = vmatprep.subr.bf16.mxu0 0
    %609 = vmatpush1.bf16.msra.mxu0 0
    %610 = vmatprep.subr.bf16.mxu0 0
    %611 = vmatpush1.bf16.msra.mxu0 0
    %612 = vmatprep.subr.bf16.mxu0 0
    %613 = vmatpush1.bf16.msra.mxu0 0
    %614 = vmatprep.subr.bf16.mxu0 0
    %615 = vmatpush1.bf16.msra.mxu0 0
    %616 = vmatprep.mubr.bf16.mxu0 0
    %617 = vmatmul.mubr.bf16.gmra.mrb[0].mxu0 %v579
    %v618 = vpop.f32.mrb[0].mxu0
    %v619 = vadd.f32 0.0, %v618
    %v620 = vpop.f32.mrb[0].mxu0
    %v621 = vpop.f32.mrb[0].mxu0
    %v622 = vpop.f32.mrb[0].mxu0
    %623 = vdwg.mxu0
    %v624 = vtanh.pop %v568
    %v625 = vtanh.pop %v619
    %v626 = vpack.c.bf16 %v624, %v624
    %v627 = vpack.c.bf16 %v625, %v625
    %v630 = vunpack.c.l.b16 %v626
    %v631 = vunpack.c.l.b16 %v627
    %v632 = vpack.c.b16 %v630, %v630
    %v633 = vpack.c.b16 %v631, %v631
    %634 = vrot.lane.b32.xlu0 %v632, 32
    %v635 = vpop.permute.xlu0 %634
    %636 = vrot.lane.b32.xlu0 %v633, 32
    %v637 = vpop.permute.xlu0 %636
    %vm640 = vcmask 519424
    %641 = vst.msk [vmem:[%s3] sm:$0xf] %vm640, %v635
    %642 = vst.msk [vmem:[%s3 + $0x4] sm:$0xf] %vm640, %v637
    %v643 = vld [vmem:[#allocation2] sm:$0xf]
    %v644 = vld [vmem:[#allocation2 + $0x4] sm:$0xf]
    %v645 = vld [vmem:[#allocation3] sm:$0xf]
    %v646 = vld [vmem:[#allocation3 + $0x4] sm:$0xf]
    %v648 = vunpack.c.l.b16 %v643
    %v649 = vpack.c.b16 %v648, %v648
    %650 = vrot.lane.b32.xlu0 %v649, 64
    %v651 = vpop.permute.xlu0 %650
    %v653 = vunpack.c.l.b16 %v645
    %v654 = vpack.c.b16 %v653, %v653
    %655 = vrot.lane.b32.xlu0 %v654, 64
    %v656 = vpop.permute.xlu0 %655
    %v658 = vsel %vm156, %v651, 0
    %v661 = vsel %vm156, %v656, 0
    %663 = vmatprep.subr.bf16.mxu0 0
    %664 = vmatpush1.bf16.xpose.msra.mxu0 %v661
    %665 = vmatprep.subr.bf16.mxu0 0
    %666 = vmatpush1.bf16.xpose.msra.mxu0 0
    %667 = vmatprep.subr.bf16.mxu0 0
    %668 = vmatpush1.bf16.xpose.msra.mxu0 0
    %669 = vmatprep.subr.bf16.mxu0 0
    %670 = vmatpush1.bf16.xpose.msra.mxu0 0
    %671 = vmatprep.subr.bf16.mxu0 0
    %672 = vmatpush1.bf16.xpose.msra.mxu0 0
    %673 = vmatprep.subr.bf16.mxu0 0
    %674 = vmatpush1.bf16.xpose.msra.mxu0 0
    %675 = vmatprep.subr.bf16.mxu0 0
    %676 = vmatpush1.bf16.xpose.msra.mxu0 0
    %677 = vmatprep.subr.bf16.mxu0 0
    %678 = vmatpush1.bf16.xpose.msra.mxu0 0
    %679 = vmatprep.subr.bf16.mxu0 0
    %680 = vmatpush1.bf16.xpose.msra.mxu0 0
    %681 = vmatprep.subr.bf16.mxu0 0
    %682 = vmatpush1.bf16.xpose.msra.mxu0 0
    %683 = vmatprep.subr.bf16.mxu0 0
    %684 = vmatpush1.bf16.xpose.msra.mxu0 0
    %685 = vmatprep.subr.bf16.mxu0 0
    %686 = vmatpush1.bf16.xpose.msra.mxu0 0
    %687 = vmatprep.subr.bf16.mxu0 0
    %688 = vmatpush1.bf16.xpose.msra.mxu0 0
    %689 = vmatprep.subr.bf16.mxu0 0
    %690 = vmatpush1.bf16.xpose.msra.mxu0 0
    %691 = vmatprep.subr.bf16.mxu0 0
    %692 = vmatpush1.bf16.xpose.msra.mxu0 0
    %693 = vmatprep.subr.bf16.mxu0 0
    %694 = vmatpush1.bf16.xpose.msra.mxu0 0
    %695 = vmatprep.mubr.bf16.mxu0 0
    %696 = vmatmul.mubr.bf16.gmra.mrb[0].mxu0 %v658
    %v697 = vpop.f32.mrb[0].mxu0
    %v698 = vadd.f32 0.0, %v697
    %v699 = vpop.f32.mrb[0].mxu0
    %v700 = vpop.f32.mrb[0].mxu0
    %v701 = vpop.f32.mrb[0].mxu0
    %702 = vdwg.mxu0
    %v704 = vunpack.c.l.b16 %v644
    %v705 = vpack.c.b16 %v704, %v704
    %706 = vrot.lane.b32.xlu0 %v705, 64
    %v707 = vpop.permute.xlu0 %706
    %v709 = vunpack.c.l.b16 %v646
    %v710 = vpack.c.b16 %v709, %v709
    %711 = vrot.lane.b32.xlu0 %v710, 64
    %v712 = vpop.permute.xlu0 %711
    %v714 = vsel %vm156, %v707, 0
    %v717 = vsel %vm156, %v712, 0
    %719 = vmatprep.subr.bf16.mxu0 0
    %720 = vmatpush1.bf16.xpose.msra.mxu0 %v717
    %721 = vmatprep.subr.bf16.mxu0 0
    %722 = vmatpush1.bf16.xpose.msra.mxu0 0
    %723 = vmatprep.subr.bf16.mxu0 0
    %724 = vmatpush1.bf16.xpose.msra.mxu0 0
    %725 = vmatprep.subr.bf16.mxu0 0
    %726 = vmatpush1.bf16.xpose.msra.mxu0 0
    %727 = vmatprep.subr.bf16.mxu0 0
    %728 = vmatpush1.bf16.xpose.msra.mxu0 0
    %729 = vmatprep.subr.bf16.mxu0 0
    %730 = vmatpush1.bf16.xpose.msra.mxu0 0
    %731 = vmatprep.subr.bf16.mxu0 0
    %732 = vmatpush1.bf16.xpose.msra.mxu0 0
    %733 = vmatprep.subr.bf16.mxu0 0
    %734 = vmatpush1.bf16.xpose.msra.mxu0 0
    %735 = vmatprep.subr.bf16.mxu0 0
    %736 = vmatpush1.bf16.xpose.msra.mxu0 0
    %737 = vmatprep.subr.bf16.mxu0 0
    %738 = vmatpush1.bf16.xpose.msra.mxu0 0
    %739 = vmatprep.subr.bf16.mxu0 0
    %740 = vmatpush1.bf16.xpose.msra.mxu0 0
    %741 = vmatprep.subr.bf16.mxu0 0
    %742 = vmatpush1.bf16.xpose.msra.mxu0 0
    %743 = vmatprep.subr.bf16.mxu0 0
    %744 = vmatpush1.bf16.xpose.msra.mxu0 0
    %745 = vmatprep.subr.bf16.mxu0 0
    %746 = vmatpush1.bf16.xpose.msra.mxu0 0
    %747 = vmatprep.subr.bf16.mxu0 0
    %748 = vmatpush1.bf16.xpose.msra.mxu0 0
    %749 = vmatprep.subr.bf16.mxu0 0
    %750 = vmatpush1.bf16.xpose.msra.mxu0 0
    %751 = vmatprep.mubr.bf16.mxu0 0
    %752 = vmatmul.mubr.bf16.gmra.mrb[0].mxu0 %v714
    %v753 = vpop.f32.mrb[0].mxu0
    %v754 = vadd.f32 0.0, %v753
    %v755 = vpop.f32.mrb[0].mxu0
    %v756 = vpop.f32.mrb[0].mxu0
    %v757 = vpop.f32.mrb[0].mxu0
    %758 = vdwg.mxu0
    %v759 = vmul.f32 %v698, 0.17677669
    %v760 = vmul.f32 %v754, 0.17677669
    %v761 = vsel %vm251, %v759, -inf
    %762 = vmax.xlane.f32.xlu0 %v761
    %v763 = vpop.xlane.xlu0 %762
    %v764 = vsel %vm251, %v760, -inf
    %765 = vmax.xlane.f32.xlu0 %v764
    %v766 = vpop.xlane.xlu0 %765
    %v767 = vsub.f32 %v759, %v763
    %v768 = vsub.f32 %v760, %v766
    %v769 = vmul.f32 %v767, 1.442695
    %v770 = vpow.pop %v769
    %v771 = vmul.f32 %v768, 1.442695
    %v772 = vpow.pop %v771
    %v773 = vsel %vm251, %v770, 0.0
    %774 = vadd.xlane.f32.xlu0 %v773
    %v775 = vpop.xlane.xlu0 %774
    %v776 = vsel %vm251, %v772, 0.0
    %777 = vadd.xlane.f32.xlu0 %v776
    %v778 = vpop.xlane.xlu0 %777
    %v779 = vrcp.pop %v775
    %v780 = vrcp.pop %v778
    %v781 = vmul.f32 %v770, %v779
    %v782 = vmul.f32 %v772, %v780
    %v783 = vpack.c.bf16 %v781, %v781
    %v784 = vpack.c.bf16 %v782, %v782
    %v785 = vld [vmem:[#allocation4] sm:$0xf]
    %v786 = vld [vmem:[#allocation4 + $0x4] sm:$0xf]
    %v788 = vunpack.c.l.b16 %v785
    %v789 = vpack.c.b16 %v788, %v788
    %790 = vrot.lane.b32.xlu0 %v789, 64
    %v791 = vpop.permute.xlu0 %790
    %v793 = vsel %vm251, %v783, 0
    %v796 = vsel %vm281, %v791, 0
    %798 = vmatprep.subr.bf16.mxu0 0
    %799 = vmatpush1.bf16.msra.mxu0 %v796
    %800 = vmatprep.subr.bf16.mxu0 0
    %801 = vmatpush1.bf16.msra.mxu0 0
    %802 = vmatprep.subr.bf16.mxu0 0
    %803 = vmatpush1.bf16.msra.mxu0 0
    %804 = vmatprep.subr.bf16.mxu0 0
    %805 = vmatpush1.bf16.msra.mxu0 0
    %806 = vmatprep.subr.bf16.mxu0 0
    %807 = vmatpush1.bf16.msra.mxu0 0
    %808 = vmatprep.subr.bf16.mxu0 0
    %809 = vmatpush1.bf16.msra.mxu0 0
    %810 = vmatprep.subr.bf16.mxu0 0
    %811 = vmatpush1.bf16.msra.mxu0 0
    %812 = vmatprep.subr.bf16.mxu0 0
    %813 = vmatpush1.bf16.msra.mxu0 0
    %814 = vmatprep.subr.bf16.mxu0 0
    %815 = vmatpush1.bf16.msra.mxu0 0
    %816 = vmatprep.subr.bf16.mxu0 0
    %817 = vmatpush1.bf16.msra.mxu0 0
    %818 = vmatprep.subr.bf16.mxu0 0
    %819 = vmatpush1.bf16.msra.mxu0 0
    %820 = vmatprep.subr.bf16.mxu0 0
    %821 = vmatpush1.bf16.msra.mxu0 0
    %822 = vmatprep.subr.bf16.mxu0 0
    %823 = vmatpush1.bf16.msra.mxu0 0
    %824 = vmatprep.subr.bf16.mxu0 0
    %825 = vmatpush1.bf16.msra.mxu0 0
    %826 = vmatprep.subr.bf16.mxu0 0
    %827 = vmatpush1.bf16.msra.mxu0 0
    %828 = vmatprep.subr.bf16.mxu0 0
    %829 = vmatpush1.bf16.msra.mxu0 0
    %830 = vmatprep.mubr.bf16.mxu0 0
    %831 = vmatmul.mubr.bf16.gmra.mrb[0].mxu0 %v793
    %v832 = vpop.f32.mrb[0].mxu0
    %v833 = vadd.f32 0.0, %v832
    %v834 = vpop.f32.mrb[0].mxu0
    %v835 = vpop.f32.mrb[0].mxu0
    %v836 = vpop.f32.mrb[0].mxu0
    %837 = vdwg.mxu0
    %v839 = vunpack.c.l.b16 %v786
    %v840 = vpack.c.b16 %v839, %v839
    %841 = vrot.lane.b32.xlu0 %v840, 64
    %v842 = vpop.permute.xlu0 %841
    %v844 = vsel %vm251, %v784, 0
    %v847 = vsel %vm281, %v842, 0
    %849 = vmatprep.subr.bf16.mxu0 0
    %850 = vmatpush1.bf16.msra.mxu0 %v847
    %851 = vmatprep.subr.bf16.mxu0 0
    %852 = vmatpush1.bf16.msra.mxu0 0
    %853 = vmatprep.subr.bf16.mxu0 0
    %854 = vmatpush1.bf16.msra.mxu0 0
    %855 = vmatprep.subr.bf16.mxu0 0
    %856 = vmatpush1.bf16.msra.mxu0 0
    %857 = vmatprep.subr.bf16.mxu0 0
    %858 = vmatpush1.bf16.msra.mxu0 0
    %859 = vmatprep.subr.bf16.mxu0 0
    %860 = vmatpush1.bf16.msra.mxu0 0
    %861 = vmatprep.subr.bf16.mxu0 0
    %862 = vmatpush1.bf16.msra.mxu0 0
    %863 = vmatprep.subr.bf16.mxu0 0
    %864 = vmatpush1.bf16.msra.mxu0 0
    %865 = vmatprep.subr.bf16.mxu0 0
    %866 = vmatpush1.bf16.msra.mxu0 0
    %867 = vmatprep.subr.bf16.mxu0 0
    %868 = vmatpush1.bf16.msra.mxu0 0
    %869 = vmatprep.subr.bf16.mxu0 0
    %870 = vmatpush1.bf16.msra.mxu0 0
    %871 = vmatprep.subr.bf16.mxu0 0
    %872 = vmatpush1.bf16.msra.mxu0 0
    %873 = vmatprep.subr.bf16.mxu0 0
    %874 = vmatpush1.bf16.msra.mxu0 0
    %875 = vmatprep.subr.bf16.mxu0 0
    %876 = vmatpush1.bf16.msra.mxu0 0
    %877 = vmatprep.subr.bf16.mxu0 0
    %878 = vmatpush1.bf16.msra.mxu0 0
    %879 = vmatprep.subr.bf16.mxu0 0
    %880 = vmatpush1.bf16.msra.mxu0 0
    %881 = vmatprep.mubr.bf16.mxu0 0
    %882 = vmatmul.mubr.bf16.gmra.mrb[0].mxu0 %v844
    %v883 = vpop.f32.mrb[0].mxu0
    %v884 = vadd.f32 0.0, %v883
    %v885 = vpop.f32.mrb[0].mxu0
    %v886 = vpop.f32.mrb[0].mxu0
    %v887 = vpop.f32.mrb[0].mxu0
    %888 = vdwg.mxu0
    %v889 = vtanh.pop %v833
    %v890 = vtanh.pop %v884
    %v891 = vpack.c.bf16 %v889, %v889
    %v892 = vpack.c.bf16 %v890, %v890
    %v895 = vunpack.c.l.b16 %v891
    %v896 = vunpack.c.l.b16 %v892
    %v897 = vpack.c.b16 %v895, %v895
    %v898 = vpack.c.b16 %v896, %v896
    %899 = vrot.lane.b32.xlu0 %v897, 64
    %v900 = vpop.permute.xlu0 %899
    %901 = vrot.lane.b32.xlu0 %v898, 64
    %v902 = vpop.permute.xlu0 %901
    %vm905 = vcmask 781824
    %906 = vst.msk [vmem:[%s3] sm:$0xf] %vm905, %v900
    %907 = vst.msk [vmem:[%s3 + $0x4] sm:$0xf] %vm905, %v902
    %v908 = vld [vmem:[#allocation2] sm:$0xf]
    %v909 = vld [vmem:[#allocation2 + $0x4] sm:$0xf]
    %v910 = vld [vmem:[#allocation3] sm:$0xf]
    %v911 = vld [vmem:[#allocation3 + $0x4] sm:$0xf]
    %v913 = vunpack.c.l.b16 %v908
    %v914 = vpack.c.b16 %v913, %v913
    %915 = vrot.lane.b32.xlu0 %v914, 32
    %v916 = vpop.permute.xlu0 %915
    %v918 = vunpack.c.l.b16 %v910
    %v919 = vpack.c.b16 %v918, %v918
    %920 = vrot.lane.b32.xlu0 %v919, 32
    %v921 = vpop.permute.xlu0 %920
    %v923 = vsel %vm156, %v916, 0
    %v926 = vsel %vm156, %v921, 0
    %928 = vmatprep.subr.bf16.mxu0 0
    %929 = vmatpush1.bf16.xpose.msra.mxu0 %v926
    %930 = vmatprep.subr.bf16.mxu0 0
    %931 = vmatpush1.bf16.xpose.msra.mxu0 0
    %932 = vmatprep.subr.bf16.mxu0 0
    %933 = vmatpush1.bf16.xpose.msra.mxu0 0
    %934 = vmatprep.subr.bf16.mxu0 0
    %935 = vmatpush1.bf16.xpose.msra.mxu0 0
    %936 = vmatprep.subr.bf16.mxu0 0
    %937 = vmatpush1.bf16.xpose.msra.mxu0 0
    %938 = vmatprep.subr.bf16.mxu0 0
    %939 = vmatpush1.bf16.xpose.msra.mxu0 0
    %940 = vmatprep.subr.bf16.mxu0 0
    %941 = vmatpush1.bf16.xpose.msra.mxu0 0
    %942 = vmatprep.subr.bf16.mxu0 0
    %943 = vmatpush1.bf16.xpose.msra.mxu0 0
    %944 = vmatprep.subr.bf16.mxu0 0
    %945 = vmatpush1.bf16.xpose.msra.mxu0 0
    %946 = vmatprep.subr.bf16.mxu0 0
    %947 = vmatpush1.bf16.xpose.msra.mxu0 0
    %948 = vmatprep.subr.bf16.mxu0 0
    %949 = vmatpush1.bf16.xpose.msra.mxu0 0
    %950 = vmatprep.subr.bf16.mxu0 0
    %951 = vmatpush1.bf16.xpose.msra.mxu0 0
    %952 = vmatprep.subr.bf16.mxu0 0
    %953 = vmatpush1.bf16.xpose.msra.mxu0 0
    %954 = vmatprep.subr.bf16.mxu0 0
    %955 = vmatpush1.bf16.xpose.msra.mxu0 0
    %956 = vmatprep.subr.bf16.mxu0 0
    %957 = vmatpush1.bf16.xpose.msra.mxu0 0
    %958 = vmatprep.subr.bf16.mxu0 0
    %959 = vmatpush1.bf16.xpose.msra.mxu0 0
    %960 = vmatprep.mubr.bf16.mxu0 0
    %961 = vmatmul.mubr.bf16.gmra.mrb[0].mxu0 %v923
    %v962 = vpop.f32.mrb[0].mxu0
    %v963 = vadd.f32 0.0, %v962
    %v964 = vpop.f32.mrb[0].mxu0
    %v965 = vpop.f32.mrb[0].mxu0
    %v966 = vpop.f32.mrb[0].mxu0
    %967 = vdwg.mxu0
    %v969 = vunpack.c.l.b16 %v909
    %v970 = vpack.c.b16 %v969, %v969
    %971 = vrot.lane.b32.xlu0 %v970, 32
    %v972 = vpop.permute.xlu0 %971
    %v974 = vunpack.c.l.b16 %v911
    %v975 = vpack.c.b16 %v974, %v974
    %976 = vrot.lane.b32.xlu0 %v975, 32
    %v977 = vpop.permute.xlu0 %976
    %v979 = vsel %vm156, %v972, 0
    %v982 = vsel %vm156, %v977, 0
    %984 = vmatprep.subr.bf16.mxu0 0
    %985 = vmatpush1.bf16.xpose.msra.mxu0 %v982
    %986 = vmatprep.subr.bf16.mxu0 0
    %987 = vmatpush1.bf16.xpose.msra.mxu0 0
    %988 = vmatprep.subr.bf16.mxu0 0
    %989 = vmatpush1.bf16.xpose.msra.mxu0 0
    %990 = vmatprep.subr.bf16.mxu0 0
    %991 = vmatpush1.bf16.xpose.msra.mxu0 0
    %992 = vmatprep.subr.bf16.mxu0 0
    %993 = vmatpush1.bf16.xpose.msra.mxu0 0
    %994 = vmatprep.subr.bf16.mxu0 0
    %995 = vmatpush1.bf16.xpose.msra.mxu0 0
    %996 = vmatprep.subr.bf16.mxu0 0
    %997 = vmatpush1.bf16.xpose.msra.mxu0 0
    %998 = vmatprep.subr.bf16.mxu0 0
    %999 = vmatpush1.bf16.xpose.msra.mxu0 0
    %1000 = vmatprep.subr.bf16.mxu0 0
    %1001 = vmatpush1.bf16.xpose.msra.mxu0 0
    %1002 = vmatprep.subr.bf16.mxu0 0
    %1003 = vmatpush1.bf16.xpose.msra.mxu0 0
    %1004 = vmatprep.subr.bf16.mxu0 0
    %1005 = vmatpush1.bf16.xpose.msra.mxu0 0
    %1006 = vmatprep.subr.bf16.mxu0 0
    %1007 = vmatpush1.bf16.xpose.msra.mxu0 0
    %1008 = vmatprep.subr.bf16.mxu0 0
    %1009 = vmatpush1.bf16.xpose.msra.mxu0 0
    %1010 = vmatprep.subr.bf16.mxu0 0
    %1011 = vmatpush1.bf16.xpose.msra.mxu0 0
    %1012 = vmatprep.subr.bf16.mxu0 0
    %1013 = vmatpush1.bf16.xpose.msra.mxu0 0
    %1014 = vmatprep.subr.bf16.mxu0 0
    %1015 = vmatpush1.bf16.xpose.msra.mxu0 0
    %1016 = vmatprep.mubr.bf16.mxu0 0
    %1017 = vmatmul.mubr.bf16.gmra.mrb[0].mxu0 %v979
    %v1018 = vpop.f32.mrb[0].mxu0
    %v1019 = vadd.f32 0.0, %v1018
    %v1020 = vpop.f32.mrb[0].mxu0
    %v1021 = vpop.f32.mrb[0].mxu0
    %v1022 = vpop.f32.mrb[0].mxu0
    %1023 = vdwg.mxu0
    %v1024 = vmul.f32 %v963, 0.17677669
    %v1025 = vmul.f32 %v1019, 0.17677669
    %v1026 = vsel %vm251, %v1024, -inf
    %1027 = vmax.xlane.f32.xlu0 %v1026
    %v1028 = vpop.xlane.xlu0 %1027
    %v1029 = vsel %vm251, %v1025, -inf
    %1030 = vmax.xlane.f32.xlu0 %v1029
    %v1031 = vpop.xlane.xlu0 %1030
    %v1032 = vsub.f32 %v1024, %v1028
    %v1033 = vsub.f32 %v1025, %v1031
    %v1034 = vmul.f32 %v1032, 1.442695
    %v1035 = vpow.pop %v1034
    %v1036 = vmul.f32 %v1033, 1.442695
    %v1037 = vpow.pop %v1036
    %v1038 = vsel %vm251, %v1035, 0.0
    %1039 = vadd.xlane.f32.xlu0 %v1038
    %v1040 = vpop.xlane.xlu0 %1039
    %v1041 = vsel %vm251, %v1037, 0.0
    %1042 = vadd.xlane.f32.xlu0 %v1041
    %v1043 = vpop.xlane.xlu0 %1042
    %v1044 = vrcp.pop %v1040
    %v1045 = vrcp.pop %v1043
    %v1046 = vmul.f32 %v1035, %v1044
    %v1047 = vmul.f32 %v1037, %v1045
    %v1048 = vpack.c.bf16 %v1046, %v1046
    %v1049 = vpack.c.bf16 %v1047, %v1047
    %v1050 = vld [vmem:[#allocation4] sm:$0xf]
    %v1051 = vld [vmem:[#allocation4 + $0x4] sm:$0xf]
    %v1053 = vunpack.c.l.b16 %v1050
    %v1054 = vpack.c.b16 %v1053, %v1053
    %1055 = vrot.lane.b32.xlu0 %v1054, 32
    %v1056 = vpop.permute.xlu0 %1055
    %v1058 = vsel %vm251, %v1048, 0
    %v1061 = vsel %vm281, %v1056, 0
    %1063 = vmatprep.subr.bf16.mxu0 0
    %1064 = vmatpush1.bf16.msra.mxu0 %v1061
    %1065 = vmatprep.subr.bf16.mxu0 0
    %1066 = vmatpush1.bf16.msra.mxu0 0
    %1067 = vmatprep.subr.bf16.mxu0 0
    %1068 = vmatpush1.bf16.msra.mxu0 0
    %1069 = vmatprep.subr.bf16.mxu0 0
    %1070 = vmatpush1.bf16.msra.mxu0 0
    %1071 = vmatprep.subr.bf16.mxu0 0
    %1072 = vmatpush1.bf16.msra.mxu0 0
    %1073 = vmatprep.subr.bf16.mxu0 0
    %1074 = vmatpush1.bf16.msra.mxu0 0
    %1075 = vmatprep.subr.bf16.mxu0 0
    %1076 = vmatpush1.bf16.msra.mxu0 0
    %1077 = vmatprep.subr.bf16.mxu0 0
    %1078 = vmatpush1.bf16.msra.mxu0 0
    %1079 = vmatprep.subr.bf16.mxu0 0
    %1080 = vmatpush1.bf16.msra.mxu0 0
    %1081 = vmatprep.subr.bf16.mxu0 0
    %1082 = vmatpush1.bf16.msra.mxu0 0
    %1083 = vmatprep.subr.bf16.mxu0 0
    %1084 = vmatpush1.bf16.msra.mxu0 0
    %1085 = vmatprep.subr.bf16.mxu0 0
    %1086 = vmatpush1.bf16.msra.mxu0 0
    %1087 = vmatprep.subr.bf16.mxu0 0
    %1088 = vmatpush1.bf16.msra.mxu0 0
    %1089 = vmatprep.subr.bf16.mxu0 0
    %1090 = vmatpush1.bf16.msra.mxu0 0
    %1091 = vmatprep.subr.bf16.mxu0 0
    %1092 = vmatpush1.bf16.msra.mxu0 0
    %1093 = vmatprep.subr.bf16.mxu0 0
    %1094 = vmatpush1.bf16.msra.mxu0 0
    %1095 = vmatprep.mubr.bf16.mxu0 0
    %1096 = vmatmul.mubr.bf16.gmra.mrb[0].mxu0 %v1058
    %v1097 = vpop.f32.mrb[0].mxu0
    %v1098 = vadd.f32 0.0, %v1097
    %v1099 = vpop.f32.mrb[0].mxu0
    %v1100 = vpop.f32.mrb[0].mxu0
    %v1101 = vpop.f32.mrb[0].mxu0
    %1102 = vdwg.mxu0
    %v1104 = vunpack.c.l.b16 %v1051
    %v1105 = vpack.c.b16 %v1104, %v1104
    %1106 = vrot.lane.b32.xlu0 %v1105, 32
    %v1107 = vpop.permute.xlu0 %1106
    %v1109 = vsel %vm251, %v1049, 0
    %v1112 = vsel %vm281, %v1107, 0
    %1114 = vmatprep.subr.bf16.mxu0 0
    %1115 = vmatpush1.bf16.msra.mxu0 %v1112
    %1116 = vmatprep.subr.bf16.mxu0 0
    %1117 = vmatpush1.bf16.msra.mxu0 0
    %1118 = vmatprep.subr.bf16.mxu0 0
    %1119 = vmatpush1.bf16.msra.mxu0 0
    %1120 = vmatprep.subr.bf16.mxu0 0
    %1121 = vmatpush1.bf16.msra.mxu0 0
    %1122 = vmatprep.subr.bf16.mxu0 0
    %1123 = vmatpush1.bf16.msra.mxu0 0
    %1124 = vmatprep.subr.bf16.mxu0 0
    %1125 = vmatpush1.bf16.msra.mxu0 0
    %1126 = vmatprep.subr.bf16.mxu0 0
    %1127 = vmatpush1.bf16.msra.mxu0 0
    %1128 = vmatprep.subr.bf16.mxu0 0
    %1129 = vmatpush1.bf16.msra.mxu0 0
    %1130 = vmatprep.subr.bf16.mxu0 0
    %1131 = vmatpush1.bf16.msra.mxu0 0
    %1132 = vmatprep.subr.bf16.mxu0 0
    %1133 = vmatpush1.bf16.msra.mxu0 0
    %1134 = vmatprep.subr.bf16.mxu0 0
    %1135 = vmatpush1.bf16.msra.mxu0 0
    %1136 = vmatprep.subr.bf16.mxu0 0
    %1137 = vmatpush1.bf16.msra.mxu0 0
    %1138 = vmatprep.subr.bf16.mxu0 0
    %1139 = vmatpush1.bf16.msra.mxu0 0
    %1140 = vmatprep.subr.bf16.mxu0 0
    %1141 = vmatpush1.bf16.msra.mxu0 0
    %1142 = vmatprep.subr.bf16.mxu0 0
    %1143 = vmatpush1.bf16.msra.mxu0 0
    %1144 = vmatprep.subr.bf16.mxu0 0
    %1145 = vmatpush1.bf16.msra.mxu0 0
    %1146 = vmatprep.mubr.bf16.mxu0 0
    %1147 = vmatmul.mubr.bf16.gmra.mrb[0].mxu0 %v1109
    %v1148 = vpop.f32.mrb[0].mxu0
    %v1149 = vadd.f32 0.0, %v1148
    %v1150 = vpop.f32.mrb[0].mxu0
    %v1151 = vpop.f32.mrb[0].mxu0
    %v1152 = vpop.f32.mrb[0].mxu0
    %1153 = vdwg.mxu0
    %v1154 = vtanh.pop %v1098
    %v1155 = vtanh.pop %v1149
    %v1156 = vpack.c.bf16 %v1154, %v1154
    %v1157 = vpack.c.bf16 %v1155, %v1155
    %v1160 = vunpack.c.l.b16 %v1156
    %v1161 = vunpack.c.l.b16 %v1157
    %v1162 = vpack.c.b16 %v1160, %v1160
    %v1163 = vpack.c.b16 %v1161, %v1161
    %1164 = vrot.lane.b32.xlu0 %v1162, 96
    %v1165 = vpop.permute.xlu0 %1164
    %1166 = vrot.lane.b32.xlu0 %v1163, 96
    %v1167 = vpop.permute.xlu0 %1166
    %vm1170 = vcmask 1044224
    %1171 = vst.msk [vmem:[%s3] sm:$0xf] %vm1170, %v1165
    %1172 = vst.msk [vmem:[%s3 + $0x4] sm:$0xf] %vm1170, %v1167
    // Predicated region
    $region137: #{_lambda_.23} parent=1 // pred_check
      _
    $region138: #{_lambda_.23} parent=1 // pred_check_branch
      %1174 = sbr.rel (0) target = $region140
    $region139: #{_lambda_.23} parent=1 // pred_region
      _
    $region140: #{_lambda_.23} parent=1 // pred_fallthru
      _
    // Predicated region
    $region141: #{_lambda_.23} parent=1 // pred_check
      _
    $region142: #{_lambda_.23} parent=1 // pred_check_branch
      %1176 = sbr.rel (0) target = $region144
    $region143: #{_lambda_.23} parent=1 // pred_region
      _
    $region144: #{_lambda_.23} parent=1 // pred_fallthru
      _

</llo_original>
